<compile_context>
chip_gen: v5e
topology: v5e:2x2
jax: 0.10.0
libtpu: 0.0.40
codegen_flags: <defaults>
</compile_context>

<pallas_src>
import jax
import jax.numpy as jnp
from jax.experimental import pallas as pl
from jax.experimental.pallas import tpu as pltpu

_EPS = 1e-5  # nn.InstanceNorm2d default


# ----------------------------------------------------------------------------
# Pallas kernel: fused [concat -> conv3x3 -> IN -> ReLU -> conv3x3 -> IN -> ReLU]
# ----------------------------------------------------------------------------
def _up_double_conv_kernel(x2_ref, x1_ref, w1_ref, w2_ref, o_ref,
                           xpad1, shift1, col1, ypad, shift2, col2, acc):
    # x2_ref : (H, W, C2)  bf16   skip connection
    # x1_ref : (H, W, C1)  bf16   upsampled low-res input
    # w1_ref : (3, 3*Cin, Cout) bf16   (kw, kh*Cin + c, cout)
    # w2_ref : (3, 3*Cout, Cout) bf16
    # o_ref  : (H, W, Cout) f32
    H, W, Cout = o_ref.shape
    C2 = x2_ref.shape[-1]
    C1 = x1_ref.shape[-1]
    Cin = C2 + C1

    def conv_in_relu(xpad, shift, col, w_ref, C):
        """3x3 conv (halo already in xpad) + InstanceNorm + ReLU -> (H*W, Cout) f32."""
        acc[...] = jnp.zeros_like(acc)                 # explicit VMEM accumulator
        for kw in range(3):                            # 3 column groups -> 3 GEMMs, K = 3*C
            shift[...] = xpad[:, kw:kw + W, :]         # one sublane shift per kw (not 9)
            for kh in range(3):                        # build im2col group in VMEM
                col[:, kh * C:(kh + 1) * C] = (
                    shift[kh:kh + H, :, :].reshape(H * W, C).astype(jnp.bfloat16))
            acc[...] += jnp.dot(col[...], w_ref[kw],
                                preferred_element_type=jnp.float32)
        y = acc[...]
        # InstanceNorm2d (affine=False): per-channel stats over H*W, biased variance.
        mean = jnp.mean(y, axis=0, keepdims=True)
        var = jnp.mean((y - mean) ** 2, axis=0, keepdims=True)
        y = (y - mean) * jax.lax.rsqrt(var + _EPS)
        return jnp.maximum(y, 0.0)                     # ReLU

    # --- concat([x2, x1], channel) + conv padding=1, built directly in VMEM ---
    xpad1[...] = jnp.zeros_like(xpad1)
    xpad1[1:H + 1, 1:W + 1, :C2] = x2_ref[...].astype(jnp.float32)
    xpad1[1:H + 1, 1:W + 1, C2:Cin] = x1_ref[...].astype(jnp.float32)

    # --- conv1 + IN + ReLU (bias is a no-op under IN and is dropped) ---
    y1 = conv_in_relu(xpad1, shift1, col1, w1_ref, Cin)

    # --- re-pad the conv1 output for conv2; intermediate never leaves VMEM ---
    ypad[...] = jnp.zeros_like(ypad)
    ypad[1:H + 1, 1:W + 1, :] = y1.reshape(H, W, Cout)

    # --- conv2 + IN + ReLU ---
    y2 = conv_in_relu(ypad, shift2, col2, w2_ref, Cout)
    o_ref[...] = y2.reshape(H, W, Cout)


# ----------------------------------------------------------------------------
# Glue: bilinear 2x upsample (align_corners=True) via gather + lerp, spatial pad
# ----------------------------------------------------------------------------
def _lerp_indices(n_in, n_out):
    if n_in == 1:
        z = jnp.zeros((n_out,), jnp.int32)
        return z, z, jnp.zeros((n_out,), jnp.float32)
    pos = jnp.arange(n_out, dtype=jnp.float32) * (n_in - 1) / (n_out - 1)
    lo = jnp.clip(jnp.floor(pos).astype(jnp.int32), 0, n_in - 1)
    hi = jnp.minimum(lo + 1, n_in - 1)
    frac = pos - lo.astype(jnp.float32)
    return lo, hi, frac


def upsample2x_bilinear_ac(x_nhwc):
    """2x bilinear upsample with align_corners=True (gather + lerp, no dense matmul)."""
    N, H, W, C = x_nhwc.shape
    ly, hy, fy = _lerp_indices(H, 2 * H)
    lx, hx, fx = _lerp_indices(W, 2 * W)
    xy = (x_nhwc[:, ly] * (1.0 - fy)[None, :, None, None]
          + x_nhwc[:, hy] * fy[None, :, None, None])
    out = (xy[:, :, lx] * (1.0 - fx)[None, None, :, None]
           + xy[:, :, hx] * fx[None, None, :, None])
    return out


def _upsample_and_pad(x1_nchw, x2_nchw):
    x1 = jnp.transpose(x1_nchw, (0, 2, 3, 1)).astype(jnp.float32)  # -> NHWC
    x2 = jnp.transpose(x2_nchw, (0, 2, 3, 1)).astype(jnp.float32)
    x1 = upsample2x_bilinear_ac(x1)
    dy = x2.shape[1] - x1.shape[1]
    dx = x2.shape[2] - x1.shape[2]
    assert dy >= 0 and dx >= 0, "x2 must be at least as large as upsampled x1"
    if dy != 0 or dx != 0:
        x1 = jnp.pad(x1, ((0, 0), (dy // 2, dy - dy // 2),
                          (dx // 2, dx - dx // 2), (0, 0)))
    return x1, x2


# ----------------------------------------------------------------------------
# Up module: params + forward
# ----------------------------------------------------------------------------
def init_up_params(key, in_channels, out_channels):
    k1, k2, k3, k4 = jax.random.split(key, 4)
    s1 = (2.0 / (9 * in_channels)) ** 0.5
    s2 = (2.0 / (9 * out_channels)) ** 0.5
    return {
        # HWIO conv weights (= PyTorch (Cout,Cin,3,3) transposed by (2,3,1,0))
        "w1": (jax.random.normal(k1, (3, 3, in_channels, out_channels)) * s1
               ).astype(jnp.float32),
        "b1": (jax.random.normal(k2, (1, out_channels)) * 0.01).astype(jnp.float32),
        "w2": (jax.random.normal(k3, (3, 3, out_channels, out_channels)) * s2
               ).astype(jnp.float32),
        "b2": (jax.random.normal(k4, (1, out_channels)) * 0.01).astype(jnp.float32),
    }


@jax.jit
def up_forward(params, x1_nchw, x2_nchw):
    x1u, x2 = _upsample_and_pad(x1_nchw, x2_nchw)      # NHWC, f32
    N, H, W, C2 = x2.shape
    C1 = x1u.shape[-1]
    Cin = C1 + C2
    Cout = params["w1"].shape[-1]
    assert params["w1"].shape[2] == Cin

    # Regroup weights as (kw, kh*Cin + c, cout) to match the per-kw im2col GEMMs.
    w1_g = jnp.transpose(params["w1"], (1, 0, 2, 3)).reshape(3, 3 * Cin, Cout)
    w2_g = jnp.transpose(params["w2"], (1, 0, 2, 3)).reshape(3, 3 * Cout, Cout)
    w1_g = w1_g.astype(jnp.bfloat16)
    w2_g = w2_g.astype(jnp.bfloat16)

    out_nhwc = pl.pallas_call(
        _up_double_conv_kernel,
        out_shape=jax.ShapeDtypeStruct((N, H, W, Cout), jnp.float32),
        grid_spec=pltpu.PrefetchScalarGridSpec(
            num_scalar_prefetch=0,
            grid=(N,),  # one full image per grid step (needed for IN stats)
            in_specs=[
                pl.BlockSpec((None, H, W, C2), lambda n: (n, 0, 0, 0)),
                pl.BlockSpec((None, H, W, C1), lambda n: (n, 0, 0, 0)),
                pl.BlockSpec((3, 3 * Cin, Cout), lambda n: (0, 0, 0)),
                pl.BlockSpec((3, 3 * Cout, Cout), lambda n: (0, 0, 0)),
            ],
            out_specs=pl.BlockSpec((None, H, W, Cout), lambda n: (n, 0, 0, 0)),
            scratch_shapes=[
                pltpu.VMEM((H + 2, W + 2, Cin), jnp.float32),   # xpad1 (concat+halo)
                pltpu.VMEM((H + 2, W, Cin), jnp.float32),       # kw-shifted view, conv1
                pltpu.VMEM((H * W, 3 * Cin), jnp.bfloat16),     # im2col group, conv1
                pltpu.VMEM((H + 2, W + 2, Cout), jnp.float32),  # padded conv1 output
                pltpu.VMEM((H + 2, W, Cout), jnp.float32),      # kw-shifted view, conv2
                pltpu.VMEM((H * W, 3 * Cout), jnp.bfloat16),    # im2col group, conv2
                pltpu.VMEM((H * W, Cout), jnp.float32),         # f32 accumulator
            ],
        ),
        compiler_params=pltpu.CompilerParams(
            dimension_semantics=("parallel",),
            vmem_limit_bytes=64 * 1024 * 1024,
        ),
    )(x2.astype(jnp.bfloat16), x1u.astype(jnp.bfloat16), w1_g, w2_g)

    return jnp.transpose(out_nhwc, (0, 3, 1, 2))        # NHWC -> NCHW


# ----------------------------------------------------------------------------
# Pure-JAX f32 reference (for correctness check only; keeps the conv bias to
# demonstrate it is cancelled by InstanceNorm).
# ----------------------------------------------------------------------------
def _conv_in_relu_ref(x, w, b):
    y = jax.lax.conv_general_dilated(
        x, w, window_strides=(1, 1), padding="SAME",
        dimension_numbers=("NHWC", "HWIO", "NHWC"))
    y = y + b.reshape(1, 1, 1, -1)
    mean = jnp.mean(y, axis=(1, 2), keepdims=True)
    var = jnp.mean((y - mean) ** 2, axis=(1, 2), keepdims=True)
    return jnp.maximum((y - mean) * jax.lax.rsqrt(var + _EPS), 0.0)


def up_forward_ref(params, x1_nchw, x2_nchw):
    x1u, x2 = _upsample_and_pad(x1_nchw, x2_nchw)
    x = jnp.concatenate([x2, x1u], axis=-1)             # torch.cat([x2, x1], dim=1)
    y = _conv_in_relu_ref(x, params["w1"], params["b1"])
    y = _conv_in_relu_ref(y, params["w2"], params["b2"])
    return jnp.transpose(y, (0, 3, 1, 2))


# ----------------------------------------------------------------------------
if __name__ == "__main__":
    key = jax.random.PRNGKey(0)
    kx1, kx2, kp = jax.random.split(key, 3)

    # Small UNet-decoder-like shapes (NCHW, matching PyTorch):
    N, C1, C2 = 2, 8, 8
    H1 = W1 = 8
    x1 = jax.random.normal(kx1, (N, C1, H1, W1), jnp.float32)          # low-res
    x2 = jax.random.normal(kx2, (N, C2, 2 * H1, 2 * W1), jnp.float32)  # skip

    in_channels = C1 + C2          # channels after concat
    out_channels = 8
    params = init_up_params(kp, in_channels, out_channels)

    out = up_forward(params, x1, x2)
    out = jax.block_until_ready(out)
    assert out.shape == (N, out_channels, 2 * H1, 2 * W1), out.shape

    ref = up_forward_ref(params, x1, x2)
    max_err = float(jnp.max(jnp.abs(out - ref)))
    # bf16 MXU operands vs f32 reference -> ~1e-2 level agreement expected.
    assert max_err < 1e-1, f"mismatch vs reference: {max_err}"

    print("KERNEL_OK")
</pallas_src>

<mosaic_0001>
module attributes {stable_mosaic.version = 11 : i64} {
  func.func @_up_double_conv_kernel(%arg0: i32, %arg1: memref<1x16x16x8xbf16, #tpu.memory_space<vmem>>, %arg2: memref<1x16x16x8xbf16, #tpu.memory_space<vmem>>, %arg3: memref<3x48x8xbf16, #tpu.memory_space<vmem>>, %arg4: memref<3x24x8xbf16, #tpu.memory_space<vmem>>, %arg5: memref<1x16x16x8xf32, #tpu.memory_space<vmem>>, %arg6: memref<18x18x16xf32, #tpu.memory_space<vmem>>, %arg7: memref<18x16x16xf32, #tpu.memory_space<vmem>>, %arg8: memref<256x48xbf16, #tpu.memory_space<vmem>>, %arg9: memref<18x18x8xf32, #tpu.memory_space<vmem>>, %arg10: memref<18x16x8xf32, #tpu.memory_space<vmem>>, %arg11: memref<256x24xbf16, #tpu.memory_space<vmem>>, %arg12: memref<256x8xf32, #tpu.memory_space<vmem>>) attributes {dimension_semantics = [#tpu.dimension_semantics<parallel>], iteration_bounds = array<i64: 2>, scalar_prefetch = 0 : i64, scratch_operands = 7 : i64, tpu.core_type = #tpu.core_type<tc>, window_params = [{transform_indices = @transform_0, window_bounds = array<i64: 1, 16, 16, 8>}, {transform_indices = @transform_1, window_bounds = array<i64: 1, 16, 16, 8>}, {pipeline_mode = #tpu.pipeline_mode<synchronous>, transform_indices = @transform_2, window_bounds = array<i64: 3, 48, 8>}, {pipeline_mode = #tpu.pipeline_mode<synchronous>, transform_indices = @transform_3, window_bounds = array<i64: 3, 24, 8>}, {transform_indices = @transform_4, window_bounds = array<i64: 1, 16, 16, 8>}]} {
    %cst = arith.constant 0.000000e+00 : f32
    %0 = vector.broadcast %cst : f32 to vector<18x18x16xf32>
    %c0 = arith.constant 0 : index
    %c0_0 = arith.constant 0 : index
    %c0_1 = arith.constant 0 : index
    %1 = vector.load %arg6[%c0, %c0_0, %c0_1] : memref<18x18x16xf32, #tpu.memory_space<vmem>>, vector<18x18x16xf32>
    tpu.vector_store %arg6[%c0, %c0_0, %c0_1], %0 {strides = array<i32>} : memref<18x18x16xf32, #tpu.memory_space<vmem>>, vector<18x18x16xf32>,
    %c0_2 = arith.constant 0 : index
    %c0_3 = arith.constant 0 : index
    %c0_4 = arith.constant 0 : index
    %c0_5 = arith.constant 0 : index
    %2 = vector.load %arg1[%c0_2, %c0_3, %c0_4, %c0_5] : memref<1x16x16x8xbf16, #tpu.memory_space<vmem>>, vector<1x16x16x8xbf16>
    %3 = vector.shape_cast %2 : vector<1x16x16x8xbf16> to vector<16x16x8xbf16>
    %4 = arith.extf %3 : vector<16x16x8xbf16> to vector<16x16x8xf32>
    %c1 = arith.constant 1 : index
    %c1_6 = arith.constant 1 : index
    %c0_7 = arith.constant 0 : index
    %5 = vector.load %arg6[%c1, %c1_6, %c0_7] : memref<18x18x16xf32, #tpu.memory_space<vmem>>, vector<16x16x8xf32>
    tpu.vector_store %arg6[%c1, %c1_6, %c0_7], %4 {strides = array<i32>} : memref<18x18x16xf32, #tpu.memory_space<vmem>>, vector<16x16x8xf32>,
    %c0_8 = arith.constant 0 : index
    %c0_9 = arith.constant 0 : index
    %c0_10 = arith.constant 0 : index
    %c0_11 = arith.constant 0 : index
    %6 = vector.load %arg2[%c0_8, %c0_9, %c0_10, %c0_11] : memref<1x16x16x8xbf16, #tpu.memory_space<vmem>>, vector<1x16x16x8xbf16>
    %7 = vector.shape_cast %6 : vector<1x16x16x8xbf16> to vector<16x16x8xbf16>
    %8 = arith.extf %7 : vector<16x16x8xbf16> to vector<16x16x8xf32>
    %c1_12 = arith.constant 1 : index
    %c1_13 = arith.constant 1 : index
    %c8 = arith.constant 8 : index
    %9 = vector.load %arg6[%c1_12, %c1_13, %c8] : memref<18x18x16xf32, #tpu.memory_space<vmem>>, vector<16x16x8xf32>
    tpu.vector_store %arg6[%c1_12, %c1_13, %c8], %8 {strides = array<i32>} : memref<18x18x16xf32, #tpu.memory_space<vmem>>, vector<16x16x8xf32>,
    %cst_14 = arith.constant 0.000000e+00 : f32
    %10 = vector.broadcast %cst_14 : f32 to vector<256x8xf32>
    %c0_15 = arith.constant 0 : index
    %c0_16 = arith.constant 0 : index
    %11 = vector.load %arg12[%c0_15, %c0_16] : memref<256x8xf32, #tpu.memory_space<vmem>>, vector<256x8xf32>
    tpu.vector_store %arg12[%c0_15, %c0_16], %10 {strides = array<i32>} : memref<256x8xf32, #tpu.memory_space<vmem>>, vector<256x8xf32>,
    %c0_17 = arith.constant 0 : index
    %c0_18 = arith.constant 0 : index
    %c0_19 = arith.constant 0 : index
    %12 = vector.load %arg6[%c0_17, %c0_18, %c0_19] : memref<18x18x16xf32, #tpu.memory_space<vmem>>, vector<18x16x16xf32>
    %c0_20 = arith.constant 0 : index
    %c0_21 = arith.constant 0 : index
    %c0_22 = arith.constant 0 : index
    %13 = vector.load %arg7[%c0_20, %c0_21, %c0_22] : memref<18x16x16xf32, #tpu.memory_space<vmem>>, vector<18x16x16xf32>
    tpu.vector_store %arg7[%c0_20, %c0_21, %c0_22], %12 {strides = array<i32>} : memref<18x16x16xf32, #tpu.memory_space<vmem>>, vector<18x16x16xf32>,
    %c0_23 = arith.constant 0 : index
    %c0_24 = arith.constant 0 : index
    %c0_25 = arith.constant 0 : index
    %14 = vector.load %arg7[%c0_23, %c0_24, %c0_25] : memref<18x16x16xf32, #tpu.memory_space<vmem>>, vector<16x16x16xf32>
    %15 = vector.shape_cast %14 : vector<16x16x16xf32> to vector<256x16xf32>
    %16 = arith.truncf %15 : vector<256x16xf32> to vector<256x16xbf16>
    %c0_26 = arith.constant 0 : index
    %c0_27 = arith.constant 0 : index
    %17 = vector.load %arg8[%c0_26, %c0_27] : memref<256x48xbf16, #tpu.memory_space<vmem>>, vector<256x16xbf16>
    tpu.vector_store %arg8[%c0_26, %c0_27], %16 {strides = array<i32>} : memref<256x48xbf16, #tpu.memory_space<vmem>>, vector<256x16xbf16>,
    %c1_28 = arith.constant 1 : index
    %c0_29 = arith.constant 0 : index
    %c0_30 = arith.constant 0 : index
    %18 = vector.load %arg7[%c1_28, %c0_29, %c0_30] : memref<18x16x16xf32, #tpu.memory_space<vmem>>, vector<16x16x16xf32>
    %19 = vector.shape_cast %18 : vector<16x16x16xf32> to vector<256x16xf32>
    %20 = arith.truncf %19 : vector<256x16xf32> to vector<256x16xbf16>
    %c0_31 = arith.constant 0 : index
    %c16 = arith.constant 16 : index
    %21 = vector.load %arg8[%c0_31, %c16] : memref<256x48xbf16, #tpu.memory_space<vmem>>, vector<256x16xbf16>
    tpu.vector_store %arg8[%c0_31, %c16], %20 {strides = array<i32>} : memref<256x48xbf16, #tpu.memory_space<vmem>>, vector<256x16xbf16>,
    %c2 = arith.constant 2 : index
    %c0_32 = arith.constant 0 : index
    %c0_33 = arith.constant 0 : index
    %22 = vector.load %arg7[%c2, %c0_32, %c0_33] : memref<18x16x16xf32, #tpu.memory_space<vmem>>, vector<16x16x16xf32>
    %23 = vector.shape_cast %22 : vector<16x16x16xf32> to vector<256x16xf32>
    %24 = arith.truncf %23 : vector<256x16xf32> to vector<256x16xbf16>
    %c0_34 = arith.constant 0 : index
    %c32 = arith.constant 32 : index
    %25 = vector.load %arg8[%c0_34, %c32] : memref<256x48xbf16, #tpu.memory_space<vmem>>, vector<256x16xbf16>
    tpu.vector_store %arg8[%c0_34, %c32], %24 {strides = array<i32>} : memref<256x48xbf16, #tpu.memory_space<vmem>>, vector<256x16xbf16>,
    %c0_35 = arith.constant 0 : index
    %c0_36 = arith.constant 0 : index
    %26 = vector.load %arg12[%c0_35, %c0_36] : memref<256x8xf32, #tpu.memory_space<vmem>>, vector<256x8xf32>
    %c0_37 = arith.constant 0 : index
    %c0_38 = arith.constant 0 : index
    %27 = vector.load %arg8[%c0_37, %c0_38] : memref<256x48xbf16, #tpu.memory_space<vmem>>, vector<256x48xbf16>
    %c0_39 = arith.constant 0 : index
    %c0_40 = arith.constant 0 : index
    %c0_41 = arith.constant 0 : index
    %28 = vector.load %arg3[%c0_39, %c0_40, %c0_41] : memref<3x48x8xbf16, #tpu.memory_space<vmem>>, vector<1x48x8xbf16>
    %29 = vector.shape_cast %28 : vector<1x48x8xbf16> to vector<48x8xbf16>
    %cst_42 = arith.constant dense<0.000000e+00> : vector<256x8xf32>
    %30 = tpu.matmul %27, %29, %cst_42 {dimension_numbers = #tpu.dot_dimension_numbers<[1], [0], [0], [1], [0, 0, 1, 1], [], []>} : vector<256x48xbf16>, vector<48x8xbf16>, vector<256x8xf32> -> vector<256x8xf32>
    %31 = arith.addf %26, %30 : vector<256x8xf32>
    %c0_43 = arith.constant 0 : index
    %c0_44 = arith.constant 0 : index
    %32 = vector.load %arg12[%c0_43, %c0_44] : memref<256x8xf32, #tpu.memory_space<vmem>>, vector<256x8xf32>
    tpu.vector_store %arg12[%c0_43, %c0_44], %31 {strides = array<i32>} : memref<256x8xf32, #tpu.memory_space<vmem>>, vector<256x8xf32>,
    %c0_45 = arith.constant 0 : index
    %c1_46 = arith.constant 1 : index
    %c0_47 = arith.constant 0 : index
    %33 = vector.load %arg6[%c0_45, %c1_46, %c0_47] : memref<18x18x16xf32, #tpu.memory_space<vmem>>, vector<18x16x16xf32>
    %c0_48 = arith.constant 0 : index
    %c0_49 = arith.constant 0 : index
    %c0_50 = arith.constant 0 : index
    %34 = vector.load %arg7[%c0_48, %c0_49, %c0_50] : memref<18x16x16xf32, #tpu.memory_space<vmem>>, vector<18x16x16xf32>
    tpu.vector_store %arg7[%c0_48, %c0_49, %c0_50], %33 {strides = array<i32>} : memref<18x16x16xf32, #tpu.memory_space<vmem>>, vector<18x16x16xf32>,
    %c0_51 = arith.constant 0 : index
    %c0_52 = arith.constant 0 : index
    %c0_53 = arith.constant 0 : index
    %35 = vector.load %arg7[%c0_51, %c0_52, %c0_53] : memref<18x16x16xf32, #tpu.memory_space<vmem>>, vector<16x16x16xf32>
    %36 = vector.shape_cast %35 : vector<16x16x16xf32> to vector<256x16xf32>
    %37 = arith.truncf %36 : vector<256x16xf32> to vector<256x16xbf16>
    %c0_54 = arith.constant 0 : index
    %c0_55 = arith.constant 0 : index
    %38 = vector.load %arg8[%c0_54, %c0_55] : memref<256x48xbf16, #tpu.memory_space<vmem>>, vector<256x16xbf16>
    tpu.vector_store %arg8[%c0_54, %c0_55], %37 {strides = array<i32>} : memref<256x48xbf16, #tpu.memory_space<vmem>>, vector<256x16xbf16>,
    %c1_56 = arith.constant 1 : index
    %c0_57 = arith.constant 0 : index
    %c0_58 = arith.constant 0 : index
    %39 = vector.load %arg7[%c1_56, %c0_57, %c0_58] : memref<18x16x16xf32, #tpu.memory_space<vmem>>, vector<16x16x16xf32>
    %40 = vector.shape_cast %39 : vector<16x16x16xf32> to vector<256x16xf32>
    %41 = arith.truncf %40 : vector<256x16xf32> to vector<256x16xbf16>
    %c0_59 = arith.constant 0 : index
    %c16_60 = arith.constant 16 : index
    %42 = vector.load %arg8[%c0_59, %c16_60] : memref<256x48xbf16, #tpu.memory_space<vmem>>, vector<256x16xbf16>
    tpu.vector_store %arg8[%c0_59, %c16_60], %41 {strides = array<i32>} : memref<256x48xbf16, #tpu.memory_space<vmem>>, vector<256x16xbf16>,
    %c2_61 = arith.constant 2 : index
    %c0_62 = arith.constant 0 : index
    %c0_63 = arith.constant 0 : index
    %43 = vector.load %arg7[%c2_61, %c0_62, %c0_63] : memref<18x16x16xf32, #tpu.memory_space<vmem>>, vector<16x16x16xf32>
    %44 = vector.shape_cast %43 : vector<16x16x16xf32> to vector<256x16xf32>
    %45 = arith.truncf %44 : vector<256x16xf32> to vector<256x16xbf16>
    %c0_64 = arith.constant 0 : index
    %c32_65 = arith.constant 32 : index
    %46 = vector.load %arg8[%c0_64, %c32_65] : memref<256x48xbf16, #tpu.memory_space<vmem>>, vector<256x16xbf16>
    tpu.vector_store %arg8[%c0_64, %c32_65], %45 {strides = array<i32>} : memref<256x48xbf16, #tpu.memory_space<vmem>>, vector<256x16xbf16>,
    %c0_66 = arith.constant 0 : index
    %c0_67 = arith.constant 0 : index
    %47 = vector.load %arg12[%c0_66, %c0_67] : memref<256x8xf32, #tpu.memory_space<vmem>>, vector<256x8xf32>
    %c0_68 = arith.constant 0 : index
    %c0_69 = arith.constant 0 : index
    %48 = vector.load %arg8[%c0_68, %c0_69] : memref<256x48xbf16, #tpu.memory_space<vmem>>, vector<256x48xbf16>
    %c1_70 = arith.constant 1 : index
    %c0_71 = arith.constant 0 : index
    %c0_72 = arith.constant 0 : index
    %49 = vector.load %arg3[%c1_70, %c0_71, %c0_72] : memref<3x48x8xbf16, #tpu.memory_space<vmem>>, vector<1x48x8xbf16>
    %50 = vector.shape_cast %49 : vector<1x48x8xbf16> to vector<48x8xbf16>
    %cst_73 = arith.constant dense<0.000000e+00> : vector<256x8xf32>
    %51 = tpu.matmul %48, %50, %cst_73 {dimension_numbers = #tpu.dot_dimension_numbers<[1], [0], [0], [1], [0, 0, 1, 1], [], []>} : vector<256x48xbf16>, vector<48x8xbf16>, vector<256x8xf32> -> vector<256x8xf32>
    %52 = arith.addf %47, %51 : vector<256x8xf32>
    %c0_74 = arith.constant 0 : index
    %c0_75 = arith.constant 0 : index
    %53 = vector.load %arg12[%c0_74, %c0_75] : memref<256x8xf32, #tpu.memory_space<vmem>>, vector<256x8xf32>
    tpu.vector_store %arg12[%c0_74, %c0_75], %52 {strides = array<i32>} : memref<256x8xf32, #tpu.memory_space<vmem>>, vector<256x8xf32>,
    %c0_76 = arith.constant 0 : index
    %c2_77 = arith.constant 2 : index
    %c0_78 = arith.constant 0 : index
    %54 = vector.load %arg6[%c0_76, %c2_77, %c0_78] : memref<18x18x16xf32, #tpu.memory_space<vmem>>, vector<18x16x16xf32>
    %c0_79 = arith.constant 0 : index
    %c0_80 = arith.constant 0 : index
    %c0_81 = arith.constant 0 : index
    %55 = vector.load %arg7[%c0_79, %c0_80, %c0_81] : memref<18x16x16xf32, #tpu.memory_space<vmem>>, vector<18x16x16xf32>
    tpu.vector_store %arg7[%c0_79, %c0_80, %c0_81], %54 {strides = array<i32>} : memref<18x16x16xf32, #tpu.memory_space<vmem>>, vector<18x16x16xf32>,
    %c0_82 = arith.constant 0 : index
    %c0_83 = arith.constant 0 : index
    %c0_84 = arith.constant 0 : index
    %56 = vector.load %arg7[%c0_82, %c0_83, %c0_84] : memref<18x16x16xf32, #tpu.memory_space<vmem>>, vector<16x16x16xf32>
    %57 = vector.shape_cast %56 : vector<16x16x16xf32> to vector<256x16xf32>
    %58 = arith.truncf %57 : vector<256x16xf32> to vector<256x16xbf16>
    %c0_85 = arith.constant 0 : index
    %c0_86 = arith.constant 0 : index
    %59 = vector.load %arg8[%c0_85, %c0_86] : memref<256x48xbf16, #tpu.memory_space<vmem>>, vector<256x16xbf16>
    tpu.vector_store %arg8[%c0_85, %c0_86], %58 {strides = array<i32>} : memref<256x48xbf16, #tpu.memory_space<vmem>>, vector<256x16xbf16>,
    %c1_87 = arith.constant 1 : index
    %c0_88 = arith.constant 0 : index
    %c0_89 = arith.constant 0 : index
    %60 = vector.load %arg7[%c1_87, %c0_88, %c0_89] : memref<18x16x16xf32, #tpu.memory_space<vmem>>, vector<16x16x16xf32>
    %61 = vector.shape_cast %60 : vector<16x16x16xf32> to vector<256x16xf32>
    %62 = arith.truncf %61 : vector<256x16xf32> to vector<256x16xbf16>
    %c0_90 = arith.constant 0 : index
    %c16_91 = arith.constant 16 : index
    %63 = vector.load %arg8[%c0_90, %c16_91] : memref<256x48xbf16, #tpu.memory_space<vmem>>, vector<256x16xbf16>
    tpu.vector_store %arg8[%c0_90, %c16_91], %62 {strides = array<i32>} : memref<256x48xbf16, #tpu.memory_space<vmem>>, vector<256x16xbf16>,
    %c2_92 = arith.constant 2 : index
    %c0_93 = arith.constant 0 : index
    %c0_94 = arith.constant 0 : index
    %64 = vector.load %arg7[%c2_92, %c0_93, %c0_94] : memref<18x16x16xf32, #tpu.memory_space<vmem>>, vector<16x16x16xf32>
    %65 = vector.shape_cast %64 : vector<16x16x16xf32> to vector<256x16xf32>
    %66 = arith.truncf %65 : vector<256x16xf32> to vector<256x16xbf16>
    %c0_95 = arith.constant 0 : index
    %c32_96 = arith.constant 32 : index
    %67 = vector.load %arg8[%c0_95, %c32_96] : memref<256x48xbf16, #tpu.memory_space<vmem>>, vector<256x16xbf16>
    tpu.vector_store %arg8[%c0_95, %c32_96], %66 {strides = array<i32>} : memref<256x48xbf16, #tpu.memory_space<vmem>>, vector<256x16xbf16>,
    %c0_97 = arith.constant 0 : index
    %c0_98 = arith.constant 0 : index
    %68 = vector.load %arg12[%c0_97, %c0_98] : memref<256x8xf32, #tpu.memory_space<vmem>>, vector<256x8xf32>
    %c0_99 = arith.constant 0 : index
    %c0_100 = arith.constant 0 : index
    %69 = vector.load %arg8[%c0_99, %c0_100] : memref<256x48xbf16, #tpu.memory_space<vmem>>, vector<256x48xbf16>
    %c2_101 = arith.constant 2 : index
    %c0_102 = arith.constant 0 : index
    %c0_103 = arith.constant 0 : index
    %70 = vector.load %arg3[%c2_101, %c0_102, %c0_103] : memref<3x48x8xbf16, #tpu.memory_space<vmem>>, vector<1x48x8xbf16>
    %71 = vector.shape_cast %70 : vector<1x48x8xbf16> to vector<48x8xbf16>
    %cst_104 = arith.constant dense<0.000000e+00> : vector<256x8xf32>
    %72 = tpu.matmul %69, %71, %cst_104 {dimension_numbers = #tpu.dot_dimension_numbers<[1], [0], [0], [1], [0, 0, 1, 1], [], []>} : vector<256x48xbf16>, vector<48x8xbf16>, vector<256x8xf32> -> vector<256x8xf32>
    %73 = arith.addf %68, %72 : vector<256x8xf32>
    %c0_105 = arith.constant 0 : index
    %c0_106 = arith.constant 0 : index
    %74 = vector.load %arg12[%c0_105, %c0_106] : memref<256x8xf32, #tpu.memory_space<vmem>>, vector<256x8xf32>
    tpu.vector_store %arg12[%c0_105, %c0_106], %73 {strides = array<i32>} : memref<256x8xf32, #tpu.memory_space<vmem>>, vector<256x8xf32>,
    %c0_107 = arith.constant 0 : index
    %c0_108 = arith.constant 0 : index
    %75 = vector.load %arg12[%c0_107, %c0_108] : memref<256x8xf32, #tpu.memory_space<vmem>>, vector<256x8xf32>
    %cst_109 = arith.constant dense<0.000000e+00> : vector<8xf32>
    %76 = vector.multi_reduction <add>, %75, %cst_109 [0] : vector<256x8xf32> to vector<8xf32>
    %77 = vector.shape_cast %76 : vector<8xf32> to vector<1x8xf32>
    %cst_110 = arith.constant 2.560000e+02 : f32
    %78 = vector.broadcast %cst_110 : f32 to vector<1x8xf32>
    %79 = arith.divf %77, %78 : vector<1x8xf32>
    %80 = vector.broadcast %79 : vector<1x8xf32> to vector<256x8xf32>
    %81 = arith.subf %75, %80 : vector<256x8xf32>
    %82 = arith.mulf %81, %81 : vector<256x8xf32>
    %cst_111 = arith.constant dense<0.000000e+00> : vector<8xf32>
    %83 = vector.multi_reduction <add>, %82, %cst_111 [0] : vector<256x8xf32> to vector<8xf32>
    %84 = vector.shape_cast %83 : vector<8xf32> to vector<1x8xf32>
    %cst_112 = arith.constant 2.560000e+02 : f32
    %85 = vector.broadcast %cst_112 : f32 to vector<1x8xf32>
    %86 = arith.divf %84, %85 : vector<1x8xf32>
    %87 = vector.broadcast %79 : vector<1x8xf32> to vector<256x8xf32>
    %88 = arith.subf %75, %87 : vector<256x8xf32>
    %cst_113 = arith.constant 9.99999974E-6 : f32
    %89 = vector.broadcast %cst_113 : f32 to vector<1x8xf32>
    %90 = arith.addf %86, %89 : vector<1x8xf32>
    %91 = math.rsqrt %90 : vector<1x8xf32>
    %92 = vector.broadcast %91 : vector<1x8xf32> to vector<256x8xf32>
    %93 = arith.mulf %88, %92 : vector<256x8xf32>
    %cst_114 = arith.constant 0.000000e+00 : f32
    %94 = vector.broadcast %cst_114 : f32 to vector<256x8xf32>
    %95 = arith.maximumf %93, %94 : vector<256x8xf32>
    %cst_115 = arith.constant 0.000000e+00 : f32
    %96 = vector.broadcast %cst_115 : f32 to vector<18x18x8xf32>
    %c0_116 = arith.constant 0 : index
    %c0_117 = arith.constant 0 : index
    %c0_118 = arith.constant 0 : index
    %97 = vector.load %arg9[%c0_116, %c0_117, %c0_118] : memref<18x18x8xf32, #tpu.memory_space<vmem>>, vector<18x18x8xf32>
    tpu.vector_store %arg9[%c0_116, %c0_117, %c0_118], %96 {strides = array<i32>} : memref<18x18x8xf32, #tpu.memory_space<vmem>>, vector<18x18x8xf32>,
    %98 = vector.shape_cast %95 : vector<256x8xf32> to vector<16x16x8xf32>
    %c1_119 = arith.constant 1 : index
    %c1_120 = arith.constant 1 : index
    %c0_121 = arith.constant 0 : index
    %99 = vector.load %arg9[%c1_119, %c1_120, %c0_121] : memref<18x18x8xf32, #tpu.memory_space<vmem>>, vector<16x16x8xf32>
    tpu.vector_store %arg9[%c1_119, %c1_120, %c0_121], %98 {strides = array<i32>} : memref<18x18x8xf32, #tpu.memory_space<vmem>>, vector<16x16x8xf32>,
    %cst_122 = arith.constant 0.000000e+00 : f32
    %100 = vector.broadcast %cst_122 : f32 to vector<256x8xf32>
    %c0_123 = arith.constant 0 : index
    %c0_124 = arith.constant 0 : index
    %101 = vector.load %arg12[%c0_123, %c0_124] : memref<256x8xf32, #tpu.memory_space<vmem>>, vector<256x8xf32>
    tpu.vector_store %arg12[%c0_123, %c0_124], %100 {strides = array<i32>} : memref<256x8xf32, #tpu.memory_space<vmem>>, vector<256x8xf32>,
    %c0_125 = arith.constant 0 : index
    %c0_126 = arith.constant 0 : index
    %c0_127 = arith.constant 0 : index
    %102 = vector.load %arg9[%c0_125, %c0_126, %c0_127] : memref<18x18x8xf32, #tpu.memory_space<vmem>>, vector<18x16x8xf32>
    %c0_128 = arith.constant 0 : index
    %c0_129 = arith.constant 0 : index
    %c0_130 = arith.constant 0 : index
    %103 = vector.load %arg10[%c0_128, %c0_129, %c0_130] : memref<18x16x8xf32, #tpu.memory_space<vmem>>, vector<18x16x8xf32>
    tpu.vector_store %arg10[%c0_128, %c0_129, %c0_130], %102 {strides = array<i32>} : memref<18x16x8xf32, #tpu.memory_space<vmem>>, vector<18x16x8xf32>,
    %c0_131 = arith.constant 0 : index
    %c0_132 = arith.constant 0 : index
    %c0_133 = arith.constant 0 : index
    %104 = vector.load %arg10[%c0_131, %c0_132, %c0_133] : memref<18x16x8xf32, #tpu.memory_space<vmem>>, vector<16x16x8xf32>
    %105 = vector.shape_cast %104 : vector<16x16x8xf32> to vector<256x8xf32>
    %106 = arith.truncf %105 : vector<256x8xf32> to vector<256x8xbf16>
    %c0_134 = arith.constant 0 : index
    %c0_135 = arith.constant 0 : index
    %107 = vector.load %arg11[%c0_134, %c0_135] : memref<256x24xbf16, #tpu.memory_space<vmem>>, vector<256x8xbf16>
    tpu.vector_store %arg11[%c0_134, %c0_135], %106 {strides = array<i32>} : memref<256x24xbf16, #tpu.memory_space<vmem>>, vector<256x8xbf16>,
    %c1_136 = arith.constant 1 : index
    %c0_137 = arith.constant 0 : index
    %c0_138 = arith.constant 0 : index
    %108 = vector.load %arg10[%c1_136, %c0_137, %c0_138] : memref<18x16x8xf32, #tpu.memory_space<vmem>>, vector<16x16x8xf32>
    %109 = vector.shape_cast %108 : vector<16x16x8xf32> to vector<256x8xf32>
    %110 = arith.truncf %109 : vector<256x8xf32> to vector<256x8xbf16>
    %c0_139 = arith.constant 0 : index
    %c8_140 = arith.constant 8 : index
    %111 = vector.load %arg11[%c0_139, %c8_140] : memref<256x24xbf16, #tpu.memory_space<vmem>>, vector<256x8xbf16>
    tpu.vector_store %arg11[%c0_139, %c8_140], %110 {strides = array<i32>} : memref<256x24xbf16, #tpu.memory_space<vmem>>, vector<256x8xbf16>,
    %c2_141 = arith.constant 2 : index
    %c0_142 = arith.constant 0 : index
    %c0_143 = arith.constant 0 : index
    %112 = vector.load %arg10[%c2_141, %c0_142, %c0_143] : memref<18x16x8xf32, #tpu.memory_space<vmem>>, vector<16x16x8xf32>
    %113 = vector.shape_cast %112 : vector<16x16x8xf32> to vector<256x8xf32>
    %114 = arith.truncf %113 : vector<256x8xf32> to vector<256x8xbf16>
    %c0_144 = arith.constant 0 : index
    %c16_145 = arith.constant 16 : index
    %115 = vector.load %arg11[%c0_144, %c16_145] : memref<256x24xbf16, #tpu.memory_space<vmem>>, vector<256x8xbf16>
    tpu.vector_store %arg11[%c0_144, %c16_145], %114 {strides = array<i32>} : memref<256x24xbf16, #tpu.memory_space<vmem>>, vector<256x8xbf16>,
    %c0_146 = arith.constant 0 : index
    %c0_147 = arith.constant 0 : index
    %116 = vector.load %arg12[%c0_146, %c0_147] : memref<256x8xf32, #tpu.memory_space<vmem>>, vector<256x8xf32>
    %c0_148 = arith.constant 0 : index
    %c0_149 = arith.constant 0 : index
    %117 = vector.load %arg11[%c0_148, %c0_149] : memref<256x24xbf16, #tpu.memory_space<vmem>>, vector<256x24xbf16>
    %c0_150 = arith.constant 0 : index
    %c0_151 = arith.constant 0 : index
    %c0_152 = arith.constant 0 : index
    %118 = vector.load %arg4[%c0_150, %c0_151, %c0_152] : memref<3x24x8xbf16, #tpu.memory_space<vmem>>, vector<1x24x8xbf16>
    %119 = vector.shape_cast %118 : vector<1x24x8xbf16> to vector<24x8xbf16>
    %cst_153 = arith.constant dense<0.000000e+00> : vector<256x8xf32>
    %120 = tpu.matmul %117, %119, %cst_153 {dimension_numbers = #tpu.dot_dimension_numbers<[1], [0], [0], [1], [0, 0, 1, 1], [], []>} : vector<256x24xbf16>, vector<24x8xbf16>, vector<256x8xf32> -> vector<256x8xf32>
    %121 = arith.addf %116, %120 : vector<256x8xf32>
    %c0_154 = arith.constant 0 : index
    %c0_155 = arith.constant 0 : index
    %122 = vector.load %arg12[%c0_154, %c0_155] : memref<256x8xf32, #tpu.memory_space<vmem>>, vector<256x8xf32>
    tpu.vector_store %arg12[%c0_154, %c0_155], %121 {strides = array<i32>} : memref<256x8xf32, #tpu.memory_space<vmem>>, vector<256x8xf32>,
    %c0_156 = arith.constant 0 : index
    %c1_157 = arith.constant 1 : index
    %c0_158 = arith.constant 0 : index
    %123 = vector.load %arg9[%c0_156, %c1_157, %c0_158] : memref<18x18x8xf32, #tpu.memory_space<vmem>>, vector<18x16x8xf32>
    %c0_159 = arith.constant 0 : index
    %c0_160 = arith.constant 0 : index
    %c0_161 = arith.constant 0 : index
    %124 = vector.load %arg10[%c0_159, %c0_160, %c0_161] : memref<18x16x8xf32, #tpu.memory_space<vmem>>, vector<18x16x8xf32>
    tpu.vector_store %arg10[%c0_159, %c0_160, %c0_161], %123 {strides = array<i32>} : memref<18x16x8xf32, #tpu.memory_space<vmem>>, vector<18x16x8xf32>,
    %c0_162 = arith.constant 0 : index
    %c0_163 = arith.constant 0 : index
    %c0_164 = arith.constant 0 : index
    %125 = vector.load %arg10[%c0_162, %c0_163, %c0_164] : memref<18x16x8xf32, #tpu.memory_space<vmem>>, vector<16x16x8xf32>
    %126 = vector.shape_cast %125 : vector<16x16x8xf32> to vector<256x8xf32>
    %127 = arith.truncf %126 : vector<256x8xf32> to vector<256x8xbf16>
    %c0_165 = arith.constant 0 : index
    %c0_166 = arith.constant 0 : index
    %128 = vector.load %arg11[%c0_165, %c0_166] : memref<256x24xbf16, #tpu.memory_space<vmem>>, vector<256x8xbf16>
    tpu.vector_store %arg11[%c0_165, %c0_166], %127 {strides = array<i32>} : memref<256x24xbf16, #tpu.memory_space<vmem>>, vector<256x8xbf16>,
    %c1_167 = arith.constant 1 : index
    %c0_168 = arith.constant 0 : index
    %c0_169 = arith.constant 0 : index
    %129 = vector.load %arg10[%c1_167, %c0_168, %c0_169] : memref<18x16x8xf32, #tpu.memory_space<vmem>>, vector<16x16x8xf32>
    %130 = vector.shape_cast %129 : vector<16x16x8xf32> to vector<256x8xf32>
    %131 = arith.truncf %130 : vector<256x8xf32> to vector<256x8xbf16>
    %c0_170 = arith.constant 0 : index
    %c8_171 = arith.constant 8 : index
    %132 = vector.load %arg11[%c0_170, %c8_171] : memref<256x24xbf16, #tpu.memory_space<vmem>>, vector<256x8xbf16>
    tpu.vector_store %arg11[%c0_170, %c8_171], %131 {strides = array<i32>} : memref<256x24xbf16, #tpu.memory_space<vmem>>, vector<256x8xbf16>,
    %c2_172 = arith.constant 2 : index
    %c0_173 = arith.constant 0 : index
    %c0_174 = arith.constant 0 : index
    %133 = vector.load %arg10[%c2_172, %c0_173, %c0_174] : memref<18x16x8xf32, #tpu.memory_space<vmem>>, vector<16x16x8xf32>
    %134 = vector.shape_cast %133 : vector<16x16x8xf32> to vector<256x8xf32>
    %135 = arith.truncf %134 : vector<256x8xf32> to vector<256x8xbf16>
    %c0_175 = arith.constant 0 : index
    %c16_176 = arith.constant 16 : index
    %136 = vector.load %arg11[%c0_175, %c16_176] : memref<256x24xbf16, #tpu.memory_space<vmem>>, vector<256x8xbf16>
    tpu.vector_store %arg11[%c0_175, %c16_176], %135 {strides = array<i32>} : memref<256x24xbf16, #tpu.memory_space<vmem>>, vector<256x8xbf16>,
    %c0_177 = arith.constant 0 : index
    %c0_178 = arith.constant 0 : index
    %137 = vector.load %arg12[%c0_177, %c0_178] : memref<256x8xf32, #tpu.memory_space<vmem>>, vector<256x8xf32>
    %c0_179 = arith.constant 0 : index
    %c0_180 = arith.constant 0 : index
    %138 = vector.load %arg11[%c0_179, %c0_180] : memref<256x24xbf16, #tpu.memory_space<vmem>>, vector<256x24xbf16>
    %c1_181 = arith.constant 1 : index
    %c0_182 = arith.constant 0 : index
    %c0_183 = arith.constant 0 : index
    %139 = vector.load %arg4[%c1_181, %c0_182, %c0_183] : memref<3x24x8xbf16, #tpu.memory_space<vmem>>, vector<1x24x8xbf16>
    %140 = vector.shape_cast %139 : vector<1x24x8xbf16> to vector<24x8xbf16>
    %cst_184 = arith.constant dense<0.000000e+00> : vector<256x8xf32>
    %141 = tpu.matmul %138, %140, %cst_184 {dimension_numbers = #tpu.dot_dimension_numbers<[1], [0], [0], [1], [0, 0, 1, 1], [], []>} : vector<256x24xbf16>, vector<24x8xbf16>, vector<256x8xf32> -> vector<256x8xf32>
    %142 = arith.addf %137, %141 : vector<256x8xf32>
    %c0_185 = arith.constant 0 : index
    %c0_186 = arith.constant 0 : index
    %143 = vector.load %arg12[%c0_185, %c0_186] : memref<256x8xf32, #tpu.memory_space<vmem>>, vector<256x8xf32>
    tpu.vector_store %arg12[%c0_185, %c0_186], %142 {strides = array<i32>} : memref<256x8xf32, #tpu.memory_space<vmem>>, vector<256x8xf32>,
    %c0_187 = arith.constant 0 : index
    %c2_188 = arith.constant 2 : index
    %c0_189 = arith.constant 0 : index
    %144 = vector.load %arg9[%c0_187, %c2_188, %c0_189] : memref<18x18x8xf32, #tpu.memory_space<vmem>>, vector<18x16x8xf32>
    %c0_190 = arith.constant 0 : index
    %c0_191 = arith.constant 0 : index
    %c0_192 = arith.constant 0 : index
    %145 = vector.load %arg10[%c0_190, %c0_191, %c0_192] : memref<18x16x8xf32, #tpu.memory_space<vmem>>, vector<18x16x8xf32>
    tpu.vector_store %arg10[%c0_190, %c0_191, %c0_192], %144 {strides = array<i32>} : memref<18x16x8xf32, #tpu.memory_space<vmem>>, vector<18x16x8xf32>,
    %c0_193 = arith.constant 0 : index
    %c0_194 = arith.constant 0 : index
    %c0_195 = arith.constant 0 : index
    %146 = vector.load %arg10[%c0_193, %c0_194, %c0_195] : memref<18x16x8xf32, #tpu.memory_space<vmem>>, vector<16x16x8xf32>
    %147 = vector.shape_cast %146 : vector<16x16x8xf32> to vector<256x8xf32>
    %148 = arith.truncf %147 : vector<256x8xf32> to vector<256x8xbf16>
    %c0_196 = arith.constant 0 : index
    %c0_197 = arith.constant 0 : index
    %149 = vector.load %arg11[%c0_196, %c0_197] : memref<256x24xbf16, #tpu.memory_space<vmem>>, vector<256x8xbf16>
    tpu.vector_store %arg11[%c0_196, %c0_197], %148 {strides = array<i32>} : memref<256x24xbf16, #tpu.memory_space<vmem>>, vector<256x8xbf16>,
    %c1_198 = arith.constant 1 : index
    %c0_199 = arith.constant 0 : index
    %c0_200 = arith.constant 0 : index
    %150 = vector.load %arg10[%c1_198, %c0_199, %c0_200] : memref<18x16x8xf32, #tpu.memory_space<vmem>>, vector<16x16x8xf32>
    %151 = vector.shape_cast %150 : vector<16x16x8xf32> to vector<256x8xf32>
    %152 = arith.truncf %151 : vector<256x8xf32> to vector<256x8xbf16>
    %c0_201 = arith.constant 0 : index
    %c8_202 = arith.constant 8 : index
    %153 = vector.load %arg11[%c0_201, %c8_202] : memref<256x24xbf16, #tpu.memory_space<vmem>>, vector<256x8xbf16>
    tpu.vector_store %arg11[%c0_201, %c8_202], %152 {strides = array<i32>} : memref<256x24xbf16, #tpu.memory_space<vmem>>, vector<256x8xbf16>,
    %c2_203 = arith.constant 2 : index
    %c0_204 = arith.constant 0 : index
    %c0_205 = arith.constant 0 : index
    %154 = vector.load %arg10[%c2_203, %c0_204, %c0_205] : memref<18x16x8xf32, #tpu.memory_space<vmem>>, vector<16x16x8xf32>
    %155 = vector.shape_cast %154 : vector<16x16x8xf32> to vector<256x8xf32>
    %156 = arith.truncf %155 : vector<256x8xf32> to vector<256x8xbf16>
    %c0_206 = arith.constant 0 : index
    %c16_207 = arith.constant 16 : index
    %157 = vector.load %arg11[%c0_206, %c16_207] : memref<256x24xbf16, #tpu.memory_space<vmem>>, vector<256x8xbf16>
    tpu.vector_store %arg11[%c0_206, %c16_207], %156 {strides = array<i32>} : memref<256x24xbf16, #tpu.memory_space<vmem>>, vector<256x8xbf16>,
    %c0_208 = arith.constant 0 : index
    %c0_209 = arith.constant 0 : index
    %158 = vector.load %arg12[%c0_208, %c0_209] : memref<256x8xf32, #tpu.memory_space<vmem>>, vector<256x8xf32>
    %c0_210 = arith.constant 0 : index
    %c0_211 = arith.constant 0 : index
    %159 = vector.load %arg11[%c0_210, %c0_211] : memref<256x24xbf16, #tpu.memory_space<vmem>>, vector<256x24xbf16>
    %c2_212 = arith.constant 2 : index
    %c0_213 = arith.constant 0 : index
    %c0_214 = arith.constant 0 : index
    %160 = vector.load %arg4[%c2_212, %c0_213, %c0_214] : memref<3x24x8xbf16, #tpu.memory_space<vmem>>, vector<1x24x8xbf16>
    %161 = vector.shape_cast %160 : vector<1x24x8xbf16> to vector<24x8xbf16>
    %cst_215 = arith.constant dense<0.000000e+00> : vector<256x8xf32>
    %162 = tpu.matmul %159, %161, %cst_215 {dimension_numbers = #tpu.dot_dimension_numbers<[1], [0], [0], [1], [0, 0, 1, 1], [], []>} : vector<256x24xbf16>, vector<24x8xbf16>, vector<256x8xf32> -> vector<256x8xf32>
    %163 = arith.addf %158, %162 : vector<256x8xf32>
    %c0_216 = arith.constant 0 : index
    %c0_217 = arith.constant 0 : index
    %164 = vector.load %arg12[%c0_216, %c0_217] : memref<256x8xf32, #tpu.memory_space<vmem>>, vector<256x8xf32>
    tpu.vector_store %arg12[%c0_216, %c0_217], %163 {strides = array<i32>} : memref<256x8xf32, #tpu.memory_space<vmem>>, vector<256x8xf32>,
    %c0_218 = arith.constant 0 : index
    %c0_219 = arith.constant 0 : index
    %165 = vector.load %arg12[%c0_218, %c0_219] : memref<256x8xf32, #tpu.memory_space<vmem>>, vector<256x8xf32>
    %cst_220 = arith.constant dense<0.000000e+00> : vector<8xf32>
    %166 = vector.multi_reduction <add>, %165, %cst_220 [0] : vector<256x8xf32> to vector<8xf32>
    %167 = vector.shape_cast %166 : vector<8xf32> to vector<1x8xf32>
    %cst_221 = arith.constant 2.560000e+02 : f32
    %168 = vector.broadcast %cst_221 : f32 to vector<1x8xf32>
    %169 = arith.divf %167, %168 : vector<1x8xf32>
    %170 = vector.broadcast %169 : vector<1x8xf32> to vector<256x8xf32>
    %171 = arith.subf %165, %170 : vector<256x8xf32>
    %172 = arith.mulf %171, %171 : vector<256x8xf32>
    %cst_222 = arith.constant dense<0.000000e+00> : vector<8xf32>
    %173 = vector.multi_reduction <add>, %172, %cst_222 [0] : vector<256x8xf32> to vector<8xf32>
    %174 = vector.shape_cast %173 : vector<8xf32> to vector<1x8xf32>
    %cst_223 = arith.constant 2.560000e+02 : f32
    %175 = vector.broadcast %cst_223 : f32 to vector<1x8xf32>
    %176 = arith.divf %174, %175 : vector<1x8xf32>
    %177 = vector.broadcast %169 : vector<1x8xf32> to vector<256x8xf32>
    %178 = arith.subf %165, %177 : vector<256x8xf32>
    %cst_224 = arith.constant 9.99999974E-6 : f32
    %179 = vector.broadcast %cst_224 : f32 to vector<1x8xf32>
    %180 = arith.addf %176, %179 : vector<1x8xf32>
    %181 = math.rsqrt %180 : vector<1x8xf32>
    %182 = vector.broadcast %181 : vector<1x8xf32> to vector<256x8xf32>
    %183 = arith.mulf %178, %182 : vector<256x8xf32>
    %cst_225 = arith.constant 0.000000e+00 : f32
    %184 = vector.broadcast %cst_225 : f32 to vector<256x8xf32>
    %185 = arith.maximumf %183, %184 : vector<256x8xf32>
    %186 = vector.shape_cast %185 : vector<256x8xf32> to vector<16x16x8xf32>
    %c0_226 = arith.constant 0 : index
    %c0_227 = arith.constant 0 : index
    %c0_228 = arith.constant 0 : index
    %c0_229 = arith.constant 0 : index
    %187 = vector.load %arg5[%c0_226, %c0_227, %c0_228, %c0_229] : memref<1x16x16x8xf32, #tpu.memory_space<vmem>>, vector<1x16x16x8xf32>
    %188 = vector.shape_cast %187 : vector<1x16x16x8xf32> to vector<16x16x8xf32>
    %189 = vector.shape_cast %186 : vector<16x16x8xf32> to vector<1x16x16x8xf32>
    tpu.vector_store %arg5[%c0_226, %c0_227, %c0_228, %c0_229], %189 {strides = array<i32>} : memref<1x16x16x8xf32, #tpu.memory_space<vmem>>, vector<1x16x16x8xf32>,
    return
  }
  func.func @transform_0(%arg0: i32) -> (i32, i32, i32, i32) {
    %c0_i32 = arith.constant 0 : i32
    %c0_i32_0 = arith.constant 0 : i32
    %c0_i32_1 = arith.constant 0 : i32
    %c0_i32_2 = arith.constant 0 : i32
    return %arg0, %c0_i32, %c0_i32_0, %c0_i32_1 : i32, i32, i32, i32
  }
  func.func @transform_1(%arg0: i32) -> (i32, i32, i32, i32) {
    %c0_i32 = arith.constant 0 : i32
    %c0_i32_0 = arith.constant 0 : i32
    %c0_i32_1 = arith.constant 0 : i32
    %c0_i32_2 = arith.constant 0 : i32
    return %arg0, %c0_i32, %c0_i32_0, %c0_i32_1 : i32, i32, i32, i32
  }
  func.func @transform_2(%arg0: i32) -> (i32, i32, i32) {
    %c0_i32 = arith.constant 0 : i32
    %c0_i32_0 = arith.constant 0 : i32
    %c0_i32_1 = arith.constant 0 : i32
    %c0_i32_2 = arith.constant 0 : i32
    return %c0_i32, %c0_i32_0, %c0_i32_1 : i32, i32, i32
  }
  func.func @transform_3(%arg0: i32) -> (i32, i32, i32) {
    %c0_i32 = arith.constant 0 : i32
    %c0_i32_0 = arith.constant 0 : i32
    %c0_i32_1 = arith.constant 0 : i32
    %c0_i32_2 = arith.constant 0 : i32
    return %c0_i32, %c0_i32_0, %c0_i32_1 : i32, i32, i32
  }
  func.func @transform_4(%arg0: i32) -> (i32, i32, i32, i32) {
    %c0_i32 = arith.constant 0 : i32
    %c0_i32_0 = arith.constant 0 : i32
    %c0_i32_1 = arith.constant 0 : i32
    %c0_i32_2 = arith.constant 0 : i32
    return %arg0, %c0_i32, %c0_i32_0, %c0_i32_1 : i32, i32, i32, i32
  }
}

</mosaic_0001>

<llo_original>
// kernel: up_forward.1
$region0: #{up_forward.1}
  #allocation0 [shape = 'u32[]', space=smem, size = 0x4, offset = 0x4, fixed_abs, tag = 'smem constant byte address 0x4 - core index']
  #allocation1 [shape = 'u32[72,128]{1,0:T(1,128)}', space=vmem, size = 0x9000, scoped, tag = 'internal scratch']
  #allocation2 [shape = 'f32[18,18,16]{2,1,0:T(8,128)}', space=vmem, size = 0x36000, scoped, tag = 'scratch operand']
  #allocation3 [shape = 'f32[18,16,16]{2,1,0:T(8,128)}', space=vmem, size = 0x24000, scoped, tag = 'scratch operand']
  #allocation4 [shape = 'bf16[256,48]{1,0:T(8,128)(2,1)}', space=vmem, size = 0x10000, scoped, tag = 'scratch operand']
  #allocation5 [shape = 'f32[18,18,8]{2,1,0:T(8,128)}', space=vmem, size = 0x36000, scoped, tag = 'scratch operand']
  #allocation6 [shape = 'f32[18,16,8]{2,1,0:T(8,128)}', space=vmem, size = 0x24000, scoped, tag = 'scratch operand']
  #allocation7 [shape = 'bf16[256,24]{1,0:T(8,128)(2,1)}', space=vmem, size = 0x10000, scoped, tag = 'scratch operand']
  #allocation8 [shape = 'f32[256,8]{1,0:T(8,128)}', space=vmem, size = 0x20000, scoped, tag = 'scratch operand']
  %s0 = inlined_call_operand.vmem [shape: bf16[2,16,16,8], index: 0, kind: input, shape index: {}]
  %s1 = inlined_call_operand.vmem [shape: bf16[2,16,16,8], index: 1, kind: input, shape index: {}]
  %s2 = inlined_call_operand.vmem [shape: bf16[3,48,8], index: 2, kind: input, shape index: {}]
  %s3 = inlined_call_operand.vmem [shape: bf16[3,24,8], index: 3, kind: input, shape index: {}]
  %s4 = inlined_call_operand.vmem [shape: f32[2,16,16,8], index: 4, kind: output, shape index: {}]
  %s5 = sld [smem:[#allocation0]]
  $region49: #{up_forward.1} parent=0
    _
  %s7 = ssub.s32 1, %s5
  %s8 = scalar_select 0, %s7, %s5
  loop: start=0, step=1, limit=4
  $region2: #{up_forward.1} parent=0 // loop_pre_header
    _
  $region3: #{up_forward.1} parent=0 // loop_header
    %s10 = sphi 0, %s14
    %p11 = scmp.ge.s32.totalorder %s10, 4
    %s20 = sphi 0, %s22
    %s23 = sphi 0, %s20
    %s24 = sphi 0, %s23
    %s40 = sphi 0, %s24
    %s46 = sphi 0, %s48
    %s49 = sphi 0, %s46
    %s50 = sphi 0, %s49
    %s66 = sphi 0, %s50
    %s70 = sphi 0, %s70
    %s72 = sphi 0, %s70
    %s73 = sphi 0, %s72
    %s87 = sphi 0, %s73
    %s91 = sphi 0, %s91
    %s93 = sphi 0, %s91
    %s94 = sphi 0, %s93
    %s108 = sphi 0, %s94
    %s114 = sphi 0, %s116
    %s117 = sphi 0, %s114
    %s118 = sphi 0, %s117
    %s134 = sphi 0, %s118
  $region4: #{up_forward.1} parent=0 // loop_header_branch
    %13 = sbr.rel (%p11) target = $region8
  $region5: #{up_forward.1} parent=0 // loop_body
    %s15 = ssub.s32 %s10, 1
    %s16 = ssub.s32 %s10, 2
    %s17 = sadd.s32 %s10, 1
    %s18 = ssub.s32 %s10, %s17
    %p19 = scmp.eq.s32.totalorder %s18, 0
    %s21 = sadd.s32 %s20, 1
    %s22 = scalar_select %p19, %s20, %s21
    %p25 = pneg %p19
    %p26 = scmp.eq.s32.totalorder %s10, 1
    %p27 = por %p25, %p26
    %p28 = scmp.ne.s32.totalorder %s20, %s23
    %p29 = scmp.eq.s32.totalorder %s10, 0
    %p30 = por %p28, %p29
    %p31 = scmp.ne.s32.totalorder %s20, %s23
    %p32 = scmp.eq.s32.totalorder %s15, 1
    %p33 = por %p31, %p32
    %p34 = scmp.ne.s32.totalorder %s23, %s24
    %p35 = scmp.eq.s32.totalorder %s15, 0
    %p36 = por %p34, %p35
    %p37 = scmp.ne.s32.totalorder %s23, %s24
    %p38 = scmp.eq.s32.totalorder %s16, 1
    %p39 = por %p37, %p38
    %p41 = scmp.ne.s32.totalorder %s24, %s40
    %p42 = scmp.eq.s32.totalorder %s16, 0
    %p43 = por %p41, %p42
    %s44 = ssub.s32 %s10, %s17
    %p45 = scmp.eq.s32.totalorder %s44, 0
    %s47 = sadd.s32 %s46, 1
    %s48 = scalar_select %p45, %s46, %s47
    %p51 = pneg %p45
    %p52 = scmp.eq.s32.totalorder %s10, 1
    %p53 = por %p51, %p52
    %p54 = scmp.ne.s32.totalorder %s46, %s49
    %p55 = scmp.eq.s32.totalorder %s10, 0
    %p56 = por %p54, %p55
    %p57 = scmp.ne.s32.totalorder %s46, %s49
    %p58 = scmp.eq.s32.totalorder %s15, 1
    %p59 = por %p57, %p58
    %p60 = scmp.ne.s32.totalorder %s49, %s50
    %p61 = scmp.eq.s32.totalorder %s15, 0
    %p62 = por %p60, %p61
    %p63 = scmp.ne.s32.totalorder %s49, %s50
    %p64 = scmp.eq.s32.totalorder %s16, 1
    %p65 = por %p63, %p64
    %p67 = scmp.ne.s32.totalorder %s50, %s66
    %p68 = scmp.eq.s32.totalorder %s16, 0
    %p69 = por %p67, %p68
    %s71 = sadd.s32 %s70, 1
    %p74 = scmp.eq.s32.totalorder %s10, 1
    %p75 = scmp.ne.s32.totalorder %s70, %s72
    %p76 = scmp.eq.s32.totalorder %s10, 0
    %p77 = por %p75, %p76
    %p78 = scmp.ne.s32.totalorder %s70, %s72
    %p79 = scmp.eq.s32.totalorder %s15, 1
    %p80 = por %p78, %p79
    %p81 = scmp.ne.s32.totalorder %s72, %s73
    %p82 = scmp.eq.s32.totalorder %s15, 0
    %p83 = por %p81, %p82
    %p84 = scmp.ne.s32.totalorder %s72, %s73
    %p85 = scmp.eq.s32.totalorder %s16, 1
    %p86 = por %p84, %p85
    %p88 = scmp.ne.s32.totalorder %s73, %s87
    %p89 = scmp.eq.s32.totalorder %s16, 0
    %p90 = por %p88, %p89
    %s92 = sadd.s32 %s91, 1
    %p95 = scmp.eq.s32.totalorder %s10, 1
    %p96 = scmp.ne.s32.totalorder %s91, %s93
    %p97 = scmp.eq.s32.totalorder %s10, 0
    %p98 = por %p96, %p97
    %p99 = scmp.ne.s32.totalorder %s91, %s93
    %p100 = scmp.eq.s32.totalorder %s15, 1
    %p101 = por %p99, %p100
    %p102 = scmp.ne.s32.totalorder %s93, %s94
    %p103 = scmp.eq.s32.totalorder %s15, 0
    %p104 = por %p102, %p103
    %p105 = scmp.ne.s32.totalorder %s93, %s94
    %p106 = scmp.eq.s32.totalorder %s16, 1
    %p107 = por %p105, %p106
    %p109 = scmp.ne.s32.totalorder %s94, %s108
    %p110 = scmp.eq.s32.totalorder %s16, 0
    %p111 = por %p109, %p110
    %s112 = ssub.s32 %s10, %s17
    %p113 = scmp.eq.s32.totalorder %s112, 0
    %s115 = sadd.s32 %s114, 1
    %s116 = scalar_select %p113, %s114, %s115
    %p119 = pneg %p113
    %p120 = scmp.eq.s32.totalorder %s10, 1
    %p121 = por %p119, %p120
    %p122 = scmp.ne.s32.totalorder %s114, %s117
    %p123 = scmp.eq.s32.totalorder %s10, 0
    %p124 = por %p122, %p123
    %p125 = scmp.ne.s32.totalorder %s114, %s117
    %p126 = scmp.eq.s32.totalorder %s15, 1
    %p127 = por %p125, %p126
    %p128 = scmp.ne.s32.totalorder %s117, %s118
    %p129 = scmp.eq.s32.totalorder %s15, 0
    %p130 = por %p128, %p129
    %p131 = scmp.ne.s32.totalorder %s117, %s118
    %p132 = scmp.eq.s32.totalorder %s16, 1
    %p133 = por %p131, %p132
    %p135 = scmp.ne.s32.totalorder %s118, %s134
    %p136 = scmp.eq.s32.totalorder %s16, 0
    %p137 = por %p135, %p136
    %p138 = scmp.le.s32.totalorder 1, %s10
    %p139 = scmp.lt.s32.totalorder %s10, 3
    %p140 = pnand %p138, %p139
    %p141 = pneg %p140
    // Predicated region
    $region9: #{up_forward.1} parent=5 // pred_check
      _
    $region10: #{up_forward.1} parent=5 // pred_check_branch
      %143 = sbr.rel (%p140) target = $region12
    $region11: #{up_forward.1} parent=5 // pred_region
      %s144 = ssub.s32 %s10, 1
      // Predicated region
      $region13: #{up_forward.1} parent=11 // pred_check
        %p145 = pneg %p83
      $region14: #{up_forward.1} parent=11 // pred_check_branch
        %147 = sbr.rel (%p145) target = $region16
      $region15: #{up_forward.1} parent=11 // pred_region
        _
      $region16: #{up_forward.1} parent=11 // pred_fallthru
        _
      // Predicated region
      $region17: #{up_forward.1} parent=11 // pred_check
        %p148 = pneg %p104
      $region18: #{up_forward.1} parent=11 // pred_check_branch
        %150 = sbr.rel (%p148) target = $region20
      $region19: #{up_forward.1} parent=11 // pred_region
        _
      $region20: #{up_forward.1} parent=11 // pred_fallthru
        _
    $region12: #{up_forward.1} parent=5 // pred_fallthru
      _
    %p151 = scmp.lt.s32.totalorder %s10, 2
    // Predicated region
    $region21: #{up_forward.1} parent=5 // pred_check
      %p152 = pneg %p151
    $region22: #{up_forward.1} parent=5 // pred_check_branch
      %154 = sbr.rel (%p152) target = $region24
    $region23: #{up_forward.1} parent=5 // pred_region
      // Predicated region
      $region25: #{up_forward.1} parent=23 // pred_check
        %p155 = pneg %p30
      $region26: #{up_forward.1} parent=23 // pred_check_branch
        %157 = sbr.rel (%p155) target = $region28
      $region27: #{up_forward.1} parent=23 // pred_region
        %p158 = scmp.lt.s32.totalorder %s10, 1
        %s159 = scalar_select %p158, %s10, 1
        %s160 = smul.addr %s159, 32
        %s161 = smul.addr %s160, 4
        %s162 = scalar_lea.vmem %s0, %s161
      $region28: #{up_forward.1} parent=23 // pred_fallthru
        _
      // Predicated region
      $region29: #{up_forward.1} parent=23 // pred_check
        %p163 = pneg %p56
      $region30: #{up_forward.1} parent=23 // pred_check_branch
        %165 = sbr.rel (%p163) target = $region32
      $region31: #{up_forward.1} parent=23 // pred_region
        %p166 = scmp.lt.s32.totalorder %s10, 1
        %s167 = scalar_select %p166, %s10, 1
        %s168 = smul.addr %s167, 32
        %s169 = smul.addr %s168, 4
        %s170 = scalar_lea.vmem %s1, %s169
      $region32: #{up_forward.1} parent=23 // pred_fallthru
        _
    $region24: #{up_forward.1} parent=5 // pred_fallthru
      _
    %p171 = scmp.le.s32.totalorder 1, %s10
    %p172 = scmp.lt.s32.totalorder %s10, 3
    %p173 = pnand %p171, %p172
    %p174 = pneg %p173
    // Predicated region
    $region33: #{up_forward.1} parent=5 // pred_check
      _
    $region34: #{up_forward.1} parent=5 // pred_check_branch
      %176 = sbr.rel (%p173) target = $region36
    $region35: #{up_forward.1} parent=5 // pred_region
      %s177 = ssub.s32 %s10, 1
      %p178 = scmp.lt.s32.totalorder %s15, 1
      %s179 = scalar_select %p178, %s15, 1
      %s180 = smul.addr %s179, 32
      %s181 = smul.addr %s180, 4
      %s182 = scalar_lea.vmem %s0, %s181
      %p183 = pneg %p36
      %p184 = pneg %p33
      %p185 = scmp.lt.s32.totalorder %s15, 1
      %s186 = scalar_select %p185, %s15, 1
      %s187 = smul.addr %s186, 32
      %s188 = smul.addr %s187, 4
      %s189 = scalar_lea.vmem %s1, %s188
      %p190 = pneg %p62
      %p191 = pneg %p59
      %p192 = pneg %p83
      %p193 = pneg %p80
      %p194 = pneg %p104
      %p195 = pneg %p101
      %p196 = pneg %p130
      %p197 = pneg %p127
      %p198 = scmp.lt.s32.totalorder %s15, 1
      %s199 = scalar_select %p198, %s15, 1
      %s200 = smul.addr %s199, 32
      %s201 = smul.addr %s200, 8
      %s202 = scalar_lea.vmem %s4, %s201
      %p203 = scmp.lt.s32.totalorder %s15, 1
      %s204 = scalar_select %p203, %s15, 1
      %s205 = smul.addr %s204, 32
      %s206 = smul.addr %s205, 4
      %s207 = scalar_lea.vmem %s0, %s206
      %p208 = scmp.lt.s32.totalorder %s15, 1
      %s209 = scalar_select %p208, %s15, 1
      %s210 = smul.addr %s209, 32
      %s211 = smul.addr %s210, 4
      %s212 = scalar_lea.vmem %s1, %s211
      %p213 = scmp.lt.s32.totalorder %s15, 1
      %s214 = scalar_select %p213, %s15, 1
      %s215 = smul.addr %s214, 32
      %s216 = smul.addr %s215, 8
      %s217 = scalar_lea.vmem %s4, %s216
      %vm219 = vcmask 130048
      %220 = vst.msk [vmem:[#allocation2] sm:$0xff] %vm219, 0.0
      %221 = vst.msk [vmem:[#allocation2 + $0x8] sm:$0xff] %vm219, 0.0
      %vm222 = vcmask 123904
      %223 = vst.msk [vmem:[#allocation2 + $0x10] sm:$0x3] %vm222, 0.0
      %224 = vst.msk [vmem:[#allocation2 + $0x18] sm:$0xff] %vm219, 0.0
      %225 = vst.msk [vmem:[#allocation2 + $0x20] sm:$0xff] %vm219, 0.0
      %226 = vst.msk [vmem:[#allocation2 + $0x28] sm:$0x3] %vm222, 0.0
      %227 = vst.msk [vmem:[#allocation2 + $0x30] sm:$0xff] %vm219, 0.0
      %228 = vst.msk [vmem:[#allocation2 + $0x38] sm:$0xff] %vm219, 0.0
      %229 = vst.msk [vmem:[#allocation2 + $0x40] sm:$0x3] %vm222, 0.0
      %230 = vst.msk [vmem:[#allocation2 + $0x48] sm:$0xff] %vm219, 0.0
      %231 = vst.msk [vmem:[#allocation2 + $0x50] sm:$0xff] %vm219, 0.0
      %232 = vst.msk [vmem:[#allocation2 + $0x58] sm:$0x3] %vm222, 0.0
      %233 = vst.msk [vmem:[#allocation2 + $0x60] sm:$0xff] %vm219, 0.0
      %234 = vst.msk [vmem:[#allocation2 + $0x68] sm:$0xff] %vm219, 0.0
      %235 = vst.msk [vmem:[#allocation2 + $0x70] sm:$0x3] %vm222, 0.0
      %236 = vst.msk [vmem:[#allocation2 + $0x78] sm:$0xff] %vm219, 0.0
      %237 = vst.msk [vmem:[#allocation2 + $0x80] sm:$0xff] %vm219, 0.0
      %238 = vst.msk [vmem:[#allocation2 + $0x88] sm:$0x3] %vm222, 0.0
      %239 = vst.msk [vmem:[#allocation2 + $0x90] sm:$0xff] %vm219, 0.0
      %240 = vst.msk [vmem:[#allocation2 + $0x98] sm:$0xff] %vm219, 0.0
      %241 = vst.msk [vmem:[#allocation2 + $0xa0] sm:$0x3] %vm222, 0.0
      %242 = vst.msk [vmem:[#allocation2 + $0xa8] sm:$0xff] %vm219, 0.0
      %243 = vst.msk [vmem:[#allocation2 + $0xb0] sm:$0xff] %vm219, 0.0
      %244 = vst.msk [vmem:[#allocation2 + $0xb8] sm:$0x3] %vm222, 0.0
      %245 = vst.msk [vmem:[#allocation2 + $0xc0] sm:$0xff] %vm219, 0.0
      %246 = vst.msk [vmem:[#allocation2 + $0xc8] sm:$0xff] %vm219, 0.0
      %247 = vst.msk [vmem:[#allocation2 + $0xd0] sm:$0x3] %vm222, 0.0
      %248 = vst.msk [vmem:[#allocation2 + $0xd8] sm:$0xff] %vm219, 0.0
      %249 = vst.msk [vmem:[#allocation2 + $0xe0] sm:$0xff] %vm219, 0.0
      %250 = vst.msk [vmem:[#allocation2 + $0xe8] sm:$0x3] %vm222, 0.0
      %251 = vst.msk [vmem:[#allocation2 + $0xf0] sm:$0xff] %vm219, 0.0
      %252 = vst.msk [vmem:[#allocation2 + $0xf8] sm:$0xff] %vm219, 0.0
      %253 = vst.msk [vmem:[#allocation2 + $0x100] sm:$0x3] %vm222, 0.0
      %254 = vst.msk [vmem:[#allocation2 + $0x108] sm:$0xff] %vm219, 0.0
      %255 = vst.msk [vmem:[#allocation2 + $0x110] sm:$0xff] %vm219, 0.0
      %256 = vst.msk [vmem:[#allocation2 + $0x118] sm:$0x3] %vm222, 0.0
      %257 = vst.msk [vmem:[#allocation2 + $0x120] sm:$0xff] %vm219, 0.0
      %258 = vst.msk [vmem:[#allocation2 + $0x128] sm:$0xff] %vm219, 0.0
      %259 = vst.msk [vmem:[#allocation2 + $0x130] sm:$0x3] %vm222, 0.0
      %260 = vst.msk [vmem:[#allocation2 + $0x138] sm:$0xff] %vm219, 0.0
      %261 = vst.msk [vmem:[#allocation2 + $0x140] sm:$0xff] %vm219, 0.0
      %262 = vst.msk [vmem:[#allocation2 + $0x148] sm:$0x3] %vm222, 0.0
      %263 = vst.msk [vmem:[#allocation2 + $0x150] sm:$0xff] %vm219, 0.0
      %264 = vst.msk [vmem:[#allocation2 + $0x158] sm:$0xff] %vm219, 0.0
      %265 = vst.msk [vmem:[#allocation2 + $0x160] sm:$0x3] %vm222, 0.0
      %266 = vst.msk [vmem:[#allocation2 + $0x168] sm:$0xff] %vm219, 0.0
      %267 = vst.msk [vmem:[#allocation2 + $0x170] sm:$0xff] %vm219, 0.0
      %268 = vst.msk [vmem:[#allocation2 + $0x178] sm:$0x3] %vm222, 0.0
      %269 = vst.msk [vmem:[#allocation2 + $0x180] sm:$0xff] %vm219, 0.0
      %270 = vst.msk [vmem:[#allocation2 + $0x188] sm:$0xff] %vm219, 0.0
      %271 = vst.msk [vmem:[#allocation2 + $0x190] sm:$0x3] %vm222, 0.0
      %272 = vst.msk [vmem:[#allocation2 + $0x198] sm:$0xff] %vm219, 0.0
      %273 = vst.msk [vmem:[#allocation2 + $0x1a0] sm:$0xff] %vm219, 0.0
      %274 = vst.msk [vmem:[#allocation2 + $0x1a8] sm:$0x3] %vm222, 0.0
      %v275 = vld [vmem:[%s207] sm:$0xf]
      %v276 = vld [vmem:[%s207 + $0x4] sm:$0xf]
      %v277 = vld [vmem:[%s207 + $0x8] sm:$0xf]
      %v278 = vld [vmem:[%s207 + $0xc] sm:$0xf]
      %v279 = vld [vmem:[%s207 + $0x10] sm:$0xf]
      %v280 = vld [vmem:[%s207 + $0x14] sm:$0xf]
      %v281 = vld [vmem:[%s207 + $0x18] sm:$0xf]
      %v282 = vld [vmem:[%s207 + $0x1c] sm:$0xf]
      %v283 = vld [vmem:[%s207 + $0x20] sm:$0xf]
      %v284 = vld [vmem:[%s207 + $0x24] sm:$0xf]
      %v285 = vld [vmem:[%s207 + $0x28] sm:$0xf]
      %v286 = vld [vmem:[%s207 + $0x2c] sm:$0xf]
      %v287 = vld [vmem:[%s207 + $0x30] sm:$0xf]
      %v288 = vld [vmem:[%s207 + $0x34] sm:$0xf]
      %v289 = vld [vmem:[%s207 + $0x38] sm:$0xf]
      %v290 = vld [vmem:[%s207 + $0x3c] sm:$0xf]
      %v291 = vld [vmem:[%s207 + $0x40] sm:$0xf]
      %v292 = vld [vmem:[%s207 + $0x44] sm:$0xf]
      %v293 = vld [vmem:[%s207 + $0x48] sm:$0xf]
      %v294 = vld [vmem:[%s207 + $0x4c] sm:$0xf]
      %v295 = vld [vmem:[%s207 + $0x50] sm:$0xf]
      %v296 = vld [vmem:[%s207 + $0x54] sm:$0xf]
      %v297 = vld [vmem:[%s207 + $0x58] sm:$0xf]
      %v298 = vld [vmem:[%s207 + $0x5c] sm:$0xf]
      %v299 = vld [vmem:[%s207 + $0x60] sm:$0xf]
      %v300 = vld [vmem:[%s207 + $0x64] sm:$0xf]
      %v301 = vld [vmem:[%s207 + $0x68] sm:$0xf]
      %v302 = vld [vmem:[%s207 + $0x6c] sm:$0xf]
      %v303 = vld [vmem:[%s207 + $0x70] sm:$0xf]
      %v304 = vld [vmem:[%s207 + $0x74] sm:$0xf]
      %v305 = vld [vmem:[%s207 + $0x78] sm:$0xf]
      %v306 = vld [vmem:[%s207 + $0x7c] sm:$0xf]
      %v307 = vunpack.c.l.bf16 %v275
      %v308 = vunpack.c.l.bf16 %v276
      %v309 = vunpack.c.l.bf16 %v277
      %v310 = vunpack.c.l.bf16 %v278
      %v311 = vunpack.c.l.bf16 %v279
      %v312 = vunpack.c.l.bf16 %v280
      %v313 = vunpack.c.l.bf16 %v281
      %v314 = vunpack.c.l.bf16 %v282
      %v315 = vunpack.c.l.bf16 %v283
      %v316 = vunpack.c.l.bf16 %v284
      %v317 = vunpack.c.l.bf16 %v285
      %v318 = vunpack.c.l.bf16 %v286
      %v319 = vunpack.c.l.bf16 %v287
      %v320 = vunpack.c.l.bf16 %v288
      %v321 = vunpack.c.l.bf16 %v289
      %v322 = vunpack.c.l.bf16 %v290
      %v323 = vunpack.c.l.bf16 %v291
      %v324 = vunpack.c.l.bf16 %v292
      %v325 = vunpack.c.l.bf16 %v293
      %v326 = vunpack.c.l.bf16 %v294
      %v327 = vunpack.c.l.bf16 %v295
      %v328 = vunpack.c.l.bf16 %v296
      %v329 = vunpack.c.l.bf16 %v297
      %v330 = vunpack.c.l.bf16 %v298
      %v331 = vunpack.c.l.bf16 %v299
      %v332 = vunpack.c.l.bf16 %v300
      %v333 = vunpack.c.l.bf16 %v301
      %v334 = vunpack.c.l.bf16 %v302
      %v335 = vunpack.c.l.bf16 %v303
      %v336 = vunpack.c.l.bf16 %v304
      %v337 = vunpack.c.l.bf16 %v305
      %v338 = vunpack.c.l.bf16 %v306
      %s339 = scalar_lea.vmem [#allocation2], 24
      %vm340 = vcmask 64512
      %341 = vst.msk [vmem:[%s339 + $0x1] sm:$0xff] %vm340, %v307
      %342 = vst.msk [vmem:[%s339 + $0x9] sm:$0xff] %vm340, %v308
      %343 = vst.msk [vmem:[%s339 + $0x19] sm:$0xff] %vm340, %v309
      %344 = vst.msk [vmem:[%s339 + $0x21] sm:$0xff] %vm340, %v310
      %345 = vst.msk [vmem:[%s339 + $0x31] sm:$0xff] %vm340, %v311
      %346 = vst.msk [vmem:[%s339 + $0x39] sm:$0xff] %vm340, %v312
      %347 = vst.msk [vmem:[%s339 + $0x49] sm:$0xff] %vm340, %v313
      %348 = vst.msk [vmem:[%s339 + $0x51] sm:$0xff] %vm340, %v314
      %349 = vst.msk [vmem:[%s339 + $0x61] sm:$0xff] %vm340, %v315
      %350 = vst.msk [vmem:[%s339 + $0x69] sm:$0xff] %vm340, %v316
      %351 = vst.msk [vmem:[%s339 + $0x79] sm:$0xff] %vm340, %v317
      %352 = vst.msk [vmem:[%s339 + $0x81] sm:$0xff] %vm340, %v318
      %353 = vst.msk [vmem:[%s339 + $0x91] sm:$0xff] %vm340, %v319
      %354 = vst.msk [vmem:[%s339 + $0x99] sm:$0xff] %vm340, %v320
      %355 = vst.msk [vmem:[%s339 + $0xa9] sm:$0xff] %vm340, %v321
      %356 = vst.msk [vmem:[%s339 + $0xb1] sm:$0xff] %vm340, %v322
      %357 = vst.msk [vmem:[%s339 + $0xc1] sm:$0xff] %vm340, %v323
      %358 = vst.msk [vmem:[%s339 + $0xc9] sm:$0xff] %vm340, %v324
      %359 = vst.msk [vmem:[%s339 + $0xd9] sm:$0xff] %vm340, %v325
      %360 = vst.msk [vmem:[%s339 + $0xe1] sm:$0xff] %vm340, %v326
      %361 = vst.msk [vmem:[%s339 + $0xf1] sm:$0xff] %vm340, %v327
      %362 = vst.msk [vmem:[%s339 + $0xf9] sm:$0xff] %vm340, %v328
      %363 = vst.msk [vmem:[%s339 + $0x109] sm:$0xff] %vm340, %v329
      %364 = vst.msk [vmem:[%s339 + $0x111] sm:$0xff] %vm340, %v330
      %365 = vst.msk [vmem:[%s339 + $0x121] sm:$0xff] %vm340, %v331
      %366 = vst.msk [vmem:[%s339 + $0x129] sm:$0xff] %vm340, %v332
      %367 = vst.msk [vmem:[%s339 + $0x139] sm:$0xff] %vm340, %v333
      %368 = vst.msk [vmem:[%s339 + $0x141] sm:$0xff] %vm340, %v334
      %369 = vst.msk [vmem:[%s339 + $0x151] sm:$0xff] %vm340, %v335
      %370 = vst.msk [vmem:[%s339 + $0x159] sm:$0xff] %vm340, %v336
      %371 = vst.msk [vmem:[%s339 + $0x169] sm:$0xff] %vm340, %v337
      %372 = vst.msk [vmem:[%s339 + $0x171] sm:$0xff] %vm340, %v338
      %v373 = vld [vmem:[%s212] sm:$0xf]
      %v374 = vld [vmem:[%s212 + $0x4] sm:$0xf]
      %v375 = vld [vmem:[%s212 + $0x8] sm:$0xf]
      %v376 = vld [vmem:[%s212 + $0xc] sm:$0xf]
      %v377 = vld [vmem:[%s212 + $0x10] sm:$0xf]
      %v378 = vld [vmem:[%s212 + $0x14] sm:$0xf]
      %v379 = vld [vmem:[%s212 + $0x18] sm:$0xf]
      %v380 = vld [vmem:[%s212 + $0x1c] sm:$0xf]
      %v381 = vld [vmem:[%s212 + $0x20] sm:$0xf]
      %v382 = vld [vmem:[%s212 + $0x24] sm:$0xf]
      %v383 = vld [vmem:[%s212 + $0x28] sm:$0xf]
      %v384 = vld [vmem:[%s212 + $0x2c] sm:$0xf]
      %v385 = vld [vmem:[%s212 + $0x30] sm:$0xf]
      %v386 = vld [vmem:[%s212 + $0x34] sm:$0xf]
      %v387 = vld [vmem:[%s212 + $0x38] sm:$0xf]
      %v388 = vld [vmem:[%s212 + $0x3c] sm:$0xf]
      %v389 = vld [vmem:[%s212 + $0x40] sm:$0xf]
      %v390 = vld [vmem:[%s212 + $0x44] sm:$0xf]
      %v391 = vld [vmem:[%s212 + $0x48] sm:$0xf]
      %v392 = vld [vmem:[%s212 + $0x4c] sm:$0xf]
      %v393 = vld [vmem:[%s212 + $0x50] sm:$0xf]
      %v394 = vld [vmem:[%s212 + $0x54] sm:$0xf]
      %v395 = vld [vmem:[%s212 + $0x58] sm:$0xf]
      %v396 = vld [vmem:[%s212 + $0x5c] sm:$0xf]
      %v397 = vld [vmem:[%s212 + $0x60] sm:$0xf]
      %v398 = vld [vmem:[%s212 + $0x64] sm:$0xf]
      %v399 = vld [vmem:[%s212 + $0x68] sm:$0xf]
      %v400 = vld [vmem:[%s212 + $0x6c] sm:$0xf]
      %v401 = vld [vmem:[%s212 + $0x70] sm:$0xf]
      %v402 = vld [vmem:[%s212 + $0x74] sm:$0xf]
      %v403 = vld [vmem:[%s212 + $0x78] sm:$0xf]
      %v404 = vld [vmem:[%s212 + $0x7c] sm:$0xf]
      %v405 = vunpack.c.l.bf16 %v373
      %v406 = vunpack.c.l.bf16 %v374
      %v407 = vunpack.c.l.bf16 %v375
      %v408 = vunpack.c.l.bf16 %v376
      %v409 = vunpack.c.l.bf16 %v377
      %v410 = vunpack.c.l.bf16 %v378
      %v411 = vunpack.c.l.bf16 %v379
      %v412 = vunpack.c.l.bf16 %v380
      %v413 = vunpack.c.l.bf16 %v381
      %v414 = vunpack.c.l.bf16 %v382
      %v415 = vunpack.c.l.bf16 %v383
      %v416 = vunpack.c.l.bf16 %v384
      %v417 = vunpack.c.l.bf16 %v385
      %v418 = vunpack.c.l.bf16 %v386
      %v419 = vunpack.c.l.bf16 %v387
      %v420 = vunpack.c.l.bf16 %v388
      %v421 = vunpack.c.l.bf16 %v389
      %v422 = vunpack.c.l.bf16 %v390
      %v423 = vunpack.c.l.bf16 %v391
      %v424 = vunpack.c.l.bf16 %v392
      %v425 = vunpack.c.l.bf16 %v393
      %v426 = vunpack.c.l.bf16 %v394
      %v427 = vunpack.c.l.bf16 %v395
      %v428 = vunpack.c.l.bf16 %v396
      %v429 = vunpack.c.l.bf16 %v397
      %v430 = vunpack.c.l.bf16 %v398
      %v431 = vunpack.c.l.bf16 %v399
      %v432 = vunpack.c.l.bf16 %v400
      %v433 = vunpack.c.l.bf16 %v401
      %v434 = vunpack.c.l.bf16 %v402
      %v435 = vunpack.c.l.bf16 %v403
      %v436 = vunpack.c.l.bf16 %v404
      %469 = vrot.lane.b32.xlu0 %v405, 8
      %v470 = vpop.permute.xlu0 %469
      %471 = vrot.lane.b32.xlu0 %v406, 8
      %v472 = vpop.permute.xlu0 %471
      %473 = vrot.lane.b32.xlu0 %v407, 8
      %v474 = vpop.permute.xlu0 %473
      %475 = vrot.lane.b32.xlu0 %v408, 8
      %v476 = vpop.permute.xlu0 %475
      %477 = vrot.lane.b32.xlu0 %v409, 8
      %v478 = vpop.permute.xlu0 %477
      %479 = vrot.lane.b32.xlu0 %v410, 8
      %v480 = vpop.permute.xlu0 %479
      %481 = vrot.lane.b32.xlu0 %v411, 8
      %v482 = vpop.permute.xlu0 %481
      %483 = vrot.lane.b32.xlu0 %v412, 8
      %v484 = vpop.permute.xlu0 %483
      %485 = vrot.lane.b32.xlu0 %v413, 8
      %v486 = vpop.permute.xlu0 %485
      %487 = vrot.lane.b32.xlu0 %v414, 8
      %v488 = vpop.permute.xlu0 %487
      %489 = vrot.lane.b32.xlu0 %v415, 8
      %v490 = vpop.permute.xlu0 %489
      %491 = vrot.lane.b32.xlu0 %v416, 8
      %v492 = vpop.permute.xlu0 %491
      %493 = vrot.lane.b32.xlu0 %v417, 8
      %v494 = vpop.permute.xlu0 %493
      %495 = vrot.lane.b32.xlu0 %v418, 8
      %v496 = vpop.permute.xlu0 %495
      %497 = vrot.lane.b32.xlu0 %v419, 8
      %v498 = vpop.permute.xlu0 %497
      %499 = vrot.lane.b32.xlu0 %v420, 8
      %v500 = vpop.permute.xlu0 %499
      %501 = vrot.lane.b32.xlu0 %v421, 8
      %v502 = vpop.permute.xlu0 %501
      %503 = vrot.lane.b32.xlu0 %v422, 8
      %v504 = vpop.permute.xlu0 %503
      %505 = vrot.lane.b32.xlu0 %v423, 8
      %v506 = vpop.permute.xlu0 %505
      %507 = vrot.lane.b32.xlu0 %v424, 8
      %v508 = vpop.permute.xlu0 %507
      %509 = vrot.lane.b32.xlu0 %v425, 8
      %v510 = vpop.permute.xlu0 %509
      %511 = vrot.lane.b32.xlu0 %v426, 8
      %v512 = vpop.permute.xlu0 %511
      %513 = vrot.lane.b32.xlu0 %v427, 8
      %v514 = vpop.permute.xlu0 %513
      %515 = vrot.lane.b32.xlu0 %v428, 8
      %v516 = vpop.permute.xlu0 %515
      %517 = vrot.lane.b32.xlu0 %v429, 8
      %v518 = vpop.permute.xlu0 %517
      %519 = vrot.lane.b32.xlu0 %v430, 8
      %v520 = vpop.permute.xlu0 %519
      %521 = vrot.lane.b32.xlu0 %v431, 8
      %v522 = vpop.permute.xlu0 %521
      %523 = vrot.lane.b32.xlu0 %v432, 8
      %v524 = vpop.permute.xlu0 %523
      %525 = vrot.lane.b32.xlu0 %v433, 8
      %v526 = vpop.permute.xlu0 %525
      %527 = vrot.lane.b32.xlu0 %v434, 8
      %v528 = vpop.permute.xlu0 %527
      %529 = vrot.lane.b32.xlu0 %v435, 8
      %v530 = vpop.permute.xlu0 %529
      %531 = vrot.lane.b32.xlu0 %v436, 8
      %v532 = vpop.permute.xlu0 %531
      %vm565 = vcmask 130112
      %566 = vst.msk [vmem:[%s339 + $0x1] sm:$0xff] %vm565, %v470
      %567 = vst.msk [vmem:[%s339 + $0x9] sm:$0xff] %vm565, %v472
      %568 = vst.msk [vmem:[%s339 + $0x19] sm:$0xff] %vm565, %v474
      %569 = vst.msk [vmem:[%s339 + $0x21] sm:$0xff] %vm565, %v476
      %570 = vst.msk [vmem:[%s339 + $0x31] sm:$0xff] %vm565, %v478
      %571 = vst.msk [vmem:[%s339 + $0x39] sm:$0xff] %vm565, %v480
      %572 = vst.msk [vmem:[%s339 + $0x49] sm:$0xff] %vm565, %v482
      %573 = vst.msk [vmem:[%s339 + $0x51] sm:$0xff] %vm565, %v484
      %574 = vst.msk [vmem:[%s339 + $0x61] sm:$0xff] %vm565, %v486
      %575 = vst.msk [vmem:[%s339 + $0x69] sm:$0xff] %vm565, %v488
      %576 = vst.msk [vmem:[%s339 + $0x79] sm:$0xff] %vm565, %v490
      %577 = vst.msk [vmem:[%s339 + $0x81] sm:$0xff] %vm565, %v492
      %578 = vst.msk [vmem:[%s339 + $0x91] sm:$0xff] %vm565, %v494
      %579 = vst.msk [vmem:[%s339 + $0x99] sm:$0xff] %vm565, %v496
      %580 = vst.msk [vmem:[%s339 + $0xa9] sm:$0xff] %vm565, %v498
      %581 = vst.msk [vmem:[%s339 + $0xb1] sm:$0xff] %vm565, %v500
      %582 = vst.msk [vmem:[%s339 + $0xc1] sm:$0xff] %vm565, %v502
      %583 = vst.msk [vmem:[%s339 + $0xc9] sm:$0xff] %vm565, %v504
      %584 = vst.msk [vmem:[%s339 + $0xd9] sm:$0xff] %vm565, %v506
      %585 = vst.msk [vmem:[%s339 + $0xe1] sm:$0xff] %vm565, %v508
      %586 = vst.msk [vmem:[%s339 + $0xf1] sm:$0xff] %vm565, %v510
      %587 = vst.msk [vmem:[%s339 + $0xf9] sm:$0xff] %vm565, %v512
      %588 = vst.msk [vmem:[%s339 + $0x109] sm:$0xff] %vm565, %v514
      %589 = vst.msk [vmem:[%s339 + $0x111] sm:$0xff] %vm565, %v516
      %590 = vst.msk [vmem:[%s339 + $0x121] sm:$0xff] %vm565, %v518
      %591 = vst.msk [vmem:[%s339 + $0x129] sm:$0xff] %vm565, %v520
      %592 = vst.msk [vmem:[%s339 + $0x139] sm:$0xff] %vm565, %v522
      %593 = vst.msk [vmem:[%s339 + $0x141] sm:$0xff] %vm565, %v524
      %594 = vst.msk [vmem:[%s339 + $0x151] sm:$0xff] %vm565, %v526
      %595 = vst.msk [vmem:[%s339 + $0x159] sm:$0xff] %vm565, %v528
      %596 = vst.msk [vmem:[%s339 + $0x169] sm:$0xff] %vm565, %v530
      %597 = vst.msk [vmem:[%s339 + $0x171] sm:$0xff] %vm565, %v532
      %598 = vst.msk [vmem:[#allocation8] sm:$0xff] %vm340, 0.0
      %599 = vst.msk [vmem:[#allocation8 + $0x8] sm:$0xff] %vm340, 0.0
      %600 = vst.msk [vmem:[#allocation8 + $0x10] sm:$0xff] %vm340, 0.0
      %601 = vst.msk [vmem:[#allocation8 + $0x18] sm:$0xff] %vm340, 0.0
      %602 = vst.msk [vmem:[#allocation8 + $0x20] sm:$0xff] %vm340, 0.0
      %603 = vst.msk [vmem:[#allocation8 + $0x28] sm:$0xff] %vm340, 0.0
      %604 = vst.msk [vmem:[#allocation8 + $0x30] sm:$0xff] %vm340, 0.0
      %605 = vst.msk [vmem:[#allocation8 + $0x38] sm:$0xff] %vm340, 0.0
      %606 = vst.msk [vmem:[#allocation8 + $0x40] sm:$0xff] %vm340, 0.0
      %607 = vst.msk [vmem:[#allocation8 + $0x48] sm:$0xff] %vm340, 0.0
      %608 = vst.msk [vmem:[#allocation8 + $0x50] sm:$0xff] %vm340, 0.0
      %609 = vst.msk [vmem:[#allocation8 + $0x58] sm:$0xff] %vm340, 0.0
      %610 = vst.msk [vmem:[#allocation8 + $0x60] sm:$0xff] %vm340, 0.0
      %611 = vst.msk [vmem:[#allocation8 + $0x68] sm:$0xff] %vm340, 0.0
      %612 = vst.msk [vmem:[#allocation8 + $0x70] sm:$0xff] %vm340, 0.0
      %613 = vst.msk [vmem:[#allocation8 + $0x78] sm:$0xff] %vm340, 0.0
      %614 = vst.msk [vmem:[#allocation8 + $0x80] sm:$0xff] %vm340, 0.0
      %615 = vst.msk [vmem:[#allocation8 + $0x88] sm:$0xff] %vm340, 0.0
      %616 = vst.msk [vmem:[#allocation8 + $0x90] sm:$0xff] %vm340, 0.0
      %617 = vst.msk [vmem:[#allocation8 + $0x98] sm:$0xff] %vm340, 0.0
      %618 = vst.msk [vmem:[#allocation8 + $0xa0] sm:$0xff] %vm340, 0.0
      %619 = vst.msk [vmem:[#allocation8 + $0xa8] sm:$0xff] %vm340, 0.0
      %620 = vst.msk [vmem:[#allocation8 + $0xb0] sm:$0xff] %vm340, 0.0
      %621 = vst.msk [vmem:[#allocation8 + $0xb8] sm:$0xff] %vm340, 0.0
      %622 = vst.msk [vmem:[#allocation8 + $0xc0] sm:$0xff] %vm340, 0.0
      %623 = vst.msk [vmem:[#allocation8 + $0xc8] sm:$0xff] %vm340, 0.0
      %624 = vst.msk [vmem:[#allocation8 + $0xd0] sm:$0xff] %vm340, 0.0
      %625 = vst.msk [vmem:[#allocation8 + $0xd8] sm:$0xff] %vm340, 0.0
      %626 = vst.msk [vmem:[#allocation8 + $0xe0] sm:$0xff] %vm340, 0.0
      %627 = vst.msk [vmem:[#allocation8 + $0xe8] sm:$0xff] %vm340, 0.0
      %628 = vst.msk [vmem:[#allocation8 + $0xf0] sm:$0xff] %vm340, 0.0
      %629 = vst.msk [vmem:[#allocation8 + $0xf8] sm:$0xff] %vm340, 0.0
      %v630 = vld [vmem:[#allocation2] sm:$0xff]
      %v631 = vld [vmem:[#allocation2 + $0x8] sm:$0xff]
      %v632 = vld [vmem:[#allocation2 + $0x18] sm:$0xff]
      %v633 = vld [vmem:[#allocation2 + $0x20] sm:$0xff]
      %v634 = vld [vmem:[#allocation2 + $0x30] sm:$0xff]
      %v635 = vld [vmem:[#allocation2 + $0x38] sm:$0xff]
      %v636 = vld [vmem:[#allocation2 + $0x48] sm:$0xff]
      %v637 = vld [vmem:[#allocation2 + $0x50] sm:$0xff]
      %v638 = vld [vmem:[#allocation2 + $0x60] sm:$0xff]
      %v639 = vld [vmem:[#allocation2 + $0x68] sm:$0xff]
      %v640 = vld [vmem:[#allocation2 + $0x78] sm:$0xff]
      %v641 = vld [vmem:[#allocation2 + $0x80] sm:$0xff]
      %v642 = vld [vmem:[#allocation2 + $0x90] sm:$0xff]
      %v643 = vld [vmem:[#allocation2 + $0x98] sm:$0xff]
      %v644 = vld [vmem:[#allocation2 + $0xa8] sm:$0xff]
      %v645 = vld [vmem:[#allocation2 + $0xb0] sm:$0xff]
      %v646 = vld [vmem:[#allocation2 + $0xc0] sm:$0xff]
      %v647 = vld [vmem:[#allocation2 + $0xc8] sm:$0xff]
      %v648 = vld [vmem:[#allocation2 + $0xd8] sm:$0xff]
      %v649 = vld [vmem:[#allocation2 + $0xe0] sm:$0xff]
      %v650 = vld [vmem:[#allocation2 + $0xf0] sm:$0xff]
      %v651 = vld [vmem:[#allocation2 + $0xf8] sm:$0xff]
      %v652 = vld [vmem:[#allocation2 + $0x108] sm:$0xff]
      %v653 = vld [vmem:[#allocation2 + $0x110] sm:$0xff]
      %v654 = vld [vmem:[#allocation2 + $0x120] sm:$0xff]
      %v655 = vld [vmem:[#allocation2 + $0x128] sm:$0xff]
      %v656 = vld [vmem:[#allocation2 + $0x138] sm:$0xff]
      %v657 = vld [vmem:[#allocation2 + $0x140] sm:$0xff]
      %v658 = vld [vmem:[#allocation2 + $0x150] sm:$0xff]
      %v659 = vld [vmem:[#allocation2 + $0x158] sm:$0xff]
      %v660 = vld [vmem:[#allocation2 + $0x168] sm:$0xff]
      %v661 = vld [vmem:[#allocation2 + $0x170] sm:$0xff]
      %v662 = vld [vmem:[#allocation2 + $0x180] sm:$0xff]
      %v663 = vld [vmem:[#allocation2 + $0x188] sm:$0xff]
      %v664 = vld [vmem:[#allocation2 + $0x198] sm:$0xff]
      %v665 = vld [vmem:[#allocation2 + $0x1a0] sm:$0xff]
      %666 = vst.msk [vmem:[#allocation3] sm:$0xff] %vm219, %v630
      %667 = vst.msk [vmem:[#allocation3 + $0x8] sm:$0xff] %vm219, %v631
      %668 = vst.msk [vmem:[#allocation3 + $0x10] sm:$0xff] %vm219, %v632
      %669 = vst.msk [vmem:[#allocation3 + $0x18] sm:$0xff] %vm219, %v633
      %670 = vst.msk [vmem:[#allocation3 + $0x20] sm:$0xff] %vm219, %v634
      %671 = vst.msk [vmem:[#allocation3 + $0x28] sm:$0xff] %vm219, %v635
      %672 = vst.msk [vmem:[#allocation3 + $0x30] sm:$0xff] %vm219, %v636
      %673 = vst.msk [vmem:[#allocation3 + $0x38] sm:$0xff] %vm219, %v637
      %674 = vst.msk [vmem:[#allocation3 + $0x40] sm:$0xff] %vm219, %v638
      %675 = vst.msk [vmem:[#allocation3 + $0x48] sm:$0xff] %vm219, %v639
      %676 = vst.msk [vmem:[#allocation3 + $0x50] sm:$0xff] %vm219, %v640
      %677 = vst.msk [vmem:[#allocation3 + $0x58] sm:$0xff] %vm219, %v641
      %678 = vst.msk [vmem:[#allocation3 + $0x60] sm:$0xff] %vm219, %v642
      %679 = vst.msk [vmem:[#allocation3 + $0x68] sm:$0xff] %vm219, %v643
      %680 = vst.msk [vmem:[#allocation3 + $0x70] sm:$0xff] %vm219, %v644
      %681 = vst.msk [vmem:[#allocation3 + $0x78] sm:$0xff] %vm219, %v645
      %682 = vst.msk [vmem:[#allocation3 + $0x80] sm:$0xff] %vm219, %v646
      %683 = vst.msk [vmem:[#allocation3 + $0x88] sm:$0xff] %vm219, %v647
      %684 = vst.msk [vmem:[#allocation3 + $0x90] sm:$0xff] %vm219, %v648
      %685 = vst.msk [vmem:[#allocation3 + $0x98] sm:$0xff] %vm219, %v649
      %686 = vst.msk [vmem:[#allocation3 + $0xa0] sm:$0xff] %vm219, %v650
      %687 = vst.msk [vmem:[#allocation3 + $0xa8] sm:$0xff] %vm219, %v651
      %688 = vst.msk [vmem:[#allocation3 + $0xb0] sm:$0xff] %vm219, %v652
      %689 = vst.msk [vmem:[#allocation3 + $0xb8] sm:$0xff] %vm219, %v653
      %690 = vst.msk [vmem:[#allocation3 + $0xc0] sm:$0xff] %vm219, %v654
      %691 = vst.msk [vmem:[#allocation3 + $0xc8] sm:$0xff] %vm219, %v655
      %692 = vst.msk [vmem:[#allocation3 + $0xd0] sm:$0xff] %vm219, %v656
      %693 = vst.msk [vmem:[#allocation3 + $0xd8] sm:$0xff] %vm219, %v657
      %694 = vst.msk [vmem:[#allocation3 + $0xe0] sm:$0xff] %vm219, %v658
      %695 = vst.msk [vmem:[#allocation3 + $0xe8] sm:$0xff] %vm219, %v659
      %696 = vst.msk [vmem:[#allocation3 + $0xf0] sm:$0xff] %vm219, %v660
      %697 = vst.msk [vmem:[#allocation3 + $0xf8] sm:$0xff] %vm219, %v661
      %698 = vst.msk [vmem:[#allocation3 + $0x100] sm:$0xff] %vm219, %v662
      %699 = vst.msk [vmem:[#allocation3 + $0x108] sm:$0xff] %vm219, %v663
      %700 = vst.msk [vmem:[#allocation3 + $0x110] sm:$0xff] %vm219, %v664
      %701 = vst.msk [vmem:[#allocation3 + $0x118] sm:$0xff] %vm219, %v665
      %v702 = vld [vmem:[#allocation3] sm:$0xff]
      %v703 = vld [vmem:[#allocation3 + $0x8] sm:$0xff]
      %v704 = vld [vmem:[#allocation3 + $0x10] sm:$0xff]
      %v705 = vld [vmem:[#allocation3 + $0x18] sm:$0xff]
      %v706 = vld [vmem:[#allocation3 + $0x20] sm:$0xff]
      %v707 = vld [vmem:[#allocation3 + $0x28] sm:$0xff]
      %v708 = vld [vmem:[#allocation3 + $0x30] sm:$0xff]
      %v709 = vld [vmem:[#allocation3 + $0x38] sm:$0xff]
      %v710 = vld [vmem:[#allocation3 + $0x40] sm:$0xff]
      %v711 = vld [vmem:[#allocation3 + $0x48] sm:$0xff]
      %v712 = vld [vmem:[#allocation3 + $0x50] sm:$0xff]
      %v713 = vld [vmem:[#allocation3 + $0x58] sm:$0xff]
      %v714 = vld [vmem:[#allocation3 + $0x60] sm:$0xff]
      %v715 = vld [vmem:[#allocation3 + $0x68] sm:$0xff]
      %v716 = vld [vmem:[#allocation3 + $0x70] sm:$0xff]
      %v717 = vld [vmem:[#allocation3 + $0x78] sm:$0xff]
      %v718 = vld [vmem:[#allocation3 + $0x80] sm:$0xff]
      %v719 = vld [vmem:[#allocation3 + $0x88] sm:$0xff]
      %v720 = vld [vmem:[#allocation3 + $0x90] sm:$0xff]
      %v721 = vld [vmem:[#allocation3 + $0x98] sm:$0xff]
      %v722 = vld [vmem:[#allocation3 + $0xa0] sm:$0xff]
      %v723 = vld [vmem:[#allocation3 + $0xa8] sm:$0xff]
      %v724 = vld [vmem:[#allocation3 + $0xb0] sm:$0xff]
      %v725 = vld [vmem:[#allocation3 + $0xb8] sm:$0xff]
      %v726 = vld [vmem:[#allocation3 + $0xc0] sm:$0xff]
      %v727 = vld [vmem:[#allocation3 + $0xc8] sm:$0xff]
      %v728 = vld [vmem:[#allocation3 + $0xd0] sm:$0xff]
      %v729 = vld [vmem:[#allocation3 + $0xd8] sm:$0xff]
      %v730 = vld [vmem:[#allocation3 + $0xe0] sm:$0xff]
      %v731 = vld [vmem:[#allocation3 + $0xe8] sm:$0xff]
      %v732 = vld [vmem:[#allocation3 + $0xf0] sm:$0xff]
      %v733 = vld [vmem:[#allocation3 + $0xf8] sm:$0xff]
      %v734 = vpack.c.bf16 %v702, %v702
      %v735 = vpack.c.bf16 %v703, %v703
      %v736 = vpack.c.bf16 %v704, %v704
      %v737 = vpack.c.bf16 %v705, %v705
      %v738 = vpack.c.bf16 %v706, %v706
      %v739 = vpack.c.bf16 %v707, %v707
      %v740 = vpack.c.bf16 %v708, %v708
      %v741 = vpack.c.bf16 %v709, %v709
      %v742 = vpack.c.bf16 %v710, %v710
      %v743 = vpack.c.bf16 %v711, %v711
      %v744 = vpack.c.bf16 %v712, %v712
      %v745 = vpack.c.bf16 %v713, %v713
      %v746 = vpack.c.bf16 %v714, %v714
      %v747 = vpack.c.bf16 %v715, %v715
      %v748 = vpack.c.bf16 %v716, %v716
      %v749 = vpack.c.bf16 %v717, %v717
      %v750 = vpack.c.bf16 %v718, %v718
      %v751 = vpack.c.bf16 %v719, %v719
      %v752 = vpack.c.bf16 %v720, %v720
      %v753 = vpack.c.bf16 %v721, %v721
      %v754 = vpack.c.bf16 %v722, %v722
      %v755 = vpack.c.bf16 %v723, %v723
      %v756 = vpack.c.bf16 %v724, %v724
      %v757 = vpack.c.bf16 %v725, %v725
      %v758 = vpack.c.bf16 %v726, %v726
      %v759 = vpack.c.bf16 %v727, %v727
      %v760 = vpack.c.bf16 %v728, %v728
      %v761 = vpack.c.bf16 %v729, %v729
      %v762 = vpack.c.bf16 %v730, %v730
      %v763 = vpack.c.bf16 %v731, %v731
      %v764 = vpack.c.bf16 %v732, %v732
      %v765 = vpack.c.bf16 %v733, %v733
      %vm766 = vcmask 125952
      %767 = vst.msk [vmem:[#allocation4] sm:$0xf] %vm766, %v734
      %768 = vst.msk [vmem:[#allocation4 + $0x4] sm:$0xf] %vm766, %v735
      %769 = vst.msk [vmem:[#allocation4 + $0x8] sm:$0xf] %vm766, %v736
      %770 = vst.msk [vmem:[#allocation4 + $0xc] sm:$0xf] %vm766, %v737
      %771 = vst.msk [vmem:[#allocation4 + $0x10] sm:$0xf] %vm766, %v738
      %772 = vst.msk [vmem:[#allocation4 + $0x14] sm:$0xf] %vm766, %v739
      %773 = vst.msk [vmem:[#allocation4 + $0x18] sm:$0xf] %vm766, %v740
      %774 = vst.msk [vmem:[#allocation4 + $0x1c] sm:$0xf] %vm766, %v741
      %775 = vst.msk [vmem:[#allocation4 + $0x20] sm:$0xf] %vm766, %v742
      %776 = vst.msk [vmem:[#allocation4 + $0x24] sm:$0xf] %vm766, %v743
      %777 = vst.msk [vmem:[#allocation4 + $0x28] sm:$0xf] %vm766, %v744
      %778 = vst.msk [vmem:[#allocation4 + $0x2c] sm:$0xf] %vm766, %v745
      %779 = vst.msk [vmem:[#allocation4 + $0x30] sm:$0xf] %vm766, %v746
      %780 = vst.msk [vmem:[#allocation4 + $0x34] sm:$0xf] %vm766, %v747
      %781 = vst.msk [vmem:[#allocation4 + $0x38] sm:$0xf] %vm766, %v748
      %782 = vst.msk [vmem:[#allocation4 + $0x3c] sm:$0xf] %vm766, %v749
      %783 = vst.msk [vmem:[#allocation4 + $0x40] sm:$0xf] %vm766, %v750
      %784 = vst.msk [vmem:[#allocation4 + $0x44] sm:$0xf] %vm766, %v751
      %785 = vst.msk [vmem:[#allocation4 + $0x48] sm:$0xf] %vm766, %v752
      %786 = vst.msk [vmem:[#allocation4 + $0x4c] sm:$0xf] %vm766, %v753
      %787 = vst.msk [vmem:[#allocation4 + $0x50] sm:$0xf] %vm766, %v754
      %788 = vst.msk [vmem:[#allocation4 + $0x54] sm:$0xf] %vm766, %v755
      %789 = vst.msk [vmem:[#allocation4 + $0x58] sm:$0xf] %vm766, %v756
      %790 = vst.msk [vmem:[#allocation4 + $0x5c] sm:$0xf] %vm766, %v757
      %791 = vst.msk [vmem:[#allocation4 + $0x60] sm:$0xf] %vm766, %v758
      %792 = vst.msk [vmem:[#allocation4 + $0x64] sm:$0xf] %vm766, %v759
      %793 = vst.msk [vmem:[#allocation4 + $0x68] sm:$0xf] %vm766, %v760
      %794 = vst.msk [vmem:[#allocation4 + $0x6c] sm:$0xf] %vm766, %v761
      %795 = vst.msk [vmem:[#allocation4 + $0x70] sm:$0xf] %vm766, %v762
      %796 = vst.msk [vmem:[#allocation4 + $0x74] sm:$0xf] %vm766, %v763
      %797 = vst.msk [vmem:[#allocation4 + $0x78] sm:$0xf] %vm766, %v764
      %798 = vst.msk [vmem:[#allocation4 + $0x7c] sm:$0xf] %vm766, %v765
      %s799 = scalar_lea.vmem [#allocation3], 16
      %v800 = vld [vmem:[%s799] sm:$0xff]
      %v801 = vld [vmem:[%s799 + $0x8] sm:$0xff]
      %v802 = vld [vmem:[%s799 + $0x10] sm:$0xff]
      %v803 = vld [vmem:[%s799 + $0x18] sm:$0xff]
      %v804 = vld [vmem:[%s799 + $0x20] sm:$0xff]
      %v805 = vld [vmem:[%s799 + $0x28] sm:$0xff]
      %v806 = vld [vmem:[%s799 + $0x30] sm:$0xff]
      %v807 = vld [vmem:[%s799 + $0x38] sm:$0xff]
      %v808 = vld [vmem:[%s799 + $0x40] sm:$0xff]
      %v809 = vld [vmem:[%s799 + $0x48] sm:$0xff]
      %v810 = vld [vmem:[%s799 + $0x50] sm:$0xff]
      %v811 = vld [vmem:[%s799 + $0x58] sm:$0xff]
      %v812 = vld [vmem:[%s799 + $0x60] sm:$0xff]
      %v813 = vld [vmem:[%s799 + $0x68] sm:$0xff]
      %v814 = vld [vmem:[%s799 + $0x70] sm:$0xff]
      %v815 = vld [vmem:[%s799 + $0x78] sm:$0xff]
      %v816 = vld [vmem:[%s799 + $0x80] sm:$0xff]
      %v817 = vld [vmem:[%s799 + $0x88] sm:$0xff]
      %v818 = vld [vmem:[%s799 + $0x90] sm:$0xff]
      %v819 = vld [vmem:[%s799 + $0x98] sm:$0xff]
      %v820 = vld [vmem:[%s799 + $0xa0] sm:$0xff]
      %v821 = vld [vmem:[%s799 + $0xa8] sm:$0xff]
      %v822 = vld [vmem:[%s799 + $0xb0] sm:$0xff]
      %v823 = vld [vmem:[%s799 + $0xb8] sm:$0xff]
      %v824 = vld [vmem:[%s799 + $0xc0] sm:$0xff]
      %v825 = vld [vmem:[%s799 + $0xc8] sm:$0xff]
      %v826 = vld [vmem:[%s799 + $0xd0] sm:$0xff]
      %v827 = vld [vmem:[%s799 + $0xd8] sm:$0xff]
      %v828 = vld [vmem:[%s799 + $0xe0] sm:$0xff]
      %v829 = vld [vmem:[%s799 + $0xe8] sm:$0xff]
      %v830 = vld [vmem:[%s799 + $0xf0] sm:$0xff]
      %v831 = vld [vmem:[%s799 + $0xf8] sm:$0xff]
      %v832 = vpack.c.bf16 %v800, %v800
      %v833 = vpack.c.bf16 %v801, %v801
      %v834 = vpack.c.bf16 %v802, %v802
      %v835 = vpack.c.bf16 %v803, %v803
      %v836 = vpack.c.bf16 %v804, %v804
      %v837 = vpack.c.bf16 %v805, %v805
      %v838 = vpack.c.bf16 %v806, %v806
      %v839 = vpack.c.bf16 %v807, %v807
      %v840 = vpack.c.bf16 %v808, %v808
      %v841 = vpack.c.bf16 %v809, %v809
      %v842 = vpack.c.bf16 %v810, %v810
      %v843 = vpack.c.bf16 %v811, %v811
      %v844 = vpack.c.bf16 %v812, %v812
      %v845 = vpack.c.bf16 %v813, %v813
      %v846 = vpack.c.bf16 %v814, %v814
      %v847 = vpack.c.bf16 %v815, %v815
      %v848 = vpack.c.bf16 %v816, %v816
      %v849 = vpack.c.bf16 %v817, %v817
      %v850 = vpack.c.bf16 %v818, %v818
      %v851 = vpack.c.bf16 %v819, %v819
      %v852 = vpack.c.bf16 %v820, %v820
      %v853 = vpack.c.bf16 %v821, %v821
      %v854 = vpack.c.bf16 %v822, %v822
      %v855 = vpack.c.bf16 %v823, %v823
      %v856 = vpack.c.bf16 %v824, %v824
      %v857 = vpack.c.bf16 %v825, %v825
      %v858 = vpack.c.bf16 %v826, %v826
      %v859 = vpack.c.bf16 %v827, %v827
      %v860 = vpack.c.bf16 %v828, %v828
      %v861 = vpack.c.bf16 %v829, %v829
      %v862 = vpack.c.bf16 %v830, %v830
      %v863 = vpack.c.bf16 %v831, %v831
      %896 = vrot.lane.b32.xlu0 %v832, 16
      %v897 = vpop.permute.xlu0 %896
      %898 = vrot.lane.b32.xlu0 %v833, 16
      %v899 = vpop.permute.xlu0 %898
      %900 = vrot.lane.b32.xlu0 %v834, 16
      %v901 = vpop.permute.xlu0 %900
      %902 = vrot.lane.b32.xlu0 %v835, 16
      %v903 = vpop.permute.xlu0 %902
      %904 = vrot.lane.b32.xlu0 %v836, 16
      %v905 = vpop.permute.xlu0 %904
      %906 = vrot.lane.b32.xlu0 %v837, 16
      %v907 = vpop.permute.xlu0 %906
      %908 = vrot.lane.b32.xlu0 %v838, 16
      %v909 = vpop.permute.xlu0 %908
      %910 = vrot.lane.b32.xlu0 %v839, 16
      %v911 = vpop.permute.xlu0 %910
      %912 = vrot.lane.b32.xlu0 %v840, 16
      %v913 = vpop.permute.xlu0 %912
      %914 = vrot.lane.b32.xlu0 %v841, 16
      %v915 = vpop.permute.xlu0 %914
      %916 = vrot.lane.b32.xlu0 %v842, 16
      %v917 = vpop.permute.xlu0 %916
      %918 = vrot.lane.b32.xlu0 %v843, 16
      %v919 = vpop.permute.xlu0 %918
      %920 = vrot.lane.b32.xlu0 %v844, 16
      %v921 = vpop.permute.xlu0 %920
      %922 = vrot.lane.b32.xlu0 %v845, 16
      %v923 = vpop.permute.xlu0 %922
      %924 = vrot.lane.b32.xlu0 %v846, 16
      %v925 = vpop.permute.xlu0 %924
      %926 = vrot.lane.b32.xlu0 %v847, 16
      %v927 = vpop.permute.xlu0 %926
      %928 = vrot.lane.b32.xlu0 %v848, 16
      %v929 = vpop.permute.xlu0 %928
      %930 = vrot.lane.b32.xlu0 %v849, 16
      %v931 = vpop.permute.xlu0 %930
      %932 = vrot.lane.b32.xlu0 %v850, 16
      %v933 = vpop.permute.xlu0 %932
      %934 = vrot.lane.b32.xlu0 %v851, 16
      %v935 = vpop.permute.xlu0 %934
      %936 = vrot.lane.b32.xlu0 %v852, 16
      %v937 = vpop.permute.xlu0 %936
      %938 = vrot.lane.b32.xlu0 %v853, 16
      %v939 = vpop.permute.xlu0 %938
      %940 = vrot.lane.b32.xlu0 %v854, 16
      %v941 = vpop.permute.xlu0 %940
      %942 = vrot.lane.b32.xlu0 %v855, 16
      %v943 = vpop.permute.xlu0 %942
      %944 = vrot.lane.b32.xlu0 %v856, 16
      %v945 = vpop.permute.xlu0 %944
      %946 = vrot.lane.b32.xlu0 %v857, 16
      %v947 = vpop.permute.xlu0 %946
      %948 = vrot.lane.b32.xlu0 %v858, 16
      %v949 = vpop.permute.xlu0 %948
      %950 = vrot.lane.b32.xlu0 %v859, 16
      %v951 = vpop.permute.xlu0 %950
      %952 = vrot.lane.b32.xlu0 %v860, 16
      %v953 = vpop.permute.xlu0 %952
      %954 = vrot.lane.b32.xlu0 %v861, 16
      %v955 = vpop.permute.xlu0 %954
      %956 = vrot.lane.b32.xlu0 %v862, 16
      %v957 = vpop.permute.xlu0 %956
      %958 = vrot.lane.b32.xlu0 %v863, 16
      %v959 = vpop.permute.xlu0 %958
      %vm992 = vcmask 257152
      %993 = vst.msk [vmem:[#allocation4] sm:$0xf] %vm992, %v897
      %994 = vst.msk [vmem:[#allocation4 + $0x4] sm:$0xf] %vm992, %v899
      %995 = vst.msk [vmem:[#allocation4 + $0x8] sm:$0xf] %vm992, %v901
      %996 = vst.msk [vmem:[#allocation4 + $0xc] sm:$0xf] %vm992, %v903
      %997 = vst.msk [vmem:[#allocation4 + $0x10] sm:$0xf] %vm992, %v905
      %998 = vst.msk [vmem:[#allocation4 + $0x14] sm:$0xf] %vm992, %v907
      %999 = vst.msk [vmem:[#allocation4 + $0x18] sm:$0xf] %vm992, %v909
      %1000 = vst.msk [vmem:[#allocation4 + $0x1c] sm:$0xf] %vm992, %v911
      %1001 = vst.msk [vmem:[#allocation4 + $0x20] sm:$0xf] %vm992, %v913
      %1002 = vst.msk [vmem:[#allocation4 + $0x24] sm:$0xf] %vm992, %v915
      %1003 = vst.msk [vmem:[#allocation4 + $0x28] sm:$0xf] %vm992, %v917
      %1004 = vst.msk [vmem:[#allocation4 + $0x2c] sm:$0xf] %vm992, %v919
      %1005 = vst.msk [vmem:[#allocation4 + $0x30] sm:$0xf] %vm992, %v921
      %1006 = vst.msk [vmem:[#allocation4 + $0x34] sm:$0xf] %vm992, %v923
      %1007 = vst.msk [vmem:[#allocation4 + $0x38] sm:$0xf] %vm992, %v925
      %1008 = vst.msk [vmem:[#allocation4 + $0x3c] sm:$0xf] %vm992, %v927
      %1009 = vst.msk [vmem:[#allocation4 + $0x40] sm:$0xf] %vm992, %v929
      %1010 = vst.msk [vmem:[#allocation4 + $0x44] sm:$0xf] %vm992, %v931
      %1011 = vst.msk [vmem:[#allocation4 + $0x48] sm:$0xf] %vm992, %v933
      %1012 = vst.msk [vmem:[#allocation4 + $0x4c] sm:$0xf] %vm992, %v935
      %1013 = vst.msk [vmem:[#allocation4 + $0x50] sm:$0xf] %vm992, %v937
      %1014 = vst.msk [vmem:[#allocation4 + $0x54] sm:$0xf] %vm992, %v939
      %1015 = vst.msk [vmem:[#allocation4 + $0x58] sm:$0xf] %vm992, %v941
      %1016 = vst.msk [vmem:[#allocation4 + $0x5c] sm:$0xf] %vm992, %v943
      %1017 = vst.msk [vmem:[#allocation4 + $0x60] sm:$0xf] %vm992, %v945
      %1018 = vst.msk [vmem:[#allocation4 + $0x64] sm:$0xf] %vm992, %v947
      %1019 = vst.msk [vmem:[#allocation4 + $0x68] sm:$0xf] %vm992, %v949
      %1020 = vst.msk [vmem:[#allocation4 + $0x6c] sm:$0xf] %vm992, %v951
      %1021 = vst.msk [vmem:[#allocation4 + $0x70] sm:$0xf] %vm992, %v953
      %1022 = vst.msk [vmem:[#allocation4 + $0x74] sm:$0xf] %vm992, %v955
      %1023 = vst.msk [vmem:[#allocation4 + $0x78] sm:$0xf] %vm992, %v957
      %1024 = vst.msk [vmem:[#allocation4 + $0x7c] sm:$0xf] %vm992, %v959
      %s1025 = scalar_lea.vmem [#allocation3], 32
      %v1026 = vld [vmem:[%s1025] sm:$0xff]
      %v1027 = vld [vmem:[%s1025 + $0x8] sm:$0xff]
      %v1028 = vld [vmem:[%s1025 + $0x10] sm:$0xff]
      %v1029 = vld [vmem:[%s1025 + $0x18] sm:$0xff]
      %v1030 = vld [vmem:[%s1025 + $0x20] sm:$0xff]
      %v1031 = vld [vmem:[%s1025 + $0x28] sm:$0xff]
      %v1032 = vld [vmem:[%s1025 + $0x30] sm:$0xff]
      %v1033 = vld [vmem:[%s1025 + $0x38] sm:$0xff]
      %v1034 = vld [vmem:[%s1025 + $0x40] sm:$0xff]
      %v1035 = vld [vmem:[%s1025 + $0x48] sm:$0xff]
      %v1036 = vld [vmem:[%s1025 + $0x50] sm:$0xff]
      %v1037 = vld [vmem:[%s1025 + $0x58] sm:$0xff]
      %v1038 = vld [vmem:[%s1025 + $0x60] sm:$0xff]
      %v1039 = vld [vmem:[%s1025 + $0x68] sm:$0xff]
      %v1040 = vld [vmem:[%s1025 + $0x70] sm:$0xff]
      %v1041 = vld [vmem:[%s1025 + $0x78] sm:$0xff]
      %v1042 = vld [vmem:[%s1025 + $0x80] sm:$0xff]
      %v1043 = vld [vmem:[%s1025 + $0x88] sm:$0xff]
      %v1044 = vld [vmem:[%s1025 + $0x90] sm:$0xff]
      %v1045 = vld [vmem:[%s1025 + $0x98] sm:$0xff]
      %v1046 = vld [vmem:[%s1025 + $0xa0] sm:$0xff]
      %v1047 = vld [vmem:[%s1025 + $0xa8] sm:$0xff]
      %v1048 = vld [vmem:[%s1025 + $0xb0] sm:$0xff]
      %v1049 = vld [vmem:[%s1025 + $0xb8] sm:$0xff]
      %v1050 = vld [vmem:[%s1025 + $0xc0] sm:$0xff]
      %v1051 = vld [vmem:[%s1025 + $0xc8] sm:$0xff]
      %v1052 = vld [vmem:[%s1025 + $0xd0] sm:$0xff]
      %v1053 = vld [vmem:[%s1025 + $0xd8] sm:$0xff]
      %v1054 = vld [vmem:[%s1025 + $0xe0] sm:$0xff]
      %v1055 = vld [vmem:[%s1025 + $0xe8] sm:$0xff]
      %v1056 = vld [vmem:[%s1025 + $0xf0] sm:$0xff]
      %v1057 = vld [vmem:[%s1025 + $0xf8] sm:$0xff]
      %v1058 = vpack.c.bf16 %v1026, %v1026
      %v1059 = vpack.c.bf16 %v1027, %v1027
      %v1060 = vpack.c.bf16 %v1028, %v1028
      %v1061 = vpack.c.bf16 %v1029, %v1029
      %v1062 = vpack.c.bf16 %v1030, %v1030
      %v1063 = vpack.c.bf16 %v1031, %v1031
      %v1064 = vpack.c.bf16 %v1032, %v1032
      %v1065 = vpack.c.bf16 %v1033, %v1033
      %v1066 = vpack.c.bf16 %v1034, %v1034
      %v1067 = vpack.c.bf16 %v1035, %v1035
      %v1068 = vpack.c.bf16 %v1036, %v1036
      %v1069 = vpack.c.bf16 %v1037, %v1037
      %v1070 = vpack.c.bf16 %v1038, %v1038
      %v1071 = vpack.c.bf16 %v1039, %v1039
      %v1072 = vpack.c.bf16 %v1040, %v1040
      %v1073 = vpack.c.bf16 %v1041, %v1041
      %v1074 = vpack.c.bf16 %v1042, %v1042
      %v1075 = vpack.c.bf16 %v1043, %v1043
      %v1076 = vpack.c.bf16 %v1044, %v1044
      %v1077 = vpack.c.bf16 %v1045, %v1045
      %v1078 = vpack.c.bf16 %v1046, %v1046
      %v1079 = vpack.c.bf16 %v1047, %v1047
      %v1080 = vpack.c.bf16 %v1048, %v1048
      %v1081 = vpack.c.bf16 %v1049, %v1049
      %v1082 = vpack.c.bf16 %v1050, %v1050
      %v1083 = vpack.c.bf16 %v1051, %v1051
      %v1084 = vpack.c.bf16 %v1052, %v1052
      %v1085 = vpack.c.bf16 %v1053, %v1053
      %v1086 = vpack.c.bf16 %v1054, %v1054
      %v1087 = vpack.c.bf16 %v1055, %v1055
      %v1088 = vpack.c.bf16 %v1056, %v1056
      %v1089 = vpack.c.bf16 %v1057, %v1057
      %1122 = vrot.lane.b32.xlu0 %v1058, 32
      %v1123 = vpop.permute.xlu0 %1122
      %1124 = vrot.lane.b32.xlu0 %v1059, 32
      %v1125 = vpop.permute.xlu0 %1124
      %1126 = vrot.lane.b32.xlu0 %v1060, 32
      %v1127 = vpop.permute.xlu0 %1126
      %1128 = vrot.lane.b32.xlu0 %v1061, 32
      %v1129 = vpop.permute.xlu0 %1128
      %1130 = vrot.lane.b32.xlu0 %v1062, 32
      %v1131 = vpop.permute.xlu0 %1130
      %1132 = vrot.lane.b32.xlu0 %v1063, 32
      %v1133 = vpop.permute.xlu0 %1132
      %1134 = vrot.lane.b32.xlu0 %v1064, 32
      %v1135 = vpop.permute.xlu0 %1134
      %1136 = vrot.lane.b32.xlu0 %v1065, 32
      %v1137 = vpop.permute.xlu0 %1136
      %1138 = vrot.lane.b32.xlu0 %v1066, 32
      %v1139 = vpop.permute.xlu0 %1138
      %1140 = vrot.lane.b32.xlu0 %v1067, 32
      %v1141 = vpop.permute.xlu0 %1140
      %1142 = vrot.lane.b32.xlu0 %v1068, 32
      %v1143 = vpop.permute.xlu0 %1142
      %1144 = vrot.lane.b32.xlu0 %v1069, 32
      %v1145 = vpop.permute.xlu0 %1144
      %1146 = vrot.lane.b32.xlu0 %v1070, 32
      %v1147 = vpop.permute.xlu0 %1146
      %1148 = vrot.lane.b32.xlu0 %v1071, 32
      %v1149 = vpop.permute.xlu0 %1148
      %1150 = vrot.lane.b32.xlu0 %v1072, 32
      %v1151 = vpop.permute.xlu0 %1150
      %1152 = vrot.lane.b32.xlu0 %v1073, 32
      %v1153 = vpop.permute.xlu0 %1152
      %1154 = vrot.lane.b32.xlu0 %v1074, 32
      %v1155 = vpop.permute.xlu0 %1154
      %1156 = vrot.lane.b32.xlu0 %v1075, 32
      %v1157 = vpop.permute.xlu0 %1156
      %1158 = vrot.lane.b32.xlu0 %v1076, 32
      %v1159 = vpop.permute.xlu0 %1158
      %1160 = vrot.lane.b32.xlu0 %v1077, 32
      %v1161 = vpop.permute.xlu0 %1160
      %1162 = vrot.lane.b32.xlu0 %v1078, 32
      %v1163 = vpop.permute.xlu0 %1162
      %1164 = vrot.lane.b32.xlu0 %v1079, 32
      %v1165 = vpop.permute.xlu0 %1164
      %1166 = vrot.lane.b32.xlu0 %v1080, 32
      %v1167 = vpop.permute.xlu0 %1166
      %1168 = vrot.lane.b32.xlu0 %v1081, 32
      %v1169 = vpop.permute.xlu0 %1168
      %1170 = vrot.lane.b32.xlu0 %v1082, 32
      %v1171 = vpop.permute.xlu0 %1170
      %1172 = vrot.lane.b32.xlu0 %v1083, 32
      %v1173 = vpop.permute.xlu0 %1172
      %1174 = vrot.lane.b32.xlu0 %v1084, 32
      %v1175 = vpop.permute.xlu0 %1174
      %1176 = vrot.lane.b32.xlu0 %v1085, 32
      %v1177 = vpop.permute.xlu0 %1176
      %1178 = vrot.lane.b32.xlu0 %v1086, 32
      %v1179 = vpop.permute.xlu0 %1178
      %1180 = vrot.lane.b32.xlu0 %v1087, 32
      %v1181 = vpop.permute.xlu0 %1180
      %1182 = vrot.lane.b32.xlu0 %v1088, 32
      %v1183 = vpop.permute.xlu0 %1182
      %1184 = vrot.lane.b32.xlu0 %v1089, 32
      %v1185 = vpop.permute.xlu0 %1184
      %vm1218 = vcmask 388352
      %1219 = vst.msk [vmem:[#allocation4] sm:$0xf] %vm1218, %v1123
      %1220 = vst.msk [vmem:[#allocation4 + $0x4] sm:$0xf] %vm1218, %v1125
      %1221 = vst.msk [vmem:[#allocation4 + $0x8] sm:$0xf] %vm1218, %v1127
      %1222 = vst.msk [vmem:[#allocation4 + $0xc] sm:$0xf] %vm1218, %v1129
      %1223 = vst.msk [vmem:[#allocation4 + $0x10] sm:$0xf] %vm1218, %v1131
      %1224 = vst.msk [vmem:[#allocation4 + $0x14] sm:$0xf] %vm1218, %v1133
      %1225 = vst.msk [vmem:[#allocation4 + $0x18] sm:$0xf] %vm1218, %v1135
      %1226 = vst.msk [vmem:[#allocation4 + $0x1c] sm:$0xf] %vm1218, %v1137
      %1227 = vst.msk [vmem:[#allocation4 + $0x20] sm:$0xf] %vm1218, %v1139
      %1228 = vst.msk [vmem:[#allocation4 + $0x24] sm:$0xf] %vm1218, %v1141
      %1229 = vst.msk [vmem:[#allocation4 + $0x28] sm:$0xf] %vm1218, %v1143
      %1230 = vst.msk [vmem:[#allocation4 + $0x2c] sm:$0xf] %vm1218, %v1145
      %1231 = vst.msk [vmem:[#allocation4 + $0x30] sm:$0xf] %vm1218, %v1147
      %1232 = vst.msk [vmem:[#allocation4 + $0x34] sm:$0xf] %vm1218, %v1149
      %1233 = vst.msk [vmem:[#allocation4 + $0x38] sm:$0xf] %vm1218, %v1151
      %1234 = vst.msk [vmem:[#allocation4 + $0x3c] sm:$0xf] %vm1218, %v1153
      %1235 = vst.msk [vmem:[#allocation4 + $0x40] sm:$0xf] %vm1218, %v1155
      %1236 = vst.msk [vmem:[#allocation4 + $0x44] sm:$0xf] %vm1218, %v1157
      %1237 = vst.msk [vmem:[#allocation4 + $0x48] sm:$0xf] %vm1218, %v1159
      %1238 = vst.msk [vmem:[#allocation4 + $0x4c] sm:$0xf] %vm1218, %v1161
      %1239 = vst.msk [vmem:[#allocation4 + $0x50] sm:$0xf] %vm1218, %v1163
      %1240 = vst.msk [vmem:[#allocation4 + $0x54] sm:$0xf] %vm1218, %v1165
      %1241 = vst.msk [vmem:[#allocation4 + $0x58] sm:$0xf] %vm1218, %v1167
      %1242 = vst.msk [vmem:[#allocation4 + $0x5c] sm:$0xf] %vm1218, %v1169
      %1243 = vst.msk [vmem:[#allocation4 + $0x60] sm:$0xf] %vm1218, %v1171
      %1244 = vst.msk [vmem:[#allocation4 + $0x64] sm:$0xf] %vm1218, %v1173
      %1245 = vst.msk [vmem:[#allocation4 + $0x68] sm:$0xf] %vm1218, %v1175
      %1246 = vst.msk [vmem:[#allocation4 + $0x6c] sm:$0xf] %vm1218, %v1177
      %1247 = vst.msk [vmem:[#allocation4 + $0x70] sm:$0xf] %vm1218, %v1179
      %1248 = vst.msk [vmem:[#allocation4 + $0x74] sm:$0xf] %vm1218, %v1181
      %1249 = vst.msk [vmem:[#allocation4 + $0x78] sm:$0xf] %vm1218, %v1183
      %1250 = vst.msk [vmem:[#allocation4 + $0x7c] sm:$0xf] %vm1218, %v1185
      %v1251 = vld [vmem:[#allocation8] sm:$0xff]
      %v1252 = vld [vmem:[#allocation8 + $0x8] sm:$0xff]
      %v1253 = vld [vmem:[#allocation8 + $0x10] sm:$0xff]
      %v1254 = vld [vmem:[#allocation8 + $0x18] sm:$0xff]
      %v1255 = vld [vmem:[#allocation8 + $0x20] sm:$0xff]
      %v1256 = vld [vmem:[#allocation8 + $0x28] sm:$0xff]
      %v1257 = vld [vmem:[#allocation8 + $0x30] sm:$0xff]
      %v1258 = vld [vmem:[#allocation8 + $0x38] sm:$0xff]
      %v1259 = vld [vmem:[#allocation8 + $0x40] sm:$0xff]
      %v1260 = vld [vmem:[#allocation8 + $0x48] sm:$0xff]
      %v1261 = vld [vmem:[#allocation8 + $0x50] sm:$0xff]
      %v1262 = vld [vmem:[#allocation8 + $0x58] sm:$0xff]
      %v1263 = vld [vmem:[#allocation8 + $0x60] sm:$0xff]
      %v1264 = vld [vmem:[#allocation8 + $0x68] sm:$0xff]
      %v1265 = vld [vmem:[#allocation8 + $0x70] sm:$0xff]
      %v1266 = vld [vmem:[#allocation8 + $0x78] sm:$0xff]
      %v1267 = vld [vmem:[#allocation8 + $0x80] sm:$0xff]
      %v1268 = vld [vmem:[#allocation8 + $0x88] sm:$0xff]
      %v1269 = vld [vmem:[#allocation8 + $0x90] sm:$0xff]
      %v1270 = vld [vmem:[#allocation8 + $0x98] sm:$0xff]
      %v1271 = vld [vmem:[#allocation8 + $0xa0] sm:$0xff]
      %v1272 = vld [vmem:[#allocation8 + $0xa8] sm:$0xff]
      %v1273 = vld [vmem:[#allocation8 + $0xb0] sm:$0xff]
      %v1274 = vld [vmem:[#allocation8 + $0xb8] sm:$0xff]
      %v1275 = vld [vmem:[#allocation8 + $0xc0] sm:$0xff]
      %v1276 = vld [vmem:[#allocation8 + $0xc8] sm:$0xff]
      %v1277 = vld [vmem:[#allocation8 + $0xd0] sm:$0xff]
      %v1278 = vld [vmem:[#allocation8 + $0xd8] sm:$0xff]
      %v1279 = vld [vmem:[#allocation8 + $0xe0] sm:$0xff]
      %v1280 = vld [vmem:[#allocation8 + $0xe8] sm:$0xff]
      %v1281 = vld [vmem:[#allocation8 + $0xf0] sm:$0xff]
      %v1282 = vld [vmem:[#allocation8 + $0xf8] sm:$0xff]
      %v1283 = vld [vmem:[#allocation4] sm:$0xf]
      %v1284 = vld [vmem:[#allocation4 + $0x4] sm:$0xf]
      %v1285 = vld [vmem:[#allocation4 + $0x8] sm:$0xf]
      %v1286 = vld [vmem:[#allocation4 + $0xc] sm:$0xf]
      %v1287 = vld [vmem:[#allocation4 + $0x10] sm:$0xf]
      %v1288 = vld [vmem:[#allocation4 + $0x14] sm:$0xf]
      %v1289 = vld [vmem:[#allocation4 + $0x18] sm:$0xf]
      %v1290 = vld [vmem:[#allocation4 + $0x1c] sm:$0xf]
      %v1291 = vld [vmem:[#allocation4 + $0x20] sm:$0xf]
      %v1292 = vld [vmem:[#allocation4 + $0x24] sm:$0xf]
      %v1293 = vld [vmem:[#allocation4 + $0x28] sm:$0xf]
      %v1294 = vld [vmem:[#allocation4 + $0x2c] sm:$0xf]
      %v1295 = vld [vmem:[#allocation4 + $0x30] sm:$0xf]
      %v1296 = vld [vmem:[#allocation4 + $0x34] sm:$0xf]
      %v1297 = vld [vmem:[#allocation4 + $0x38] sm:$0xf]
      %v1298 = vld [vmem:[#allocation4 + $0x3c] sm:$0xf]
      %v1299 = vld [vmem:[#allocation4 + $0x40] sm:$0xf]
      %v1300 = vld [vmem:[#allocation4 + $0x44] sm:$0xf]
      %v1301 = vld [vmem:[#allocation4 + $0x48] sm:$0xf]
      %v1302 = vld [vmem:[#allocation4 + $0x4c] sm:$0xf]
      %v1303 = vld [vmem:[#allocation4 + $0x50] sm:$0xf]
      %v1304 = vld [vmem:[#allocation4 + $0x54] sm:$0xf]
      %v1305 = vld [vmem:[#allocation4 + $0x58] sm:$0xf]
      %v1306 = vld [vmem:[#allocation4 + $0x5c] sm:$0xf]
      %v1307 = vld [vmem:[#allocation4 + $0x60] sm:$0xf]
      %v1308 = vld [vmem:[#allocation4 + $0x64] sm:$0xf]
      %v1309 = vld [vmem:[#allocation4 + $0x68] sm:$0xf]
      %v1310 = vld [vmem:[#allocation4 + $0x6c] sm:$0xf]
      %v1311 = vld [vmem:[#allocation4 + $0x70] sm:$0xf]
      %v1312 = vld [vmem:[#allocation4 + $0x74] sm:$0xf]
      %v1313 = vld [vmem:[#allocation4 + $0x78] sm:$0xf]
      %v1314 = vld [vmem:[#allocation4 + $0x7c] sm:$0xf]
      %v1315 = vld [vmem:[%s2] sm:$0xf]
      %v1316 = vld [vmem:[%s2 + $0x4] sm:$0xf]
      %v1317 = vld [vmem:[%s2 + $0x8] sm:$0xf]
      %v1318 = vld [vmem:[%s2 + $0xc] sm:$0xf]
      %v1319 = vld [vmem:[%s2 + $0x10] sm:$0xf]
      %v1320 = vld [vmem:[%s2 + $0x14] sm:$0xf]
      %v1353 = vunpack.c.l.b16 %v1283
      %v1354 = vunpack.c.l.b16 %v1284
      %v1355 = vunpack.c.l.b16 %v1285
      %v1356 = vunpack.c.l.b16 %v1286
      %v1357 = vunpack.c.l.b16 %v1287
      %v1358 = vunpack.c.l.b16 %v1288
      %v1359 = vunpack.c.l.b16 %v1289
      %v1360 = vunpack.c.l.b16 %v1290
      %v1361 = vunpack.c.l.b16 %v1291
      %v1362 = vunpack.c.l.b16 %v1292
      %v1363 = vunpack.c.l.b16 %v1293
      %v1364 = vunpack.c.l.b16 %v1294
      %v1365 = vunpack.c.l.b16 %v1295
      %v1366 = vunpack.c.l.b16 %v1296
      %v1367 = vunpack.c.l.b16 %v1297
      %v1368 = vunpack.c.l.b16 %v1298
      %v1369 = vunpack.c.l.b16 %v1299
      %v1370 = vunpack.c.l.b16 %v1300
      %v1371 = vunpack.c.l.b16 %v1301
      %v1372 = vunpack.c.l.b16 %v1302
      %v1373 = vunpack.c.l.b16 %v1303
      %v1374 = vunpack.c.l.b16 %v1304
      %v1375 = vunpack.c.l.b16 %v1305
      %v1376 = vunpack.c.l.b16 %v1306
      %v1377 = vunpack.c.l.b16 %v1307
      %v1378 = vunpack.c.l.b16 %v1308
      %v1379 = vunpack.c.l.b16 %v1309
      %v1380 = vunpack.c.l.b16 %v1310
      %v1381 = vunpack.c.l.b16 %v1311
      %v1382 = vunpack.c.l.b16 %v1312
      %v1383 = vunpack.c.l.b16 %v1313
      %v1384 = vunpack.c.l.b16 %v1314
      %v1385 = vpack.c.b16 %v1354, %v1353
      %v1386 = vpack.c.b16 %v1356, %v1355
      %v1387 = vpack.c.b16 %v1358, %v1357
      %v1388 = vpack.c.b16 %v1360, %v1359
      %v1389 = vpack.c.b16 %v1362, %v1361
      %v1390 = vpack.c.b16 %v1364, %v1363
      %v1391 = vpack.c.b16 %v1366, %v1365
      %v1392 = vpack.c.b16 %v1368, %v1367
      %v1393 = vpack.c.b16 %v1370, %v1369
      %v1394 = vpack.c.b16 %v1372, %v1371
      %v1395 = vpack.c.b16 %v1374, %v1373
      %v1396 = vpack.c.b16 %v1376, %v1375
      %v1397 = vpack.c.b16 %v1378, %v1377
      %v1398 = vpack.c.b16 %v1380, %v1379
      %v1399 = vpack.c.b16 %v1382, %v1381
      %v1400 = vpack.c.b16 %v1384, %v1383
      %v1407 = vunpack.c.l.b16 %v1315
      %v1408 = vunpack.c.l.b16 %v1316
      %v1409 = vunpack.c.l.b16 %v1317
      %v1410 = vunpack.c.l.b16 %v1318
      %v1411 = vunpack.c.l.b16 %v1319
      %v1412 = vunpack.c.l.b16 %v1320
      %v1413 = vpack.c.b16 %v1408, %v1407
      %v1414 = vpack.c.b16 %v1410, %v1409
      %v1415 = vpack.c.b16 %v1412, %v1411
      %vm1419 = vcmask 392192
      %v1421 = vsel %vm1419, %v1385, 0
      %v1424 = vsel %vm1419, %v1386, 0
      %v1427 = vsel %vm1419, %v1387, 0
      %v1430 = vsel %vm1419, %v1388, 0
      %v1433 = vsel %vm1419, %v1389, 0
      %v1436 = vsel %vm1419, %v1390, 0
      %v1439 = vsel %vm1419, %v1391, 0
      %v1442 = vsel %vm1419, %v1392, 0
      %v1445 = vsel %vm1419, %v1393, 0
      %v1448 = vsel %vm1419, %v1394, 0
      %v1451 = vsel %vm1419, %v1395, 0
      %v1454 = vsel %vm1419, %v1396, 0
      %v1457 = vsel %vm1419, %v1397, 0
      %v1460 = vsel %vm1419, %v1398, 0
      %v1463 = vsel %vm1419, %v1399, 0
      %v1466 = vsel %vm1419, %v1400, 0
      %1468 = vmatpush.bf16.msra.mxu0 0
      %1469 = vmatpush.bf16.msra.mxu0 0
      %1470 = vmatpush.bf16.msra.mxu0 0
      %1471 = vmatpush.bf16.msra.mxu0 0
      %1472 = vmatpush.bf16.msra.mxu0 0
      %1473 = vmatpush.bf16.msra.mxu0 %v1415
      %1474 = vmatpush.bf16.msra.mxu0 %v1414
      %1475 = vmatpush.bf16.msra.mxu0 %v1413
      %1476 = vmatmul.bf16.gmra.mxu0 %v1421
      %v1477 = vpop.f32.mrf.mxu0
      %v1478 = vadd.f32 0.0, %v1477
      %v1479 = vpop.f32.mrf.mxu0
      %v1480 = vadd.f32 0.0, %v1479
      %1481 = vmatmul.bf16.gmra.mxu0 %v1424
      %v1482 = vpop.f32.mrf.mxu0
      %v1483 = vadd.f32 0.0, %v1482
      %v1484 = vpop.f32.mrf.mxu0
      %v1485 = vadd.f32 0.0, %v1484
      %1486 = vmatmul.bf16.gmra.mxu0 %v1427
      %v1487 = vpop.f32.mrf.mxu0
      %v1488 = vadd.f32 0.0, %v1487
      %v1489 = vpop.f32.mrf.mxu0
      %v1490 = vadd.f32 0.0, %v1489
      %1491 = vmatmul.bf16.gmra.mxu0 %v1430
      %v1492 = vpop.f32.mrf.mxu0
      %v1493 = vadd.f32 0.0, %v1492
      %v1494 = vpop.f32.mrf.mxu0
      %v1495 = vadd.f32 0.0, %v1494
      %1496 = vmatmul.bf16.gmra.mxu0 %v1433
      %v1497 = vpop.f32.mrf.mxu0
      %v1498 = vadd.f32 0.0, %v1497
      %v1499 = vpop.f32.mrf.mxu0
      %v1500 = vadd.f32 0.0, %v1499
      %1501 = vmatmul.bf16.gmra.mxu0 %v1436
      %v1502 = vpop.f32.mrf.mxu0
      %v1503 = vadd.f32 0.0, %v1502
      %v1504 = vpop.f32.mrf.mxu0
      %v1505 = vadd.f32 0.0, %v1504
      %1506 = vmatmul.bf16.gmra.mxu0 %v1439
      %v1507 = vpop.f32.mrf.mxu0
      %v1508 = vadd.f32 0.0, %v1507
      %v1509 = vpop.f32.mrf.mxu0
      %v1510 = vadd.f32 0.0, %v1509
      %1511 = vmatmul.bf16.gmra.mxu0 %v1442
      %v1512 = vpop.f32.mrf.mxu0
      %v1513 = vadd.f32 0.0, %v1512
      %v1514 = vpop.f32.mrf.mxu0
      %v1515 = vadd.f32 0.0, %v1514
      %1516 = vmatmul.bf16.gmra.mxu0 %v1445
      %v1517 = vpop.f32.mrf.mxu0
      %v1518 = vadd.f32 0.0, %v1517
      %v1519 = vpop.f32.mrf.mxu0
      %v1520 = vadd.f32 0.0, %v1519
      %1521 = vmatmul.bf16.gmra.mxu0 %v1448
      %v1522 = vpop.f32.mrf.mxu0
      %v1523 = vadd.f32 0.0, %v1522
      %v1524 = vpop.f32.mrf.mxu0
      %v1525 = vadd.f32 0.0, %v1524
      %1526 = vmatmul.bf16.gmra.mxu0 %v1451
      %v1527 = vpop.f32.mrf.mxu0
      %v1528 = vadd.f32 0.0, %v1527
      %v1529 = vpop.f32.mrf.mxu0
      %v1530 = vadd.f32 0.0, %v1529
      %1531 = vmatmul.bf16.gmra.mxu0 %v1454
      %v1532 = vpop.f32.mrf.mxu0
      %v1533 = vadd.f32 0.0, %v1532
      %v1534 = vpop.f32.mrf.mxu0
      %v1535 = vadd.f32 0.0, %v1534
      %1536 = vmatmul.bf16.gmra.mxu0 %v1457
      %v1537 = vpop.f32.mrf.mxu0
      %v1538 = vadd.f32 0.0, %v1537
      %v1539 = vpop.f32.mrf.mxu0
      %v1540 = vadd.f32 0.0, %v1539
      %1541 = vmatmul.bf16.gmra.mxu0 %v1460
      %v1542 = vpop.f32.mrf.mxu0
      %v1543 = vadd.f32 0.0, %v1542
      %v1544 = vpop.f32.mrf.mxu0
      %v1545 = vadd.f32 0.0, %v1544
      %1546 = vmatmul.bf16.gmra.mxu0 %v1463
      %v1547 = vpop.f32.mrf.mxu0
      %v1548 = vadd.f32 0.0, %v1547
      %v1549 = vpop.f32.mrf.mxu0
      %v1550 = vadd.f32 0.0, %v1549
      %1551 = vmatmul.bf16.gmra.mxu0 %v1466
      %v1552 = vpop.f32.mrf.mxu0
      %v1553 = vadd.f32 0.0, %v1552
      %v1554 = vpop.f32.mrf.mxu0
      %v1555 = vadd.f32 0.0, %v1554
      %1556 = vdwg.mxu0
      %v1557 = vadd.f32 %v1251, %v1478
      %v1558 = vadd.f32 %v1252, %v1480
      %v1559 = vadd.f32 %v1253, %v1483
      %v1560 = vadd.f32 %v1254, %v1485
      %v1561 = vadd.f32 %v1255, %v1488
      %v1562 = vadd.f32 %v1256, %v1490
      %v1563 = vadd.f32 %v1257, %v1493
      %v1564 = vadd.f32 %v1258, %v1495
      %v1565 = vadd.f32 %v1259, %v1498
      %v1566 = vadd.f32 %v1260, %v1500
      %v1567 = vadd.f32 %v1261, %v1503
      %v1568 = vadd.f32 %v1262, %v1505
      %v1569 = vadd.f32 %v1263, %v1508
      %v1570 = vadd.f32 %v1264, %v1510
      %v1571 = vadd.f32 %v1265, %v1513
      %v1572 = vadd.f32 %v1266, %v1515
      %v1573 = vadd.f32 %v1267, %v1518
      %v1574 = vadd.f32 %v1268, %v1520
      %v1575 = vadd.f32 %v1269, %v1523
      %v1576 = vadd.f32 %v1270, %v1525
      %v1577 = vadd.f32 %v1271, %v1528
      %v1578 = vadd.f32 %v1272, %v1530
      %v1579 = vadd.f32 %v1273, %v1533
      %v1580 = vadd.f32 %v1274, %v1535
      %v1581 = vadd.f32 %v1275, %v1538
      %v1582 = vadd.f32 %v1276, %v1540
      %v1583 = vadd.f32 %v1277, %v1543
      %v1584 = vadd.f32 %v1278, %v1545
      %v1585 = vadd.f32 %v1279, %v1548
      %v1586 = vadd.f32 %v1280, %v1550
      %v1587 = vadd.f32 %v1281, %v1553
      %v1588 = vadd.f32 %v1282, %v1555
      %1589 = vst.msk [vmem:[#allocation8] sm:$0xff] %vm340, %v1557
      %1590 = vst.msk [vmem:[#allocation8 + $0x8] sm:$0xff] %vm340, %v1558
      %1591 = vst.msk [vmem:[#allocation8 + $0x10] sm:$0xff] %vm340, %v1559
      %1592 = vst.msk [vmem:[#allocation8 + $0x18] sm:$0xff] %vm340, %v1560
      %1593 = vst.msk [vmem:[#allocation8 + $0x20] sm:$0xff] %vm340, %v1561
      %1594 = vst.msk [vmem:[#allocation8 + $0x28] sm:$0xff] %vm340, %v1562
      %1595 = vst.msk [vmem:[#allocation8 + $0x30] sm:$0xff] %vm340, %v1563
      %1596 = vst.msk [vmem:[#allocation8 + $0x38] sm:$0xff] %vm340, %v1564
      %1597 = vst.msk [vmem:[#allocation8 + $0x40] sm:$0xff] %vm340, %v1565
      %1598 = vst.msk [vmem:[#allocation8 + $0x48] sm:$0xff] %vm340, %v1566
      %1599 = vst.msk [vmem:[#allocation8 + $0x50] sm:$0xff] %vm340, %v1567
      %1600 = vst.msk [vmem:[#allocation8 + $0x58] sm:$0xff] %vm340, %v1568
      %1601 = vst.msk [vmem:[#allocation8 + $0x60] sm:$0xff] %vm340, %v1569
      %1602 = vst.msk [vmem:[#allocation8 + $0x68] sm:$0xff] %vm340, %v1570
      %1603 = vst.msk [vmem:[#allocation8 + $0x70] sm:$0xff] %vm340, %v1571
      %1604 = vst.msk [vmem:[#allocation8 + $0x78] sm:$0xff] %vm340, %v1572
      %1605 = vst.msk [vmem:[#allocation8 + $0x80] sm:$0xff] %vm340, %v1573
      %1606 = vst.msk [vmem:[#allocation8 + $0x88] sm:$0xff] %vm340, %v1574
      %1607 = vst.msk [vmem:[#allocation8 + $0x90] sm:$0xff] %vm340, %v1575
      %1608 = vst.msk [vmem:[#allocation8 + $0x98] sm:$0xff] %vm340, %v1576
      %1609 = vst.msk [vmem:[#allocation8 + $0xa0] sm:$0xff] %vm340, %v1577
      %1610 = vst.msk [vmem:[#allocation8 + $0xa8] sm:$0xff] %vm340, %v1578
      %1611 = vst.msk [vmem:[#allocation8 + $0xb0] sm:$0xff] %vm340, %v1579
      %1612 = vst.msk [vmem:[#allocation8 + $0xb8] sm:$0xff] %vm340, %v1580
      %1613 = vst.msk [vmem:[#allocation8 + $0xc0] sm:$0xff] %vm340, %v1581
      %1614 = vst.msk [vmem:[#allocation8 + $0xc8] sm:$0xff] %vm340, %v1582
      %1615 = vst.msk [vmem:[#allocation8 + $0xd0] sm:$0xff] %vm340, %v1583
      %1616 = vst.msk [vmem:[#allocation8 + $0xd8] sm:$0xff] %vm340, %v1584
      %1617 = vst.msk [vmem:[#allocation8 + $0xe0] sm:$0xff] %vm340, %v1585
      %1618 = vst.msk [vmem:[#allocation8 + $0xe8] sm:$0xff] %vm340, %v1586
      %1619 = vst.msk [vmem:[#allocation8 + $0xf0] sm:$0xff] %vm340, %v1587
      %1620 = vst.msk [vmem:[#allocation8 + $0xf8] sm:$0xff] %vm340, %v1588
      %v1621 = vld [vmem:[#allocation2 + $0x1] sm:$0xff]
      %v1622 = vld [vmem:[#allocation2 + $0x9] sm:$0xff]
      %v1623 = vld [vmem:[#allocation2 + $0x19] sm:$0xff]
      %v1624 = vld [vmem:[#allocation2 + $0x21] sm:$0xff]
      %v1625 = vld [vmem:[#allocation2 + $0x31] sm:$0xff]
      %v1626 = vld [vmem:[#allocation2 + $0x39] sm:$0xff]
      %v1627 = vld [vmem:[#allocation2 + $0x49] sm:$0xff]
      %v1628 = vld [vmem:[#allocation2 + $0x51] sm:$0xff]
      %v1629 = vld [vmem:[#allocation2 + $0x61] sm:$0xff]
      %v1630 = vld [vmem:[#allocation2 + $0x69] sm:$0xff]
      %v1631 = vld [vmem:[#allocation2 + $0x79] sm:$0xff]
      %v1632 = vld [vmem:[#allocation2 + $0x81] sm:$0xff]
      %v1633 = vld [vmem:[#allocation2 + $0x91] sm:$0xff]
      %v1634 = vld [vmem:[#allocation2 + $0x99] sm:$0xff]
      %v1635 = vld [vmem:[#allocation2 + $0xa9] sm:$0xff]
      %v1636 = vld [vmem:[#allocation2 + $0xb1] sm:$0xff]
      %v1637 = vld [vmem:[#allocation2 + $0xc1] sm:$0xff]
      %v1638 = vld [vmem:[#allocation2 + $0xc9] sm:$0xff]
      %v1639 = vld [vmem:[#allocation2 + $0xd9] sm:$0xff]
      %v1640 = vld [vmem:[#allocation2 + $0xe1] sm:$0xff]
      %v1641 = vld [vmem:[#allocation2 + $0xf1] sm:$0xff]
      %v1642 = vld [vmem:[#allocation2 + $0xf9] sm:$0xff]
      %v1643 = vld [vmem:[#allocation2 + $0x109] sm:$0xff]
      %v1644 = vld [vmem:[#allocation2 + $0x111] sm:$0xff]
      %v1645 = vld [vmem:[#allocation2 + $0x121] sm:$0xff]
      %v1646 = vld [vmem:[#allocation2 + $0x129] sm:$0xff]
      %v1647 = vld [vmem:[#allocation2 + $0x139] sm:$0xff]
      %v1648 = vld [vmem:[#allocation2 + $0x141] sm:$0xff]
      %v1649 = vld [vmem:[#allocation2 + $0x151] sm:$0xff]
      %v1650 = vld [vmem:[#allocation2 + $0x159] sm:$0xff]
      %v1651 = vld [vmem:[#allocation2 + $0x169] sm:$0xff]
      %v1652 = vld [vmem:[#allocation2 + $0x171] sm:$0xff]
      %v1653 = vld [vmem:[#allocation2 + $0x181] sm:$0xff]
      %v1654 = vld [vmem:[#allocation2 + $0x189] sm:$0xff]
      %v1655 = vld [vmem:[#allocation2 + $0x199] sm:$0xff]
      %v1656 = vld [vmem:[#allocation2 + $0x1a1] sm:$0xff]
      %1657 = vst.msk [vmem:[#allocation3] sm:$0xff] %vm219, %v1621
      %1658 = vst.msk [vmem:[#allocation3 + $0x8] sm:$0xff] %vm219, %v1622
      %1659 = vst.msk [vmem:[#allocation3 + $0x10] sm:$0xff] %vm219, %v1623
      %1660 = vst.msk [vmem:[#allocation3 + $0x18] sm:$0xff] %vm219, %v1624
      %1661 = vst.msk [vmem:[#allocation3 + $0x20] sm:$0xff] %vm219, %v1625
      %1662 = vst.msk [vmem:[#allocation3 + $0x28] sm:$0xff] %vm219, %v1626
      %1663 = vst.msk [vmem:[#allocation3 + $0x30] sm:$0xff] %vm219, %v1627
      %1664 = vst.msk [vmem:[#allocation3 + $0x38] sm:$0xff] %vm219, %v1628
      %1665 = vst.msk [vmem:[#allocation3 + $0x40] sm:$0xff] %vm219, %v1629
      %1666 = vst.msk [vmem:[#allocation3 + $0x48] sm:$0xff] %vm219, %v1630
      %1667 = vst.msk [vmem:[#allocation3 + $0x50] sm:$0xff] %vm219, %v1631
      %1668 = vst.msk [vmem:[#allocation3 + $0x58] sm:$0xff] %vm219, %v1632
      %1669 = vst.msk [vmem:[#allocation3 + $0x60] sm:$0xff] %vm219, %v1633
      %1670 = vst.msk [vmem:[#allocation3 + $0x68] sm:$0xff] %vm219, %v1634
      %1671 = vst.msk [vmem:[#allocation3 + $0x70] sm:$0xff] %vm219, %v1635
      %1672 = vst.msk [vmem:[#allocation3 + $0x78] sm:$0xff] %vm219, %v1636
      %1673 = vst.msk [vmem:[#allocation3 + $0x80] sm:$0xff] %vm219, %v1637
      %1674 = vst.msk [vmem:[#allocation3 + $0x88] sm:$0xff] %vm219, %v1638
      %1675 = vst.msk [vmem:[#allocation3 + $0x90] sm:$0xff] %vm219, %v1639
      %1676 = vst.msk [vmem:[#allocation3 + $0x98] sm:$0xff] %vm219, %v1640
      %1677 = vst.msk [vmem:[#allocation3 + $0xa0] sm:$0xff] %vm219, %v1641
      %1678 = vst.msk [vmem:[#allocation3 + $0xa8] sm:$0xff] %vm219, %v1642
      %1679 = vst.msk [vmem:[#allocation3 + $0xb0] sm:$0xff] %vm219, %v1643
      %1680 = vst.msk [vmem:[#allocation3 + $0xb8] sm:$0xff] %vm219, %v1644
      %1681 = vst.msk [vmem:[#allocation3 + $0xc0] sm:$0xff] %vm219, %v1645
      %1682 = vst.msk [vmem:[#allocation3 + $0xc8] sm:$0xff] %vm219, %v1646
      %1683 = vst.msk [vmem:[#allocation3 + $0xd0] sm:$0xff] %vm219, %v1647
      %1684 = vst.msk [vmem:[#allocation3 + $0xd8] sm:$0xff] %vm219, %v1648
      %1685 = vst.msk [vmem:[#allocation3 + $0xe0] sm:$0xff] %vm219, %v1649
      %1686 = vst.msk [vmem:[#allocation3 + $0xe8] sm:$0xff] %vm219, %v1650
      %1687 = vst.msk [vmem:[#allocation3 + $0xf0] sm:$0xff] %vm219, %v1651
      %1688 = vst.msk [vmem:[#allocation3 + $0xf8] sm:$0xff] %vm219, %v1652
      %1689 = vst.msk [vmem:[#allocation3 + $0x100] sm:$0xff] %vm219, %v1653
      %1690 = vst.msk [vmem:[#allocation3 + $0x108] sm:$0xff] %vm219, %v1654
      %1691 = vst.msk [vmem:[#allocation3 + $0x110] sm:$0xff] %vm219, %v1655
      %1692 = vst.msk [vmem:[#allocation3 + $0x118] sm:$0xff] %vm219, %v1656
      %v1693 = vld [vmem:[#allocation3] sm:$0xff]
      %v1694 = vld [vmem:[#allocation3 + $0x8] sm:$0xff]
      %v1695 = vld [vmem:[#allocation3 + $0x10] sm:$0xff]
      %v1696 = vld [vmem:[#allocation3 + $0x18] sm:$0xff]
      %v1697 = vld [vmem:[#allocation3 + $0x20] sm:$0xff]
      %v1698 = vld [vmem:[#allocation3 + $0x28] sm:$0xff]
      %v1699 = vld [vmem:[#allocation3 + $0x30] sm:$0xff]
      %v1700 = vld [vmem:[#allocation3 + $0x38] sm:$0xff]
      %v1701 = vld [vmem:[#allocation3 + $0x40] sm:$0xff]
      %v1702 = vld [vmem:[#allocation3 + $0x48] sm:$0xff]
      %v1703 = vld [vmem:[#allocation3 + $0x50] sm:$0xff]
      %v1704 = vld [vmem:[#allocation3 + $0x58] sm:$0xff]
      %v1705 = vld [vmem:[#allocation3 + $0x60] sm:$0xff]
      %v1706 = vld [vmem:[#allocation3 + $0x68] sm:$0xff]
      %v1707 = vld [vmem:[#allocation3 + $0x70] sm:$0xff]
      %v1708 = vld [vmem:[#allocation3 + $0x78] sm:$0xff]
      %v1709 = vld [vmem:[#allocation3 + $0x80] sm:$0xff]
      %v1710 = vld [vmem:[#allocation3 + $0x88] sm:$0xff]
      %v1711 = vld [vmem:[#allocation3 + $0x90] sm:$0xff]
      %v1712 = vld [vmem:[#allocation3 + $0x98] sm:$0xff]
      %v1713 = vld [vmem:[#allocation3 + $0xa0] sm:$0xff]
      %v1714 = vld [vmem:[#allocation3 + $0xa8] sm:$0xff]
      %v1715 = vld [vmem:[#allocation3 + $0xb0] sm:$0xff]
      %v1716 = vld [vmem:[#allocation3 + $0xb8] sm:$0xff]
      %v1717 = vld [vmem:[#allocation3 + $0xc0] sm:$0xff]
      %v1718 = vld [vmem:[#allocation3 + $0xc8] sm:$0xff]
      %v1719 = vld [vmem:[#allocation3 + $0xd0] sm:$0xff]
      %v1720 = vld [vmem:[#allocation3 + $0xd8] sm:$0xff]
      %v1721 = vld [vmem:[#allocation3 + $0xe0] sm:$0xff]
      %v1722 = vld [vmem:[#allocation3 + $0xe8] sm:$0xff]
      %v1723 = vld [vmem:[#allocation3 + $0xf0] sm:$0xff]
      %v1724 = vld [vmem:[#allocation3 + $0xf8] sm:$0xff]
      %v1725 = vpack.c.bf16 %v1693, %v1693
      %v1726 = vpack.c.bf16 %v1694, %v1694
      %v1727 = vpack.c.bf16 %v1695, %v1695
      %v1728 = vpack.c.bf16 %v1696, %v1696
      %v1729 = vpack.c.bf16 %v1697, %v1697
      %v1730 = vpack.c.bf16 %v1698, %v1698
      %v1731 = vpack.c.bf16 %v1699, %v1699
      %v1732 = vpack.c.bf16 %v1700, %v1700
      %v1733 = vpack.c.bf16 %v1701, %v1701
      %v1734 = vpack.c.bf16 %v1702, %v1702
      %v1735 = vpack.c.bf16 %v1703, %v1703
      %v1736 = vpack.c.bf16 %v1704, %v1704
      %v1737 = vpack.c.bf16 %v1705, %v1705
      %v1738 = vpack.c.bf16 %v1706, %v1706
      %v1739 = vpack.c.bf16 %v1707, %v1707
      %v1740 = vpack.c.bf16 %v1708, %v1708
      %v1741 = vpack.c.bf16 %v1709, %v1709
      %v1742 = vpack.c.bf16 %v1710, %v1710
      %v1743 = vpack.c.bf16 %v1711, %v1711
      %v1744 = vpack.c.bf16 %v1712, %v1712
      %v1745 = vpack.c.bf16 %v1713, %v1713
      %v1746 = vpack.c.bf16 %v1714, %v1714
      %v1747 = vpack.c.bf16 %v1715, %v1715
      %v1748 = vpack.c.bf16 %v1716, %v1716
      %v1749 = vpack.c.bf16 %v1717, %v1717
      %v1750 = vpack.c.bf16 %v1718, %v1718
      %v1751 = vpack.c.bf16 %v1719, %v1719
      %v1752 = vpack.c.bf16 %v1720, %v1720
      %v1753 = vpack.c.bf16 %v1721, %v1721
      %v1754 = vpack.c.bf16 %v1722, %v1722
      %v1755 = vpack.c.bf16 %v1723, %v1723
      %v1756 = vpack.c.bf16 %v1724, %v1724
      %1757 = vst.msk [vmem:[#allocation4] sm:$0xf] %vm766, %v1725
      %1758 = vst.msk [vmem:[#allocation4 + $0x4] sm:$0xf] %vm766, %v1726
      %1759 = vst.msk [vmem:[#allocation4 + $0x8] sm:$0xf] %vm766, %v1727
      %1760 = vst.msk [vmem:[#allocation4 + $0xc] sm:$0xf] %vm766, %v1728
      %1761 = vst.msk [vmem:[#allocation4 + $0x10] sm:$0xf] %vm766, %v1729
      %1762 = vst.msk [vmem:[#allocation4 + $0x14] sm:$0xf] %vm766, %v1730
      %1763 = vst.msk [vmem:[#allocation4 + $0x18] sm:$0xf] %vm766, %v1731
      %1764 = vst.msk [vmem:[#allocation4 + $0x1c] sm:$0xf] %vm766, %v1732
      %1765 = vst.msk [vmem:[#allocation4 + $0x20] sm:$0xf] %vm766, %v1733
      %1766 = vst.msk [vmem:[#allocation4 + $0x24] sm:$0xf] %vm766, %v1734
      %1767 = vst.msk [vmem:[#allocation4 + $0x28] sm:$0xf] %vm766, %v1735
      %1768 = vst.msk [vmem:[#allocation4 + $0x2c] sm:$0xf] %vm766, %v1736
      %1769 = vst.msk [vmem:[#allocation4 + $0x30] sm:$0xf] %vm766, %v1737
      %1770 = vst.msk [vmem:[#allocation4 + $0x34] sm:$0xf] %vm766, %v1738
      %1771 = vst.msk [vmem:[#allocation4 + $0x38] sm:$0xf] %vm766, %v1739
      %1772 = vst.msk [vmem:[#allocation4 + $0x3c] sm:$0xf] %vm766, %v1740
      %1773 = vst.msk [vmem:[#allocation4 + $0x40] sm:$0xf] %vm766, %v1741
      %1774 = vst.msk [vmem:[#allocation4 + $0x44] sm:$0xf] %vm766, %v1742
      %1775 = vst.msk [vmem:[#allocation4 + $0x48] sm:$0xf] %vm766, %v1743
      %1776 = vst.msk [vmem:[#allocation4 + $0x4c] sm:$0xf] %vm766, %v1744
      %1777 = vst.msk [vmem:[#allocation4 + $0x50] sm:$0xf] %vm766, %v1745
      %1778 = vst.msk [vmem:[#allocation4 + $0x54] sm:$0xf] %vm766, %v1746
      %1779 = vst.msk [vmem:[#allocation4 + $0x58] sm:$0xf] %vm766, %v1747
      %1780 = vst.msk [vmem:[#allocation4 + $0x5c] sm:$0xf] %vm766, %v1748
      %1781 = vst.msk [vmem:[#allocation4 + $0x60] sm:$0xf] %vm766, %v1749
      %1782 = vst.msk [vmem:[#allocation4 + $0x64] sm:$0xf] %vm766, %v1750
      %1783 = vst.msk [vmem:[#allocation4 + $0x68] sm:$0xf] %vm766, %v1751
      %1784 = vst.msk [vmem:[#allocation4 + $0x6c] sm:$0xf] %vm766, %v1752
      %1785 = vst.msk [vmem:[#allocation4 + $0x70] sm:$0xf] %vm766, %v1753
      %1786 = vst.msk [vmem:[#allocation4 + $0x74] sm:$0xf] %vm766, %v1754
      %1787 = vst.msk [vmem:[#allocation4 + $0x78] sm:$0xf] %vm766, %v1755
      %1788 = vst.msk [vmem:[#allocation4 + $0x7c] sm:$0xf] %vm766, %v1756
      %v1789 = vld [vmem:[%s799] sm:$0xff]
      %v1790 = vld [vmem:[%s799 + $0x8] sm:$0xff]
      %v1791 = vld [vmem:[%s799 + $0x10] sm:$0xff]
      %v1792 = vld [vmem:[%s799 + $0x18] sm:$0xff]
      %v1793 = vld [vmem:[%s799 + $0x20] sm:$0xff]
      %v1794 = vld [vmem:[%s799 + $0x28] sm:$0xff]
      %v1795 = vld [vmem:[%s799 + $0x30] sm:$0xff]
      %v1796 = vld [vmem:[%s799 + $0x38] sm:$0xff]
      %v1797 = vld [vmem:[%s799 + $0x40] sm:$0xff]
      %v1798 = vld [vmem:[%s799 + $0x48] sm:$0xff]
      %v1799 = vld [vmem:[%s799 + $0x50] sm:$0xff]
      %v1800 = vld [vmem:[%s799 + $0x58] sm:$0xff]
      %v1801 = vld [vmem:[%s799 + $0x60] sm:$0xff]
      %v1802 = vld [vmem:[%s799 + $0x68] sm:$0xff]
      %v1803 = vld [vmem:[%s799 + $0x70] sm:$0xff]
      %v1804 = vld [vmem:[%s799 + $0x78] sm:$0xff]
      %v1805 = vld [vmem:[%s799 + $0x80] sm:$0xff]
      %v1806 = vld [vmem:[%s799 + $0x88] sm:$0xff]
      %v1807 = vld [vmem:[%s799 + $0x90] sm:$0xff]
      %v1808 = vld [vmem:[%s799 + $0x98] sm:$0xff]
      %v1809 = vld [vmem:[%s799 + $0xa0] sm:$0xff]
      %v1810 = vld [vmem:[%s799 + $0xa8] sm:$0xff]
      %v1811 = vld [vmem:[%s799 + $0xb0] sm:$0xff]
      %v1812 = vld [vmem:[%s799 + $0xb8] sm:$0xff]
      %v1813 = vld [vmem:[%s799 + $0xc0] sm:$0xff]
      %v1814 = vld [vmem:[%s799 + $0xc8] sm:$0xff]
      %v1815 = vld [vmem:[%s799 + $0xd0] sm:$0xff]
      %v1816 = vld [vmem:[%s799 + $0xd8] sm:$0xff]
      %v1817 = vld [vmem:[%s799 + $0xe0] sm:$0xff]
      %v1818 = vld [vmem:[%s799 + $0xe8] sm:$0xff]
      %v1819 = vld [vmem:[%s799 + $0xf0] sm:$0xff]
      %v1820 = vld [vmem:[%s799 + $0xf8] sm:$0xff]
      %v1821 = vpack.c.bf16 %v1789, %v1789
      %v1822 = vpack.c.bf16 %v1790, %v1790
      %v1823 = vpack.c.bf16 %v1791, %v1791
      %v1824 = vpack.c.bf16 %v1792, %v1792
      %v1825 = vpack.c.bf16 %v1793, %v1793
      %v1826 = vpack.c.bf16 %v1794, %v1794
      %v1827 = vpack.c.bf16 %v1795, %v1795
      %v1828 = vpack.c.bf16 %v1796, %v1796
      %v1829 = vpack.c.bf16 %v1797, %v1797
      %v1830 = vpack.c.bf16 %v1798, %v1798
      %v1831 = vpack.c.bf16 %v1799, %v1799
      %v1832 = vpack.c.bf16 %v1800, %v1800
      %v1833 = vpack.c.bf16 %v1801, %v1801
      %v1834 = vpack.c.bf16 %v1802, %v1802
      %v1835 = vpack.c.bf16 %v1803, %v1803
      %v1836 = vpack.c.bf16 %v1804, %v1804
      %v1837 = vpack.c.bf16 %v1805, %v1805
      %v1838 = vpack.c.bf16 %v1806, %v1806
      %v1839 = vpack.c.bf16 %v1807, %v1807
      %v1840 = vpack.c.bf16 %v1808, %v1808
      %v1841 = vpack.c.bf16 %v1809, %v1809
      %v1842 = vpack.c.bf16 %v1810, %v1810
      %v1843 = vpack.c.bf16 %v1811, %v1811
      %v1844 = vpack.c.bf16 %v1812, %v1812
      %v1845 = vpack.c.bf16 %v1813, %v1813
      %v1846 = vpack.c.bf16 %v1814, %v1814
      %v1847 = vpack.c.bf16 %v1815, %v1815
      %v1848 = vpack.c.bf16 %v1816, %v1816
      %v1849 = vpack.c.bf16 %v1817, %v1817
      %v1850 = vpack.c.bf16 %v1818, %v1818
      %v1851 = vpack.c.bf16 %v1819, %v1819
      %v1852 = vpack.c.bf16 %v1820, %v1820
      %1885 = vrot.lane.b32.xlu0 %v1821, 16
      %v1886 = vpop.permute.xlu0 %1885
      %1887 = vrot.lane.b32.xlu0 %v1822, 16
      %v1888 = vpop.permute.xlu0 %1887
      %1889 = vrot.lane.b32.xlu0 %v1823, 16
      %v1890 = vpop.permute.xlu0 %1889
      %1891 = vrot.lane.b32.xlu0 %v1824, 16
      %v1892 = vpop.permute.xlu0 %1891
      %1893 = vrot.lane.b32.xlu0 %v1825, 16
      %v1894 = vpop.permute.xlu0 %1893
      %1895 = vrot.lane.b32.xlu0 %v1826, 16
      %v1896 = vpop.permute.xlu0 %1895
      %1897 = vrot.lane.b32.xlu0 %v1827, 16
      %v1898 = vpop.permute.xlu0 %1897
      %1899 = vrot.lane.b32.xlu0 %v1828, 16
      %v1900 = vpop.permute.xlu0 %1899
      %1901 = vrot.lane.b32.xlu0 %v1829, 16
      %v1902 = vpop.permute.xlu0 %1901
      %1903 = vrot.lane.b32.xlu0 %v1830, 16
      %v1904 = vpop.permute.xlu0 %1903
      %1905 = vrot.lane.b32.xlu0 %v1831, 16
      %v1906 = vpop.permute.xlu0 %1905
      %1907 = vrot.lane.b32.xlu0 %v1832, 16
      %v1908 = vpop.permute.xlu0 %1907
      %1909 = vrot.lane.b32.xlu0 %v1833, 16
      %v1910 = vpop.permute.xlu0 %1909
      %1911 = vrot.lane.b32.xlu0 %v1834, 16
      %v1912 = vpop.permute.xlu0 %1911
      %1913 = vrot.lane.b32.xlu0 %v1835, 16
      %v1914 = vpop.permute.xlu0 %1913
      %1915 = vrot.lane.b32.xlu0 %v1836, 16
      %v1916 = vpop.permute.xlu0 %1915
      %1917 = vrot.lane.b32.xlu0 %v1837, 16
      %v1918 = vpop.permute.xlu0 %1917
      %1919 = vrot.lane.b32.xlu0 %v1838, 16
      %v1920 = vpop.permute.xlu0 %1919
      %1921 = vrot.lane.b32.xlu0 %v1839, 16
      %v1922 = vpop.permute.xlu0 %1921
      %1923 = vrot.lane.b32.xlu0 %v1840, 16
      %v1924 = vpop.permute.xlu0 %1923
      %1925 = vrot.lane.b32.xlu0 %v1841, 16
      %v1926 = vpop.permute.xlu0 %1925
      %1927 = vrot.lane.b32.xlu0 %v1842, 16
      %v1928 = vpop.permute.xlu0 %1927
      %1929 = vrot.lane.b32.xlu0 %v1843, 16
      %v1930 = vpop.permute.xlu0 %1929
      %1931 = vrot.lane.b32.xlu0 %v1844, 16
      %v1932 = vpop.permute.xlu0 %1931
      %1933 = vrot.lane.b32.xlu0 %v1845, 16
      %v1934 = vpop.permute.xlu0 %1933
      %1935 = vrot.lane.b32.xlu0 %v1846, 16
      %v1936 = vpop.permute.xlu0 %1935
      %1937 = vrot.lane.b32.xlu0 %v1847, 16
      %v1938 = vpop.permute.xlu0 %1937
      %1939 = vrot.lane.b32.xlu0 %v1848, 16
      %v1940 = vpop.permute.xlu0 %1939
      %1941 = vrot.lane.b32.xlu0 %v1849, 16
      %v1942 = vpop.permute.xlu0 %1941
      %1943 = vrot.lane.b32.xlu0 %v1850, 16
      %v1944 = vpop.permute.xlu0 %1943
      %1945 = vrot.lane.b32.xlu0 %v1851, 16
      %v1946 = vpop.permute.xlu0 %1945
      %1947 = vrot.lane.b32.xlu0 %v1852, 16
      %v1948 = vpop.permute.xlu0 %1947
      %1981 = vst.msk [vmem:[#allocation4] sm:$0xf] %vm992, %v1886
      %1982 = vst.msk [vmem:[#allocation4 + $0x4] sm:$0xf] %vm992, %v1888
      %1983 = vst.msk [vmem:[#allocation4 + $0x8] sm:$0xf] %vm992, %v1890
      %1984 = vst.msk [vmem:[#allocation4 + $0xc] sm:$0xf] %vm992, %v1892
      %1985 = vst.msk [vmem:[#allocation4 + $0x10] sm:$0xf] %vm992, %v1894
      %1986 = vst.msk [vmem:[#allocation4 + $0x14] sm:$0xf] %vm992, %v1896
      %1987 = vst.msk [vmem:[#allocation4 + $0x18] sm:$0xf] %vm992, %v1898
      %1988 = vst.msk [vmem:[#allocation4 + $0x1c] sm:$0xf] %vm992, %v1900
      %1989 = vst.msk [vmem:[#allocation4 + $0x20] sm:$0xf] %vm992, %v1902
      %1990 = vst.msk [vmem:[#allocation4 + $0x24] sm:$0xf] %vm992, %v1904
      %1991 = vst.msk [vmem:[#allocation4 + $0x28] sm:$0xf] %vm992, %v1906
      %1992 = vst.msk [vmem:[#allocation4 + $0x2c] sm:$0xf] %vm992, %v1908
      %1993 = vst.msk [vmem:[#allocation4 + $0x30] sm:$0xf] %vm992, %v1910
      %1994 = vst.msk [vmem:[#allocation4 + $0x34] sm:$0xf] %vm992, %v1912
      %1995 = vst.msk [vmem:[#allocation4 + $0x38] sm:$0xf] %vm992, %v1914
      %1996 = vst.msk [vmem:[#allocation4 + $0x3c] sm:$0xf] %vm992, %v1916
      %1997 = vst.msk [vmem:[#allocation4 + $0x40] sm:$0xf] %vm992, %v1918
      %1998 = vst.msk [vmem:[#allocation4 + $0x44] sm:$0xf] %vm992, %v1920
      %1999 = vst.msk [vmem:[#allocation4 + $0x48] sm:$0xf] %vm992, %v1922
      %2000 = vst.msk [vmem:[#allocation4 + $0x4c] sm:$0xf] %vm992, %v1924
      %2001 = vst.msk [vmem:[#allocation4 + $0x50] sm:$0xf] %vm992, %v1926
      %2002 = vst.msk [vmem:[#allocation4 + $0x54] sm:$0xf] %vm992, %v1928
      %2003 = vst.msk [vmem:[#allocation4 + $0x58] sm:$0xf] %vm992, %v1930
      %2004 = vst.msk [vmem:[#allocation4 + $0x5c] sm:$0xf] %vm992, %v1932
      %2005 = vst.msk [vmem:[#allocation4 + $0x60] sm:$0xf] %vm992, %v1934
      %2006 = vst.msk [vmem:[#allocation4 + $0x64] sm:$0xf] %vm992, %v1936
      %2007 = vst.msk [vmem:[#allocation4 + $0x68] sm:$0xf] %vm992, %v1938
      %2008 = vst.msk [vmem:[#allocation4 + $0x6c] sm:$0xf] %vm992, %v1940
      %2009 = vst.msk [vmem:[#allocation4 + $0x70] sm:$0xf] %vm992, %v1942
      %2010 = vst.msk [vmem:[#allocation4 + $0x74] sm:$0xf] %vm992, %v1944
      %2011 = vst.msk [vmem:[#allocation4 + $0x78] sm:$0xf] %vm992, %v1946
      %2012 = vst.msk [vmem:[#allocation4 + $0x7c] sm:$0xf] %vm992, %v1948
      %v2013 = vld [vmem:[%s1025] sm:$0xff]
      %v2014 = vld [vmem:[%s1025 + $0x8] sm:$0xff]
      %v2015 = vld [vmem:[%s1025 + $0x10] sm:$0xff]
      %v2016 = vld [vmem:[%s1025 + $0x18] sm:$0xff]
      %v2017 = vld [vmem:[%s1025 + $0x20] sm:$0xff]
      %v2018 = vld [vmem:[%s1025 + $0x28] sm:$0xff]
      %v2019 = vld [vmem:[%s1025 + $0x30] sm:$0xff]
      %v2020 = vld [vmem:[%s1025 + $0x38] sm:$0xff]
      %v2021 = vld [vmem:[%s1025 + $0x40] sm:$0xff]
      %v2022 = vld [vmem:[%s1025 + $0x48] sm:$0xff]
      %v2023 = vld [vmem:[%s1025 + $0x50] sm:$0xff]
      %v2024 = vld [vmem:[%s1025 + $0x58] sm:$0xff]
      %v2025 = vld [vmem:[%s1025 + $0x60] sm:$0xff]
      %v2026 = vld [vmem:[%s1025 + $0x68] sm:$0xff]
      %v2027 = vld [vmem:[%s1025 + $0x70] sm:$0xff]
      %v2028 = vld [vmem:[%s1025 + $0x78] sm:$0xff]
      %v2029 = vld [vmem:[%s1025 + $0x80] sm:$0xff]
      %v2030 = vld [vmem:[%s1025 + $0x88] sm:$0xff]
      %v2031 = vld [vmem:[%s1025 + $0x90] sm:$0xff]
      %v2032 = vld [vmem:[%s1025 + $0x98] sm:$0xff]
      %v2033 = vld [vmem:[%s1025 + $0xa0] sm:$0xff]
      %v2034 = vld [vmem:[%s1025 + $0xa8] sm:$0xff]
      %v2035 = vld [vmem:[%s1025 + $0xb0] sm:$0xff]
      %v2036 = vld [vmem:[%s1025 + $0xb8] sm:$0xff]
      %v2037 = vld [vmem:[%s1025 + $0xc0] sm:$0xff]
      %v2038 = vld [vmem:[%s1025 + $0xc8] sm:$0xff]
      %v2039 = vld [vmem:[%s1025 + $0xd0] sm:$0xff]
      %v2040 = vld [vmem:[%s1025 + $0xd8] sm:$0xff]
      %v2041 = vld [vmem:[%s1025 + $0xe0] sm:$0xff]
      %v2042 = vld [vmem:[%s1025 + $0xe8] sm:$0xff]
      %v2043 = vld [vmem:[%s1025 + $0xf0] sm:$0xff]
      %v2044 = vld [vmem:[%s1025 + $0xf8] sm:$0xff]
      %v2045 = vpack.c.bf16 %v2013, %v2013
      %v2046 = vpack.c.bf16 %v2014, %v2014
      %v2047 = vpack.c.bf16 %v2015, %v2015
      %v2048 = vpack.c.bf16 %v2016, %v2016
      %v2049 = vpack.c.bf16 %v2017, %v2017
      %v2050 = vpack.c.bf16 %v2018, %v2018
      %v2051 = vpack.c.bf16 %v2019, %v2019
      %v2052 = vpack.c.bf16 %v2020, %v2020
      %v2053 = vpack.c.bf16 %v2021, %v2021
      %v2054 = vpack.c.bf16 %v2022, %v2022
      %v2055 = vpack.c.bf16 %v2023, %v2023
      %v2056 = vpack.c.bf16 %v2024, %v2024
      %v2057 = vpack.c.bf16 %v2025, %v2025
      %v2058 = vpack.c.bf16 %v2026, %v2026
      %v2059 = vpack.c.bf16 %v2027, %v2027
      %v2060 = vpack.c.bf16 %v2028, %v2028
      %v2061 = vpack.c.bf16 %v2029, %v2029
      %v2062 = vpack.c.bf16 %v2030, %v2030
      %v2063 = vpack.c.bf16 %v2031, %v2031
      %v2064 = vpack.c.bf16 %v2032, %v2032
      %v2065 = vpack.c.bf16 %v2033, %v2033
      %v2066 = vpack.c.bf16 %v2034, %v2034
      %v2067 = vpack.c.bf16 %v2035, %v2035
      %v2068 = vpack.c.bf16 %v2036, %v2036
      %v2069 = vpack.c.bf16 %v2037, %v2037
      %v2070 = vpack.c.bf16 %v2038, %v2038
      %v2071 = vpack.c.bf16 %v2039, %v2039
      %v2072 = vpack.c.bf16 %v2040, %v2040
      %v2073 = vpack.c.bf16 %v2041, %v2041
      %v2074 = vpack.c.bf16 %v2042, %v2042
      %v2075 = vpack.c.bf16 %v2043, %v2043
      %v2076 = vpack.c.bf16 %v2044, %v2044
      %2109 = vrot.lane.b32.xlu0 %v2045, 32
      %v2110 = vpop.permute.xlu0 %2109
      %2111 = vrot.lane.b32.xlu0 %v2046, 32
      %v2112 = vpop.permute.xlu0 %2111
      %2113 = vrot.lane.b32.xlu0 %v2047, 32
      %v2114 = vpop.permute.xlu0 %2113
      %2115 = vrot.lane.b32.xlu0 %v2048, 32
      %v2116 = vpop.permute.xlu0 %2115
      %2117 = vrot.lane.b32.xlu0 %v2049, 32
      %v2118 = vpop.permute.xlu0 %2117
      %2119 = vrot.lane.b32.xlu0 %v2050, 32
      %v2120 = vpop.permute.xlu0 %2119
      %2121 = vrot.lane.b32.xlu0 %v2051, 32
      %v2122 = vpop.permute.xlu0 %2121
      %2123 = vrot.lane.b32.xlu0 %v2052, 32
      %v2124 = vpop.permute.xlu0 %2123
      %2125 = vrot.lane.b32.xlu0 %v2053, 32
      %v2126 = vpop.permute.xlu0 %2125
      %2127 = vrot.lane.b32.xlu0 %v2054, 32
      %v2128 = vpop.permute.xlu0 %2127
      %2129 = vrot.lane.b32.xlu0 %v2055, 32
      %v2130 = vpop.permute.xlu0 %2129
      %2131 = vrot.lane.b32.xlu0 %v2056, 32
      %v2132 = vpop.permute.xlu0 %2131
      %2133 = vrot.lane.b32.xlu0 %v2057, 32
      %v2134 = vpop.permute.xlu0 %2133
      %2135 = vrot.lane.b32.xlu0 %v2058, 32
      %v2136 = vpop.permute.xlu0 %2135
      %2137 = vrot.lane.b32.xlu0 %v2059, 32
      %v2138 = vpop.permute.xlu0 %2137
      %2139 = vrot.lane.b32.xlu0 %v2060, 32
      %v2140 = vpop.permute.xlu0 %2139
      %2141 = vrot.lane.b32.xlu0 %v2061, 32
      %v2142 = vpop.permute.xlu0 %2141
      %2143 = vrot.lane.b32.xlu0 %v2062, 32
      %v2144 = vpop.permute.xlu0 %2143
      %2145 = vrot.lane.b32.xlu0 %v2063, 32
      %v2146 = vpop.permute.xlu0 %2145
      %2147 = vrot.lane.b32.xlu0 %v2064, 32
      %v2148 = vpop.permute.xlu0 %2147
      %2149 = vrot.lane.b32.xlu0 %v2065, 32
      %v2150 = vpop.permute.xlu0 %2149
      %2151 = vrot.lane.b32.xlu0 %v2066, 32
      %v2152 = vpop.permute.xlu0 %2151
      %2153 = vrot.lane.b32.xlu0 %v2067, 32
      %v2154 = vpop.permute.xlu0 %2153
      %2155 = vrot.lane.b32.xlu0 %v2068, 32
      %v2156 = vpop.permute.xlu0 %2155
      %2157 = vrot.lane.b32.xlu0 %v2069, 32
      %v2158 = vpop.permute.xlu0 %2157
      %2159 = vrot.lane.b32.xlu0 %v2070, 32
      %v2160 = vpop.permute.xlu0 %2159
      %2161 = vrot.lane.b32.xlu0 %v2071, 32
      %v2162 = vpop.permute.xlu0 %2161
      %2163 = vrot.lane.b32.xlu0 %v2072, 32
      %v2164 = vpop.permute.xlu0 %2163
      %2165 = vrot.lane.b32.xlu0 %v2073, 32
      %v2166 = vpop.permute.xlu0 %2165
      %2167 = vrot.lane.b32.xlu0 %v2074, 32
      %v2168 = vpop.permute.xlu0 %2167
      %2169 = vrot.lane.b32.xlu0 %v2075, 32
      %v2170 = vpop.permute.xlu0 %2169
      %2171 = vrot.lane.b32.xlu0 %v2076, 32
      %v2172 = vpop.permute.xlu0 %2171
      %2205 = vst.msk [vmem:[#allocation4] sm:$0xf] %vm1218, %v2110
      %2206 = vst.msk [vmem:[#allocation4 + $0x4] sm:$0xf] %vm1218, %v2112
      %2207 = vst.msk [vmem:[#allocation4 + $0x8] sm:$0xf] %vm1218, %v2114
      %2208 = vst.msk [vmem:[#allocation4 + $0xc] sm:$0xf] %vm1218, %v2116
      %2209 = vst.msk [vmem:[#allocation4 + $0x10] sm:$0xf] %vm1218, %v2118
      %2210 = vst.msk [vmem:[#allocation4 + $0x14] sm:$0xf] %vm1218, %v2120
      %2211 = vst.msk [vmem:[#allocation4 + $0x18] sm:$0xf] %vm1218, %v2122
      %2212 = vst.msk [vmem:[#allocation4 + $0x1c] sm:$0xf] %vm1218, %v2124
      %2213 = vst.msk [vmem:[#allocation4 + $0x20] sm:$0xf] %vm1218, %v2126
      %2214 = vst.msk [vmem:[#allocation4 + $0x24] sm:$0xf] %vm1218, %v2128
      %2215 = vst.msk [vmem:[#allocation4 + $0x28] sm:$0xf] %vm1218, %v2130
      %2216 = vst.msk [vmem:[#allocation4 + $0x2c] sm:$0xf] %vm1218, %v2132
      %2217 = vst.msk [vmem:[#allocation4 + $0x30] sm:$0xf] %vm1218, %v2134
      %2218 = vst.msk [vmem:[#allocation4 + $0x34] sm:$0xf] %vm1218, %v2136
      %2219 = vst.msk [vmem:[#allocation4 + $0x38] sm:$0xf] %vm1218, %v2138
      %2220 = vst.msk [vmem:[#allocation4 + $0x3c] sm:$0xf] %vm1218, %v2140
      %2221 = vst.msk [vmem:[#allocation4 + $0x40] sm:$0xf] %vm1218, %v2142
      %2222 = vst.msk [vmem:[#allocation4 + $0x44] sm:$0xf] %vm1218, %v2144
      %2223 = vst.msk [vmem:[#allocation4 + $0x48] sm:$0xf] %vm1218, %v2146
      %2224 = vst.msk [vmem:[#allocation4 + $0x4c] sm:$0xf] %vm1218, %v2148
      %2225 = vst.msk [vmem:[#allocation4 + $0x50] sm:$0xf] %vm1218, %v2150
      %2226 = vst.msk [vmem:[#allocation4 + $0x54] sm:$0xf] %vm1218, %v2152
      %2227 = vst.msk [vmem:[#allocation4 + $0x58] sm:$0xf] %vm1218, %v2154
      %2228 = vst.msk [vmem:[#allocation4 + $0x5c] sm:$0xf] %vm1218, %v2156
      %2229 = vst.msk [vmem:[#allocation4 + $0x60] sm:$0xf] %vm1218, %v2158
      %2230 = vst.msk [vmem:[#allocation4 + $0x64] sm:$0xf] %vm1218, %v2160
      %2231 = vst.msk [vmem:[#allocation4 + $0x68] sm:$0xf] %vm1218, %v2162
      %2232 = vst.msk [vmem:[#allocation4 + $0x6c] sm:$0xf] %vm1218, %v2164
      %2233 = vst.msk [vmem:[#allocation4 + $0x70] sm:$0xf] %vm1218, %v2166
      %2234 = vst.msk [vmem:[#allocation4 + $0x74] sm:$0xf] %vm1218, %v2168
      %2235 = vst.msk [vmem:[#allocation4 + $0x78] sm:$0xf] %vm1218, %v2170
      %2236 = vst.msk [vmem:[#allocation4 + $0x7c] sm:$0xf] %vm1218, %v2172
      %v2237 = vld [vmem:[#allocation8] sm:$0xff]
      %v2238 = vld [vmem:[#allocation8 + $0x8] sm:$0xff]
      %v2239 = vld [vmem:[#allocation8 + $0x10] sm:$0xff]
      %v2240 = vld [vmem:[#allocation8 + $0x18] sm:$0xff]
      %v2241 = vld [vmem:[#allocation8 + $0x20] sm:$0xff]
      %v2242 = vld [vmem:[#allocation8 + $0x28] sm:$0xff]
      %v2243 = vld [vmem:[#allocation8 + $0x30] sm:$0xff]
      %v2244 = vld [vmem:[#allocation8 + $0x38] sm:$0xff]
      %v2245 = vld [vmem:[#allocation8 + $0x40] sm:$0xff]
      %v2246 = vld [vmem:[#allocation8 + $0x48] sm:$0xff]
      %v2247 = vld [vmem:[#allocation8 + $0x50] sm:$0xff]
      %v2248 = vld [vmem:[#allocation8 + $0x58] sm:$0xff]
      %v2249 = vld [vmem:[#allocation8 + $0x60] sm:$0xff]
      %v2250 = vld [vmem:[#allocation8 + $0x68] sm:$0xff]
      %v2251 = vld [vmem:[#allocation8 + $0x70] sm:$0xff]
      %v2252 = vld [vmem:[#allocation8 + $0x78] sm:$0xff]
      %v2253 = vld [vmem:[#allocation8 + $0x80] sm:$0xff]
      %v2254 = vld [vmem:[#allocation8 + $0x88] sm:$0xff]
      %v2255 = vld [vmem:[#allocation8 + $0x90] sm:$0xff]
      %v2256 = vld [vmem:[#allocation8 + $0x98] sm:$0xff]
      %v2257 = vld [vmem:[#allocation8 + $0xa0] sm:$0xff]
      %v2258 = vld [vmem:[#allocation8 + $0xa8] sm:$0xff]
      %v2259 = vld [vmem:[#allocation8 + $0xb0] sm:$0xff]
      %v2260 = vld [vmem:[#allocation8 + $0xb8] sm:$0xff]
      %v2261 = vld [vmem:[#allocation8 + $0xc0] sm:$0xff]
      %v2262 = vld [vmem:[#allocation8 + $0xc8] sm:$0xff]
      %v2263 = vld [vmem:[#allocation8 + $0xd0] sm:$0xff]
      %v2264 = vld [vmem:[#allocation8 + $0xd8] sm:$0xff]
      %v2265 = vld [vmem:[#allocation8 + $0xe0] sm:$0xff]
      %v2266 = vld [vmem:[#allocation8 + $0xe8] sm:$0xff]
      %v2267 = vld [vmem:[#allocation8 + $0xf0] sm:$0xff]
      %v2268 = vld [vmem:[#allocation8 + $0xf8] sm:$0xff]
      %v2269 = vld [vmem:[#allocation4] sm:$0xf]
      %v2270 = vld [vmem:[#allocation4 + $0x4] sm:$0xf]
      %v2271 = vld [vmem:[#allocation4 + $0x8] sm:$0xf]
      %v2272 = vld [vmem:[#allocation4 + $0xc] sm:$0xf]
      %v2273 = vld [vmem:[#allocation4 + $0x10] sm:$0xf]
      %v2274 = vld [vmem:[#allocation4 + $0x14] sm:$0xf]
      %v2275 = vld [vmem:[#allocation4 + $0x18] sm:$0xf]
      %v2276 = vld [vmem:[#allocation4 + $0x1c] sm:$0xf]
      %v2277 = vld [vmem:[#allocation4 + $0x20] sm:$0xf]
      %v2278 = vld [vmem:[#allocation4 + $0x24] sm:$0xf]
      %v2279 = vld [vmem:[#allocation4 + $0x28] sm:$0xf]
      %v2280 = vld [vmem:[#allocation4 + $0x2c] sm:$0xf]
      %v2281 = vld [vmem:[#allocation4 + $0x30] sm:$0xf]
      %v2282 = vld [vmem:[#allocation4 + $0x34] sm:$0xf]
      %v2283 = vld [vmem:[#allocation4 + $0x38] sm:$0xf]
      %v2284 = vld [vmem:[#allocation4 + $0x3c] sm:$0xf]
      %v2285 = vld [vmem:[#allocation4 + $0x40] sm:$0xf]
      %v2286 = vld [vmem:[#allocation4 + $0x44] sm:$0xf]
      %v2287 = vld [vmem:[#allocation4 + $0x48] sm:$0xf]
      %v2288 = vld [vmem:[#allocation4 + $0x4c] sm:$0xf]
      %v2289 = vld [vmem:[#allocation4 + $0x50] sm:$0xf]
      %v2290 = vld [vmem:[#allocation4 + $0x54] sm:$0xf]
      %v2291 = vld [vmem:[#allocation4 + $0x58] sm:$0xf]
      %v2292 = vld [vmem:[#allocation4 + $0x5c] sm:$0xf]
      %v2293 = vld [vmem:[#allocation4 + $0x60] sm:$0xf]
      %v2294 = vld [vmem:[#allocation4 + $0x64] sm:$0xf]
      %v2295 = vld [vmem:[#allocation4 + $0x68] sm:$0xf]
      %v2296 = vld [vmem:[#allocation4 + $0x6c] sm:$0xf]
      %v2297 = vld [vmem:[#allocation4 + $0x70] sm:$0xf]
      %v2298 = vld [vmem:[#allocation4 + $0x74] sm:$0xf]
      %v2299 = vld [vmem:[#allocation4 + $0x78] sm:$0xf]
      %v2300 = vld [vmem:[#allocation4 + $0x7c] sm:$0xf]
      %s2301 = scalar_lea.vmem %s2, 24
      %v2302 = vld [vmem:[%s2301] sm:$0xf]
      %v2303 = vld [vmem:[%s2301 + $0x4] sm:$0xf]
      %v2304 = vld [vmem:[%s2301 + $0x8] sm:$0xf]
      %v2305 = vld [vmem:[%s2301 + $0xc] sm:$0xf]
      %v2306 = vld [vmem:[%s2301 + $0x10] sm:$0xf]
      %v2307 = vld [vmem:[%s2301 + $0x14] sm:$0xf]
      %v2340 = vunpack.c.l.b16 %v2269
      %v2341 = vunpack.c.l.b16 %v2270
      %v2342 = vunpack.c.l.b16 %v2271
      %v2343 = vunpack.c.l.b16 %v2272
      %v2344 = vunpack.c.l.b16 %v2273
      %v2345 = vunpack.c.l.b16 %v2274
      %v2346 = vunpack.c.l.b16 %v2275
      %v2347 = vunpack.c.l.b16 %v2276
      %v2348 = vunpack.c.l.b16 %v2277
      %v2349 = vunpack.c.l.b16 %v2278
      %v2350 = vunpack.c.l.b16 %v2279
      %v2351 = vunpack.c.l.b16 %v2280
      %v2352 = vunpack.c.l.b16 %v2281
      %v2353 = vunpack.c.l.b16 %v2282
      %v2354 = vunpack.c.l.b16 %v2283
      %v2355 = vunpack.c.l.b16 %v2284
      %v2356 = vunpack.c.l.b16 %v2285
      %v2357 = vunpack.c.l.b16 %v2286
      %v2358 = vunpack.c.l.b16 %v2287
      %v2359 = vunpack.c.l.b16 %v2288
      %v2360 = vunpack.c.l.b16 %v2289
      %v2361 = vunpack.c.l.b16 %v2290
      %v2362 = vunpack.c.l.b16 %v2291
      %v2363 = vunpack.c.l.b16 %v2292
      %v2364 = vunpack.c.l.b16 %v2293
      %v2365 = vunpack.c.l.b16 %v2294
      %v2366 = vunpack.c.l.b16 %v2295
      %v2367 = vunpack.c.l.b16 %v2296
      %v2368 = vunpack.c.l.b16 %v2297
      %v2369 = vunpack.c.l.b16 %v2298
      %v2370 = vunpack.c.l.b16 %v2299
      %v2371 = vunpack.c.l.b16 %v2300
      %v2372 = vpack.c.b16 %v2341, %v2340
      %v2373 = vpack.c.b16 %v2343, %v2342
      %v2374 = vpack.c.b16 %v2345, %v2344
      %v2375 = vpack.c.b16 %v2347, %v2346
      %v2376 = vpack.c.b16 %v2349, %v2348
      %v2377 = vpack.c.b16 %v2351, %v2350
      %v2378 = vpack.c.b16 %v2353, %v2352
      %v2379 = vpack.c.b16 %v2355, %v2354
      %v2380 = vpack.c.b16 %v2357, %v2356
      %v2381 = vpack.c.b16 %v2359, %v2358
      %v2382 = vpack.c.b16 %v2361, %v2360
      %v2383 = vpack.c.b16 %v2363, %v2362
      %v2384 = vpack.c.b16 %v2365, %v2364
      %v2385 = vpack.c.b16 %v2367, %v2366
      %v2386 = vpack.c.b16 %v2369, %v2368
      %v2387 = vpack.c.b16 %v2371, %v2370
      %v2394 = vunpack.c.l.b16 %v2302
      %v2395 = vunpack.c.l.b16 %v2303
      %v2396 = vunpack.c.l.b16 %v2304
      %v2397 = vunpack.c.l.b16 %v2305
      %v2398 = vunpack.c.l.b16 %v2306
      %v2399 = vunpack.c.l.b16 %v2307
      %v2400 = vpack.c.b16 %v2395, %v2394
      %v2401 = vpack.c.b16 %v2397, %v2396
      %v2402 = vpack.c.b16 %v2399, %v2398
      %v2407 = vsel %vm1419, %v2372, 0
      %v2410 = vsel %vm1419, %v2373, 0
      %v2413 = vsel %vm1419, %v2374, 0
      %v2416 = vsel %vm1419, %v2375, 0
      %v2419 = vsel %vm1419, %v2376, 0
      %v2422 = vsel %vm1419, %v2377, 0
      %v2425 = vsel %vm1419, %v2378, 0
      %v2428 = vsel %vm1419, %v2379, 0
      %v2431 = vsel %vm1419, %v2380, 0
      %v2434 = vsel %vm1419, %v2381, 0
      %v2437 = vsel %vm1419, %v2382, 0
      %v2440 = vsel %vm1419, %v2383, 0
      %v2443 = vsel %vm1419, %v2384, 0
      %v2446 = vsel %vm1419, %v2385, 0
      %v2449 = vsel %vm1419, %v2386, 0
      %v2452 = vsel %vm1419, %v2387, 0
      %2454 = vmatpush.bf16.msra.mxu0 0
      %2455 = vmatpush.bf16.msra.mxu0 0
      %2456 = vmatpush.bf16.msra.mxu0 0
      %2457 = vmatpush.bf16.msra.mxu0 0
      %2458 = vmatpush.bf16.msra.mxu0 0
      %2459 = vmatpush.bf16.msra.mxu0 %v2402
      %2460 = vmatpush.bf16.msra.mxu0 %v2401
      %2461 = vmatpush.bf16.msra.mxu0 %v2400
      %2462 = vmatmul.bf16.gmra.mxu0 %v2407
      %v2463 = vpop.f32.mrf.mxu0
      %v2464 = vadd.f32 0.0, %v2463
      %v2465 = vpop.f32.mrf.mxu0
      %v2466 = vadd.f32 0.0, %v2465
      %2467 = vmatmul.bf16.gmra.mxu0 %v2410
      %v2468 = vpop.f32.mrf.mxu0
      %v2469 = vadd.f32 0.0, %v2468
      %v2470 = vpop.f32.mrf.mxu0
      %v2471 = vadd.f32 0.0, %v2470
      %2472 = vmatmul.bf16.gmra.mxu0 %v2413
      %v2473 = vpop.f32.mrf.mxu0
      %v2474 = vadd.f32 0.0, %v2473
      %v2475 = vpop.f32.mrf.mxu0
      %v2476 = vadd.f32 0.0, %v2475
      %2477 = vmatmul.bf16.gmra.mxu0 %v2416
      %v2478 = vpop.f32.mrf.mxu0
      %v2479 = vadd.f32 0.0, %v2478
      %v2480 = vpop.f32.mrf.mxu0
      %v2481 = vadd.f32 0.0, %v2480
      %2482 = vmatmul.bf16.gmra.mxu0 %v2419
      %v2483 = vpop.f32.mrf.mxu0
      %v2484 = vadd.f32 0.0, %v2483
      %v2485 = vpop.f32.mrf.mxu0
      %v2486 = vadd.f32 0.0, %v2485
      %2487 = vmatmul.bf16.gmra.mxu0 %v2422
      %v2488 = vpop.f32.mrf.mxu0
      %v2489 = vadd.f32 0.0, %v2488
      %v2490 = vpop.f32.mrf.mxu0
      %v2491 = vadd.f32 0.0, %v2490
      %2492 = vmatmul.bf16.gmra.mxu0 %v2425
      %v2493 = vpop.f32.mrf.mxu0
      %v2494 = vadd.f32 0.0, %v2493
      %v2495 = vpop.f32.mrf.mxu0
      %v2496 = vadd.f32 0.0, %v2495
      %2497 = vmatmul.bf16.gmra.mxu0 %v2428
      %v2498 = vpop.f32.mrf.mxu0
      %v2499 = vadd.f32 0.0, %v2498
      %v2500 = vpop.f32.mrf.mxu0
      %v2501 = vadd.f32 0.0, %v2500
      %2502 = vmatmul.bf16.gmra.mxu0 %v2431
      %v2503 = vpop.f32.mrf.mxu0
      %v2504 = vadd.f32 0.0, %v2503
      %v2505 = vpop.f32.mrf.mxu0
      %v2506 = vadd.f32 0.0, %v2505
      %2507 = vmatmul.bf16.gmra.mxu0 %v2434
      %v2508 = vpop.f32.mrf.mxu0
      %v2509 = vadd.f32 0.0, %v2508
      %v2510 = vpop.f32.mrf.mxu0
      %v2511 = vadd.f32 0.0, %v2510
      %2512 = vmatmul.bf16.gmra.mxu0 %v2437
      %v2513 = vpop.f32.mrf.mxu0
      %v2514 = vadd.f32 0.0, %v2513
      %v2515 = vpop.f32.mrf.mxu0
      %v2516 = vadd.f32 0.0, %v2515
      %2517 = vmatmul.bf16.gmra.mxu0 %v2440
      %v2518 = vpop.f32.mrf.mxu0
      %v2519 = vadd.f32 0.0, %v2518
      %v2520 = vpop.f32.mrf.mxu0
      %v2521 = vadd.f32 0.0, %v2520
      %2522 = vmatmul.bf16.gmra.mxu0 %v2443
      %v2523 = vpop.f32.mrf.mxu0
      %v2524 = vadd.f32 0.0, %v2523
      %v2525 = vpop.f32.mrf.mxu0
      %v2526 = vadd.f32 0.0, %v2525
      %2527 = vmatmul.bf16.gmra.mxu0 %v2446
      %v2528 = vpop.f32.mrf.mxu0
      %v2529 = vadd.f32 0.0, %v2528
      %v2530 = vpop.f32.mrf.mxu0
      %v2531 = vadd.f32 0.0, %v2530
      %2532 = vmatmul.bf16.gmra.mxu0 %v2449
      %v2533 = vpop.f32.mrf.mxu0
      %v2534 = vadd.f32 0.0, %v2533
      %v2535 = vpop.f32.mrf.mxu0
      %v2536 = vadd.f32 0.0, %v2535
      %2537 = vmatmul.bf16.gmra.mxu0 %v2452
      %v2538 = vpop.f32.mrf.mxu0
      %v2539 = vadd.f32 0.0, %v2538
      %v2540 = vpop.f32.mrf.mxu0
      %v2541 = vadd.f32 0.0, %v2540
      %2542 = vdwg.mxu0
      %v2543 = vadd.f32 %v2237, %v2464
      %v2544 = vadd.f32 %v2238, %v2466
      %v2545 = vadd.f32 %v2239, %v2469
      %v2546 = vadd.f32 %v2240, %v2471
      %v2547 = vadd.f32 %v2241, %v2474
      %v2548 = vadd.f32 %v2242, %v2476
      %v2549 = vadd.f32 %v2243, %v2479
      %v2550 = vadd.f32 %v2244, %v2481
      %v2551 = vadd.f32 %v2245, %v2484
      %v2552 = vadd.f32 %v2246, %v2486
      %v2553 = vadd.f32 %v2247, %v2489
      %v2554 = vadd.f32 %v2248, %v2491
      %v2555 = vadd.f32 %v2249, %v2494
      %v2556 = vadd.f32 %v2250, %v2496
      %v2557 = vadd.f32 %v2251, %v2499
      %v2558 = vadd.f32 %v2252, %v2501
      %v2559 = vadd.f32 %v2253, %v2504
      %v2560 = vadd.f32 %v2254, %v2506
      %v2561 = vadd.f32 %v2255, %v2509
      %v2562 = vadd.f32 %v2256, %v2511
      %v2563 = vadd.f32 %v2257, %v2514
      %v2564 = vadd.f32 %v2258, %v2516
      %v2565 = vadd.f32 %v2259, %v2519
      %v2566 = vadd.f32 %v2260, %v2521
      %v2567 = vadd.f32 %v2261, %v2524
      %v2568 = vadd.f32 %v2262, %v2526
      %v2569 = vadd.f32 %v2263, %v2529
      %v2570 = vadd.f32 %v2264, %v2531
      %v2571 = vadd.f32 %v2265, %v2534
      %v2572 = vadd.f32 %v2266, %v2536
      %v2573 = vadd.f32 %v2267, %v2539
      %v2574 = vadd.f32 %v2268, %v2541
      %2575 = vst.msk [vmem:[#allocation8] sm:$0xff] %vm340, %v2543
      %2576 = vst.msk [vmem:[#allocation8 + $0x8] sm:$0xff] %vm340, %v2544
      %2577 = vst.msk [vmem:[#allocation8 + $0x10] sm:$0xff] %vm340, %v2545
      %2578 = vst.msk [vmem:[#allocation8 + $0x18] sm:$0xff] %vm340, %v2546
      %2579 = vst.msk [vmem:[#allocation8 + $0x20] sm:$0xff] %vm340, %v2547
      %2580 = vst.msk [vmem:[#allocation8 + $0x28] sm:$0xff] %vm340, %v2548
      %2581 = vst.msk [vmem:[#allocation8 + $0x30] sm:$0xff] %vm340, %v2549
      %2582 = vst.msk [vmem:[#allocation8 + $0x38] sm:$0xff] %vm340, %v2550
      %2583 = vst.msk [vmem:[#allocation8 + $0x40] sm:$0xff] %vm340, %v2551
      %2584 = vst.msk [vmem:[#allocation8 + $0x48] sm:$0xff] %vm340, %v2552
      %2585 = vst.msk [vmem:[#allocation8 + $0x50] sm:$0xff] %vm340, %v2553
      %2586 = vst.msk [vmem:[#allocation8 + $0x58] sm:$0xff] %vm340, %v2554
      %2587 = vst.msk [vmem:[#allocation8 + $0x60] sm:$0xff] %vm340, %v2555
      %2588 = vst.msk [vmem:[#allocation8 + $0x68] sm:$0xff] %vm340, %v2556
      %2589 = vst.msk [vmem:[#allocation8 + $0x70] sm:$0xff] %vm340, %v2557
      %2590 = vst.msk [vmem:[#allocation8 + $0x78] sm:$0xff] %vm340, %v2558
      %2591 = vst.msk [vmem:[#allocation8 + $0x80] sm:$0xff] %vm340, %v2559
      %2592 = vst.msk [vmem:[#allocation8 + $0x88] sm:$0xff] %vm340, %v2560
      %2593 = vst.msk [vmem:[#allocation8 + $0x90] sm:$0xff] %vm340, %v2561
      %2594 = vst.msk [vmem:[#allocation8 + $0x98] sm:$0xff] %vm340, %v2562
      %2595 = vst.msk [vmem:[#allocation8 + $0xa0] sm:$0xff] %vm340, %v2563
      %2596 = vst.msk [vmem:[#allocation8 + $0xa8] sm:$0xff] %vm340, %v2564
      %2597 = vst.msk [vmem:[#allocation8 + $0xb0] sm:$0xff] %vm340, %v2565
      %2598 = vst.msk [vmem:[#allocation8 + $0xb8] sm:$0xff] %vm340, %v2566
      %2599 = vst.msk [vmem:[#allocation8 + $0xc0] sm:$0xff] %vm340, %v2567
      %2600 = vst.msk [vmem:[#allocation8 + $0xc8] sm:$0xff] %vm340, %v2568
      %2601 = vst.msk [vmem:[#allocation8 + $0xd0] sm:$0xff] %vm340, %v2569
      %2602 = vst.msk [vmem:[#allocation8 + $0xd8] sm:$0xff] %vm340, %v2570
      %2603 = vst.msk [vmem:[#allocation8 + $0xe0] sm:$0xff] %vm340, %v2571
      %2604 = vst.msk [vmem:[#allocation8 + $0xe8] sm:$0xff] %vm340, %v2572
      %2605 = vst.msk [vmem:[#allocation8 + $0xf0] sm:$0xff] %vm340, %v2573
      %2606 = vst.msk [vmem:[#allocation8 + $0xf8] sm:$0xff] %vm340, %v2574
      %v2607 = vld [vmem:[#allocation2 + $0x2] sm:$0xff]
      %v2608 = vld [vmem:[#allocation2 + $0xa] sm:$0xff]
      %v2609 = vld [vmem:[#allocation2 + $0x1a] sm:$0xff]
      %v2610 = vld [vmem:[#allocation2 + $0x22] sm:$0xff]
      %v2611 = vld [vmem:[#allocation2 + $0x32] sm:$0xff]
      %v2612 = vld [vmem:[#allocation2 + $0x3a] sm:$0xff]
      %v2613 = vld [vmem:[#allocation2 + $0x4a] sm:$0xff]
      %v2614 = vld [vmem:[#allocation2 + $0x52] sm:$0xff]
      %v2615 = vld [vmem:[#allocation2 + $0x62] sm:$0xff]
      %v2616 = vld [vmem:[#allocation2 + $0x6a] sm:$0xff]
      %v2617 = vld [vmem:[#allocation2 + $0x7a] sm:$0xff]
      %v2618 = vld [vmem:[#allocation2 + $0x82] sm:$0xff]
      %v2619 = vld [vmem:[#allocation2 + $0x92] sm:$0xff]
      %v2620 = vld [vmem:[#allocation2 + $0x9a] sm:$0xff]
      %v2621 = vld [vmem:[#allocation2 + $0xaa] sm:$0xff]
      %v2622 = vld [vmem:[#allocation2 + $0xb2] sm:$0xff]
      %v2623 = vld [vmem:[#allocation2 + $0xc2] sm:$0xff]
      %v2624 = vld [vmem:[#allocation2 + $0xca] sm:$0xff]
      %v2625 = vld [vmem:[#allocation2 + $0xda] sm:$0xff]
      %v2626 = vld [vmem:[#allocation2 + $0xe2] sm:$0xff]
      %v2627 = vld [vmem:[#allocation2 + $0xf2] sm:$0xff]
      %v2628 = vld [vmem:[#allocation2 + $0xfa] sm:$0xff]
      %v2629 = vld [vmem:[#allocation2 + $0x10a] sm:$0xff]
      %v2630 = vld [vmem:[#allocation2 + $0x112] sm:$0xff]
      %v2631 = vld [vmem:[#allocation2 + $0x122] sm:$0xff]
      %v2632 = vld [vmem:[#allocation2 + $0x12a] sm:$0xff]
      %v2633 = vld [vmem:[#allocation2 + $0x13a] sm:$0xff]
      %v2634 = vld [vmem:[#allocation2 + $0x142] sm:$0xff]
      %v2635 = vld [vmem:[#allocation2 + $0x152] sm:$0xff]
      %v2636 = vld [vmem:[#allocation2 + $0x15a] sm:$0xff]
      %v2637 = vld [vmem:[#allocation2 + $0x16a] sm:$0xff]
      %v2638 = vld [vmem:[#allocation2 + $0x172] sm:$0xff]
      %v2639 = vld [vmem:[#allocation2 + $0x182] sm:$0xff]
      %v2640 = vld [vmem:[#allocation2 + $0x18a] sm:$0xff]
      %v2641 = vld [vmem:[#allocation2 + $0x19a] sm:$0xff]
      %v2642 = vld [vmem:[#allocation2 + $0x1a2] sm:$0xff]
      %2643 = vst.msk [vmem:[#allocation3] sm:$0xff] %vm219, %v2607
      %2644 = vst.msk [vmem:[#allocation3 + $0x8] sm:$0xff] %vm219, %v2608
      %2645 = vst.msk [vmem:[#allocation3 + $0x10] sm:$0xff] %vm219, %v2609
      %2646 = vst.msk [vmem:[#allocation3 + $0x18] sm:$0xff] %vm219, %v2610
      %2647 = vst.msk [vmem:[#allocation3 + $0x20] sm:$0xff] %vm219, %v2611
      %2648 = vst.msk [vmem:[#allocation3 + $0x28] sm:$0xff] %vm219, %v2612
      %2649 = vst.msk [vmem:[#allocation3 + $0x30] sm:$0xff] %vm219, %v2613
      %2650 = vst.msk [vmem:[#allocation3 + $0x38] sm:$0xff] %vm219, %v2614
      %2651 = vst.msk [vmem:[#allocation3 + $0x40] sm:$0xff] %vm219, %v2615
      %2652 = vst.msk [vmem:[#allocation3 + $0x48] sm:$0xff] %vm219, %v2616
      %2653 = vst.msk [vmem:[#allocation3 + $0x50] sm:$0xff] %vm219, %v2617
      %2654 = vst.msk [vmem:[#allocation3 + $0x58] sm:$0xff] %vm219, %v2618
      %2655 = vst.msk [vmem:[#allocation3 + $0x60] sm:$0xff] %vm219, %v2619
      %2656 = vst.msk [vmem:[#allocation3 + $0x68] sm:$0xff] %vm219, %v2620
      %2657 = vst.msk [vmem:[#allocation3 + $0x70] sm:$0xff] %vm219, %v2621
      %2658 = vst.msk [vmem:[#allocation3 + $0x78] sm:$0xff] %vm219, %v2622
      %2659 = vst.msk [vmem:[#allocation3 + $0x80] sm:$0xff] %vm219, %v2623
      %2660 = vst.msk [vmem:[#allocation3 + $0x88] sm:$0xff] %vm219, %v2624
      %2661 = vst.msk [vmem:[#allocation3 + $0x90] sm:$0xff] %vm219, %v2625
      %2662 = vst.msk [vmem:[#allocation3 + $0x98] sm:$0xff] %vm219, %v2626
      %2663 = vst.msk [vmem:[#allocation3 + $0xa0] sm:$0xff] %vm219, %v2627
      %2664 = vst.msk [vmem:[#allocation3 + $0xa8] sm:$0xff] %vm219, %v2628
      %2665 = vst.msk [vmem:[#allocation3 + $0xb0] sm:$0xff] %vm219, %v2629
      %2666 = vst.msk [vmem:[#allocation3 + $0xb8] sm:$0xff] %vm219, %v2630
      %2667 = vst.msk [vmem:[#allocation3 + $0xc0] sm:$0xff] %vm219, %v2631
      %2668 = vst.msk [vmem:[#allocation3 + $0xc8] sm:$0xff] %vm219, %v2632
      %2669 = vst.msk [vmem:[#allocation3 + $0xd0] sm:$0xff] %vm219, %v2633
      %2670 = vst.msk [vmem:[#allocation3 + $0xd8] sm:$0xff] %vm219, %v2634
      %2671 = vst.msk [vmem:[#allocation3 + $0xe0] sm:$0xff] %vm219, %v2635
      %2672 = vst.msk [vmem:[#allocation3 + $0xe8] sm:$0xff] %vm219, %v2636
      %2673 = vst.msk [vmem:[#allocation3 + $0xf0] sm:$0xff] %vm219, %v2637
      %2674 = vst.msk [vmem:[#allocation3 + $0xf8] sm:$0xff] %vm219, %v2638
      %2675 = vst.msk [vmem:[#allocation3 + $0x100] sm:$0xff] %vm219, %v2639
      %2676 = vst.msk [vmem:[#allocation3 + $0x108] sm:$0xff] %vm219, %v2640
      %2677 = vst.msk [vmem:[#allocation3 + $0x110] sm:$0xff] %vm219, %v2641
      %2678 = vst.msk [vmem:[#allocation3 + $0x118] sm:$0xff] %vm219, %v2642
      %v2679 = vld [vmem:[#allocation3] sm:$0xff]
      %v2680 = vld [vmem:[#allocation3 + $0x8] sm:$0xff]
      %v2681 = vld [vmem:[#allocation3 + $0x10] sm:$0xff]
      %v2682 = vld [vmem:[#allocation3 + $0x18] sm:$0xff]
      %v2683 = vld [vmem:[#allocation3 + $0x20] sm:$0xff]
      %v2684 = vld [vmem:[#allocation3 + $0x28] sm:$0xff]
      %v2685 = vld [vmem:[#allocation3 + $0x30] sm:$0xff]
      %v2686 = vld [vmem:[#allocation3 + $0x38] sm:$0xff]
      %v2687 = vld [vmem:[#allocation3 + $0x40] sm:$0xff]
      %v2688 = vld [vmem:[#allocation3 + $0x48] sm:$0xff]
      %v2689 = vld [vmem:[#allocation3 + $0x50] sm:$0xff]
      %v2690 = vld [vmem:[#allocation3 + $0x58] sm:$0xff]
      %v2691 = vld [vmem:[#allocation3 + $0x60] sm:$0xff]
      %v2692 = vld [vmem:[#allocation3 + $0x68] sm:$0xff]
      %v2693 = vld [vmem:[#allocation3 + $0x70] sm:$0xff]
      %v2694 = vld [vmem:[#allocation3 + $0x78] sm:$0xff]
      %v2695 = vld [vmem:[#allocation3 + $0x80] sm:$0xff]
      %v2696 = vld [vmem:[#allocation3 + $0x88] sm:$0xff]
      %v2697 = vld [vmem:[#allocation3 + $0x90] sm:$0xff]
      %v2698 = vld [vmem:[#allocation3 + $0x98] sm:$0xff]
      %v2699 = vld [vmem:[#allocation3 + $0xa0] sm:$0xff]
      %v2700 = vld [vmem:[#allocation3 + $0xa8] sm:$0xff]
      %v2701 = vld [vmem:[#allocation3 + $0xb0] sm:$0xff]
      %v2702 = vld [vmem:[#allocation3 + $0xb8] sm:$0xff]
      %v2703 = vld [vmem:[#allocation3 + $0xc0] sm:$0xff]
      %v2704 = vld [vmem:[#allocation3 + $0xc8] sm:$0xff]
      %v2705 = vld [vmem:[#allocation3 + $0xd0] sm:$0xff]
      %v2706 = vld [vmem:[#allocation3 + $0xd8] sm:$0xff]
      %v2707 = vld [vmem:[#allocation3 + $0xe0] sm:$0xff]
      %v2708 = vld [vmem:[#allocation3 + $0xe8] sm:$0xff]
      %v2709 = vld [vmem:[#allocation3 + $0xf0] sm:$0xff]
      %v2710 = vld [vmem:[#allocation3 + $0xf8] sm:$0xff]
      %v2711 = vpack.c.bf16 %v2679, %v2679
      %v2712 = vpack.c.bf16 %v2680, %v2680
      %v2713 = vpack.c.bf16 %v2681, %v2681
      %v2714 = vpack.c.bf16 %v2682, %v2682
      %v2715 = vpack.c.bf16 %v2683, %v2683
      %v2716 = vpack.c.bf16 %v2684, %v2684
      %v2717 = vpack.c.bf16 %v2685, %v2685
      %v2718 = vpack.c.bf16 %v2686, %v2686
      %v2719 = vpack.c.bf16 %v2687, %v2687
      %v2720 = vpack.c.bf16 %v2688, %v2688
      %v2721 = vpack.c.bf16 %v2689, %v2689
      %v2722 = vpack.c.bf16 %v2690, %v2690
      %v2723 = vpack.c.bf16 %v2691, %v2691
      %v2724 = vpack.c.bf16 %v2692, %v2692
      %v2725 = vpack.c.bf16 %v2693, %v2693
      %v2726 = vpack.c.bf16 %v2694, %v2694
      %v2727 = vpack.c.bf16 %v2695, %v2695
      %v2728 = vpack.c.bf16 %v2696, %v2696
      %v2729 = vpack.c.bf16 %v2697, %v2697
      %v2730 = vpack.c.bf16 %v2698, %v2698
      %v2731 = vpack.c.bf16 %v2699, %v2699
      %v2732 = vpack.c.bf16 %v2700, %v2700
      %v2733 = vpack.c.bf16 %v2701, %v2701
      %v2734 = vpack.c.bf16 %v2702, %v2702
      %v2735 = vpack.c.bf16 %v2703, %v2703
      %v2736 = vpack.c.bf16 %v2704, %v2704
      %v2737 = vpack.c.bf16 %v2705, %v2705
      %v2738 = vpack.c.bf16 %v2706, %v2706
      %v2739 = vpack.c.bf16 %v2707, %v2707
      %v2740 = vpack.c.bf16 %v2708, %v2708
      %v2741 = vpack.c.bf16 %v2709, %v2709
      %v2742 = vpack.c.bf16 %v2710, %v2710
      %2743 = vst.msk [vmem:[#allocation4] sm:$0xf] %vm766, %v2711
      %2744 = vst.msk [vmem:[#allocation4 + $0x4] sm:$0xf] %vm766, %v2712
      %2745 = vst.msk [vmem:[#allocation4 + $0x8] sm:$0xf] %vm766, %v2713
      %2746 = vst.msk [vmem:[#allocation4 + $0xc] sm:$0xf] %vm766, %v2714
      %2747 = vst.msk [vmem:[#allocation4 + $0x10] sm:$0xf] %vm766, %v2715
      %2748 = vst.msk [vmem:[#allocation4 + $0x14] sm:$0xf] %vm766, %v2716
      %2749 = vst.msk [vmem:[#allocation4 + $0x18] sm:$0xf] %vm766, %v2717
      %2750 = vst.msk [vmem:[#allocation4 + $0x1c] sm:$0xf] %vm766, %v2718
      %2751 = vst.msk [vmem:[#allocation4 + $0x20] sm:$0xf] %vm766, %v2719
      %2752 = vst.msk [vmem:[#allocation4 + $0x24] sm:$0xf] %vm766, %v2720
      %2753 = vst.msk [vmem:[#allocation4 + $0x28] sm:$0xf] %vm766, %v2721
      %2754 = vst.msk [vmem:[#allocation4 + $0x2c] sm:$0xf] %vm766, %v2722
      %2755 = vst.msk [vmem:[#allocation4 + $0x30] sm:$0xf] %vm766, %v2723
      %2756 = vst.msk [vmem:[#allocation4 + $0x34] sm:$0xf] %vm766, %v2724
      %2757 = vst.msk [vmem:[#allocation4 + $0x38] sm:$0xf] %vm766, %v2725
      %2758 = vst.msk [vmem:[#allocation4 + $0x3c] sm:$0xf] %vm766, %v2726
      %2759 = vst.msk [vmem:[#allocation4 + $0x40] sm:$0xf] %vm766, %v2727
      %2760 = vst.msk [vmem:[#allocation4 + $0x44] sm:$0xf] %vm766, %v2728
      %2761 = vst.msk [vmem:[#allocation4 + $0x48] sm:$0xf] %vm766, %v2729
      %2762 = vst.msk [vmem:[#allocation4 + $0x4c] sm:$0xf] %vm766, %v2730
      %2763 = vst.msk [vmem:[#allocation4 + $0x50] sm:$0xf] %vm766, %v2731
      %2764 = vst.msk [vmem:[#allocation4 + $0x54] sm:$0xf] %vm766, %v2732
      %2765 = vst.msk [vmem:[#allocation4 + $0x58] sm:$0xf] %vm766, %v2733
      %2766 = vst.msk [vmem:[#allocation4 + $0x5c] sm:$0xf] %vm766, %v2734
      %2767 = vst.msk [vmem:[#allocation4 + $0x60] sm:$0xf] %vm766, %v2735
      %2768 = vst.msk [vmem:[#allocation4 + $0x64] sm:$0xf] %vm766, %v2736
      %2769 = vst.msk [vmem:[#allocation4 + $0x68] sm:$0xf] %vm766, %v2737
      %2770 = vst.msk [vmem:[#allocation4 + $0x6c] sm:$0xf] %vm766, %v2738
      %2771 = vst.msk [vmem:[#allocation4 + $0x70] sm:$0xf] %vm766, %v2739
      %2772 = vst.msk [vmem:[#allocation4 + $0x74] sm:$0xf] %vm766, %v2740
      %2773 = vst.msk [vmem:[#allocation4 + $0x78] sm:$0xf] %vm766, %v2741
      %2774 = vst.msk [vmem:[#allocation4 + $0x7c] sm:$0xf] %vm766, %v2742
      %v2775 = vld [vmem:[%s799] sm:$0xff]
      %v2776 = vld [vmem:[%s799 + $0x8] sm:$0xff]
      %v2777 = vld [vmem:[%s799 + $0x10] sm:$0xff]
      %v2778 = vld [vmem:[%s799 + $0x18] sm:$0xff]
      %v2779 = vld [vmem:[%s799 + $0x20] sm:$0xff]
      %v2780 = vld [vmem:[%s799 + $0x28] sm:$0xff]
      %v2781 = vld [vmem:[%s799 + $0x30] sm:$0xff]
      %v2782 = vld [vmem:[%s799 + $0x38] sm:$0xff]
      %v2783 = vld [vmem:[%s799 + $0x40] sm:$0xff]
      %v2784 = vld [vmem:[%s799 + $0x48] sm:$0xff]
      %v2785 = vld [vmem:[%s799 + $0x50] sm:$0xff]
      %v2786 = vld [vmem:[%s799 + $0x58] sm:$0xff]
      %v2787 = vld [vmem:[%s799 + $0x60] sm:$0xff]
      %v2788 = vld [vmem:[%s799 + $0x68] sm:$0xff]
      %v2789 = vld [vmem:[%s799 + $0x70] sm:$0xff]
      %v2790 = vld [vmem:[%s799 + $0x78] sm:$0xff]
      %v2791 = vld [vmem:[%s799 + $0x80] sm:$0xff]
      %v2792 = vld [vmem:[%s799 + $0x88] sm:$0xff]
      %v2793 = vld [vmem:[%s799 + $0x90] sm:$0xff]
      %v2794 = vld [vmem:[%s799 + $0x98] sm:$0xff]
      %v2795 = vld [vmem:[%s799 + $0xa0] sm:$0xff]
      %v2796 = vld [vmem:[%s799 + $0xa8] sm:$0xff]
      %v2797 = vld [vmem:[%s799 + $0xb0] sm:$0xff]
      %v2798 = vld [vmem:[%s799 + $0xb8] sm:$0xff]
      %v2799 = vld [vmem:[%s799 + $0xc0] sm:$0xff]
      %v2800 = vld [vmem:[%s799 + $0xc8] sm:$0xff]
      %v2801 = vld [vmem:[%s799 + $0xd0] sm:$0xff]
      %v2802 = vld [vmem:[%s799 + $0xd8] sm:$0xff]
      %v2803 = vld [vmem:[%s799 + $0xe0] sm:$0xff]
      %v2804 = vld [vmem:[%s799 + $0xe8] sm:$0xff]
      %v2805 = vld [vmem:[%s799 + $0xf0] sm:$0xff]
      %v2806 = vld [vmem:[%s799 + $0xf8] sm:$0xff]
      %v2807 = vpack.c.bf16 %v2775, %v2775
      %v2808 = vpack.c.bf16 %v2776, %v2776
      %v2809 = vpack.c.bf16 %v2777, %v2777
      %v2810 = vpack.c.bf16 %v2778, %v2778
      %v2811 = vpack.c.bf16 %v2779, %v2779
      %v2812 = vpack.c.bf16 %v2780, %v2780
      %v2813 = vpack.c.bf16 %v2781, %v2781
      %v2814 = vpack.c.bf16 %v2782, %v2782
      %v2815 = vpack.c.bf16 %v2783, %v2783
      %v2816 = vpack.c.bf16 %v2784, %v2784
      %v2817 = vpack.c.bf16 %v2785, %v2785
      %v2818 = vpack.c.bf16 %v2786, %v2786
      %v2819 = vpack.c.bf16 %v2787, %v2787
      %v2820 = vpack.c.bf16 %v2788, %v2788
      %v2821 = vpack.c.bf16 %v2789, %v2789
      %v2822 = vpack.c.bf16 %v2790, %v2790
      %v2823 = vpack.c.bf16 %v2791, %v2791
      %v2824 = vpack.c.bf16 %v2792, %v2792
      %v2825 = vpack.c.bf16 %v2793, %v2793
      %v2826 = vpack.c.bf16 %v2794, %v2794
      %v2827 = vpack.c.bf16 %v2795, %v2795
      %v2828 = vpack.c.bf16 %v2796, %v2796
      %v2829 = vpack.c.bf16 %v2797, %v2797
      %v2830 = vpack.c.bf16 %v2798, %v2798
      %v2831 = vpack.c.bf16 %v2799, %v2799
      %v2832 = vpack.c.bf16 %v2800, %v2800
      %v2833 = vpack.c.bf16 %v2801, %v2801
      %v2834 = vpack.c.bf16 %v2802, %v2802
      %v2835 = vpack.c.bf16 %v2803, %v2803
      %v2836 = vpack.c.bf16 %v2804, %v2804
      %v2837 = vpack.c.bf16 %v2805, %v2805
      %v2838 = vpack.c.bf16 %v2806, %v2806
      %2871 = vrot.lane.b32.xlu0 %v2807, 16
      %v2872 = vpop.permute.xlu0 %2871
      %2873 = vrot.lane.b32.xlu0 %v2808, 16
      %v2874 = vpop.permute.xlu0 %2873
      %2875 = vrot.lane.b32.xlu0 %v2809, 16
      %v2876 = vpop.permute.xlu0 %2875
      %2877 = vrot.lane.b32.xlu0 %v2810, 16
      %v2878 = vpop.permute.xlu0 %2877
      %2879 = vrot.lane.b32.xlu0 %v2811, 16
      %v2880 = vpop.permute.xlu0 %2879
      %2881 = vrot.lane.b32.xlu0 %v2812, 16
      %v2882 = vpop.permute.xlu0 %2881
      %2883 = vrot.lane.b32.xlu0 %v2813, 16
      %v2884 = vpop.permute.xlu0 %2883
      %2885 = vrot.lane.b32.xlu0 %v2814, 16
      %v2886 = vpop.permute.xlu0 %2885
      %2887 = vrot.lane.b32.xlu0 %v2815, 16
      %v2888 = vpop.permute.xlu0 %2887
      %2889 = vrot.lane.b32.xlu0 %v2816, 16
      %v2890 = vpop.permute.xlu0 %2889
      %2891 = vrot.lane.b32.xlu0 %v2817, 16
      %v2892 = vpop.permute.xlu0 %2891
      %2893 = vrot.lane.b32.xlu0 %v2818, 16
      %v2894 = vpop.permute.xlu0 %2893
      %2895 = vrot.lane.b32.xlu0 %v2819, 16
      %v2896 = vpop.permute.xlu0 %2895
      %2897 = vrot.lane.b32.xlu0 %v2820, 16
      %v2898 = vpop.permute.xlu0 %2897
      %2899 = vrot.lane.b32.xlu0 %v2821, 16
      %v2900 = vpop.permute.xlu0 %2899
      %2901 = vrot.lane.b32.xlu0 %v2822, 16
      %v2902 = vpop.permute.xlu0 %2901
      %2903 = vrot.lane.b32.xlu0 %v2823, 16
      %v2904 = vpop.permute.xlu0 %2903
      %2905 = vrot.lane.b32.xlu0 %v2824, 16
      %v2906 = vpop.permute.xlu0 %2905
      %2907 = vrot.lane.b32.xlu0 %v2825, 16
      %v2908 = vpop.permute.xlu0 %2907
      %2909 = vrot.lane.b32.xlu0 %v2826, 16
      %v2910 = vpop.permute.xlu0 %2909
      %2911 = vrot.lane.b32.xlu0 %v2827, 16
      %v2912 = vpop.permute.xlu0 %2911
      %2913 = vrot.lane.b32.xlu0 %v2828, 16
      %v2914 = vpop.permute.xlu0 %2913
      %2915 = vrot.lane.b32.xlu0 %v2829, 16
      %v2916 = vpop.permute.xlu0 %2915
      %2917 = vrot.lane.b32.xlu0 %v2830, 16
      %v2918 = vpop.permute.xlu0 %2917
      %2919 = vrot.lane.b32.xlu0 %v2831, 16
      %v2920 = vpop.permute.xlu0 %2919
      %2921 = vrot.lane.b32.xlu0 %v2832, 16
      %v2922 = vpop.permute.xlu0 %2921
      %2923 = vrot.lane.b32.xlu0 %v2833, 16
      %v2924 = vpop.permute.xlu0 %2923
      %2925 = vrot.lane.b32.xlu0 %v2834, 16
      %v2926 = vpop.permute.xlu0 %2925
      %2927 = vrot.lane.b32.xlu0 %v2835, 16
      %v2928 = vpop.permute.xlu0 %2927
      %2929 = vrot.lane.b32.xlu0 %v2836, 16
      %v2930 = vpop.permute.xlu0 %2929
      %2931 = vrot.lane.b32.xlu0 %v2837, 16
      %v2932 = vpop.permute.xlu0 %2931
      %2933 = vrot.lane.b32.xlu0 %v2838, 16
      %v2934 = vpop.permute.xlu0 %2933
      %2967 = vst.msk [vmem:[#allocation4] sm:$0xf] %vm992, %v2872
      %2968 = vst.msk [vmem:[#allocation4 + $0x4] sm:$0xf] %vm992, %v2874
      %2969 = vst.msk [vmem:[#allocation4 + $0x8] sm:$0xf] %vm992, %v2876
      %2970 = vst.msk [vmem:[#allocation4 + $0xc] sm:$0xf] %vm992, %v2878
      %2971 = vst.msk [vmem:[#allocation4 + $0x10] sm:$0xf] %vm992, %v2880
      %2972 = vst.msk [vmem:[#allocation4 + $0x14] sm:$0xf] %vm992, %v2882
      %2973 = vst.msk [vmem:[#allocation4 + $0x18] sm:$0xf] %vm992, %v2884
      %2974 = vst.msk [vmem:[#allocation4 + $0x1c] sm:$0xf] %vm992, %v2886
      %2975 = vst.msk [vmem:[#allocation4 + $0x20] sm:$0xf] %vm992, %v2888
      %2976 = vst.msk [vmem:[#allocation4 + $0x24] sm:$0xf] %vm992, %v2890
      %2977 = vst.msk [vmem:[#allocation4 + $0x28] sm:$0xf] %vm992, %v2892
      %2978 = vst.msk [vmem:[#allocation4 + $0x2c] sm:$0xf] %vm992, %v2894
      %2979 = vst.msk [vmem:[#allocation4 + $0x30] sm:$0xf] %vm992, %v2896
      %2980 = vst.msk [vmem:[#allocation4 + $0x34] sm:$0xf] %vm992, %v2898
      %2981 = vst.msk [vmem:[#allocation4 + $0x38] sm:$0xf] %vm992, %v2900
      %2982 = vst.msk [vmem:[#allocation4 + $0x3c] sm:$0xf] %vm992, %v2902
      %2983 = vst.msk [vmem:[#allocation4 + $0x40] sm:$0xf] %vm992, %v2904
      %2984 = vst.msk [vmem:[#allocation4 + $0x44] sm:$0xf] %vm992, %v2906
      %2985 = vst.msk [vmem:[#allocation4 + $0x48] sm:$0xf] %vm992, %v2908
      %2986 = vst.msk [vmem:[#allocation4 + $0x4c] sm:$0xf] %vm992, %v2910
      %2987 = vst.msk [vmem:[#allocation4 + $0x50] sm:$0xf] %vm992, %v2912
      %2988 = vst.msk [vmem:[#allocation4 + $0x54] sm:$0xf] %vm992, %v2914
      %2989 = vst.msk [vmem:[#allocation4 + $0x58] sm:$0xf] %vm992, %v2916
      %2990 = vst.msk [vmem:[#allocation4 + $0x5c] sm:$0xf] %vm992, %v2918
      %2991 = vst.msk [vmem:[#allocation4 + $0x60] sm:$0xf] %vm992, %v2920
      %2992 = vst.msk [vmem:[#allocation4 + $0x64] sm:$0xf] %vm992, %v2922
      %2993 = vst.msk [vmem:[#allocation4 + $0x68] sm:$0xf] %vm992, %v2924
      %2994 = vst.msk [vmem:[#allocation4 + $0x6c] sm:$0xf] %vm992, %v2926
      %2995 = vst.msk [vmem:[#allocation4 + $0x70] sm:$0xf] %vm992, %v2928
      %2996 = vst.msk [vmem:[#allocation4 + $0x74] sm:$0xf] %vm992, %v2930
      %2997 = vst.msk [vmem:[#allocation4 + $0x78] sm:$0xf] %vm992, %v2932
      %2998 = vst.msk [vmem:[#allocation4 + $0x7c] sm:$0xf] %vm992, %v2934
      %v2999 = vld [vmem:[%s1025] sm:$0xff]
      %v3000 = vld [vmem:[%s1025 + $0x8] sm:$0xff]
      %v3001 = vld [vmem:[%s1025 + $0x10] sm:$0xff]
      %v3002 = vld [vmem:[%s1025 + $0x18] sm:$0xff]
      %v3003 = vld [vmem:[%s1025 + $0x20] sm:$0xff]
      %v3004 = vld [vmem:[%s1025 + $0x28] sm:$0xff]
      %v3005 = vld [vmem:[%s1025 + $0x30] sm:$0xff]
      %v3006 = vld [vmem:[%s1025 + $0x38] sm:$0xff]
      %v3007 = vld [vmem:[%s1025 + $0x40] sm:$0xff]
      %v3008 = vld [vmem:[%s1025 + $0x48] sm:$0xff]
      %v3009 = vld [vmem:[%s1025 + $0x50] sm:$0xff]
      %v3010 = vld [vmem:[%s1025 + $0x58] sm:$0xff]
      %v3011 = vld [vmem:[%s1025 + $0x60] sm:$0xff]
      %v3012 = vld [vmem:[%s1025 + $0x68] sm:$0xff]
      %v3013 = vld [vmem:[%s1025 + $0x70] sm:$0xff]
      %v3014 = vld [vmem:[%s1025 + $0x78] sm:$0xff]
      %v3015 = vld [vmem:[%s1025 + $0x80] sm:$0xff]
      %v3016 = vld [vmem:[%s1025 + $0x88] sm:$0xff]
      %v3017 = vld [vmem:[%s1025 + $0x90] sm:$0xff]
      %v3018 = vld [vmem:[%s1025 + $0x98] sm:$0xff]
      %v3019 = vld [vmem:[%s1025 + $0xa0] sm:$0xff]
      %v3020 = vld [vmem:[%s1025 + $0xa8] sm:$0xff]
      %v3021 = vld [vmem:[%s1025 + $0xb0] sm:$0xff]
      %v3022 = vld [vmem:[%s1025 + $0xb8] sm:$0xff]
      %v3023 = vld [vmem:[%s1025 + $0xc0] sm:$0xff]
      %v3024 = vld [vmem:[%s1025 + $0xc8] sm:$0xff]
      %v3025 = vld [vmem:[%s1025 + $0xd0] sm:$0xff]
      %v3026 = vld [vmem:[%s1025 + $0xd8] sm:$0xff]
      %v3027 = vld [vmem:[%s1025 + $0xe0] sm:$0xff]
      %v3028 = vld [vmem:[%s1025 + $0xe8] sm:$0xff]
      %v3029 = vld [vmem:[%s1025 + $0xf0] sm:$0xff]
      %v3030 = vld [vmem:[%s1025 + $0xf8] sm:$0xff]
      %v3031 = vpack.c.bf16 %v2999, %v2999
      %v3032 = vpack.c.bf16 %v3000, %v3000
      %v3033 = vpack.c.bf16 %v3001, %v3001
      %v3034 = vpack.c.bf16 %v3002, %v3002
      %v3035 = vpack.c.bf16 %v3003, %v3003
      %v3036 = vpack.c.bf16 %v3004, %v3004
      %v3037 = vpack.c.bf16 %v3005, %v3005
      %v3038 = vpack.c.bf16 %v3006, %v3006
      %v3039 = vpack.c.bf16 %v3007, %v3007
      %v3040 = vpack.c.bf16 %v3008, %v3008
      %v3041 = vpack.c.bf16 %v3009, %v3009
      %v3042 = vpack.c.bf16 %v3010, %v3010
      %v3043 = vpack.c.bf16 %v3011, %v3011
      %v3044 = vpack.c.bf16 %v3012, %v3012
      %v3045 = vpack.c.bf16 %v3013, %v3013
      %v3046 = vpack.c.bf16 %v3014, %v3014
      %v3047 = vpack.c.bf16 %v3015, %v3015
      %v3048 = vpack.c.bf16 %v3016, %v3016
      %v3049 = vpack.c.bf16 %v3017, %v3017
      %v3050 = vpack.c.bf16 %v3018, %v3018
      %v3051 = vpack.c.bf16 %v3019, %v3019
      %v3052 = vpack.c.bf16 %v3020, %v3020
      %v3053 = vpack.c.bf16 %v3021, %v3021
      %v3054 = vpack.c.bf16 %v3022, %v3022
      %v3055 = vpack.c.bf16 %v3023, %v3023
      %v3056 = vpack.c.bf16 %v3024, %v3024
      %v3057 = vpack.c.bf16 %v3025, %v3025
      %v3058 = vpack.c.bf16 %v3026, %v3026
      %v3059 = vpack.c.bf16 %v3027, %v3027
      %v3060 = vpack.c.bf16 %v3028, %v3028
      %v3061 = vpack.c.bf16 %v3029, %v3029
      %v3062 = vpack.c.bf16 %v3030, %v3030
      %3095 = vrot.lane.b32.xlu0 %v3031, 32
      %v3096 = vpop.permute.xlu0 %3095
      %3097 = vrot.lane.b32.xlu0 %v3032, 32
      %v3098 = vpop.permute.xlu0 %3097
      %3099 = vrot.lane.b32.xlu0 %v3033, 32
      %v3100 = vpop.permute.xlu0 %3099
      %3101 = vrot.lane.b32.xlu0 %v3034, 32
      %v3102 = vpop.permute.xlu0 %3101
      %3103 = vrot.lane.b32.xlu0 %v3035, 32
      %v3104 = vpop.permute.xlu0 %3103
      %3105 = vrot.lane.b32.xlu0 %v3036, 32
      %v3106 = vpop.permute.xlu0 %3105
      %3107 = vrot.lane.b32.xlu0 %v3037, 32
      %v3108 = vpop.permute.xlu0 %3107
      %3109 = vrot.lane.b32.xlu0 %v3038, 32
      %v3110 = vpop.permute.xlu0 %3109
      %3111 = vrot.lane.b32.xlu0 %v3039, 32
      %v3112 = vpop.permute.xlu0 %3111
      %3113 = vrot.lane.b32.xlu0 %v3040, 32
      %v3114 = vpop.permute.xlu0 %3113
      %3115 = vrot.lane.b32.xlu0 %v3041, 32
      %v3116 = vpop.permute.xlu0 %3115
      %3117 = vrot.lane.b32.xlu0 %v3042, 32
      %v3118 = vpop.permute.xlu0 %3117
      %3119 = vrot.lane.b32.xlu0 %v3043, 32
      %v3120 = vpop.permute.xlu0 %3119
      %3121 = vrot.lane.b32.xlu0 %v3044, 32
      %v3122 = vpop.permute.xlu0 %3121
      %3123 = vrot.lane.b32.xlu0 %v3045, 32
      %v3124 = vpop.permute.xlu0 %3123
      %3125 = vrot.lane.b32.xlu0 %v3046, 32
      %v3126 = vpop.permute.xlu0 %3125
      %3127 = vrot.lane.b32.xlu0 %v3047, 32
      %v3128 = vpop.permute.xlu0 %3127
      %3129 = vrot.lane.b32.xlu0 %v3048, 32
      %v3130 = vpop.permute.xlu0 %3129
      %3131 = vrot.lane.b32.xlu0 %v3049, 32
      %v3132 = vpop.permute.xlu0 %3131
      %3133 = vrot.lane.b32.xlu0 %v3050, 32
      %v3134 = vpop.permute.xlu0 %3133
      %3135 = vrot.lane.b32.xlu0 %v3051, 32
      %v3136 = vpop.permute.xlu0 %3135
      %3137 = vrot.lane.b32.xlu0 %v3052, 32
      %v3138 = vpop.permute.xlu0 %3137
      %3139 = vrot.lane.b32.xlu0 %v3053, 32
      %v3140 = vpop.permute.xlu0 %3139
      %3141 = vrot.lane.b32.xlu0 %v3054, 32
      %v3142 = vpop.permute.xlu0 %3141
      %3143 = vrot.lane.b32.xlu0 %v3055, 32
      %v3144 = vpop.permute.xlu0 %3143
      %3145 = vrot.lane.b32.xlu0 %v3056, 32
      %v3146 = vpop.permute.xlu0 %3145
      %3147 = vrot.lane.b32.xlu0 %v3057, 32
      %v3148 = vpop.permute.xlu0 %3147
      %3149 = vrot.lane.b32.xlu0 %v3058, 32
      %v3150 = vpop.permute.xlu0 %3149
      %3151 = vrot.lane.b32.xlu0 %v3059, 32
      %v3152 = vpop.permute.xlu0 %3151
      %3153 = vrot.lane.b32.xlu0 %v3060, 32
      %v3154 = vpop.permute.xlu0 %3153
      %3155 = vrot.lane.b32.xlu0 %v3061, 32
      %v3156 = vpop.permute.xlu0 %3155
      %3157 = vrot.lane.b32.xlu0 %v3062, 32
      %v3158 = vpop.permute.xlu0 %3157
      %3191 = vst.msk [vmem:[#allocation4] sm:$0xf] %vm1218, %v3096
      %3192 = vst.msk [vmem:[#allocation4 + $0x4] sm:$0xf] %vm1218, %v3098
      %3193 = vst.msk [vmem:[#allocation4 + $0x8] sm:$0xf] %vm1218, %v3100
      %3194 = vst.msk [vmem:[#allocation4 + $0xc] sm:$0xf] %vm1218, %v3102
      %3195 = vst.msk [vmem:[#allocation4 + $0x10] sm:$0xf] %vm1218, %v3104
      %3196 = vst.msk [vmem:[#allocation4 + $0x14] sm:$0xf] %vm1218, %v3106
      %3197 = vst.msk [vmem:[#allocation4 + $0x18] sm:$0xf] %vm1218, %v3108
      %3198 = vst.msk [vmem:[#allocation4 + $0x1c] sm:$0xf] %vm1218, %v3110
      %3199 = vst.msk [vmem:[#allocation4 + $0x20] sm:$0xf] %vm1218, %v3112
      %3200 = vst.msk [vmem:[#allocation4 + $0x24] sm:$0xf] %vm1218, %v3114
      %3201 = vst.msk [vmem:[#allocation4 + $0x28] sm:$0xf] %vm1218, %v3116
      %3202 = vst.msk [vmem:[#allocation4 + $0x2c] sm:$0xf] %vm1218, %v3118
      %3203 = vst.msk [vmem:[#allocation4 + $0x30] sm:$0xf] %vm1218, %v3120
      %3204 = vst.msk [vmem:[#allocation4 + $0x34] sm:$0xf] %vm1218, %v3122
      %3205 = vst.msk [vmem:[#allocation4 + $0x38] sm:$0xf] %vm1218, %v3124
      %3206 = vst.msk [vmem:[#allocation4 + $0x3c] sm:$0xf] %vm1218, %v3126
      %3207 = vst.msk [vmem:[#allocation4 + $0x40] sm:$0xf] %vm1218, %v3128
      %3208 = vst.msk [vmem:[#allocation4 + $0x44] sm:$0xf] %vm1218, %v3130
      %3209 = vst.msk [vmem:[#allocation4 + $0x48] sm:$0xf] %vm1218, %v3132
      %3210 = vst.msk [vmem:[#allocation4 + $0x4c] sm:$0xf] %vm1218, %v3134
      %3211 = vst.msk [vmem:[#allocation4 + $0x50] sm:$0xf] %vm1218, %v3136
      %3212 = vst.msk [vmem:[#allocation4 + $0x54] sm:$0xf] %vm1218, %v3138
      %3213 = vst.msk [vmem:[#allocation4 + $0x58] sm:$0xf] %vm1218, %v3140
      %3214 = vst.msk [vmem:[#allocation4 + $0x5c] sm:$0xf] %vm1218, %v3142
      %3215 = vst.msk [vmem:[#allocation4 + $0x60] sm:$0xf] %vm1218, %v3144
      %3216 = vst.msk [vmem:[#allocation4 + $0x64] sm:$0xf] %vm1218, %v3146
      %3217 = vst.msk [vmem:[#allocation4 + $0x68] sm:$0xf] %vm1218, %v3148
      %3218 = vst.msk [vmem:[#allocation4 + $0x6c] sm:$0xf] %vm1218, %v3150
      %3219 = vst.msk [vmem:[#allocation4 + $0x70] sm:$0xf] %vm1218, %v3152
      %3220 = vst.msk [vmem:[#allocation4 + $0x74] sm:$0xf] %vm1218, %v3154
      %3221 = vst.msk [vmem:[#allocation4 + $0x78] sm:$0xf] %vm1218, %v3156
      %3222 = vst.msk [vmem:[#allocation4 + $0x7c] sm:$0xf] %vm1218, %v3158
      %v3223 = vld [vmem:[#allocation8] sm:$0xff]
      %v3224 = vld [vmem:[#allocation8 + $0x8] sm:$0xff]
      %v3225 = vld [vmem:[#allocation8 + $0x10] sm:$0xff]
      %v3226 = vld [vmem:[#allocation8 + $0x18] sm:$0xff]
      %v3227 = vld [vmem:[#allocation8 + $0x20] sm:$0xff]
      %v3228 = vld [vmem:[#allocation8 + $0x28] sm:$0xff]
      %v3229 = vld [vmem:[#allocation8 + $0x30] sm:$0xff]
      %v3230 = vld [vmem:[#allocation8 + $0x38] sm:$0xff]
      %v3231 = vld [vmem:[#allocation8 + $0x40] sm:$0xff]
      %v3232 = vld [vmem:[#allocation8 + $0x48] sm:$0xff]
      %v3233 = vld [vmem:[#allocation8 + $0x50] sm:$0xff]
      %v3234 = vld [vmem:[#allocation8 + $0x58] sm:$0xff]
      %v3235 = vld [vmem:[#allocation8 + $0x60] sm:$0xff]
      %v3236 = vld [vmem:[#allocation8 + $0x68] sm:$0xff]
      %v3237 = vld [vmem:[#allocation8 + $0x70] sm:$0xff]
      %v3238 = vld [vmem:[#allocation8 + $0x78] sm:$0xff]
      %v3239 = vld [vmem:[#allocation8 + $0x80] sm:$0xff]
      %v3240 = vld [vmem:[#allocation8 + $0x88] sm:$0xff]
      %v3241 = vld [vmem:[#allocation8 + $0x90] sm:$0xff]
      %v3242 = vld [vmem:[#allocation8 + $0x98] sm:$0xff]
      %v3243 = vld [vmem:[#allocation8 + $0xa0] sm:$0xff]
      %v3244 = vld [vmem:[#allocation8 + $0xa8] sm:$0xff]
      %v3245 = vld [vmem:[#allocation8 + $0xb0] sm:$0xff]
      %v3246 = vld [vmem:[#allocation8 + $0xb8] sm:$0xff]
      %v3247 = vld [vmem:[#allocation8 + $0xc0] sm:$0xff]
      %v3248 = vld [vmem:[#allocation8 + $0xc8] sm:$0xff]
      %v3249 = vld [vmem:[#allocation8 + $0xd0] sm:$0xff]
      %v3250 = vld [vmem:[#allocation8 + $0xd8] sm:$0xff]
      %v3251 = vld [vmem:[#allocation8 + $0xe0] sm:$0xff]
      %v3252 = vld [vmem:[#allocation8 + $0xe8] sm:$0xff]
      %v3253 = vld [vmem:[#allocation8 + $0xf0] sm:$0xff]
      %v3254 = vld [vmem:[#allocation8 + $0xf8] sm:$0xff]
      %v3255 = vld [vmem:[#allocation4] sm:$0xf]
      %v3256 = vld [vmem:[#allocation4 + $0x4] sm:$0xf]
      %v3257 = vld [vmem:[#allocation4 + $0x8] sm:$0xf]
      %v3258 = vld [vmem:[#allocation4 + $0xc] sm:$0xf]
      %v3259 = vld [vmem:[#allocation4 + $0x10] sm:$0xf]
      %v3260 = vld [vmem:[#allocation4 + $0x14] sm:$0xf]
      %v3261 = vld [vmem:[#allocation4 + $0x18] sm:$0xf]
      %v3262 = vld [vmem:[#allocation4 + $0x1c] sm:$0xf]
      %v3263 = vld [vmem:[#allocation4 + $0x20] sm:$0xf]
      %v3264 = vld [vmem:[#allocation4 + $0x24] sm:$0xf]
      %v3265 = vld [vmem:[#allocation4 + $0x28] sm:$0xf]
      %v3266 = vld [vmem:[#allocation4 + $0x2c] sm:$0xf]
      %v3267 = vld [vmem:[#allocation4 + $0x30] sm:$0xf]
      %v3268 = vld [vmem:[#allocation4 + $0x34] sm:$0xf]
      %v3269 = vld [vmem:[#allocation4 + $0x38] sm:$0xf]
      %v3270 = vld [vmem:[#allocation4 + $0x3c] sm:$0xf]
      %v3271 = vld [vmem:[#allocation4 + $0x40] sm:$0xf]
      %v3272 = vld [vmem:[#allocation4 + $0x44] sm:$0xf]
      %v3273 = vld [vmem:[#allocation4 + $0x48] sm:$0xf]
      %v3274 = vld [vmem:[#allocation4 + $0x4c] sm:$0xf]
      %v3275 = vld [vmem:[#allocation4 + $0x50] sm:$0xf]
      %v3276 = vld [vmem:[#allocation4 + $0x54] sm:$0xf]
      %v3277 = vld [vmem:[#allocation4 + $0x58] sm:$0xf]
      %v3278 = vld [vmem:[#allocation4 + $0x5c] sm:$0xf]
      %v3279 = vld [vmem:[#allocation4 + $0x60] sm:$0xf]
      %v3280 = vld [vmem:[#allocation4 + $0x64] sm:$0xf]
      %v3281 = vld [vmem:[#allocation4 + $0x68] sm:$0xf]
      %v3282 = vld [vmem:[#allocation4 + $0x6c] sm:$0xf]
      %v3283 = vld [vmem:[#allocation4 + $0x70] sm:$0xf]
      %v3284 = vld [vmem:[#allocation4 + $0x74] sm:$0xf]
      %v3285 = vld [vmem:[#allocation4 + $0x78] sm:$0xf]
      %v3286 = vld [vmem:[#allocation4 + $0x7c] sm:$0xf]
      %s3287 = scalar_lea.vmem %s2, 48
      %v3288 = vld [vmem:[%s3287] sm:$0xf]
      %v3289 = vld [vmem:[%s3287 + $0x4] sm:$0xf]
      %v3290 = vld [vmem:[%s3287 + $0x8] sm:$0xf]
      %v3291 = vld [vmem:[%s3287 + $0xc] sm:$0xf]
      %v3292 = vld [vmem:[%s3287 + $0x10] sm:$0xf]
      %v3293 = vld [vmem:[%s3287 + $0x14] sm:$0xf]
      %v3326 = vunpack.c.l.b16 %v3255
      %v3327 = vunpack.c.l.b16 %v3256
      %v3328 = vunpack.c.l.b16 %v3257
      %v3329 = vunpack.c.l.b16 %v3258
      %v3330 = vunpack.c.l.b16 %v3259
      %v3331 = vunpack.c.l.b16 %v3260
      %v3332 = vunpack.c.l.b16 %v3261
      %v3333 = vunpack.c.l.b16 %v3262
      %v3334 = vunpack.c.l.b16 %v3263
      %v3335 = vunpack.c.l.b16 %v3264
      %v3336 = vunpack.c.l.b16 %v3265
      %v3337 = vunpack.c.l.b16 %v3266
      %v3338 = vunpack.c.l.b16 %v3267
      %v3339 = vunpack.c.l.b16 %v3268
      %v3340 = vunpack.c.l.b16 %v3269
      %v3341 = vunpack.c.l.b16 %v3270
      %v3342 = vunpack.c.l.b16 %v3271
      %v3343 = vunpack.c.l.b16 %v3272
      %v3344 = vunpack.c.l.b16 %v3273
      %v3345 = vunpack.c.l.b16 %v3274
      %v3346 = vunpack.c.l.b16 %v3275
      %v3347 = vunpack.c.l.b16 %v3276
      %v3348 = vunpack.c.l.b16 %v3277
      %v3349 = vunpack.c.l.b16 %v3278
      %v3350 = vunpack.c.l.b16 %v3279
      %v3351 = vunpack.c.l.b16 %v3280
      %v3352 = vunpack.c.l.b16 %v3281
      %v3353 = vunpack.c.l.b16 %v3282
      %v3354 = vunpack.c.l.b16 %v3283
      %v3355 = vunpack.c.l.b16 %v3284
      %v3356 = vunpack.c.l.b16 %v3285
      %v3357 = vunpack.c.l.b16 %v3286
      %v3358 = vpack.c.b16 %v3327, %v3326
      %v3359 = vpack.c.b16 %v3329, %v3328
      %v3360 = vpack.c.b16 %v3331, %v3330
      %v3361 = vpack.c.b16 %v3333, %v3332
      %v3362 = vpack.c.b16 %v3335, %v3334
      %v3363 = vpack.c.b16 %v3337, %v3336
      %v3364 = vpack.c.b16 %v3339, %v3338
      %v3365 = vpack.c.b16 %v3341, %v3340
      %v3366 = vpack.c.b16 %v3343, %v3342
      %v3367 = vpack.c.b16 %v3345, %v3344
      %v3368 = vpack.c.b16 %v3347, %v3346
      %v3369 = vpack.c.b16 %v3349, %v3348
      %v3370 = vpack.c.b16 %v3351, %v3350
      %v3371 = vpack.c.b16 %v3353, %v3352
      %v3372 = vpack.c.b16 %v3355, %v3354
      %v3373 = vpack.c.b16 %v3357, %v3356
      %v3380 = vunpack.c.l.b16 %v3288
      %v3381 = vunpack.c.l.b16 %v3289
      %v3382 = vunpack.c.l.b16 %v3290
      %v3383 = vunpack.c.l.b16 %v3291
      %v3384 = vunpack.c.l.b16 %v3292
      %v3385 = vunpack.c.l.b16 %v3293
      %v3386 = vpack.c.b16 %v3381, %v3380
      %v3387 = vpack.c.b16 %v3383, %v3382
      %v3388 = vpack.c.b16 %v3385, %v3384
      %v3393 = vsel %vm1419, %v3358, 0
      %v3396 = vsel %vm1419, %v3359, 0
      %v3399 = vsel %vm1419, %v3360, 0
      %v3402 = vsel %vm1419, %v3361, 0
      %v3405 = vsel %vm1419, %v3362, 0
      %v3408 = vsel %vm1419, %v3363, 0
      %v3411 = vsel %vm1419, %v3364, 0
      %v3414 = vsel %vm1419, %v3365, 0
      %v3417 = vsel %vm1419, %v3366, 0
      %v3420 = vsel %vm1419, %v3367, 0
      %v3423 = vsel %vm1419, %v3368, 0
      %v3426 = vsel %vm1419, %v3369, 0
      %v3429 = vsel %vm1419, %v3370, 0
      %v3432 = vsel %vm1419, %v3371, 0
      %v3435 = vsel %vm1419, %v3372, 0
      %v3438 = vsel %vm1419, %v3373, 0
      %3440 = vmatpush.bf16.msra.mxu0 0
      %3441 = vmatpush.bf16.msra.mxu0 0
      %3442 = vmatpush.bf16.msra.mxu0 0
      %3443 = vmatpush.bf16.msra.mxu0 0
      %3444 = vmatpush.bf16.msra.mxu0 0
      %3445 = vmatpush.bf16.msra.mxu0 %v3388
      %3446 = vmatpush.bf16.msra.mxu0 %v3387
      %3447 = vmatpush.bf16.msra.mxu0 %v3386
      %3448 = vmatmul.bf16.gmra.mxu0 %v3393
      %v3449 = vpop.f32.mrf.mxu0
      %v3450 = vadd.f32 0.0, %v3449
      %v3451 = vpop.f32.mrf.mxu0
      %v3452 = vadd.f32 0.0, %v3451
      %3453 = vmatmul.bf16.gmra.mxu0 %v3396
      %v3454 = vpop.f32.mrf.mxu0
      %v3455 = vadd.f32 0.0, %v3454
      %v3456 = vpop.f32.mrf.mxu0
      %v3457 = vadd.f32 0.0, %v3456
      %3458 = vmatmul.bf16.gmra.mxu0 %v3399
      %v3459 = vpop.f32.mrf.mxu0
      %v3460 = vadd.f32 0.0, %v3459
      %v3461 = vpop.f32.mrf.mxu0
      %v3462 = vadd.f32 0.0, %v3461
      %3463 = vmatmul.bf16.gmra.mxu0 %v3402
      %v3464 = vpop.f32.mrf.mxu0
      %v3465 = vadd.f32 0.0, %v3464
      %v3466 = vpop.f32.mrf.mxu0
      %v3467 = vadd.f32 0.0, %v3466
      %3468 = vmatmul.bf16.gmra.mxu0 %v3405
      %v3469 = vpop.f32.mrf.mxu0
      %v3470 = vadd.f32 0.0, %v3469
      %v3471 = vpop.f32.mrf.mxu0
      %v3472 = vadd.f32 0.0, %v3471
      %3473 = vmatmul.bf16.gmra.mxu0 %v3408
      %v3474 = vpop.f32.mrf.mxu0
      %v3475 = vadd.f32 0.0, %v3474
      %v3476 = vpop.f32.mrf.mxu0
      %v3477 = vadd.f32 0.0, %v3476
      %3478 = vmatmul.bf16.gmra.mxu0 %v3411
      %v3479 = vpop.f32.mrf.mxu0
      %v3480 = vadd.f32 0.0, %v3479
      %v3481 = vpop.f32.mrf.mxu0
      %v3482 = vadd.f32 0.0, %v3481
      %3483 = vmatmul.bf16.gmra.mxu0 %v3414
      %v3484 = vpop.f32.mrf.mxu0
      %v3485 = vadd.f32 0.0, %v3484
      %v3486 = vpop.f32.mrf.mxu0
      %v3487 = vadd.f32 0.0, %v3486
      %3488 = vmatmul.bf16.gmra.mxu0 %v3417
      %v3489 = vpop.f32.mrf.mxu0
      %v3490 = vadd.f32 0.0, %v3489
      %v3491 = vpop.f32.mrf.mxu0
      %v3492 = vadd.f32 0.0, %v3491
      %3493 = vmatmul.bf16.gmra.mxu0 %v3420
      %v3494 = vpop.f32.mrf.mxu0
      %v3495 = vadd.f32 0.0, %v3494
      %v3496 = vpop.f32.mrf.mxu0
      %v3497 = vadd.f32 0.0, %v3496
      %3498 = vmatmul.bf16.gmra.mxu0 %v3423
      %v3499 = vpop.f32.mrf.mxu0
      %v3500 = vadd.f32 0.0, %v3499
      %v3501 = vpop.f32.mrf.mxu0
      %v3502 = vadd.f32 0.0, %v3501
      %3503 = vmatmul.bf16.gmra.mxu0 %v3426
      %v3504 = vpop.f32.mrf.mxu0
      %v3505 = vadd.f32 0.0, %v3504
      %v3506 = vpop.f32.mrf.mxu0
      %v3507 = vadd.f32 0.0, %v3506
      %3508 = vmatmul.bf16.gmra.mxu0 %v3429
      %v3509 = vpop.f32.mrf.mxu0
      %v3510 = vadd.f32 0.0, %v3509
      %v3511 = vpop.f32.mrf.mxu0
      %v3512 = vadd.f32 0.0, %v3511
      %3513 = vmatmul.bf16.gmra.mxu0 %v3432
      %v3514 = vpop.f32.mrf.mxu0
      %v3515 = vadd.f32 0.0, %v3514
      %v3516 = vpop.f32.mrf.mxu0
      %v3517 = vadd.f32 0.0, %v3516
      %3518 = vmatmul.bf16.gmra.mxu0 %v3435
      %v3519 = vpop.f32.mrf.mxu0
      %v3520 = vadd.f32 0.0, %v3519
      %v3521 = vpop.f32.mrf.mxu0
      %v3522 = vadd.f32 0.0, %v3521
      %3523 = vmatmul.bf16.gmra.mxu0 %v3438
      %v3524 = vpop.f32.mrf.mxu0
      %v3525 = vadd.f32 0.0, %v3524
      %v3526 = vpop.f32.mrf.mxu0
      %v3527 = vadd.f32 0.0, %v3526
      %3528 = vdwg.mxu0
      %v3529 = vadd.f32 %v3223, %v3450
      %v3530 = vadd.f32 %v3224, %v3452
      %v3531 = vadd.f32 %v3225, %v3455
      %v3532 = vadd.f32 %v3226, %v3457
      %v3533 = vadd.f32 %v3227, %v3460
      %v3534 = vadd.f32 %v3228, %v3462
      %v3535 = vadd.f32 %v3229, %v3465
      %v3536 = vadd.f32 %v3230, %v3467
      %v3537 = vadd.f32 %v3231, %v3470
      %v3538 = vadd.f32 %v3232, %v3472
      %v3539 = vadd.f32 %v3233, %v3475
      %v3540 = vadd.f32 %v3234, %v3477
      %v3541 = vadd.f32 %v3235, %v3480
      %v3542 = vadd.f32 %v3236, %v3482
      %v3543 = vadd.f32 %v3237, %v3485
      %v3544 = vadd.f32 %v3238, %v3487
      %v3545 = vadd.f32 %v3239, %v3490
      %v3546 = vadd.f32 %v3240, %v3492
      %v3547 = vadd.f32 %v3241, %v3495
      %v3548 = vadd.f32 %v3242, %v3497
      %v3549 = vadd.f32 %v3243, %v3500
      %v3550 = vadd.f32 %v3244, %v3502
      %v3551 = vadd.f32 %v3245, %v3505
      %v3552 = vadd.f32 %v3246, %v3507
      %v3553 = vadd.f32 %v3247, %v3510
      %v3554 = vadd.f32 %v3248, %v3512
      %v3555 = vadd.f32 %v3249, %v3515
      %v3556 = vadd.f32 %v3250, %v3517
      %v3557 = vadd.f32 %v3251, %v3520
      %v3558 = vadd.f32 %v3252, %v3522
      %v3559 = vadd.f32 %v3253, %v3525
      %v3560 = vadd.f32 %v3254, %v3527
      %3561 = vst.msk [vmem:[#allocation8] sm:$0xff] %vm340, %v3529
      %3562 = vst.msk [vmem:[#allocation8 + $0x8] sm:$0xff] %vm340, %v3530
      %3563 = vst.msk [vmem:[#allocation8 + $0x10] sm:$0xff] %vm340, %v3531
      %3564 = vst.msk [vmem:[#allocation8 + $0x18] sm:$0xff] %vm340, %v3532
      %3565 = vst.msk [vmem:[#allocation8 + $0x20] sm:$0xff] %vm340, %v3533
      %3566 = vst.msk [vmem:[#allocation8 + $0x28] sm:$0xff] %vm340, %v3534
      %3567 = vst.msk [vmem:[#allocation8 + $0x30] sm:$0xff] %vm340, %v3535
      %3568 = vst.msk [vmem:[#allocation8 + $0x38] sm:$0xff] %vm340, %v3536
      %3569 = vst.msk [vmem:[#allocation8 + $0x40] sm:$0xff] %vm340, %v3537
      %3570 = vst.msk [vmem:[#allocation8 + $0x48] sm:$0xff] %vm340, %v3538
      %3571 = vst.msk [vmem:[#allocation8 + $0x50] sm:$0xff] %vm340, %v3539
      %3572 = vst.msk [vmem:[#allocation8 + $0x58] sm:$0xff] %vm340, %v3540
      %3573 = vst.msk [vmem:[#allocation8 + $0x60] sm:$0xff] %vm340, %v3541
      %3574 = vst.msk [vmem:[#allocation8 + $0x68] sm:$0xff] %vm340, %v3542
      %3575 = vst.msk [vmem:[#allocation8 + $0x70] sm:$0xff] %vm340, %v3543
      %3576 = vst.msk [vmem:[#allocation8 + $0x78] sm:$0xff] %vm340, %v3544
      %3577 = vst.msk [vmem:[#allocation8 + $0x80] sm:$0xff] %vm340, %v3545
      %3578 = vst.msk [vmem:[#allocation8 + $0x88] sm:$0xff] %vm340, %v3546
      %3579 = vst.msk [vmem:[#allocation8 + $0x90] sm:$0xff] %vm340, %v3547
      %3580 = vst.msk [vmem:[#allocation8 + $0x98] sm:$0xff] %vm340, %v3548
      %3581 = vst.msk [vmem:[#allocation8 + $0xa0] sm:$0xff] %vm340, %v3549
      %3582 = vst.msk [vmem:[#allocation8 + $0xa8] sm:$0xff] %vm340, %v3550
      %3583 = vst.msk [vmem:[#allocation8 + $0xb0] sm:$0xff] %vm340, %v3551
      %3584 = vst.msk [vmem:[#allocation8 + $0xb8] sm:$0xff] %vm340, %v3552
      %3585 = vst.msk [vmem:[#allocation8 + $0xc0] sm:$0xff] %vm340, %v3553
      %3586 = vst.msk [vmem:[#allocation8 + $0xc8] sm:$0xff] %vm340, %v3554
      %3587 = vst.msk [vmem:[#allocation8 + $0xd0] sm:$0xff] %vm340, %v3555
      %3588 = vst.msk [vmem:[#allocation8 + $0xd8] sm:$0xff] %vm340, %v3556
      %3589 = vst.msk [vmem:[#allocation8 + $0xe0] sm:$0xff] %vm340, %v3557
      %3590 = vst.msk [vmem:[#allocation8 + $0xe8] sm:$0xff] %vm340, %v3558
      %3591 = vst.msk [vmem:[#allocation8 + $0xf0] sm:$0xff] %vm340, %v3559
      %3592 = vst.msk [vmem:[#allocation8 + $0xf8] sm:$0xff] %vm340, %v3560
      %v3593 = vld [vmem:[#allocation8] sm:$0xff]
      %v3594 = vld [vmem:[#allocation8 + $0x8] sm:$0xff]
      %v3595 = vld [vmem:[#allocation8 + $0x10] sm:$0xff]
      %v3596 = vld [vmem:[#allocation8 + $0x18] sm:$0xff]
      %v3597 = vld [vmem:[#allocation8 + $0x20] sm:$0xff]
      %v3598 = vld [vmem:[#allocation8 + $0x28] sm:$0xff]
      %v3599 = vld [vmem:[#allocation8 + $0x30] sm:$0xff]
      %v3600 = vld [vmem:[#allocation8 + $0x38] sm:$0xff]
      %v3601 = vld [vmem:[#allocation8 + $0x40] sm:$0xff]
      %v3602 = vld [vmem:[#allocation8 + $0x48] sm:$0xff]
      %v3603 = vld [vmem:[#allocation8 + $0x50] sm:$0xff]
      %v3604 = vld [vmem:[#allocation8 + $0x58] sm:$0xff]
      %v3605 = vld [vmem:[#allocation8 + $0x60] sm:$0xff]
      %v3606 = vld [vmem:[#allocation8 + $0x68] sm:$0xff]
      %v3607 = vld [vmem:[#allocation8 + $0x70] sm:$0xff]
      %v3608 = vld [vmem:[#allocation8 + $0x78] sm:$0xff]
      %v3609 = vld [vmem:[#allocation8 + $0x80] sm:$0xff]
      %v3610 = vld [vmem:[#allocation8 + $0x88] sm:$0xff]
      %v3611 = vld [vmem:[#allocation8 + $0x90] sm:$0xff]
      %v3612 = vld [vmem:[#allocation8 + $0x98] sm:$0xff]
      %v3613 = vld [vmem:[#allocation8 + $0xa0] sm:$0xff]
      %v3614 = vld [vmem:[#allocation8 + $0xa8] sm:$0xff]
      %v3615 = vld [vmem:[#allocation8 + $0xb0] sm:$0xff]
      %v3616 = vld [vmem:[#allocation8 + $0xb8] sm:$0xff]
      %v3617 = vld [vmem:[#allocation8 + $0xc0] sm:$0xff]
      %v3618 = vld [vmem:[#allocation8 + $0xc8] sm:$0xff]
      %v3619 = vld [vmem:[#allocation8 + $0xd0] sm:$0xff]
      %v3620 = vld [vmem:[#allocation8 + $0xd8] sm:$0xff]
      %v3621 = vld [vmem:[#allocation8 + $0xe0] sm:$0xff]
      %v3622 = vld [vmem:[#allocation8 + $0xe8] sm:$0xff]
      %v3623 = vld [vmem:[#allocation8 + $0xf0] sm:$0xff]
      %v3624 = vld [vmem:[#allocation8 + $0xf8] sm:$0xff]
      %v3625 = vsel %vm340, %v3593, 0.0
      %v3626 = vsel %vm340, %v3594, 0.0
      %v3627 = vadd.f32 %v3625, %v3626
      %v3628 = vsel %vm340, %v3595, 0.0
      %v3629 = vadd.f32 %v3627, %v3628
      %v3630 = vsel %vm340, %v3596, 0.0
      %v3631 = vadd.f32 %v3629, %v3630
      %v3632 = vsel %vm340, %v3597, 0.0
      %v3633 = vadd.f32 %v3631, %v3632
      %v3634 = vsel %vm340, %v3598, 0.0
      %v3635 = vadd.f32 %v3633, %v3634
      %v3636 = vsel %vm340, %v3599, 0.0
      %v3637 = vadd.f32 %v3635, %v3636
      %v3638 = vsel %vm340, %v3600, 0.0
      %v3639 = vadd.f32 %v3637, %v3638
      %v3640 = vsel %vm340, %v3601, 0.0
      %v3641 = vadd.f32 %v3639, %v3640
      %v3642 = vsel %vm340, %v3602, 0.0
      %v3643 = vadd.f32 %v3641, %v3642
      %v3644 = vsel %vm340, %v3603, 0.0
      %v3645 = vadd.f32 %v3643, %v3644
      %v3646 = vsel %vm340, %v3604, 0.0
      %v3647 = vadd.f32 %v3645, %v3646
      %v3648 = vsel %vm340, %v3605, 0.0
      %v3649 = vadd.f32 %v3647, %v3648
      %v3650 = vsel %vm340, %v3606, 0.0
      %v3651 = vadd.f32 %v3649, %v3650
      %v3652 = vsel %vm340, %v3607, 0.0
      %v3653 = vadd.f32 %v3651, %v3652
      %v3654 = vsel %vm340, %v3608, 0.0
      %v3655 = vadd.f32 %v3653, %v3654
      %v3656 = vsel %vm340, %v3609, 0.0
      %v3657 = vadd.f32 %v3655, %v3656
      %v3658 = vsel %vm340, %v3610, 0.0
      %v3659 = vadd.f32 %v3657, %v3658
      %v3660 = vsel %vm340, %v3611, 0.0
      %v3661 = vadd.f32 %v3659, %v3660
      %v3662 = vsel %vm340, %v3612, 0.0
      %v3663 = vadd.f32 %v3661, %v3662
      %v3664 = vsel %vm340, %v3613, 0.0
      %v3665 = vadd.f32 %v3663, %v3664
      %v3666 = vsel %vm340, %v3614, 0.0
      %v3667 = vadd.f32 %v3665, %v3666
      %v3668 = vsel %vm340, %v3615, 0.0
      %v3669 = vadd.f32 %v3667, %v3668
      %v3670 = vsel %vm340, %v3616, 0.0
      %v3671 = vadd.f32 %v3669, %v3670
      %v3672 = vsel %vm340, %v3617, 0.0
      %v3673 = vadd.f32 %v3671, %v3672
      %v3674 = vsel %vm340, %v3618, 0.0
      %v3675 = vadd.f32 %v3673, %v3674
      %v3676 = vsel %vm340, %v3619, 0.0
      %v3677 = vadd.f32 %v3675, %v3676
      %v3678 = vsel %vm340, %v3620, 0.0
      %v3679 = vadd.f32 %v3677, %v3678
      %v3680 = vsel %vm340, %v3621, 0.0
      %v3681 = vadd.f32 %v3679, %v3680
      %v3682 = vsel %vm340, %v3622, 0.0
      %v3683 = vadd.f32 %v3681, %v3682
      %v3684 = vsel %vm340, %v3623, 0.0
      %v3685 = vadd.f32 %v3683, %v3684
      %v3686 = vsel %vm340, %v3624, 0.0
      %v3687 = vadd.f32 %v3685, %v3686
      %v3688 = vrot.slane %v3687, 4
      %v3689 = vadd.f32 %v3687, %v3688
      %v3690 = vrot.slane %v3689, 2
      %v3691 = vadd.f32 %v3689, %v3690
      %v3692 = vrot.slane %v3691, 1
      %v3693 = vadd.f32 %v3691, %v3692
      %v3694 = vrcp.pop 256.0
      %v3695 = vmul.f32 256.0, %v3694
      %v3696 = vsub.f32 1.0, %v3695
      %v3697 = vmul.f32 %v3694, %v3696
      %v3698 = vadd.f32 %v3694, %v3697
      %vm3699 = vweird.f32 %v3694
      %v3700 = vsel %vm3699, %v3694, %v3698
      %v3701 = vmul.f32 %v3693, %v3700
      %v3702 = vsub.f32 %v3593, %v3701
      %v3703 = vsub.f32 %v3594, %v3701
      %v3704 = vsub.f32 %v3595, %v3701
      %v3705 = vsub.f32 %v3596, %v3701
      %v3706 = vsub.f32 %v3597, %v3701
      %v3707 = vsub.f32 %v3598, %v3701
      %v3708 = vsub.f32 %v3599, %v3701
      %v3709 = vsub.f32 %v3600, %v3701
      %v3710 = vsub.f32 %v3601, %v3701
      %v3711 = vsub.f32 %v3602, %v3701
      %v3712 = vsub.f32 %v3603, %v3701
      %v3713 = vsub.f32 %v3604, %v3701
      %v3714 = vsub.f32 %v3605, %v3701
      %v3715 = vsub.f32 %v3606, %v3701
      %v3716 = vsub.f32 %v3607, %v3701
      %v3717 = vsub.f32 %v3608, %v3701
      %v3718 = vsub.f32 %v3609, %v3701
      %v3719 = vsub.f32 %v3610, %v3701
      %v3720 = vsub.f32 %v3611, %v3701
      %v3721 = vsub.f32 %v3612, %v3701
      %v3722 = vsub.f32 %v3613, %v3701
      %v3723 = vsub.f32 %v3614, %v3701
      %v3724 = vsub.f32 %v3615, %v3701
      %v3725 = vsub.f32 %v3616, %v3701
      %v3726 = vsub.f32 %v3617, %v3701
      %v3727 = vsub.f32 %v3618, %v3701
      %v3728 = vsub.f32 %v3619, %v3701
      %v3729 = vsub.f32 %v3620, %v3701
      %v3730 = vsub.f32 %v3621, %v3701
      %v3731 = vsub.f32 %v3622, %v3701
      %v3732 = vsub.f32 %v3623, %v3701
      %v3733 = vsub.f32 %v3624, %v3701
      %v3734 = vmul.f32 %v3702, %v3702
      %v3735 = vmul.f32 %v3703, %v3703
      %v3736 = vmul.f32 %v3704, %v3704
      %v3737 = vmul.f32 %v3705, %v3705
      %v3738 = vmul.f32 %v3706, %v3706
      %v3739 = vmul.f32 %v3707, %v3707
      %v3740 = vmul.f32 %v3708, %v3708
      %v3741 = vmul.f32 %v3709, %v3709
      %v3742 = vmul.f32 %v3710, %v3710
      %v3743 = vmul.f32 %v3711, %v3711
      %v3744 = vmul.f32 %v3712, %v3712
      %v3745 = vmul.f32 %v3713, %v3713
      %v3746 = vmul.f32 %v3714, %v3714
      %v3747 = vmul.f32 %v3715, %v3715
      %v3748 = vmul.f32 %v3716, %v3716
      %v3749 = vmul.f32 %v3717, %v3717
      %v3750 = vmul.f32 %v3718, %v3718
      %v3751 = vmul.f32 %v3719, %v3719
      %v3752 = vmul.f32 %v3720, %v3720
      %v3753 = vmul.f32 %v3721, %v3721
      %v3754 = vmul.f32 %v3722, %v3722
      %v3755 = vmul.f32 %v3723, %v3723
      %v3756 = vmul.f32 %v3724, %v3724
      %v3757 = vmul.f32 %v3725, %v3725
      %v3758 = vmul.f32 %v3726, %v3726
      %v3759 = vmul.f32 %v3727, %v3727
      %v3760 = vmul.f32 %v3728, %v3728
      %v3761 = vmul.f32 %v3729, %v3729
      %v3762 = vmul.f32 %v3730, %v3730
      %v3763 = vmul.f32 %v3731, %v3731
      %v3764 = vmul.f32 %v3732, %v3732
      %v3765 = vmul.f32 %v3733, %v3733
      %v3766 = vsel %vm340, %v3734, 0.0
      %v3767 = vsel %vm340, %v3735, 0.0
      %v3768 = vadd.f32 %v3766, %v3767
      %v3769 = vsel %vm340, %v3736, 0.0
      %v3770 = vadd.f32 %v3768, %v3769
      %v3771 = vsel %vm340, %v3737, 0.0
      %v3772 = vadd.f32 %v3770, %v3771
      %v3773 = vsel %vm340, %v3738, 0.0
      %v3774 = vadd.f32 %v3772, %v3773
      %v3775 = vsel %vm340, %v3739, 0.0
      %v3776 = vadd.f32 %v3774, %v3775
      %v3777 = vsel %vm340, %v3740, 0.0
      %v3778 = vadd.f32 %v3776, %v3777
      %v3779 = vsel %vm340, %v3741, 0.0
      %v3780 = vadd.f32 %v3778, %v3779
      %v3781 = vsel %vm340, %v3742, 0.0
      %v3782 = vadd.f32 %v3780, %v3781
      %v3783 = vsel %vm340, %v3743, 0.0
      %v3784 = vadd.f32 %v3782, %v3783
      %v3785 = vsel %vm340, %v3744, 0.0
      %v3786 = vadd.f32 %v3784, %v3785
      %v3787 = vsel %vm340, %v3745, 0.0
      %v3788 = vadd.f32 %v3786, %v3787
      %v3789 = vsel %vm340, %v3746, 0.0
      %v3790 = vadd.f32 %v3788, %v3789
      %v3791 = vsel %vm340, %v3747, 0.0
      %v3792 = vadd.f32 %v3790, %v3791
      %v3793 = vsel %vm340, %v3748, 0.0
      %v3794 = vadd.f32 %v3792, %v3793
      %v3795 = vsel %vm340, %v3749, 0.0
      %v3796 = vadd.f32 %v3794, %v3795
      %v3797 = vsel %vm340, %v3750, 0.0
      %v3798 = vadd.f32 %v3796, %v3797
      %v3799 = vsel %vm340, %v3751, 0.0
      %v3800 = vadd.f32 %v3798, %v3799
      %v3801 = vsel %vm340, %v3752, 0.0
      %v3802 = vadd.f32 %v3800, %v3801
      %v3803 = vsel %vm340, %v3753, 0.0
      %v3804 = vadd.f32 %v3802, %v3803
      %v3805 = vsel %vm340, %v3754, 0.0
      %v3806 = vadd.f32 %v3804, %v3805
      %v3807 = vsel %vm340, %v3755, 0.0
      %v3808 = vadd.f32 %v3806, %v3807
      %v3809 = vsel %vm340, %v3756, 0.0
      %v3810 = vadd.f32 %v3808, %v3809
      %v3811 = vsel %vm340, %v3757, 0.0
      %v3812 = vadd.f32 %v3810, %v3811
      %v3813 = vsel %vm340, %v3758, 0.0
      %v3814 = vadd.f32 %v3812, %v3813
      %v3815 = vsel %vm340, %v3759, 0.0
      %v3816 = vadd.f32 %v3814, %v3815
      %v3817 = vsel %vm340, %v3760, 0.0
      %v3818 = vadd.f32 %v3816, %v3817
      %v3819 = vsel %vm340, %v3761, 0.0
      %v3820 = vadd.f32 %v3818, %v3819
      %v3821 = vsel %vm340, %v3762, 0.0
      %v3822 = vadd.f32 %v3820, %v3821
      %v3823 = vsel %vm340, %v3763, 0.0
      %v3824 = vadd.f32 %v3822, %v3823
      %v3825 = vsel %vm340, %v3764, 0.0
      %v3826 = vadd.f32 %v3824, %v3825
      %v3827 = vsel %vm340, %v3765, 0.0
      %v3828 = vadd.f32 %v3826, %v3827
      %v3829 = vrot.slane %v3828, 4
      %v3830 = vadd.f32 %v3828, %v3829
      %v3831 = vrot.slane %v3830, 2
      %v3832 = vadd.f32 %v3830, %v3831
      %v3833 = vrot.slane %v3832, 1
      %v3834 = vadd.f32 %v3832, %v3833
      %v3835 = vmul.f32 %v3834, %v3700
      %v3836 = vadd.f32 %v3835, 1e-05
      %v3837 = vrsqrt.pop %v3836
      %v3838 = vmul.f32 %v3837, %v3836
      %v3839 = vmul.f32 %v3838, %v3837
      %v3840 = vmul.f32 0.5, %v3839
      %v3841 = vsub.f32 1.5, %v3840
      %v3842 = vmul.f32 %v3837, %v3841
      %vm3843 = vweird.f32 %v3836
      %vm3844 = vweird.f32 %v3837
      %vm3845 = vmor %vm3843, %vm3844
      %v3846 = vsel %vm3845, %v3837, %v3842
      %v3847 = vmul.f32 %v3702, %v3846
      %v3848 = vmul.f32 %v3703, %v3846
      %v3849 = vmul.f32 %v3704, %v3846
      %v3850 = vmul.f32 %v3705, %v3846
      %v3851 = vmul.f32 %v3706, %v3846
      %v3852 = vmul.f32 %v3707, %v3846
      %v3853 = vmul.f32 %v3708, %v3846
      %v3854 = vmul.f32 %v3709, %v3846
      %v3855 = vmul.f32 %v3710, %v3846
      %v3856 = vmul.f32 %v3711, %v3846
      %v3857 = vmul.f32 %v3712, %v3846
      %v3858 = vmul.f32 %v3713, %v3846
      %v3859 = vmul.f32 %v3714, %v3846
      %v3860 = vmul.f32 %v3715, %v3846
      %v3861 = vmul.f32 %v3716, %v3846
      %v3862 = vmul.f32 %v3717, %v3846
      %v3863 = vmul.f32 %v3718, %v3846
      %v3864 = vmul.f32 %v3719, %v3846
      %v3865 = vmul.f32 %v3720, %v3846
      %v3866 = vmul.f32 %v3721, %v3846
      %v3867 = vmul.f32 %v3722, %v3846
      %v3868 = vmul.f32 %v3723, %v3846
      %v3869 = vmul.f32 %v3724, %v3846
      %v3870 = vmul.f32 %v3725, %v3846
      %v3871 = vmul.f32 %v3726, %v3846
      %v3872 = vmul.f32 %v3727, %v3846
      %v3873 = vmul.f32 %v3728, %v3846
      %v3874 = vmul.f32 %v3729, %v3846
      %v3875 = vmul.f32 %v3730, %v3846
      %v3876 = vmul.f32 %v3731, %v3846
      %v3877 = vmul.f32 %v3732, %v3846
      %v3878 = vmul.f32 %v3733, %v3846
      %v3879 = vmax.f32 %v3847, 0.0
      %v3880 = vmax.f32 %v3848, 0.0
      %v3881 = vmax.f32 %v3849, 0.0
      %v3882 = vmax.f32 %v3850, 0.0
      %v3883 = vmax.f32 %v3851, 0.0
      %v3884 = vmax.f32 %v3852, 0.0
      %v3885 = vmax.f32 %v3853, 0.0
      %v3886 = vmax.f32 %v3854, 0.0
      %v3887 = vmax.f32 %v3855, 0.0
      %v3888 = vmax.f32 %v3856, 0.0
      %v3889 = vmax.f32 %v3857, 0.0
      %v3890 = vmax.f32 %v3858, 0.0
      %v3891 = vmax.f32 %v3859, 0.0
      %v3892 = vmax.f32 %v3860, 0.0
      %v3893 = vmax.f32 %v3861, 0.0
      %v3894 = vmax.f32 %v3862, 0.0
      %v3895 = vmax.f32 %v3863, 0.0
      %v3896 = vmax.f32 %v3864, 0.0
      %v3897 = vmax.f32 %v3865, 0.0
      %v3898 = vmax.f32 %v3866, 0.0
      %v3899 = vmax.f32 %v3867, 0.0
      %v3900 = vmax.f32 %v3868, 0.0
      %v3901 = vmax.f32 %v3869, 0.0
      %v3902 = vmax.f32 %v3870, 0.0
      %v3903 = vmax.f32 %v3871, 0.0
      %v3904 = vmax.f32 %v3872, 0.0
      %v3905 = vmax.f32 %v3873, 0.0
      %v3906 = vmax.f32 %v3874, 0.0
      %v3907 = vmax.f32 %v3875, 0.0
      %v3908 = vmax.f32 %v3876, 0.0
      %v3909 = vmax.f32 %v3877, 0.0
      %v3910 = vmax.f32 %v3878, 0.0
      %3911 = vst.msk [vmem:[#allocation5] sm:$0xff] %vm340, 0.0
      %3912 = vst.msk [vmem:[#allocation5 + $0x8] sm:$0xff] %vm340, 0.0
      %vm3913 = vcmask 58368
      %3914 = vst.msk [vmem:[#allocation5 + $0x10] sm:$0x3] %vm3913, 0.0
      %3915 = vst.msk [vmem:[#allocation5 + $0x18] sm:$0xff] %vm340, 0.0
      %3916 = vst.msk [vmem:[#allocation5 + $0x20] sm:$0xff] %vm340, 0.0
      %3917 = vst.msk [vmem:[#allocation5 + $0x28] sm:$0x3] %vm3913, 0.0
      %3918 = vst.msk [vmem:[#allocation5 + $0x30] sm:$0xff] %vm340, 0.0
      %3919 = vst.msk [vmem:[#allocation5 + $0x38] sm:$0xff] %vm340, 0.0
      %3920 = vst.msk [vmem:[#allocation5 + $0x40] sm:$0x3] %vm3913, 0.0
      %3921 = vst.msk [vmem:[#allocation5 + $0x48] sm:$0xff] %vm340, 0.0
      %3922 = vst.msk [vmem:[#allocation5 + $0x50] sm:$0xff] %vm340, 0.0
      %3923 = vst.msk [vmem:[#allocation5 + $0x58] sm:$0x3] %vm3913, 0.0
      %3924 = vst.msk [vmem:[#allocation5 + $0x60] sm:$0xff] %vm340, 0.0
      %3925 = vst.msk [vmem:[#allocation5 + $0x68] sm:$0xff] %vm340, 0.0
      %3926 = vst.msk [vmem:[#allocation5 + $0x70] sm:$0x3] %vm3913, 0.0
      %3927 = vst.msk [vmem:[#allocation5 + $0x78] sm:$0xff] %vm340, 0.0
      %3928 = vst.msk [vmem:[#allocation5 + $0x80] sm:$0xff] %vm340, 0.0
      %3929 = vst.msk [vmem:[#allocation5 + $0x88] sm:$0x3] %vm3913, 0.0
      %3930 = vst.msk [vmem:[#allocation5 + $0x90] sm:$0xff] %vm340, 0.0
      %3931 = vst.msk [vmem:[#allocation5 + $0x98] sm:$0xff] %vm340, 0.0
      %3932 = vst.msk [vmem:[#allocation5 + $0xa0] sm:$0x3] %vm3913, 0.0
      %3933 = vst.msk [vmem:[#allocation5 + $0xa8] sm:$0xff] %vm340, 0.0
      %3934 = vst.msk [vmem:[#allocation5 + $0xb0] sm:$0xff] %vm340, 0.0
      %3935 = vst.msk [vmem:[#allocation5 + $0xb8] sm:$0x3] %vm3913, 0.0
      %3936 = vst.msk [vmem:[#allocation5 + $0xc0] sm:$0xff] %vm340, 0.0
      %3937 = vst.msk [vmem:[#allocation5 + $0xc8] sm:$0xff] %vm340, 0.0
      %3938 = vst.msk [vmem:[#allocation5 + $0xd0] sm:$0x3] %vm3913, 0.0
      %3939 = vst.msk [vmem:[#allocation5 + $0xd8] sm:$0xff] %vm340, 0.0
      %3940 = vst.msk [vmem:[#allocation5 + $0xe0] sm:$0xff] %vm340, 0.0
      %3941 = vst.msk [vmem:[#allocation5 + $0xe8] sm:$0x3] %vm3913, 0.0
      %3942 = vst.msk [vmem:[#allocation5 + $0xf0] sm:$0xff] %vm340, 0.0
      %3943 = vst.msk [vmem:[#allocation5 + $0xf8] sm:$0xff] %vm340, 0.0
      %3944 = vst.msk [vmem:[#allocation5 + $0x100] sm:$0x3] %vm3913, 0.0
      %3945 = vst.msk [vmem:[#allocation5 + $0x108] sm:$0xff] %vm340, 0.0
      %3946 = vst.msk [vmem:[#allocation5 + $0x110] sm:$0xff] %vm340, 0.0
      %3947 = vst.msk [vmem:[#allocation5 + $0x118] sm:$0x3] %vm3913, 0.0
      %3948 = vst.msk [vmem:[#allocation5 + $0x120] sm:$0xff] %vm340, 0.0
      %3949 = vst.msk [vmem:[#allocation5 + $0x128] sm:$0xff] %vm340, 0.0
      %3950 = vst.msk [vmem:[#allocation5 + $0x130] sm:$0x3] %vm3913, 0.0
      %3951 = vst.msk [vmem:[#allocation5 + $0x138] sm:$0xff] %vm340, 0.0
      %3952 = vst.msk [vmem:[#allocation5 + $0x140] sm:$0xff] %vm340, 0.0
      %3953 = vst.msk [vmem:[#allocation5 + $0x148] sm:$0x3] %vm3913, 0.0
      %3954 = vst.msk [vmem:[#allocation5 + $0x150] sm:$0xff] %vm340, 0.0
      %3955 = vst.msk [vmem:[#allocation5 + $0x158] sm:$0xff] %vm340, 0.0
      %3956 = vst.msk [vmem:[#allocation5 + $0x160] sm:$0x3] %vm3913, 0.0
      %3957 = vst.msk [vmem:[#allocation5 + $0x168] sm:$0xff] %vm340, 0.0
      %3958 = vst.msk [vmem:[#allocation5 + $0x170] sm:$0xff] %vm340, 0.0
      %3959 = vst.msk [vmem:[#allocation5 + $0x178] sm:$0x3] %vm3913, 0.0
      %3960 = vst.msk [vmem:[#allocation5 + $0x180] sm:$0xff] %vm340, 0.0
      %3961 = vst.msk [vmem:[#allocation5 + $0x188] sm:$0xff] %vm340, 0.0
      %3962 = vst.msk [vmem:[#allocation5 + $0x190] sm:$0x3] %vm3913, 0.0
      %3963 = vst.msk [vmem:[#allocation5 + $0x198] sm:$0xff] %vm340, 0.0
      %3964 = vst.msk [vmem:[#allocation5 + $0x1a0] sm:$0xff] %vm340, 0.0
      %3965 = vst.msk [vmem:[#allocation5 + $0x1a8] sm:$0x3] %vm3913, 0.0
      %s3966 = scalar_lea.vmem [#allocation5], 24
      %3967 = vst.msk [vmem:[%s3966 + $0x1] sm:$0xff] %vm340, %v3879
      %3968 = vst.msk [vmem:[%s3966 + $0x9] sm:$0xff] %vm340, %v3880
      %3969 = vst.msk [vmem:[%s3966 + $0x19] sm:$0xff] %vm340, %v3881
      %3970 = vst.msk [vmem:[%s3966 + $0x21] sm:$0xff] %vm340, %v3882
      %3971 = vst.msk [vmem:[%s3966 + $0x31] sm:$0xff] %vm340, %v3883
      %3972 = vst.msk [vmem:[%s3966 + $0x39] sm:$0xff] %vm340, %v3884
      %3973 = vst.msk [vmem:[%s3966 + $0x49] sm:$0xff] %vm340, %v3885
      %3974 = vst.msk [vmem:[%s3966 + $0x51] sm:$0xff] %vm340, %v3886
      %3975 = vst.msk [vmem:[%s3966 + $0x61] sm:$0xff] %vm340, %v3887
      %3976 = vst.msk [vmem:[%s3966 + $0x69] sm:$0xff] %vm340, %v3888
      %3977 = vst.msk [vmem:[%s3966 + $0x79] sm:$0xff] %vm340, %v3889
      %3978 = vst.msk [vmem:[%s3966 + $0x81] sm:$0xff] %vm340, %v3890
      %3979 = vst.msk [vmem:[%s3966 + $0x91] sm:$0xff] %vm340, %v3891
      %3980 = vst.msk [vmem:[%s3966 + $0x99] sm:$0xff] %vm340, %v3892
      %3981 = vst.msk [vmem:[%s3966 + $0xa9] sm:$0xff] %vm340, %v3893
      %3982 = vst.msk [vmem:[%s3966 + $0xb1] sm:$0xff] %vm340, %v3894
      %3983 = vst.msk [vmem:[%s3966 + $0xc1] sm:$0xff] %vm340, %v3895
      %3984 = vst.msk [vmem:[%s3966 + $0xc9] sm:$0xff] %vm340, %v3896
      %3985 = vst.msk [vmem:[%s3966 + $0xd9] sm:$0xff] %vm340, %v3897
      %3986 = vst.msk [vmem:[%s3966 + $0xe1] sm:$0xff] %vm340, %v3898
      %3987 = vst.msk [vmem:[%s3966 + $0xf1] sm:$0xff] %vm340, %v3899
      %3988 = vst.msk [vmem:[%s3966 + $0xf9] sm:$0xff] %vm340, %v3900
      %3989 = vst.msk [vmem:[%s3966 + $0x109] sm:$0xff] %vm340, %v3901
      %3990 = vst.msk [vmem:[%s3966 + $0x111] sm:$0xff] %vm340, %v3902
      %3991 = vst.msk [vmem:[%s3966 + $0x121] sm:$0xff] %vm340, %v3903
      %3992 = vst.msk [vmem:[%s3966 + $0x129] sm:$0xff] %vm340, %v3904
      %3993 = vst.msk [vmem:[%s3966 + $0x139] sm:$0xff] %vm340, %v3905
      %3994 = vst.msk [vmem:[%s3966 + $0x141] sm:$0xff] %vm340, %v3906
      %3995 = vst.msk [vmem:[%s3966 + $0x151] sm:$0xff] %vm340, %v3907
      %3996 = vst.msk [vmem:[%s3966 + $0x159] sm:$0xff] %vm340, %v3908
      %3997 = vst.msk [vmem:[%s3966 + $0x169] sm:$0xff] %vm340, %v3909
      %3998 = vst.msk [vmem:[%s3966 + $0x171] sm:$0xff] %vm340, %v3910
      %3999 = vst.msk [vmem:[#allocation8] sm:$0xff] %vm340, 0.0
      %4000 = vst.msk [vmem:[#allocation8 + $0x8] sm:$0xff] %vm340, 0.0
      %4001 = vst.msk [vmem:[#allocation8 + $0x10] sm:$0xff] %vm340, 0.0
      %4002 = vst.msk [vmem:[#allocation8 + $0x18] sm:$0xff] %vm340, 0.0
      %4003 = vst.msk [vmem:[#allocation8 + $0x20] sm:$0xff] %vm340, 0.0
      %4004 = vst.msk [vmem:[#allocation8 + $0x28] sm:$0xff] %vm340, 0.0
      %4005 = vst.msk [vmem:[#allocation8 + $0x30] sm:$0xff] %vm340, 0.0
      %4006 = vst.msk [vmem:[#allocation8 + $0x38] sm:$0xff] %vm340, 0.0
      %4007 = vst.msk [vmem:[#allocation8 + $0x40] sm:$0xff] %vm340, 0.0
      %4008 = vst.msk [vmem:[#allocation8 + $0x48] sm:$0xff] %vm340, 0.0
      %4009 = vst.msk [vmem:[#allocation8 + $0x50] sm:$0xff] %vm340, 0.0
      %4010 = vst.msk [vmem:[#allocation8 + $0x58] sm:$0xff] %vm340, 0.0
      %4011 = vst.msk [vmem:[#allocation8 + $0x60] sm:$0xff] %vm340, 0.0
      %4012 = vst.msk [vmem:[#allocation8 + $0x68] sm:$0xff] %vm340, 0.0
      %4013 = vst.msk [vmem:[#allocation8 + $0x70] sm:$0xff] %vm340, 0.0
      %4014 = vst.msk [vmem:[#allocation8 + $0x78] sm:$0xff] %vm340, 0.0
      %4015 = vst.msk [vmem:[#allocation8 + $0x80] sm:$0xff] %vm340, 0.0
      %4016 = vst.msk [vmem:[#allocation8 + $0x88] sm:$0xff] %vm340, 0.0
      %4017 = vst.msk [vmem:[#allocation8 + $0x90] sm:$0xff] %vm340, 0.0
      %4018 = vst.msk [vmem:[#allocation8 + $0x98] sm:$0xff] %vm340, 0.0
      %4019 = vst.msk [vmem:[#allocation8 + $0xa0] sm:$0xff] %vm340, 0.0
      %4020 = vst.msk [vmem:[#allocation8 + $0xa8] sm:$0xff] %vm340, 0.0
      %4021 = vst.msk [vmem:[#allocation8 + $0xb0] sm:$0xff] %vm340, 0.0
      %4022 = vst.msk [vmem:[#allocation8 + $0xb8] sm:$0xff] %vm340, 0.0
      %4023 = vst.msk [vmem:[#allocation8 + $0xc0] sm:$0xff] %vm340, 0.0
      %4024 = vst.msk [vmem:[#allocation8 + $0xc8] sm:$0xff] %vm340, 0.0
      %4025 = vst.msk [vmem:[#allocation8 + $0xd0] sm:$0xff] %vm340, 0.0
      %4026 = vst.msk [vmem:[#allocation8 + $0xd8] sm:$0xff] %vm340, 0.0
      %4027 = vst.msk [vmem:[#allocation8 + $0xe0] sm:$0xff] %vm340, 0.0
      %4028 = vst.msk [vmem:[#allocation8 + $0xe8] sm:$0xff] %vm340, 0.0
      %4029 = vst.msk [vmem:[#allocation8 + $0xf0] sm:$0xff] %vm340, 0.0
      %4030 = vst.msk [vmem:[#allocation8 + $0xf8] sm:$0xff] %vm340, 0.0
      %v4031 = vld [vmem:[#allocation5] sm:$0xff]
      %v4032 = vld [vmem:[#allocation5 + $0x8] sm:$0xff]
      %v4033 = vld [vmem:[#allocation5 + $0x18] sm:$0xff]
      %v4034 = vld [vmem:[#allocation5 + $0x20] sm:$0xff]
      %v4035 = vld [vmem:[#allocation5 + $0x30] sm:$0xff]
      %v4036 = vld [vmem:[#allocation5 + $0x38] sm:$0xff]
      %v4037 = vld [vmem:[#allocation5 + $0x48] sm:$0xff]
      %v4038 = vld [vmem:[#allocation5 + $0x50] sm:$0xff]
      %v4039 = vld [vmem:[#allocation5 + $0x60] sm:$0xff]
      %v4040 = vld [vmem:[#allocation5 + $0x68] sm:$0xff]
      %v4041 = vld [vmem:[#allocation5 + $0x78] sm:$0xff]
      %v4042 = vld [vmem:[#allocation5 + $0x80] sm:$0xff]
      %v4043 = vld [vmem:[#allocation5 + $0x90] sm:$0xff]
      %v4044 = vld [vmem:[#allocation5 + $0x98] sm:$0xff]
      %v4045 = vld [vmem:[#allocation5 + $0xa8] sm:$0xff]
      %v4046 = vld [vmem:[#allocation5 + $0xb0] sm:$0xff]
      %v4047 = vld [vmem:[#allocation5 + $0xc0] sm:$0xff]
      %v4048 = vld [vmem:[#allocation5 + $0xc8] sm:$0xff]
      %v4049 = vld [vmem:[#allocation5 + $0xd8] sm:$0xff]
      %v4050 = vld [vmem:[#allocation5 + $0xe0] sm:$0xff]
      %v4051 = vld [vmem:[#allocation5 + $0xf0] sm:$0xff]
      %v4052 = vld [vmem:[#allocation5 + $0xf8] sm:$0xff]
      %v4053 = vld [vmem:[#allocation5 + $0x108] sm:$0xff]
      %v4054 = vld [vmem:[#allocation5 + $0x110] sm:$0xff]
      %v4055 = vld [vmem:[#allocation5 + $0x120] sm:$0xff]
      %v4056 = vld [vmem:[#allocation5 + $0x128] sm:$0xff]
      %v4057 = vld [vmem:[#allocation5 + $0x138] sm:$0xff]
      %v4058 = vld [vmem:[#allocation5 + $0x140] sm:$0xff]
      %v4059 = vld [vmem:[#allocation5 + $0x150] sm:$0xff]
      %v4060 = vld [vmem:[#allocation5 + $0x158] sm:$0xff]
      %v4061 = vld [vmem:[#allocation5 + $0x168] sm:$0xff]
      %v4062 = vld [vmem:[#allocation5 + $0x170] sm:$0xff]
      %v4063 = vld [vmem:[#allocation5 + $0x180] sm:$0xff]
      %v4064 = vld [vmem:[#allocation5 + $0x188] sm:$0xff]
      %v4065 = vld [vmem:[#allocation5 + $0x198] sm:$0xff]
      %v4066 = vld [vmem:[#allocation5 + $0x1a0] sm:$0xff]
      %4067 = vst.msk [vmem:[#allocation6] sm:$0xff] %vm340, %v4031
      %4068 = vst.msk [vmem:[#allocation6 + $0x8] sm:$0xff] %vm340, %v4032
      %4069 = vst.msk [vmem:[#allocation6 + $0x10] sm:$0xff] %vm340, %v4033
      %4070 = vst.msk [vmem:[#allocation6 + $0x18] sm:$0xff] %vm340, %v4034
      %4071 = vst.msk [vmem:[#allocation6 + $0x20] sm:$0xff] %vm340, %v4035
      %4072 = vst.msk [vmem:[#allocation6 + $0x28] sm:$0xff] %vm340, %v4036
      %4073 = vst.msk [vmem:[#allocation6 + $0x30] sm:$0xff] %vm340, %v4037
      %4074 = vst.msk [vmem:[#allocation6 + $0x38] sm:$0xff] %vm340, %v4038
      %4075 = vst.msk [vmem:[#allocation6 + $0x40] sm:$0xff] %vm340, %v4039
      %4076 = vst.msk [vmem:[#allocation6 + $0x48] sm:$0xff] %vm340, %v4040
      %4077 = vst.msk [vmem:[#allocation6 + $0x50] sm:$0xff] %vm340, %v4041
      %4078 = vst.msk [vmem:[#allocation6 + $0x58] sm:$0xff] %vm340, %v4042
      %4079 = vst.msk [vmem:[#allocation6 + $0x60] sm:$0xff] %vm340, %v4043
      %4080 = vst.msk [vmem:[#allocation6 + $0x68] sm:$0xff] %vm340, %v4044
      %4081 = vst.msk [vmem:[#allocation6 + $0x70] sm:$0xff] %vm340, %v4045
      %4082 = vst.msk [vmem:[#allocation6 + $0x78] sm:$0xff] %vm340, %v4046
      %4083 = vst.msk [vmem:[#allocation6 + $0x80] sm:$0xff] %vm340, %v4047
      %4084 = vst.msk [vmem:[#allocation6 + $0x88] sm:$0xff] %vm340, %v4048
      %4085 = vst.msk [vmem:[#allocation6 + $0x90] sm:$0xff] %vm340, %v4049
      %4086 = vst.msk [vmem:[#allocation6 + $0x98] sm:$0xff] %vm340, %v4050
      %4087 = vst.msk [vmem:[#allocation6 + $0xa0] sm:$0xff] %vm340, %v4051
      %4088 = vst.msk [vmem:[#allocation6 + $0xa8] sm:$0xff] %vm340, %v4052
      %4089 = vst.msk [vmem:[#allocation6 + $0xb0] sm:$0xff] %vm340, %v4053
      %4090 = vst.msk [vmem:[#allocation6 + $0xb8] sm:$0xff] %vm340, %v4054
      %4091 = vst.msk [vmem:[#allocation6 + $0xc0] sm:$0xff] %vm340, %v4055
      %4092 = vst.msk [vmem:[#allocation6 + $0xc8] sm:$0xff] %vm340, %v4056
      %4093 = vst.msk [vmem:[#allocation6 + $0xd0] sm:$0xff] %vm340, %v4057
      %4094 = vst.msk [vmem:[#allocation6 + $0xd8] sm:$0xff] %vm340, %v4058
      %4095 = vst.msk [vmem:[#allocation6 + $0xe0] sm:$0xff] %vm340, %v4059
      %4096 = vst.msk [vmem:[#allocation6 + $0xe8] sm:$0xff] %vm340, %v4060
      %4097 = vst.msk [vmem:[#allocation6 + $0xf0] sm:$0xff] %vm340, %v4061
      %4098 = vst.msk [vmem:[#allocation6 + $0xf8] sm:$0xff] %vm340, %v4062
      %4099 = vst.msk [vmem:[#allocation6 + $0x100] sm:$0xff] %vm340, %v4063
      %4100 = vst.msk [vmem:[#allocation6 + $0x108] sm:$0xff] %vm340, %v4064
      %4101 = vst.msk [vmem:[#allocation6 + $0x110] sm:$0xff] %vm340, %v4065
      %4102 = vst.msk [vmem:[#allocation6 + $0x118] sm:$0xff] %vm340, %v4066
      %v4103 = vld [vmem:[#allocation6] sm:$0xff]
      %v4104 = vld [vmem:[#allocation6 + $0x8] sm:$0xff]
      %v4105 = vld [vmem:[#allocation6 + $0x10] sm:$0xff]
      %v4106 = vld [vmem:[#allocation6 + $0x18] sm:$0xff]
      %v4107 = vld [vmem:[#allocation6 + $0x20] sm:$0xff]
      %v4108 = vld [vmem:[#allocation6 + $0x28] sm:$0xff]
      %v4109 = vld [vmem:[#allocation6 + $0x30] sm:$0xff]
      %v4110 = vld [vmem:[#allocation6 + $0x38] sm:$0xff]
      %v4111 = vld [vmem:[#allocation6 + $0x40] sm:$0xff]
      %v4112 = vld [vmem:[#allocation6 + $0x48] sm:$0xff]
      %v4113 = vld [vmem:[#allocation6 + $0x50] sm:$0xff]
      %v4114 = vld [vmem:[#allocation6 + $0x58] sm:$0xff]
      %v4115 = vld [vmem:[#allocation6 + $0x60] sm:$0xff]
      %v4116 = vld [vmem:[#allocation6 + $0x68] sm:$0xff]
      %v4117 = vld [vmem:[#allocation6 + $0x70] sm:$0xff]
      %v4118 = vld [vmem:[#allocation6 + $0x78] sm:$0xff]
      %v4119 = vld [vmem:[#allocation6 + $0x80] sm:$0xff]
      %v4120 = vld [vmem:[#allocation6 + $0x88] sm:$0xff]
      %v4121 = vld [vmem:[#allocation6 + $0x90] sm:$0xff]
      %v4122 = vld [vmem:[#allocation6 + $0x98] sm:$0xff]
      %v4123 = vld [vmem:[#allocation6 + $0xa0] sm:$0xff]
      %v4124 = vld [vmem:[#allocation6 + $0xa8] sm:$0xff]
      %v4125 = vld [vmem:[#allocation6 + $0xb0] sm:$0xff]
      %v4126 = vld [vmem:[#allocation6 + $0xb8] sm:$0xff]
      %v4127 = vld [vmem:[#allocation6 + $0xc0] sm:$0xff]
      %v4128 = vld [vmem:[#allocation6 + $0xc8] sm:$0xff]
      %v4129 = vld [vmem:[#allocation6 + $0xd0] sm:$0xff]
      %v4130 = vld [vmem:[#allocation6 + $0xd8] sm:$0xff]
      %v4131 = vld [vmem:[#allocation6 + $0xe0] sm:$0xff]
      %v4132 = vld [vmem:[#allocation6 + $0xe8] sm:$0xff]
      %v4133 = vld [vmem:[#allocation6 + $0xf0] sm:$0xff]
      %v4134 = vld [vmem:[#allocation6 + $0xf8] sm:$0xff]
      %v4135 = vpack.c.bf16 %v4103, %v4103
      %v4136 = vpack.c.bf16 %v4104, %v4104
      %v4137 = vpack.c.bf16 %v4105, %v4105
      %v4138 = vpack.c.bf16 %v4106, %v4106
      %v4139 = vpack.c.bf16 %v4107, %v4107
      %v4140 = vpack.c.bf16 %v4108, %v4108
      %v4141 = vpack.c.bf16 %v4109, %v4109
      %v4142 = vpack.c.bf16 %v4110, %v4110
      %v4143 = vpack.c.bf16 %v4111, %v4111
      %v4144 = vpack.c.bf16 %v4112, %v4112
      %v4145 = vpack.c.bf16 %v4113, %v4113
      %v4146 = vpack.c.bf16 %v4114, %v4114
      %v4147 = vpack.c.bf16 %v4115, %v4115
      %v4148 = vpack.c.bf16 %v4116, %v4116
      %v4149 = vpack.c.bf16 %v4117, %v4117
      %v4150 = vpack.c.bf16 %v4118, %v4118
      %v4151 = vpack.c.bf16 %v4119, %v4119
      %v4152 = vpack.c.bf16 %v4120, %v4120
      %v4153 = vpack.c.bf16 %v4121, %v4121
      %v4154 = vpack.c.bf16 %v4122, %v4122
      %v4155 = vpack.c.bf16 %v4123, %v4123
      %v4156 = vpack.c.bf16 %v4124, %v4124
      %v4157 = vpack.c.bf16 %v4125, %v4125
      %v4158 = vpack.c.bf16 %v4126, %v4126
      %v4159 = vpack.c.bf16 %v4127, %v4127
      %v4160 = vpack.c.bf16 %v4128, %v4128
      %v4161 = vpack.c.bf16 %v4129, %v4129
      %v4162 = vpack.c.bf16 %v4130, %v4130
      %v4163 = vpack.c.bf16 %v4131, %v4131
      %v4164 = vpack.c.bf16 %v4132, %v4132
      %v4165 = vpack.c.bf16 %v4133, %v4133
      %v4166 = vpack.c.bf16 %v4134, %v4134
      %vm4167 = vcmask 60416
      %4168 = vst.msk [vmem:[#allocation7] sm:$0xf] %vm4167, %v4135
      %4169 = vst.msk [vmem:[#allocation7 + $0x4] sm:$0xf] %vm4167, %v4136
      %4170 = vst.msk [vmem:[#allocation7 + $0x8] sm:$0xf] %vm4167, %v4137
      %4171 = vst.msk [vmem:[#allocation7 + $0xc] sm:$0xf] %vm4167, %v4138
      %4172 = vst.msk [vmem:[#allocation7 + $0x10] sm:$0xf] %vm4167, %v4139
      %4173 = vst.msk [vmem:[#allocation7 + $0x14] sm:$0xf] %vm4167, %v4140
      %4174 = vst.msk [vmem:[#allocation7 + $0x18] sm:$0xf] %vm4167, %v4141
      %4175 = vst.msk [vmem:[#allocation7 + $0x1c] sm:$0xf] %vm4167, %v4142
      %4176 = vst.msk [vmem:[#allocation7 + $0x20] sm:$0xf] %vm4167, %v4143
      %4177 = vst.msk [vmem:[#allocation7 + $0x24] sm:$0xf] %vm4167, %v4144
      %4178 = vst.msk [vmem:[#allocation7 + $0x28] sm:$0xf] %vm4167, %v4145
      %4179 = vst.msk [vmem:[#allocation7 + $0x2c] sm:$0xf] %vm4167, %v4146
      %4180 = vst.msk [vmem:[#allocation7 + $0x30] sm:$0xf] %vm4167, %v4147
      %4181 = vst.msk [vmem:[#allocation7 + $0x34] sm:$0xf] %vm4167, %v4148
      %4182 = vst.msk [vmem:[#allocation7 + $0x38] sm:$0xf] %vm4167, %v4149
      %4183 = vst.msk [vmem:[#allocation7 + $0x3c] sm:$0xf] %vm4167, %v4150
      %4184 = vst.msk [vmem:[#allocation7 + $0x40] sm:$0xf] %vm4167, %v4151
      %4185 = vst.msk [vmem:[#allocation7 + $0x44] sm:$0xf] %vm4167, %v4152
      %4186 = vst.msk [vmem:[#allocation7 + $0x48] sm:$0xf] %vm4167, %v4153
      %4187 = vst.msk [vmem:[#allocation7 + $0x4c] sm:$0xf] %vm4167, %v4154
      %4188 = vst.msk [vmem:[#allocation7 + $0x50] sm:$0xf] %vm4167, %v4155
      %4189 = vst.msk [vmem:[#allocation7 + $0x54] sm:$0xf] %vm4167, %v4156
      %4190 = vst.msk [vmem:[#allocation7 + $0x58] sm:$0xf] %vm4167, %v4157
      %4191 = vst.msk [vmem:[#allocation7 + $0x5c] sm:$0xf] %vm4167, %v4158
      %4192 = vst.msk [vmem:[#allocation7 + $0x60] sm:$0xf] %vm4167, %v4159
      %4193 = vst.msk [vmem:[#allocation7 + $0x64] sm:$0xf] %vm4167, %v4160
      %4194 = vst.msk [vmem:[#allocation7 + $0x68] sm:$0xf] %vm4167, %v4161
      %4195 = vst.msk [vmem:[#allocation7 + $0x6c] sm:$0xf] %vm4167, %v4162
      %4196 = vst.msk [vmem:[#allocation7 + $0x70] sm:$0xf] %vm4167, %v4163
      %4197 = vst.msk [vmem:[#allocation7 + $0x74] sm:$0xf] %vm4167, %v4164
      %4198 = vst.msk [vmem:[#allocation7 + $0x78] sm:$0xf] %vm4167, %v4165
      %4199 = vst.msk [vmem:[#allocation7 + $0x7c] sm:$0xf] %vm4167, %v4166
      %s4200 = scalar_lea.vmem [#allocation6], 16
      %v4201 = vld [vmem:[%s4200] sm:$0xff]
      %v4202 = vld [vmem:[%s4200 + $0x8] sm:$0xff]
      %v4203 = vld [vmem:[%s4200 + $0x10] sm:$0xff]
      %v4204 = vld [vmem:[%s4200 + $0x18] sm:$0xff]
      %v4205 = vld [vmem:[%s4200 + $0x20] sm:$0xff]
      %v4206 = vld [vmem:[%s4200 + $0x28] sm:$0xff]
      %v4207 = vld [vmem:[%s4200 + $0x30] sm:$0xff]
      %v4208 = vld [vmem:[%s4200 + $0x38] sm:$0xff]
      %v4209 = vld [vmem:[%s4200 + $0x40] sm:$0xff]
      %v4210 = vld [vmem:[%s4200 + $0x48] sm:$0xff]
      %v4211 = vld [vmem:[%s4200 + $0x50] sm:$0xff]
      %v4212 = vld [vmem:[%s4200 + $0x58] sm:$0xff]
      %v4213 = vld [vmem:[%s4200 + $0x60] sm:$0xff]
      %v4214 = vld [vmem:[%s4200 + $0x68] sm:$0xff]
      %v4215 = vld [vmem:[%s4200 + $0x70] sm:$0xff]
      %v4216 = vld [vmem:[%s4200 + $0x78] sm:$0xff]
      %v4217 = vld [vmem:[%s4200 + $0x80] sm:$0xff]
      %v4218 = vld [vmem:[%s4200 + $0x88] sm:$0xff]
      %v4219 = vld [vmem:[%s4200 + $0x90] sm:$0xff]
      %v4220 = vld [vmem:[%s4200 + $0x98] sm:$0xff]
      %v4221 = vld [vmem:[%s4200 + $0xa0] sm:$0xff]
      %v4222 = vld [vmem:[%s4200 + $0xa8] sm:$0xff]
      %v4223 = vld [vmem:[%s4200 + $0xb0] sm:$0xff]
      %v4224 = vld [vmem:[%s4200 + $0xb8] sm:$0xff]
      %v4225 = vld [vmem:[%s4200 + $0xc0] sm:$0xff]
      %v4226 = vld [vmem:[%s4200 + $0xc8] sm:$0xff]
      %v4227 = vld [vmem:[%s4200 + $0xd0] sm:$0xff]
      %v4228 = vld [vmem:[%s4200 + $0xd8] sm:$0xff]
      %v4229 = vld [vmem:[%s4200 + $0xe0] sm:$0xff]
      %v4230 = vld [vmem:[%s4200 + $0xe8] sm:$0xff]
      %v4231 = vld [vmem:[%s4200 + $0xf0] sm:$0xff]
      %v4232 = vld [vmem:[%s4200 + $0xf8] sm:$0xff]
      %v4233 = vpack.c.bf16 %v4201, %v4201
      %v4234 = vpack.c.bf16 %v4202, %v4202
      %v4235 = vpack.c.bf16 %v4203, %v4203
      %v4236 = vpack.c.bf16 %v4204, %v4204
      %v4237 = vpack.c.bf16 %v4205, %v4205
      %v4238 = vpack.c.bf16 %v4206, %v4206
      %v4239 = vpack.c.bf16 %v4207, %v4207
      %v4240 = vpack.c.bf16 %v4208, %v4208
      %v4241 = vpack.c.bf16 %v4209, %v4209
      %v4242 = vpack.c.bf16 %v4210, %v4210
      %v4243 = vpack.c.bf16 %v4211, %v4211
      %v4244 = vpack.c.bf16 %v4212, %v4212
      %v4245 = vpack.c.bf16 %v4213, %v4213
      %v4246 = vpack.c.bf16 %v4214, %v4214
      %v4247 = vpack.c.bf16 %v4215, %v4215
      %v4248 = vpack.c.bf16 %v4216, %v4216
      %v4249 = vpack.c.bf16 %v4217, %v4217
      %v4250 = vpack.c.bf16 %v4218, %v4218
      %v4251 = vpack.c.bf16 %v4219, %v4219
      %v4252 = vpack.c.bf16 %v4220, %v4220
      %v4253 = vpack.c.bf16 %v4221, %v4221
      %v4254 = vpack.c.bf16 %v4222, %v4222
      %v4255 = vpack.c.bf16 %v4223, %v4223
      %v4256 = vpack.c.bf16 %v4224, %v4224
      %v4257 = vpack.c.bf16 %v4225, %v4225
      %v4258 = vpack.c.bf16 %v4226, %v4226
      %v4259 = vpack.c.bf16 %v4227, %v4227
      %v4260 = vpack.c.bf16 %v4228, %v4228
      %v4261 = vpack.c.bf16 %v4229, %v4229
      %v4262 = vpack.c.bf16 %v4230, %v4230
      %v4263 = vpack.c.bf16 %v4231, %v4231
      %v4264 = vpack.c.bf16 %v4232, %v4232
      %4297 = vrot.lane.b32.xlu0 %v4233, 8
      %v4298 = vpop.permute.xlu0 %4297
      %4299 = vrot.lane.b32.xlu0 %v4234, 8
      %v4300 = vpop.permute.xlu0 %4299
      %4301 = vrot.lane.b32.xlu0 %v4235, 8
      %v4302 = vpop.permute.xlu0 %4301
      %4303 = vrot.lane.b32.xlu0 %v4236, 8
      %v4304 = vpop.permute.xlu0 %4303
      %4305 = vrot.lane.b32.xlu0 %v4237, 8
      %v4306 = vpop.permute.xlu0 %4305
      %4307 = vrot.lane.b32.xlu0 %v4238, 8
      %v4308 = vpop.permute.xlu0 %4307
      %4309 = vrot.lane.b32.xlu0 %v4239, 8
      %v4310 = vpop.permute.xlu0 %4309
      %4311 = vrot.lane.b32.xlu0 %v4240, 8
      %v4312 = vpop.permute.xlu0 %4311
      %4313 = vrot.lane.b32.xlu0 %v4241, 8
      %v4314 = vpop.permute.xlu0 %4313
      %4315 = vrot.lane.b32.xlu0 %v4242, 8
      %v4316 = vpop.permute.xlu0 %4315
      %4317 = vrot.lane.b32.xlu0 %v4243, 8
      %v4318 = vpop.permute.xlu0 %4317
      %4319 = vrot.lane.b32.xlu0 %v4244, 8
      %v4320 = vpop.permute.xlu0 %4319
      %4321 = vrot.lane.b32.xlu0 %v4245, 8
      %v4322 = vpop.permute.xlu0 %4321
      %4323 = vrot.lane.b32.xlu0 %v4246, 8
      %v4324 = vpop.permute.xlu0 %4323
      %4325 = vrot.lane.b32.xlu0 %v4247, 8
      %v4326 = vpop.permute.xlu0 %4325
      %4327 = vrot.lane.b32.xlu0 %v4248, 8
      %v4328 = vpop.permute.xlu0 %4327
      %4329 = vrot.lane.b32.xlu0 %v4249, 8
      %v4330 = vpop.permute.xlu0 %4329
      %4331 = vrot.lane.b32.xlu0 %v4250, 8
      %v4332 = vpop.permute.xlu0 %4331
      %4333 = vrot.lane.b32.xlu0 %v4251, 8
      %v4334 = vpop.permute.xlu0 %4333
      %4335 = vrot.lane.b32.xlu0 %v4252, 8
      %v4336 = vpop.permute.xlu0 %4335
      %4337 = vrot.lane.b32.xlu0 %v4253, 8
      %v4338 = vpop.permute.xlu0 %4337
      %4339 = vrot.lane.b32.xlu0 %v4254, 8
      %v4340 = vpop.permute.xlu0 %4339
      %4341 = vrot.lane.b32.xlu0 %v4255, 8
      %v4342 = vpop.permute.xlu0 %4341
      %4343 = vrot.lane.b32.xlu0 %v4256, 8
      %v4344 = vpop.permute.xlu0 %4343
      %4345 = vrot.lane.b32.xlu0 %v4257, 8
      %v4346 = vpop.permute.xlu0 %4345
      %4347 = vrot.lane.b32.xlu0 %v4258, 8
      %v4348 = vpop.permute.xlu0 %4347
      %4349 = vrot.lane.b32.xlu0 %v4259, 8
      %v4350 = vpop.permute.xlu0 %4349
      %4351 = vrot.lane.b32.xlu0 %v4260, 8
      %v4352 = vpop.permute.xlu0 %4351
      %4353 = vrot.lane.b32.xlu0 %v4261, 8
      %v4354 = vpop.permute.xlu0 %4353
      %4355 = vrot.lane.b32.xlu0 %v4262, 8
      %v4356 = vpop.permute.xlu0 %4355
      %4357 = vrot.lane.b32.xlu0 %v4263, 8
      %v4358 = vpop.permute.xlu0 %4357
      %4359 = vrot.lane.b32.xlu0 %v4264, 8
      %v4360 = vpop.permute.xlu0 %4359
      %vm4393 = vcmask 126016
      %4394 = vst.msk [vmem:[#allocation7] sm:$0xf] %vm4393, %v4298
      %4395 = vst.msk [vmem:[#allocation7 + $0x4] sm:$0xf] %vm4393, %v4300
      %4396 = vst.msk [vmem:[#allocation7 + $0x8] sm:$0xf] %vm4393, %v4302
      %4397 = vst.msk [vmem:[#allocation7 + $0xc] sm:$0xf] %vm4393, %v4304
      %4398 = vst.msk [vmem:[#allocation7 + $0x10] sm:$0xf] %vm4393, %v4306
      %4399 = vst.msk [vmem:[#allocation7 + $0x14] sm:$0xf] %vm4393, %v4308
      %4400 = vst.msk [vmem:[#allocation7 + $0x18] sm:$0xf] %vm4393, %v4310
      %4401 = vst.msk [vmem:[#allocation7 + $0x1c] sm:$0xf] %vm4393, %v4312
      %4402 = vst.msk [vmem:[#allocation7 + $0x20] sm:$0xf] %vm4393, %v4314
      %4403 = vst.msk [vmem:[#allocation7 + $0x24] sm:$0xf] %vm4393, %v4316
      %4404 = vst.msk [vmem:[#allocation7 + $0x28] sm:$0xf] %vm4393, %v4318
      %4405 = vst.msk [vmem:[#allocation7 + $0x2c] sm:$0xf] %vm4393, %v4320
      %4406 = vst.msk [vmem:[#allocation7 + $0x30] sm:$0xf] %vm4393, %v4322
      %4407 = vst.msk [vmem:[#allocation7 + $0x34] sm:$0xf] %vm4393, %v4324
      %4408 = vst.msk [vmem:[#allocation7 + $0x38] sm:$0xf] %vm4393, %v4326
      %4409 = vst.msk [vmem:[#allocation7 + $0x3c] sm:$0xf] %vm4393, %v4328
      %4410 = vst.msk [vmem:[#allocation7 + $0x40] sm:$0xf] %vm4393, %v4330
      %4411 = vst.msk [vmem:[#allocation7 + $0x44] sm:$0xf] %vm4393, %v4332
      %4412 = vst.msk [vmem:[#allocation7 + $0x48] sm:$0xf] %vm4393, %v4334
      %4413 = vst.msk [vmem:[#allocation7 + $0x4c] sm:$0xf] %vm4393, %v4336
      %4414 = vst.msk [vmem:[#allocation7 + $0x50] sm:$0xf] %vm4393, %v4338
      %4415 = vst.msk [vmem:[#allocation7 + $0x54] sm:$0xf] %vm4393, %v4340
      %4416 = vst.msk [vmem:[#allocation7 + $0x58] sm:$0xf] %vm4393, %v4342
      %4417 = vst.msk [vmem:[#allocation7 + $0x5c] sm:$0xf] %vm4393, %v4344
      %4418 = vst.msk [vmem:[#allocation7 + $0x60] sm:$0xf] %vm4393, %v4346
      %4419 = vst.msk [vmem:[#allocation7 + $0x64] sm:$0xf] %vm4393, %v4348
      %4420 = vst.msk [vmem:[#allocation7 + $0x68] sm:$0xf] %vm4393, %v4350
      %4421 = vst.msk [vmem:[#allocation7 + $0x6c] sm:$0xf] %vm4393, %v4352
      %4422 = vst.msk [vmem:[#allocation7 + $0x70] sm:$0xf] %vm4393, %v4354
      %4423 = vst.msk [vmem:[#allocation7 + $0x74] sm:$0xf] %vm4393, %v4356
      %4424 = vst.msk [vmem:[#allocation7 + $0x78] sm:$0xf] %vm4393, %v4358
      %4425 = vst.msk [vmem:[#allocation7 + $0x7c] sm:$0xf] %vm4393, %v4360
      %s4426 = scalar_lea.vmem [#allocation6], 32
      %v4427 = vld [vmem:[%s4426] sm:$0xff]
      %v4428 = vld [vmem:[%s4426 + $0x8] sm:$0xff]
      %v4429 = vld [vmem:[%s4426 + $0x10] sm:$0xff]
      %v4430 = vld [vmem:[%s4426 + $0x18] sm:$0xff]
      %v4431 = vld [vmem:[%s4426 + $0x20] sm:$0xff]
      %v4432 = vld [vmem:[%s4426 + $0x28] sm:$0xff]
      %v4433 = vld [vmem:[%s4426 + $0x30] sm:$0xff]
      %v4434 = vld [vmem:[%s4426 + $0x38] sm:$0xff]
      %v4435 = vld [vmem:[%s4426 + $0x40] sm:$0xff]
      %v4436 = vld [vmem:[%s4426 + $0x48] sm:$0xff]
      %v4437 = vld [vmem:[%s4426 + $0x50] sm:$0xff]
      %v4438 = vld [vmem:[%s4426 + $0x58] sm:$0xff]
      %v4439 = vld [vmem:[%s4426 + $0x60] sm:$0xff]
      %v4440 = vld [vmem:[%s4426 + $0x68] sm:$0xff]
      %v4441 = vld [vmem:[%s4426 + $0x70] sm:$0xff]
      %v4442 = vld [vmem:[%s4426 + $0x78] sm:$0xff]
      %v4443 = vld [vmem:[%s4426 + $0x80] sm:$0xff]
      %v4444 = vld [vmem:[%s4426 + $0x88] sm:$0xff]
      %v4445 = vld [vmem:[%s4426 + $0x90] sm:$0xff]
      %v4446 = vld [vmem:[%s4426 + $0x98] sm:$0xff]
      %v4447 = vld [vmem:[%s4426 + $0xa0] sm:$0xff]
      %v4448 = vld [vmem:[%s4426 + $0xa8] sm:$0xff]
      %v4449 = vld [vmem:[%s4426 + $0xb0] sm:$0xff]
      %v4450 = vld [vmem:[%s4426 + $0xb8] sm:$0xff]
      %v4451 = vld [vmem:[%s4426 + $0xc0] sm:$0xff]
      %v4452 = vld [vmem:[%s4426 + $0xc8] sm:$0xff]
      %v4453 = vld [vmem:[%s4426 + $0xd0] sm:$0xff]
      %v4454 = vld [vmem:[%s4426 + $0xd8] sm:$0xff]
      %v4455 = vld [vmem:[%s4426 + $0xe0] sm:$0xff]
      %v4456 = vld [vmem:[%s4426 + $0xe8] sm:$0xff]
      %v4457 = vld [vmem:[%s4426 + $0xf0] sm:$0xff]
      %v4458 = vld [vmem:[%s4426 + $0xf8] sm:$0xff]
      %v4459 = vpack.c.bf16 %v4427, %v4427
      %v4460 = vpack.c.bf16 %v4428, %v4428
      %v4461 = vpack.c.bf16 %v4429, %v4429
      %v4462 = vpack.c.bf16 %v4430, %v4430
      %v4463 = vpack.c.bf16 %v4431, %v4431
      %v4464 = vpack.c.bf16 %v4432, %v4432
      %v4465 = vpack.c.bf16 %v4433, %v4433
      %v4466 = vpack.c.bf16 %v4434, %v4434
      %v4467 = vpack.c.bf16 %v4435, %v4435
      %v4468 = vpack.c.bf16 %v4436, %v4436
      %v4469 = vpack.c.bf16 %v4437, %v4437
      %v4470 = vpack.c.bf16 %v4438, %v4438
      %v4471 = vpack.c.bf16 %v4439, %v4439
      %v4472 = vpack.c.bf16 %v4440, %v4440
      %v4473 = vpack.c.bf16 %v4441, %v4441
      %v4474 = vpack.c.bf16 %v4442, %v4442
      %v4475 = vpack.c.bf16 %v4443, %v4443
      %v4476 = vpack.c.bf16 %v4444, %v4444
      %v4477 = vpack.c.bf16 %v4445, %v4445
      %v4478 = vpack.c.bf16 %v4446, %v4446
      %v4479 = vpack.c.bf16 %v4447, %v4447
      %v4480 = vpack.c.bf16 %v4448, %v4448
      %v4481 = vpack.c.bf16 %v4449, %v4449
      %v4482 = vpack.c.bf16 %v4450, %v4450
      %v4483 = vpack.c.bf16 %v4451, %v4451
      %v4484 = vpack.c.bf16 %v4452, %v4452
      %v4485 = vpack.c.bf16 %v4453, %v4453
      %v4486 = vpack.c.bf16 %v4454, %v4454
      %v4487 = vpack.c.bf16 %v4455, %v4455
      %v4488 = vpack.c.bf16 %v4456, %v4456
      %v4489 = vpack.c.bf16 %v4457, %v4457
      %v4490 = vpack.c.bf16 %v4458, %v4458
      %4523 = vrot.lane.b32.xlu0 %v4459, 16
      %v4524 = vpop.permute.xlu0 %4523
      %4525 = vrot.lane.b32.xlu0 %v4460, 16
      %v4526 = vpop.permute.xlu0 %4525
      %4527 = vrot.lane.b32.xlu0 %v4461, 16
      %v4528 = vpop.permute.xlu0 %4527
      %4529 = vrot.lane.b32.xlu0 %v4462, 16
      %v4530 = vpop.permute.xlu0 %4529
      %4531 = vrot.lane.b32.xlu0 %v4463, 16
      %v4532 = vpop.permute.xlu0 %4531
      %4533 = vrot.lane.b32.xlu0 %v4464, 16
      %v4534 = vpop.permute.xlu0 %4533
      %4535 = vrot.lane.b32.xlu0 %v4465, 16
      %v4536 = vpop.permute.xlu0 %4535
      %4537 = vrot.lane.b32.xlu0 %v4466, 16
      %v4538 = vpop.permute.xlu0 %4537
      %4539 = vrot.lane.b32.xlu0 %v4467, 16
      %v4540 = vpop.permute.xlu0 %4539
      %4541 = vrot.lane.b32.xlu0 %v4468, 16
      %v4542 = vpop.permute.xlu0 %4541
      %4543 = vrot.lane.b32.xlu0 %v4469, 16
      %v4544 = vpop.permute.xlu0 %4543
      %4545 = vrot.lane.b32.xlu0 %v4470, 16
      %v4546 = vpop.permute.xlu0 %4545
      %4547 = vrot.lane.b32.xlu0 %v4471, 16
      %v4548 = vpop.permute.xlu0 %4547
      %4549 = vrot.lane.b32.xlu0 %v4472, 16
      %v4550 = vpop.permute.xlu0 %4549
      %4551 = vrot.lane.b32.xlu0 %v4473, 16
      %v4552 = vpop.permute.xlu0 %4551
      %4553 = vrot.lane.b32.xlu0 %v4474, 16
      %v4554 = vpop.permute.xlu0 %4553
      %4555 = vrot.lane.b32.xlu0 %v4475, 16
      %v4556 = vpop.permute.xlu0 %4555
      %4557 = vrot.lane.b32.xlu0 %v4476, 16
      %v4558 = vpop.permute.xlu0 %4557
      %4559 = vrot.lane.b32.xlu0 %v4477, 16
      %v4560 = vpop.permute.xlu0 %4559
      %4561 = vrot.lane.b32.xlu0 %v4478, 16
      %v4562 = vpop.permute.xlu0 %4561
      %4563 = vrot.lane.b32.xlu0 %v4479, 16
      %v4564 = vpop.permute.xlu0 %4563
      %4565 = vrot.lane.b32.xlu0 %v4480, 16
      %v4566 = vpop.permute.xlu0 %4565
      %4567 = vrot.lane.b32.xlu0 %v4481, 16
      %v4568 = vpop.permute.xlu0 %4567
      %4569 = vrot.lane.b32.xlu0 %v4482, 16
      %v4570 = vpop.permute.xlu0 %4569
      %4571 = vrot.lane.b32.xlu0 %v4483, 16
      %v4572 = vpop.permute.xlu0 %4571
      %4573 = vrot.lane.b32.xlu0 %v4484, 16
      %v4574 = vpop.permute.xlu0 %4573
      %4575 = vrot.lane.b32.xlu0 %v4485, 16
      %v4576 = vpop.permute.xlu0 %4575
      %4577 = vrot.lane.b32.xlu0 %v4486, 16
      %v4578 = vpop.permute.xlu0 %4577
      %4579 = vrot.lane.b32.xlu0 %v4487, 16
      %v4580 = vpop.permute.xlu0 %4579
      %4581 = vrot.lane.b32.xlu0 %v4488, 16
      %v4582 = vpop.permute.xlu0 %4581
      %4583 = vrot.lane.b32.xlu0 %v4489, 16
      %v4584 = vpop.permute.xlu0 %4583
      %4585 = vrot.lane.b32.xlu0 %v4490, 16
      %v4586 = vpop.permute.xlu0 %4585
      %vm4619 = vcmask 191616
      %4620 = vst.msk [vmem:[#allocation7] sm:$0xf] %vm4619, %v4524
      %4621 = vst.msk [vmem:[#allocation7 + $0x4] sm:$0xf] %vm4619, %v4526
      %4622 = vst.msk [vmem:[#allocation7 + $0x8] sm:$0xf] %vm4619, %v4528
      %4623 = vst.msk [vmem:[#allocation7 + $0xc] sm:$0xf] %vm4619, %v4530
      %4624 = vst.msk [vmem:[#allocation7 + $0x10] sm:$0xf] %vm4619, %v4532
      %4625 = vst.msk [vmem:[#allocation7 + $0x14] sm:$0xf] %vm4619, %v4534
      %4626 = vst.msk [vmem:[#allocation7 + $0x18] sm:$0xf] %vm4619, %v4536
      %4627 = vst.msk [vmem:[#allocation7 + $0x1c] sm:$0xf] %vm4619, %v4538
      %4628 = vst.msk [vmem:[#allocation7 + $0x20] sm:$0xf] %vm4619, %v4540
      %4629 = vst.msk [vmem:[#allocation7 + $0x24] sm:$0xf] %vm4619, %v4542
      %4630 = vst.msk [vmem:[#allocation7 + $0x28] sm:$0xf] %vm4619, %v4544
      %4631 = vst.msk [vmem:[#allocation7 + $0x2c] sm:$0xf] %vm4619, %v4546
      %4632 = vst.msk [vmem:[#allocation7 + $0x30] sm:$0xf] %vm4619, %v4548
      %4633 = vst.msk [vmem:[#allocation7 + $0x34] sm:$0xf] %vm4619, %v4550
      %4634 = vst.msk [vmem:[#allocation7 + $0x38] sm:$0xf] %vm4619, %v4552
      %4635 = vst.msk [vmem:[#allocation7 + $0x3c] sm:$0xf] %vm4619, %v4554
      %4636 = vst.msk [vmem:[#allocation7 + $0x40] sm:$0xf] %vm4619, %v4556
      %4637 = vst.msk [vmem:[#allocation7 + $0x44] sm:$0xf] %vm4619, %v4558
      %4638 = vst.msk [vmem:[#allocation7 + $0x48] sm:$0xf] %vm4619, %v4560
      %4639 = vst.msk [vmem:[#allocation7 + $0x4c] sm:$0xf] %vm4619, %v4562
      %4640 = vst.msk [vmem:[#allocation7 + $0x50] sm:$0xf] %vm4619, %v4564
      %4641 = vst.msk [vmem:[#allocation7 + $0x54] sm:$0xf] %vm4619, %v4566
      %4642 = vst.msk [vmem:[#allocation7 + $0x58] sm:$0xf] %vm4619, %v4568
      %4643 = vst.msk [vmem:[#allocation7 + $0x5c] sm:$0xf] %vm4619, %v4570
      %4644 = vst.msk [vmem:[#allocation7 + $0x60] sm:$0xf] %vm4619, %v4572
      %4645 = vst.msk [vmem:[#allocation7 + $0x64] sm:$0xf] %vm4619, %v4574
      %4646 = vst.msk [vmem:[#allocation7 + $0x68] sm:$0xf] %vm4619, %v4576
      %4647 = vst.msk [vmem:[#allocation7 + $0x6c] sm:$0xf] %vm4619, %v4578
      %4648 = vst.msk [vmem:[#allocation7 + $0x70] sm:$0xf] %vm4619, %v4580
      %4649 = vst.msk [vmem:[#allocation7 + $0x74] sm:$0xf] %vm4619, %v4582
      %4650 = vst.msk [vmem:[#allocation7 + $0x78] sm:$0xf] %vm4619, %v4584
      %4651 = vst.msk [vmem:[#allocation7 + $0x7c] sm:$0xf] %vm4619, %v4586
      %v4652 = vld [vmem:[#allocation8] sm:$0xff]
      %v4653 = vld [vmem:[#allocation8 + $0x8] sm:$0xff]
      %v4654 = vld [vmem:[#allocation8 + $0x10] sm:$0xff]
      %v4655 = vld [vmem:[#allocation8 + $0x18] sm:$0xff]
      %v4656 = vld [vmem:[#allocation8 + $0x20] sm:$0xff]
      %v4657 = vld [vmem:[#allocation8 + $0x28] sm:$0xff]
      %v4658 = vld [vmem:[#allocation8 + $0x30] sm:$0xff]
      %v4659 = vld [vmem:[#allocation8 + $0x38] sm:$0xff]
      %v4660 = vld [vmem:[#allocation8 + $0x40] sm:$0xff]
      %v4661 = vld [vmem:[#allocation8 + $0x48] sm:$0xff]
      %v4662 = vld [vmem:[#allocation8 + $0x50] sm:$0xff]
      %v4663 = vld [vmem:[#allocation8 + $0x58] sm:$0xff]
      %v4664 = vld [vmem:[#allocation8 + $0x60] sm:$0xff]
      %v4665 = vld [vmem:[#allocation8 + $0x68] sm:$0xff]
      %v4666 = vld [vmem:[#allocation8 + $0x70] sm:$0xff]
      %v4667 = vld [vmem:[#allocation8 + $0x78] sm:$0xff]
      %v4668 = vld [vmem:[#allocation8 + $0x80] sm:$0xff]
      %v4669 = vld [vmem:[#allocation8 + $0x88] sm:$0xff]
      %v4670 = vld [vmem:[#allocation8 + $0x90] sm:$0xff]
      %v4671 = vld [vmem:[#allocation8 + $0x98] sm:$0xff]
      %v4672 = vld [vmem:[#allocation8 + $0xa0] sm:$0xff]
      %v4673 = vld [vmem:[#allocation8 + $0xa8] sm:$0xff]
      %v4674 = vld [vmem:[#allocation8 + $0xb0] sm:$0xff]
      %v4675 = vld [vmem:[#allocation8 + $0xb8] sm:$0xff]
      %v4676 = vld [vmem:[#allocation8 + $0xc0] sm:$0xff]
      %v4677 = vld [vmem:[#allocation8 + $0xc8] sm:$0xff]
      %v4678 = vld [vmem:[#allocation8 + $0xd0] sm:$0xff]
      %v4679 = vld [vmem:[#allocation8 + $0xd8] sm:$0xff]
      %v4680 = vld [vmem:[#allocation8 + $0xe0] sm:$0xff]
      %v4681 = vld [vmem:[#allocation8 + $0xe8] sm:$0xff]
      %v4682 = vld [vmem:[#allocation8 + $0xf0] sm:$0xff]
      %v4683 = vld [vmem:[#allocation8 + $0xf8] sm:$0xff]
      %v4684 = vld [vmem:[#allocation7] sm:$0xf]
      %v4685 = vld [vmem:[#allocation7 + $0x4] sm:$0xf]
      %v4686 = vld [vmem:[#allocation7 + $0x8] sm:$0xf]
      %v4687 = vld [vmem:[#allocation7 + $0xc] sm:$0xf]
      %v4688 = vld [vmem:[#allocation7 + $0x10] sm:$0xf]
      %v4689 = vld [vmem:[#allocation7 + $0x14] sm:$0xf]
      %v4690 = vld [vmem:[#allocation7 + $0x18] sm:$0xf]
      %v4691 = vld [vmem:[#allocation7 + $0x1c] sm:$0xf]
      %v4692 = vld [vmem:[#allocation7 + $0x20] sm:$0xf]
      %v4693 = vld [vmem:[#allocation7 + $0x24] sm:$0xf]
      %v4694 = vld [vmem:[#allocation7 + $0x28] sm:$0xf]
      %v4695 = vld [vmem:[#allocation7 + $0x2c] sm:$0xf]
      %v4696 = vld [vmem:[#allocation7 + $0x30] sm:$0xf]
      %v4697 = vld [vmem:[#allocation7 + $0x34] sm:$0xf]
      %v4698 = vld [vmem:[#allocation7 + $0x38] sm:$0xf]
      %v4699 = vld [vmem:[#allocation7 + $0x3c] sm:$0xf]
      %v4700 = vld [vmem:[#allocation7 + $0x40] sm:$0xf]
      %v4701 = vld [vmem:[#allocation7 + $0x44] sm:$0xf]
      %v4702 = vld [vmem:[#allocation7 + $0x48] sm:$0xf]
      %v4703 = vld [vmem:[#allocation7 + $0x4c] sm:$0xf]
      %v4704 = vld [vmem:[#allocation7 + $0x50] sm:$0xf]
      %v4705 = vld [vmem:[#allocation7 + $0x54] sm:$0xf]
      %v4706 = vld [vmem:[#allocation7 + $0x58] sm:$0xf]
      %v4707 = vld [vmem:[#allocation7 + $0x5c] sm:$0xf]
      %v4708 = vld [vmem:[#allocation7 + $0x60] sm:$0xf]
      %v4709 = vld [vmem:[#allocation7 + $0x64] sm:$0xf]
      %v4710 = vld [vmem:[#allocation7 + $0x68] sm:$0xf]
      %v4711 = vld [vmem:[#allocation7 + $0x6c] sm:$0xf]
      %v4712 = vld [vmem:[#allocation7 + $0x70] sm:$0xf]
      %v4713 = vld [vmem:[#allocation7 + $0x74] sm:$0xf]
      %v4714 = vld [vmem:[#allocation7 + $0x78] sm:$0xf]
      %v4715 = vld [vmem:[#allocation7 + $0x7c] sm:$0xf]
      %v4716 = vld [vmem:[%s3] sm:$0xf]
      %v4717 = vld [vmem:[%s3 + $0x4] sm:$0xf]
      %v4718 = vld [vmem:[%s3 + $0x8] sm:$0xf]
      %v4751 = vunpack.c.l.b16 %v4684
      %v4752 = vunpack.c.l.b16 %v4685
      %v4753 = vunpack.c.l.b16 %v4686
      %v4754 = vunpack.c.l.b16 %v4687
      %v4755 = vunpack.c.l.b16 %v4688
      %v4756 = vunpack.c.l.b16 %v4689
      %v4757 = vunpack.c.l.b16 %v4690
      %v4758 = vunpack.c.l.b16 %v4691
      %v4759 = vunpack.c.l.b16 %v4692
      %v4760 = vunpack.c.l.b16 %v4693
      %v4761 = vunpack.c.l.b16 %v4694
      %v4762 = vunpack.c.l.b16 %v4695
      %v4763 = vunpack.c.l.b16 %v4696
      %v4764 = vunpack.c.l.b16 %v4697
      %v4765 = vunpack.c.l.b16 %v4698
      %v4766 = vunpack.c.l.b16 %v4699
      %v4767 = vunpack.c.l.b16 %v4700
      %v4768 = vunpack.c.l.b16 %v4701
      %v4769 = vunpack.c.l.b16 %v4702
      %v4770 = vunpack.c.l.b16 %v4703
      %v4771 = vunpack.c.l.b16 %v4704
      %v4772 = vunpack.c.l.b16 %v4705
      %v4773 = vunpack.c.l.b16 %v4706
      %v4774 = vunpack.c.l.b16 %v4707
      %v4775 = vunpack.c.l.b16 %v4708
      %v4776 = vunpack.c.l.b16 %v4709
      %v4777 = vunpack.c.l.b16 %v4710
      %v4778 = vunpack.c.l.b16 %v4711
      %v4779 = vunpack.c.l.b16 %v4712
      %v4780 = vunpack.c.l.b16 %v4713
      %v4781 = vunpack.c.l.b16 %v4714
      %v4782 = vunpack.c.l.b16 %v4715
      %v4783 = vpack.c.b16 %v4752, %v4751
      %v4784 = vpack.c.b16 %v4754, %v4753
      %v4785 = vpack.c.b16 %v4756, %v4755
      %v4786 = vpack.c.b16 %v4758, %v4757
      %v4787 = vpack.c.b16 %v4760, %v4759
      %v4788 = vpack.c.b16 %v4762, %v4761
      %v4789 = vpack.c.b16 %v4764, %v4763
      %v4790 = vpack.c.b16 %v4766, %v4765
      %v4791 = vpack.c.b16 %v4768, %v4767
      %v4792 = vpack.c.b16 %v4770, %v4769
      %v4793 = vpack.c.b16 %v4772, %v4771
      %v4794 = vpack.c.b16 %v4774, %v4773
      %v4795 = vpack.c.b16 %v4776, %v4775
      %v4796 = vpack.c.b16 %v4778, %v4777
      %v4797 = vpack.c.b16 %v4780, %v4779
      %v4798 = vpack.c.b16 %v4782, %v4781
      %v4802 = vunpack.c.l.b16 %v4716
      %v4803 = vunpack.c.l.b16 %v4717
      %v4804 = vunpack.c.l.b16 %v4718
      %v4805 = vpack.c.b16 %v4803, %v4802
      %v4806 = vpack.c.b16 %v4804, %v4804
      %vm4808 = vcmask 195584
      %v4810 = vsel %vm4808, %v4783, 0
      %v4813 = vsel %vm4808, %v4784, 0
      %v4816 = vsel %vm4808, %v4785, 0
      %v4819 = vsel %vm4808, %v4786, 0
      %v4822 = vsel %vm4808, %v4787, 0
      %v4825 = vsel %vm4808, %v4788, 0
      %v4828 = vsel %vm4808, %v4789, 0
      %v4831 = vsel %vm4808, %v4790, 0
      %v4834 = vsel %vm4808, %v4791, 0
      %v4837 = vsel %vm4808, %v4792, 0
      %v4840 = vsel %vm4808, %v4793, 0
      %v4843 = vsel %vm4808, %v4794, 0
      %v4846 = vsel %vm4808, %v4795, 0
      %v4849 = vsel %vm4808, %v4796, 0
      %v4852 = vsel %vm4808, %v4797, 0
      %v4855 = vsel %vm4808, %v4798, 0
      %vm4857 = vcmask 1043456
      %v4859 = vsel %vm4857, %v4806, 0
      %4861 = vmatpush.bf16.msra.mxu0 0
      %4862 = vmatpush.bf16.msra.mxu0 0
      %4863 = vmatpush.bf16.msra.mxu0 0
      %4864 = vmatpush.bf16.msra.mxu0 0
      %4865 = vmatpush.bf16.msra.mxu0 0
      %4866 = vmatpush.bf16.msra.mxu0 0
      %4867 = vmatpush.bf16.msra.mxu0 %v4859
      %4868 = vmatpush.bf16.msra.mxu0 %v4805
      %4869 = vmatmul.bf16.gmra.mxu0 %v4810
      %v4870 = vpop.f32.mrf.mxu0
      %v4871 = vadd.f32 0.0, %v4870
      %v4872 = vpop.f32.mrf.mxu0
      %v4873 = vadd.f32 0.0, %v4872
      %4874 = vmatmul.bf16.gmra.mxu0 %v4813
      %v4875 = vpop.f32.mrf.mxu0
      %v4876 = vadd.f32 0.0, %v4875
      %v4877 = vpop.f32.mrf.mxu0
      %v4878 = vadd.f32 0.0, %v4877
      %4879 = vmatmul.bf16.gmra.mxu0 %v4816
      %v4880 = vpop.f32.mrf.mxu0
      %v4881 = vadd.f32 0.0, %v4880
      %v4882 = vpop.f32.mrf.mxu0
      %v4883 = vadd.f32 0.0, %v4882
      %4884 = vmatmul.bf16.gmra.mxu0 %v4819
      %v4885 = vpop.f32.mrf.mxu0
      %v4886 = vadd.f32 0.0, %v4885
      %v4887 = vpop.f32.mrf.mxu0
      %v4888 = vadd.f32 0.0, %v4887
      %4889 = vmatmul.bf16.gmra.mxu0 %v4822
      %v4890 = vpop.f32.mrf.mxu0
      %v4891 = vadd.f32 0.0, %v4890
      %v4892 = vpop.f32.mrf.mxu0
      %v4893 = vadd.f32 0.0, %v4892
      %4894 = vmatmul.bf16.gmra.mxu0 %v4825
      %v4895 = vpop.f32.mrf.mxu0
      %v4896 = vadd.f32 0.0, %v4895
      %v4897 = vpop.f32.mrf.mxu0
      %v4898 = vadd.f32 0.0, %v4897
      %4899 = vmatmul.bf16.gmra.mxu0 %v4828
      %v4900 = vpop.f32.mrf.mxu0
      %v4901 = vadd.f32 0.0, %v4900
      %v4902 = vpop.f32.mrf.mxu0
      %v4903 = vadd.f32 0.0, %v4902
      %4904 = vmatmul.bf16.gmra.mxu0 %v4831
      %v4905 = vpop.f32.mrf.mxu0
      %v4906 = vadd.f32 0.0, %v4905
      %v4907 = vpop.f32.mrf.mxu0
      %v4908 = vadd.f32 0.0, %v4907
      %4909 = vmatmul.bf16.gmra.mxu0 %v4834
      %v4910 = vpop.f32.mrf.mxu0
      %v4911 = vadd.f32 0.0, %v4910
      %v4912 = vpop.f32.mrf.mxu0
      %v4913 = vadd.f32 0.0, %v4912
      %4914 = vmatmul.bf16.gmra.mxu0 %v4837
      %v4915 = vpop.f32.mrf.mxu0
      %v4916 = vadd.f32 0.0, %v4915
      %v4917 = vpop.f32.mrf.mxu0
      %v4918 = vadd.f32 0.0, %v4917
      %4919 = vmatmul.bf16.gmra.mxu0 %v4840
      %v4920 = vpop.f32.mrf.mxu0
      %v4921 = vadd.f32 0.0, %v4920
      %v4922 = vpop.f32.mrf.mxu0
      %v4923 = vadd.f32 0.0, %v4922
      %4924 = vmatmul.bf16.gmra.mxu0 %v4843
      %v4925 = vpop.f32.mrf.mxu0
      %v4926 = vadd.f32 0.0, %v4925
      %v4927 = vpop.f32.mrf.mxu0
      %v4928 = vadd.f32 0.0, %v4927
      %4929 = vmatmul.bf16.gmra.mxu0 %v4846
      %v4930 = vpop.f32.mrf.mxu0
      %v4931 = vadd.f32 0.0, %v4930
      %v4932 = vpop.f32.mrf.mxu0
      %v4933 = vadd.f32 0.0, %v4932
      %4934 = vmatmul.bf16.gmra.mxu0 %v4849
      %v4935 = vpop.f32.mrf.mxu0
      %v4936 = vadd.f32 0.0, %v4935
      %v4937 = vpop.f32.mrf.mxu0
      %v4938 = vadd.f32 0.0, %v4937
      %4939 = vmatmul.bf16.gmra.mxu0 %v4852
      %v4940 = vpop.f32.mrf.mxu0
      %v4941 = vadd.f32 0.0, %v4940
      %v4942 = vpop.f32.mrf.mxu0
      %v4943 = vadd.f32 0.0, %v4942
      %4944 = vmatmul.bf16.gmra.mxu0 %v4855
      %v4945 = vpop.f32.mrf.mxu0
      %v4946 = vadd.f32 0.0, %v4945
      %v4947 = vpop.f32.mrf.mxu0
      %v4948 = vadd.f32 0.0, %v4947
      %4949 = vdwg.mxu0
      %v4950 = vadd.f32 %v4652, %v4871
      %v4951 = vadd.f32 %v4653, %v4873
      %v4952 = vadd.f32 %v4654, %v4876
      %v4953 = vadd.f32 %v4655, %v4878
      %v4954 = vadd.f32 %v4656, %v4881
      %v4955 = vadd.f32 %v4657, %v4883
      %v4956 = vadd.f32 %v4658, %v4886
      %v4957 = vadd.f32 %v4659, %v4888
      %v4958 = vadd.f32 %v4660, %v4891
      %v4959 = vadd.f32 %v4661, %v4893
      %v4960 = vadd.f32 %v4662, %v4896
      %v4961 = vadd.f32 %v4663, %v4898
      %v4962 = vadd.f32 %v4664, %v4901
      %v4963 = vadd.f32 %v4665, %v4903
      %v4964 = vadd.f32 %v4666, %v4906
      %v4965 = vadd.f32 %v4667, %v4908
      %v4966 = vadd.f32 %v4668, %v4911
      %v4967 = vadd.f32 %v4669, %v4913
      %v4968 = vadd.f32 %v4670, %v4916
      %v4969 = vadd.f32 %v4671, %v4918
      %v4970 = vadd.f32 %v4672, %v4921
      %v4971 = vadd.f32 %v4673, %v4923
      %v4972 = vadd.f32 %v4674, %v4926
      %v4973 = vadd.f32 %v4675, %v4928
      %v4974 = vadd.f32 %v4676, %v4931
      %v4975 = vadd.f32 %v4677, %v4933
      %v4976 = vadd.f32 %v4678, %v4936
      %v4977 = vadd.f32 %v4679, %v4938
      %v4978 = vadd.f32 %v4680, %v4941
      %v4979 = vadd.f32 %v4681, %v4943
      %v4980 = vadd.f32 %v4682, %v4946
      %v4981 = vadd.f32 %v4683, %v4948
      %4982 = vst.msk [vmem:[#allocation8] sm:$0xff] %vm340, %v4950
      %4983 = vst.msk [vmem:[#allocation8 + $0x8] sm:$0xff] %vm340, %v4951
      %4984 = vst.msk [vmem:[#allocation8 + $0x10] sm:$0xff] %vm340, %v4952
      %4985 = vst.msk [vmem:[#allocation8 + $0x18] sm:$0xff] %vm340, %v4953
      %4986 = vst.msk [vmem:[#allocation8 + $0x20] sm:$0xff] %vm340, %v4954
      %4987 = vst.msk [vmem:[#allocation8 + $0x28] sm:$0xff] %vm340, %v4955
      %4988 = vst.msk [vmem:[#allocation8 + $0x30] sm:$0xff] %vm340, %v4956
      %4989 = vst.msk [vmem:[#allocation8 + $0x38] sm:$0xff] %vm340, %v4957
      %4990 = vst.msk [vmem:[#allocation8 + $0x40] sm:$0xff] %vm340, %v4958
      %4991 = vst.msk [vmem:[#allocation8 + $0x48] sm:$0xff] %vm340, %v4959
      %4992 = vst.msk [vmem:[#allocation8 + $0x50] sm:$0xff] %vm340, %v4960
      %4993 = vst.msk [vmem:[#allocation8 + $0x58] sm:$0xff] %vm340, %v4961
      %4994 = vst.msk [vmem:[#allocation8 + $0x60] sm:$0xff] %vm340, %v4962
      %4995 = vst.msk [vmem:[#allocation8 + $0x68] sm:$0xff] %vm340, %v4963
      %4996 = vst.msk [vmem:[#allocation8 + $0x70] sm:$0xff] %vm340, %v4964
      %4997 = vst.msk [vmem:[#allocation8 + $0x78] sm:$0xff] %vm340, %v4965
      %4998 = vst.msk [vmem:[#allocation8 + $0x80] sm:$0xff] %vm340, %v4966
      %4999 = vst.msk [vmem:[#allocation8 + $0x88] sm:$0xff] %vm340, %v4967
      %5000 = vst.msk [vmem:[#allocation8 + $0x90] sm:$0xff] %vm340, %v4968
      %5001 = vst.msk [vmem:[#allocation8 + $0x98] sm:$0xff] %vm340, %v4969
      %5002 = vst.msk [vmem:[#allocation8 + $0xa0] sm:$0xff] %vm340, %v4970
      %5003 = vst.msk [vmem:[#allocation8 + $0xa8] sm:$0xff] %vm340, %v4971
      %5004 = vst.msk [vmem:[#allocation8 + $0xb0] sm:$0xff] %vm340, %v4972
      %5005 = vst.msk [vmem:[#allocation8 + $0xb8] sm:$0xff] %vm340, %v4973
      %5006 = vst.msk [vmem:[#allocation8 + $0xc0] sm:$0xff] %vm340, %v4974
      %5007 = vst.msk [vmem:[#allocation8 + $0xc8] sm:$0xff] %vm340, %v4975
      %5008 = vst.msk [vmem:[#allocation8 + $0xd0] sm:$0xff] %vm340, %v4976
      %5009 = vst.msk [vmem:[#allocation8 + $0xd8] sm:$0xff] %vm340, %v4977
      %5010 = vst.msk [vmem:[#allocation8 + $0xe0] sm:$0xff] %vm340, %v4978
      %5011 = vst.msk [vmem:[#allocation8 + $0xe8] sm:$0xff] %vm340, %v4979
      %5012 = vst.msk [vmem:[#allocation8 + $0xf0] sm:$0xff] %vm340, %v4980
      %5013 = vst.msk [vmem:[#allocation8 + $0xf8] sm:$0xff] %vm340, %v4981
      %v5014 = vld [vmem:[#allocation5 + $0x1] sm:$0xff]
      %v5015 = vld [vmem:[#allocation5 + $0x9] sm:$0xff]
      %v5016 = vld [vmem:[#allocation5 + $0x19] sm:$0xff]
      %v5017 = vld [vmem:[#allocation5 + $0x21] sm:$0xff]
      %v5018 = vld [vmem:[#allocation5 + $0x31] sm:$0xff]
      %v5019 = vld [vmem:[#allocation5 + $0x39] sm:$0xff]
      %v5020 = vld [vmem:[#allocation5 + $0x49] sm:$0xff]
      %v5021 = vld [vmem:[#allocation5 + $0x51] sm:$0xff]
      %v5022 = vld [vmem:[#allocation5 + $0x61] sm:$0xff]
      %v5023 = vld [vmem:[#allocation5 + $0x69] sm:$0xff]
      %v5024 = vld [vmem:[#allocation5 + $0x79] sm:$0xff]
      %v5025 = vld [vmem:[#allocation5 + $0x81] sm:$0xff]
      %v5026 = vld [vmem:[#allocation5 + $0x91] sm:$0xff]
      %v5027 = vld [vmem:[#allocation5 + $0x99] sm:$0xff]
      %v5028 = vld [vmem:[#allocation5 + $0xa9] sm:$0xff]
      %v5029 = vld [vmem:[#allocation5 + $0xb1] sm:$0xff]
      %v5030 = vld [vmem:[#allocation5 + $0xc1] sm:$0xff]
      %v5031 = vld [vmem:[#allocation5 + $0xc9] sm:$0xff]
      %v5032 = vld [vmem:[#allocation5 + $0xd9] sm:$0xff]
      %v5033 = vld [vmem:[#allocation5 + $0xe1] sm:$0xff]
      %v5034 = vld [vmem:[#allocation5 + $0xf1] sm:$0xff]
      %v5035 = vld [vmem:[#allocation5 + $0xf9] sm:$0xff]
      %v5036 = vld [vmem:[#allocation5 + $0x109] sm:$0xff]
      %v5037 = vld [vmem:[#allocation5 + $0x111] sm:$0xff]
      %v5038 = vld [vmem:[#allocation5 + $0x121] sm:$0xff]
      %v5039 = vld [vmem:[#allocation5 + $0x129] sm:$0xff]
      %v5040 = vld [vmem:[#allocation5 + $0x139] sm:$0xff]
      %v5041 = vld [vmem:[#allocation5 + $0x141] sm:$0xff]
      %v5042 = vld [vmem:[#allocation5 + $0x151] sm:$0xff]
      %v5043 = vld [vmem:[#allocation5 + $0x159] sm:$0xff]
      %v5044 = vld [vmem:[#allocation5 + $0x169] sm:$0xff]
      %v5045 = vld [vmem:[#allocation5 + $0x171] sm:$0xff]
      %v5046 = vld [vmem:[#allocation5 + $0x181] sm:$0xff]
      %v5047 = vld [vmem:[#allocation5 + $0x189] sm:$0xff]
      %v5048 = vld [vmem:[#allocation5 + $0x199] sm:$0xff]
      %v5049 = vld [vmem:[#allocation5 + $0x1a1] sm:$0xff]
      %5050 = vst.msk [vmem:[#allocation6] sm:$0xff] %vm340, %v5014
      %5051 = vst.msk [vmem:[#allocation6 + $0x8] sm:$0xff] %vm340, %v5015
      %5052 = vst.msk [vmem:[#allocation6 + $0x10] sm:$0xff] %vm340, %v5016
      %5053 = vst.msk [vmem:[#allocation6 + $0x18] sm:$0xff] %vm340, %v5017
      %5054 = vst.msk [vmem:[#allocation6 + $0x20] sm:$0xff] %vm340, %v5018
      %5055 = vst.msk [vmem:[#allocation6 + $0x28] sm:$0xff] %vm340, %v5019
      %5056 = vst.msk [vmem:[#allocation6 + $0x30] sm:$0xff] %vm340, %v5020
      %5057 = vst.msk [vmem:[#allocation6 + $0x38] sm:$0xff] %vm340, %v5021
      %5058 = vst.msk [vmem:[#allocation6 + $0x40] sm:$0xff] %vm340, %v5022
      %5059 = vst.msk [vmem:[#allocation6 + $0x48] sm:$0xff] %vm340, %v5023
      %5060 = vst.msk [vmem:[#allocation6 + $0x50] sm:$0xff] %vm340, %v5024
      %5061 = vst.msk [vmem:[#allocation6 + $0x58] sm:$0xff] %vm340, %v5025
      %5062 = vst.msk [vmem:[#allocation6 + $0x60] sm:$0xff] %vm340, %v5026
      %5063 = vst.msk [vmem:[#allocation6 + $0x68] sm:$0xff] %vm340, %v5027
      %5064 = vst.msk [vmem:[#allocation6 + $0x70] sm:$0xff] %vm340, %v5028
      %5065 = vst.msk [vmem:[#allocation6 + $0x78] sm:$0xff] %vm340, %v5029
      %5066 = vst.msk [vmem:[#allocation6 + $0x80] sm:$0xff] %vm340, %v5030
      %5067 = vst.msk [vmem:[#allocation6 + $0x88] sm:$0xff] %vm340, %v5031
      %5068 = vst.msk [vmem:[#allocation6 + $0x90] sm:$0xff] %vm340, %v5032
      %5069 = vst.msk [vmem:[#allocation6 + $0x98] sm:$0xff] %vm340, %v5033
      %5070 = vst.msk [vmem:[#allocation6 + $0xa0] sm:$0xff] %vm340, %v5034
      %5071 = vst.msk [vmem:[#allocation6 + $0xa8] sm:$0xff] %vm340, %v5035
      %5072 = vst.msk [vmem:[#allocation6 + $0xb0] sm:$0xff] %vm340, %v5036
      %5073 = vst.msk [vmem:[#allocation6 + $0xb8] sm:$0xff] %vm340, %v5037
      %5074 = vst.msk [vmem:[#allocation6 + $0xc0] sm:$0xff] %vm340, %v5038
      %5075 = vst.msk [vmem:[#allocation6 + $0xc8] sm:$0xff] %vm340, %v5039
      %5076 = vst.msk [vmem:[#allocation6 + $0xd0] sm:$0xff] %vm340, %v5040
      %5077 = vst.msk [vmem:[#allocation6 + $0xd8] sm:$0xff] %vm340, %v5041
      %5078 = vst.msk [vmem:[#allocation6 + $0xe0] sm:$0xff] %vm340, %v5042
      %5079 = vst.msk [vmem:[#allocation6 + $0xe8] sm:$0xff] %vm340, %v5043
      %5080 = vst.msk [vmem:[#allocation6 + $0xf0] sm:$0xff] %vm340, %v5044
      %5081 = vst.msk [vmem:[#allocation6 + $0xf8] sm:$0xff] %vm340, %v5045
      %5082 = vst.msk [vmem:[#allocation6 + $0x100] sm:$0xff] %vm340, %v5046
      %5083 = vst.msk [vmem:[#allocation6 + $0x108] sm:$0xff] %vm340, %v5047
      %5084 = vst.msk [vmem:[#allocation6 + $0x110] sm:$0xff] %vm340, %v5048
      %5085 = vst.msk [vmem:[#allocation6 + $0x118] sm:$0xff] %vm340, %v5049
      %v5086 = vld [vmem:[#allocation6] sm:$0xff]
      %v5087 = vld [vmem:[#allocation6 + $0x8] sm:$0xff]
      %v5088 = vld [vmem:[#allocation6 + $0x10] sm:$0xff]
      %v5089 = vld [vmem:[#allocation6 + $0x18] sm:$0xff]
      %v5090 = vld [vmem:[#allocation6 + $0x20] sm:$0xff]
      %v5091 = vld [vmem:[#allocation6 + $0x28] sm:$0xff]
      %v5092 = vld [vmem:[#allocation6 + $0x30] sm:$0xff]
      %v5093 = vld [vmem:[#allocation6 + $0x38] sm:$0xff]
      %v5094 = vld [vmem:[#allocation6 + $0x40] sm:$0xff]
      %v5095 = vld [vmem:[#allocation6 + $0x48] sm:$0xff]
      %v5096 = vld [vmem:[#allocation6 + $0x50] sm:$0xff]
      %v5097 = vld [vmem:[#allocation6 + $0x58] sm:$0xff]
      %v5098 = vld [vmem:[#allocation6 + $0x60] sm:$0xff]
      %v5099 = vld [vmem:[#allocation6 + $0x68] sm:$0xff]
      %v5100 = vld [vmem:[#allocation6 + $0x70] sm:$0xff]
      %v5101 = vld [vmem:[#allocation6 + $0x78] sm:$0xff]
      %v5102 = vld [vmem:[#allocation6 + $0x80] sm:$0xff]
      %v5103 = vld [vmem:[#allocation6 + $0x88] sm:$0xff]
      %v5104 = vld [vmem:[#allocation6 + $0x90] sm:$0xff]
      %v5105 = vld [vmem:[#allocation6 + $0x98] sm:$0xff]
      %v5106 = vld [vmem:[#allocation6 + $0xa0] sm:$0xff]
      %v5107 = vld [vmem:[#allocation6 + $0xa8] sm:$0xff]
      %v5108 = vld [vmem:[#allocation6 + $0xb0] sm:$0xff]
      %v5109 = vld [vmem:[#allocation6 + $0xb8] sm:$0xff]
      %v5110 = vld [vmem:[#allocation6 + $0xc0] sm:$0xff]
      %v5111 = vld [vmem:[#allocation6 + $0xc8] sm:$0xff]
      %v5112 = vld [vmem:[#allocation6 + $0xd0] sm:$0xff]
      %v5113 = vld [vmem:[#allocation6 + $0xd8] sm:$0xff]
      %v5114 = vld [vmem:[#allocation6 + $0xe0] sm:$0xff]
      %v5115 = vld [vmem:[#allocation6 + $0xe8] sm:$0xff]
      %v5116 = vld [vmem:[#allocation6 + $0xf0] sm:$0xff]
      %v5117 = vld [vmem:[#allocation6 + $0xf8] sm:$0xff]
      %v5118 = vpack.c.bf16 %v5086, %v5086
      %v5119 = vpack.c.bf16 %v5087, %v5087
      %v5120 = vpack.c.bf16 %v5088, %v5088
      %v5121 = vpack.c.bf16 %v5089, %v5089
      %v5122 = vpack.c.bf16 %v5090, %v5090
      %v5123 = vpack.c.bf16 %v5091, %v5091
      %v5124 = vpack.c.bf16 %v5092, %v5092
      %v5125 = vpack.c.bf16 %v5093, %v5093
      %v5126 = vpack.c.bf16 %v5094, %v5094
      %v5127 = vpack.c.bf16 %v5095, %v5095
      %v5128 = vpack.c.bf16 %v5096, %v5096
      %v5129 = vpack.c.bf16 %v5097, %v5097
      %v5130 = vpack.c.bf16 %v5098, %v5098
      %v5131 = vpack.c.bf16 %v5099, %v5099
      %v5132 = vpack.c.bf16 %v5100, %v5100
      %v5133 = vpack.c.bf16 %v5101, %v5101
      %v5134 = vpack.c.bf16 %v5102, %v5102
      %v5135 = vpack.c.bf16 %v5103, %v5103
      %v5136 = vpack.c.bf16 %v5104, %v5104
      %v5137 = vpack.c.bf16 %v5105, %v5105
      %v5138 = vpack.c.bf16 %v5106, %v5106
      %v5139 = vpack.c.bf16 %v5107, %v5107
      %v5140 = vpack.c.bf16 %v5108, %v5108
      %v5141 = vpack.c.bf16 %v5109, %v5109
      %v5142 = vpack.c.bf16 %v5110, %v5110
      %v5143 = vpack.c.bf16 %v5111, %v5111
      %v5144 = vpack.c.bf16 %v5112, %v5112
      %v5145 = vpack.c.bf16 %v5113, %v5113
      %v5146 = vpack.c.bf16 %v5114, %v5114
      %v5147 = vpack.c.bf16 %v5115, %v5115
      %v5148 = vpack.c.bf16 %v5116, %v5116
      %v5149 = vpack.c.bf16 %v5117, %v5117
      %5150 = vst.msk [vmem:[#allocation7] sm:$0xf] %vm4167, %v5118
      %5151 = vst.msk [vmem:[#allocation7 + $0x4] sm:$0xf] %vm4167, %v5119
      %5152 = vst.msk [vmem:[#allocation7 + $0x8] sm:$0xf] %vm4167, %v5120
      %5153 = vst.msk [vmem:[#allocation7 + $0xc] sm:$0xf] %vm4167, %v5121
      %5154 = vst.msk [vmem:[#allocation7 + $0x10] sm:$0xf] %vm4167, %v5122
      %5155 = vst.msk [vmem:[#allocation7 + $0x14] sm:$0xf] %vm4167, %v5123
      %5156 = vst.msk [vmem:[#allocation7 + $0x18] sm:$0xf] %vm4167, %v5124
      %5157 = vst.msk [vmem:[#allocation7 + $0x1c] sm:$0xf] %vm4167, %v5125
      %5158 = vst.msk [vmem:[#allocation7 + $0x20] sm:$0xf] %vm4167, %v5126
      %5159 = vst.msk [vmem:[#allocation7 + $0x24] sm:$0xf] %vm4167, %v5127
      %5160 = vst.msk [vmem:[#allocation7 + $0x28] sm:$0xf] %vm4167, %v5128
      %5161 = vst.msk [vmem:[#allocation7 + $0x2c] sm:$0xf] %vm4167, %v5129
      %5162 = vst.msk [vmem:[#allocation7 + $0x30] sm:$0xf] %vm4167, %v5130
      %5163 = vst.msk [vmem:[#allocation7 + $0x34] sm:$0xf] %vm4167, %v5131
      %5164 = vst.msk [vmem:[#allocation7 + $0x38] sm:$0xf] %vm4167, %v5132
      %5165 = vst.msk [vmem:[#allocation7 + $0x3c] sm:$0xf] %vm4167, %v5133
      %5166 = vst.msk [vmem:[#allocation7 + $0x40] sm:$0xf] %vm4167, %v5134
      %5167 = vst.msk [vmem:[#allocation7 + $0x44] sm:$0xf] %vm4167, %v5135
      %5168 = vst.msk [vmem:[#allocation7 + $0x48] sm:$0xf] %vm4167, %v5136
      %5169 = vst.msk [vmem:[#allocation7 + $0x4c] sm:$0xf] %vm4167, %v5137
      %5170 = vst.msk [vmem:[#allocation7 + $0x50] sm:$0xf] %vm4167, %v5138
      %5171 = vst.msk [vmem:[#allocation7 + $0x54] sm:$0xf] %vm4167, %v5139
      %5172 = vst.msk [vmem:[#allocation7 + $0x58] sm:$0xf] %vm4167, %v5140
      %5173 = vst.msk [vmem:[#allocation7 + $0x5c] sm:$0xf] %vm4167, %v5141
      %5174 = vst.msk [vmem:[#allocation7 + $0x60] sm:$0xf] %vm4167, %v5142
      %5175 = vst.msk [vmem:[#allocation7 + $0x64] sm:$0xf] %vm4167, %v5143
      %5176 = vst.msk [vmem:[#allocation7 + $0x68] sm:$0xf] %vm4167, %v5144
      %5177 = vst.msk [vmem:[#allocation7 + $0x6c] sm:$0xf] %vm4167, %v5145
      %5178 = vst.msk [vmem:[#allocation7 + $0x70] sm:$0xf] %vm4167, %v5146
      %5179 = vst.msk [vmem:[#allocation7 + $0x74] sm:$0xf] %vm4167, %v5147
      %5180 = vst.msk [vmem:[#allocation7 + $0x78] sm:$0xf] %vm4167, %v5148
      %5181 = vst.msk [vmem:[#allocation7 + $0x7c] sm:$0xf] %vm4167, %v5149
      %v5182 = vld [vmem:[%s4200] sm:$0xff]
      %v5183 = vld [vmem:[%s4200 + $0x8] sm:$0xff]
      %v5184 = vld [vmem:[%s4200 + $0x10] sm:$0xff]
      %v5185 = vld [vmem:[%s4200 + $0x18] sm:$0xff]
      %v5186 = vld [vmem:[%s4200 + $0x20] sm:$0xff]
      %v5187 = vld [vmem:[%s4200 + $0x28] sm:$0xff]
      %v5188 = vld [vmem:[%s4200 + $0x30] sm:$0xff]
      %v5189 = vld [vmem:[%s4200 + $0x38] sm:$0xff]
      %v5190 = vld [vmem:[%s4200 + $0x40] sm:$0xff]
      %v5191 = vld [vmem:[%s4200 + $0x48] sm:$0xff]
      %v5192 = vld [vmem:[%s4200 + $0x50] sm:$0xff]
      %v5193 = vld [vmem:[%s4200 + $0x58] sm:$0xff]
      %v5194 = vld [vmem:[%s4200 + $0x60] sm:$0xff]
      %v5195 = vld [vmem:[%s4200 + $0x68] sm:$0xff]
      %v5196 = vld [vmem:[%s4200 + $0x70] sm:$0xff]
      %v5197 = vld [vmem:[%s4200 + $0x78] sm:$0xff]
      %v5198 = vld [vmem:[%s4200 + $0x80] sm:$0xff]
      %v5199 = vld [vmem:[%s4200 + $0x88] sm:$0xff]
      %v5200 = vld [vmem:[%s4200 + $0x90] sm:$0xff]
      %v5201 = vld [vmem:[%s4200 + $0x98] sm:$0xff]
      %v5202 = vld [vmem:[%s4200 + $0xa0] sm:$0xff]
      %v5203 = vld [vmem:[%s4200 + $0xa8] sm:$0xff]
      %v5204 = vld [vmem:[%s4200 + $0xb0] sm:$0xff]
      %v5205 = vld [vmem:[%s4200 + $0xb8] sm:$0xff]
      %v5206 = vld [vmem:[%s4200 + $0xc0] sm:$0xff]
      %v5207 = vld [vmem:[%s4200 + $0xc8] sm:$0xff]
      %v5208 = vld [vmem:[%s4200 + $0xd0] sm:$0xff]
      %v5209 = vld [vmem:[%s4200 + $0xd8] sm:$0xff]
      %v5210 = vld [vmem:[%s4200 + $0xe0] sm:$0xff]
      %v5211 = vld [vmem:[%s4200 + $0xe8] sm:$0xff]
      %v5212 = vld [vmem:[%s4200 + $0xf0] sm:$0xff]
      %v5213 = vld [vmem:[%s4200 + $0xf8] sm:$0xff]
      %v5214 = vpack.c.bf16 %v5182, %v5182
      %v5215 = vpack.c.bf16 %v5183, %v5183
      %v5216 = vpack.c.bf16 %v5184, %v5184
      %v5217 = vpack.c.bf16 %v5185, %v5185
      %v5218 = vpack.c.bf16 %v5186, %v5186
      %v5219 = vpack.c.bf16 %v5187, %v5187
      %v5220 = vpack.c.bf16 %v5188, %v5188
      %v5221 = vpack.c.bf16 %v5189, %v5189
      %v5222 = vpack.c.bf16 %v5190, %v5190
      %v5223 = vpack.c.bf16 %v5191, %v5191
      %v5224 = vpack.c.bf16 %v5192, %v5192
      %v5225 = vpack.c.bf16 %v5193, %v5193
      %v5226 = vpack.c.bf16 %v5194, %v5194
      %v5227 = vpack.c.bf16 %v5195, %v5195
      %v5228 = vpack.c.bf16 %v5196, %v5196
      %v5229 = vpack.c.bf16 %v5197, %v5197
      %v5230 = vpack.c.bf16 %v5198, %v5198
      %v5231 = vpack.c.bf16 %v5199, %v5199
      %v5232 = vpack.c.bf16 %v5200, %v5200
      %v5233 = vpack.c.bf16 %v5201, %v5201
      %v5234 = vpack.c.bf16 %v5202, %v5202
      %v5235 = vpack.c.bf16 %v5203, %v5203
      %v5236 = vpack.c.bf16 %v5204, %v5204
      %v5237 = vpack.c.bf16 %v5205, %v5205
      %v5238 = vpack.c.bf16 %v5206, %v5206
      %v5239 = vpack.c.bf16 %v5207, %v5207
      %v5240 = vpack.c.bf16 %v5208, %v5208
      %v5241 = vpack.c.bf16 %v5209, %v5209
      %v5242 = vpack.c.bf16 %v5210, %v5210
      %v5243 = vpack.c.bf16 %v5211, %v5211
      %v5244 = vpack.c.bf16 %v5212, %v5212
      %v5245 = vpack.c.bf16 %v5213, %v5213
      %5278 = vrot.lane.b32.xlu0 %v5214, 8
      %v5279 = vpop.permute.xlu0 %5278
      %5280 = vrot.lane.b32.xlu0 %v5215, 8
      %v5281 = vpop.permute.xlu0 %5280
      %5282 = vrot.lane.b32.xlu0 %v5216, 8
      %v5283 = vpop.permute.xlu0 %5282
      %5284 = vrot.lane.b32.xlu0 %v5217, 8
      %v5285 = vpop.permute.xlu0 %5284
      %5286 = vrot.lane.b32.xlu0 %v5218, 8
      %v5287 = vpop.permute.xlu0 %5286
      %5288 = vrot.lane.b32.xlu0 %v5219, 8
      %v5289 = vpop.permute.xlu0 %5288
      %5290 = vrot.lane.b32.xlu0 %v5220, 8
      %v5291 = vpop.permute.xlu0 %5290
      %5292 = vrot.lane.b32.xlu0 %v5221, 8
      %v5293 = vpop.permute.xlu0 %5292
      %5294 = vrot.lane.b32.xlu0 %v5222, 8
      %v5295 = vpop.permute.xlu0 %5294
      %5296 = vrot.lane.b32.xlu0 %v5223, 8
      %v5297 = vpop.permute.xlu0 %5296
      %5298 = vrot.lane.b32.xlu0 %v5224, 8
      %v5299 = vpop.permute.xlu0 %5298
      %5300 = vrot.lane.b32.xlu0 %v5225, 8
      %v5301 = vpop.permute.xlu0 %5300
      %5302 = vrot.lane.b32.xlu0 %v5226, 8
      %v5303 = vpop.permute.xlu0 %5302
      %5304 = vrot.lane.b32.xlu0 %v5227, 8
      %v5305 = vpop.permute.xlu0 %5304
      %5306 = vrot.lane.b32.xlu0 %v5228, 8
      %v5307 = vpop.permute.xlu0 %5306
      %5308 = vrot.lane.b32.xlu0 %v5229, 8
      %v5309 = vpop.permute.xlu0 %5308
      %5310 = vrot.lane.b32.xlu0 %v5230, 8
      %v5311 = vpop.permute.xlu0 %5310
      %5312 = vrot.lane.b32.xlu0 %v5231, 8
      %v5313 = vpop.permute.xlu0 %5312
      %5314 = vrot.lane.b32.xlu0 %v5232, 8
      %v5315 = vpop.permute.xlu0 %5314
      %5316 = vrot.lane.b32.xlu0 %v5233, 8
      %v5317 = vpop.permute.xlu0 %5316
      %5318 = vrot.lane.b32.xlu0 %v5234, 8
      %v5319 = vpop.permute.xlu0 %5318
      %5320 = vrot.lane.b32.xlu0 %v5235, 8
      %v5321 = vpop.permute.xlu0 %5320
      %5322 = vrot.lane.b32.xlu0 %v5236, 8
      %v5323 = vpop.permute.xlu0 %5322
      %5324 = vrot.lane.b32.xlu0 %v5237, 8
      %v5325 = vpop.permute.xlu0 %5324
      %5326 = vrot.lane.b32.xlu0 %v5238, 8
      %v5327 = vpop.permute.xlu0 %5326
      %5328 = vrot.lane.b32.xlu0 %v5239, 8
      %v5329 = vpop.permute.xlu0 %5328
      %5330 = vrot.lane.b32.xlu0 %v5240, 8
      %v5331 = vpop.permute.xlu0 %5330
      %5332 = vrot.lane.b32.xlu0 %v5241, 8
      %v5333 = vpop.permute.xlu0 %5332
      %5334 = vrot.lane.b32.xlu0 %v5242, 8
      %v5335 = vpop.permute.xlu0 %5334
      %5336 = vrot.lane.b32.xlu0 %v5243, 8
      %v5337 = vpop.permute.xlu0 %5336
      %5338 = vrot.lane.b32.xlu0 %v5244, 8
      %v5339 = vpop.permute.xlu0 %5338
      %5340 = vrot.lane.b32.xlu0 %v5245, 8
      %v5341 = vpop.permute.xlu0 %5340
      %5374 = vst.msk [vmem:[#allocation7] sm:$0xf] %vm4393, %v5279
      %5375 = vst.msk [vmem:[#allocation7 + $0x4] sm:$0xf] %vm4393, %v5281
      %5376 = vst.msk [vmem:[#allocation7 + $0x8] sm:$0xf] %vm4393, %v5283
      %5377 = vst.msk [vmem:[#allocation7 + $0xc] sm:$0xf] %vm4393, %v5285
      %5378 = vst.msk [vmem:[#allocation7 + $0x10] sm:$0xf] %vm4393, %v5287
      %5379 = vst.msk [vmem:[#allocation7 + $0x14] sm:$0xf] %vm4393, %v5289
      %5380 = vst.msk [vmem:[#allocation7 + $0x18] sm:$0xf] %vm4393, %v5291
      %5381 = vst.msk [vmem:[#allocation7 + $0x1c] sm:$0xf] %vm4393, %v5293
      %5382 = vst.msk [vmem:[#allocation7 + $0x20] sm:$0xf] %vm4393, %v5295
      %5383 = vst.msk [vmem:[#allocation7 + $0x24] sm:$0xf] %vm4393, %v5297
      %5384 = vst.msk [vmem:[#allocation7 + $0x28] sm:$0xf] %vm4393, %v5299
      %5385 = vst.msk [vmem:[#allocation7 + $0x2c] sm:$0xf] %vm4393, %v5301
      %5386 = vst.msk [vmem:[#allocation7 + $0x30] sm:$0xf] %vm4393, %v5303
      %5387 = vst.msk [vmem:[#allocation7 + $0x34] sm:$0xf] %vm4393, %v5305
      %5388 = vst.msk [vmem:[#allocation7 + $0x38] sm:$0xf] %vm4393, %v5307
      %5389 = vst.msk [vmem:[#allocation7 + $0x3c] sm:$0xf] %vm4393, %v5309
      %5390 = vst.msk [vmem:[#allocation7 + $0x40] sm:$0xf] %vm4393, %v5311
      %5391 = vst.msk [vmem:[#allocation7 + $0x44] sm:$0xf] %vm4393, %v5313
      %5392 = vst.msk [vmem:[#allocation7 + $0x48] sm:$0xf] %vm4393, %v5315
      %5393 = vst.msk [vmem:[#allocation7 + $0x4c] sm:$0xf] %vm4393, %v5317
      %5394 = vst.msk [vmem:[#allocation7 + $0x50] sm:$0xf] %vm4393, %v5319
      %5395 = vst.msk [vmem:[#allocation7 + $0x54] sm:$0xf] %vm4393, %v5321
      %5396 = vst.msk [vmem:[#allocation7 + $0x58] sm:$0xf] %vm4393, %v5323
      %5397 = vst.msk [vmem:[#allocation7 + $0x5c] sm:$0xf] %vm4393, %v5325
      %5398 = vst.msk [vmem:[#allocation7 + $0x60] sm:$0xf] %vm4393, %v5327
      %5399 = vst.msk [vmem:[#allocation7 + $0x64] sm:$0xf] %vm4393, %v5329
      %5400 = vst.msk [vmem:[#allocation7 + $0x68] sm:$0xf] %vm4393, %v5331
      %5401 = vst.msk [vmem:[#allocation7 + $0x6c] sm:$0xf] %vm4393, %v5333
      %5402 = vst.msk [vmem:[#allocation7 + $0x70] sm:$0xf] %vm4393, %v5335
      %5403 = vst.msk [vmem:[#allocation7 + $0x74] sm:$0xf] %vm4393, %v5337
      %5404 = vst.msk [vmem:[#allocation7 + $0x78] sm:$0xf] %vm4393, %v5339
      %5405 = vst.msk [vmem:[#allocation7 + $0x7c] sm:$0xf] %vm4393, %v5341
      %v5406 = vld [vmem:[%s4426] sm:$0xff]
      %v5407 = vld [vmem:[%s4426 + $0x8] sm:$0xff]
      %v5408 = vld [vmem:[%s4426 + $0x10] sm:$0xff]
      %v5409 = vld [vmem:[%s4426 + $0x18] sm:$0xff]
      %v5410 = vld [vmem:[%s4426 + $0x20] sm:$0xff]
      %v5411 = vld [vmem:[%s4426 + $0x28] sm:$0xff]
      %v5412 = vld [vmem:[%s4426 + $0x30] sm:$0xff]
      %v5413 = vld [vmem:[%s4426 + $0x38] sm:$0xff]
      %v5414 = vld [vmem:[%s4426 + $0x40] sm:$0xff]
      %v5415 = vld [vmem:[%s4426 + $0x48] sm:$0xff]
      %v5416 = vld [vmem:[%s4426 + $0x50] sm:$0xff]
      %v5417 = vld [vmem:[%s4426 + $0x58] sm:$0xff]
      %v5418 = vld [vmem:[%s4426 + $0x60] sm:$0xff]
      %v5419 = vld [vmem:[%s4426 + $0x68] sm:$0xff]
      %v5420 = vld [vmem:[%s4426 + $0x70] sm:$0xff]
      %v5421 = vld [vmem:[%s4426 + $0x78] sm:$0xff]
      %v5422 = vld [vmem:[%s4426 + $0x80] sm:$0xff]
      %v5423 = vld [vmem:[%s4426 + $0x88] sm:$0xff]
      %v5424 = vld [vmem:[%s4426 + $0x90] sm:$0xff]
      %v5425 = vld [vmem:[%s4426 + $0x98] sm:$0xff]
      %v5426 = vld [vmem:[%s4426 + $0xa0] sm:$0xff]
      %v5427 = vld [vmem:[%s4426 + $0xa8] sm:$0xff]
      %v5428 = vld [vmem:[%s4426 + $0xb0] sm:$0xff]
      %v5429 = vld [vmem:[%s4426 + $0xb8] sm:$0xff]
      %v5430 = vld [vmem:[%s4426 + $0xc0] sm:$0xff]
      %v5431 = vld [vmem:[%s4426 + $0xc8] sm:$0xff]
      %v5432 = vld [vmem:[%s4426 + $0xd0] sm:$0xff]
      %v5433 = vld [vmem:[%s4426 + $0xd8] sm:$0xff]
      %v5434 = vld [vmem:[%s4426 + $0xe0] sm:$0xff]
      %v5435 = vld [vmem:[%s4426 + $0xe8] sm:$0xff]
      %v5436 = vld [vmem:[%s4426 + $0xf0] sm:$0xff]
      %v5437 = vld [vmem:[%s4426 + $0xf8] sm:$0xff]
      %v5438 = vpack.c.bf16 %v5406, %v5406
      %v5439 = vpack.c.bf16 %v5407, %v5407
      %v5440 = vpack.c.bf16 %v5408, %v5408
      %v5441 = vpack.c.bf16 %v5409, %v5409
      %v5442 = vpack.c.bf16 %v5410, %v5410
      %v5443 = vpack.c.bf16 %v5411, %v5411
      %v5444 = vpack.c.bf16 %v5412, %v5412
      %v5445 = vpack.c.bf16 %v5413, %v5413
      %v5446 = vpack.c.bf16 %v5414, %v5414
      %v5447 = vpack.c.bf16 %v5415, %v5415
      %v5448 = vpack.c.bf16 %v5416, %v5416
      %v5449 = vpack.c.bf16 %v5417, %v5417
      %v5450 = vpack.c.bf16 %v5418, %v5418
      %v5451 = vpack.c.bf16 %v5419, %v5419
      %v5452 = vpack.c.bf16 %v5420, %v5420
      %v5453 = vpack.c.bf16 %v5421, %v5421
      %v5454 = vpack.c.bf16 %v5422, %v5422
      %v5455 = vpack.c.bf16 %v5423, %v5423
      %v5456 = vpack.c.bf16 %v5424, %v5424
      %v5457 = vpack.c.bf16 %v5425, %v5425
      %v5458 = vpack.c.bf16 %v5426, %v5426
      %v5459 = vpack.c.bf16 %v5427, %v5427
      %v5460 = vpack.c.bf16 %v5428, %v5428
      %v5461 = vpack.c.bf16 %v5429, %v5429
      %v5462 = vpack.c.bf16 %v5430, %v5430
      %v5463 = vpack.c.bf16 %v5431, %v5431
      %v5464 = vpack.c.bf16 %v5432, %v5432
      %v5465 = vpack.c.bf16 %v5433, %v5433
      %v5466 = vpack.c.bf16 %v5434, %v5434
      %v5467 = vpack.c.bf16 %v5435, %v5435
      %v5468 = vpack.c.bf16 %v5436, %v5436
      %v5469 = vpack.c.bf16 %v5437, %v5437
      %5502 = vrot.lane.b32.xlu0 %v5438, 16
      %v5503 = vpop.permute.xlu0 %5502
      %5504 = vrot.lane.b32.xlu0 %v5439, 16
      %v5505 = vpop.permute.xlu0 %5504
      %5506 = vrot.lane.b32.xlu0 %v5440, 16
      %v5507 = vpop.permute.xlu0 %5506
      %5508 = vrot.lane.b32.xlu0 %v5441, 16
      %v5509 = vpop.permute.xlu0 %5508
      %5510 = vrot.lane.b32.xlu0 %v5442, 16
      %v5511 = vpop.permute.xlu0 %5510
      %5512 = vrot.lane.b32.xlu0 %v5443, 16
      %v5513 = vpop.permute.xlu0 %5512
      %5514 = vrot.lane.b32.xlu0 %v5444, 16
      %v5515 = vpop.permute.xlu0 %5514
      %5516 = vrot.lane.b32.xlu0 %v5445, 16
      %v5517 = vpop.permute.xlu0 %5516
      %5518 = vrot.lane.b32.xlu0 %v5446, 16
      %v5519 = vpop.permute.xlu0 %5518
      %5520 = vrot.lane.b32.xlu0 %v5447, 16
      %v5521 = vpop.permute.xlu0 %5520
      %5522 = vrot.lane.b32.xlu0 %v5448, 16
      %v5523 = vpop.permute.xlu0 %5522
      %5524 = vrot.lane.b32.xlu0 %v5449, 16
      %v5525 = vpop.permute.xlu0 %5524
      %5526 = vrot.lane.b32.xlu0 %v5450, 16
      %v5527 = vpop.permute.xlu0 %5526
      %5528 = vrot.lane.b32.xlu0 %v5451, 16
      %v5529 = vpop.permute.xlu0 %5528
      %5530 = vrot.lane.b32.xlu0 %v5452, 16
      %v5531 = vpop.permute.xlu0 %5530
      %5532 = vrot.lane.b32.xlu0 %v5453, 16
      %v5533 = vpop.permute.xlu0 %5532
      %5534 = vrot.lane.b32.xlu0 %v5454, 16
      %v5535 = vpop.permute.xlu0 %5534
      %5536 = vrot.lane.b32.xlu0 %v5455, 16
      %v5537 = vpop.permute.xlu0 %5536
      %5538 = vrot.lane.b32.xlu0 %v5456, 16
      %v5539 = vpop.permute.xlu0 %5538
      %5540 = vrot.lane.b32.xlu0 %v5457, 16
      %v5541 = vpop.permute.xlu0 %5540
      %5542 = vrot.lane.b32.xlu0 %v5458, 16
      %v5543 = vpop.permute.xlu0 %5542
      %5544 = vrot.lane.b32.xlu0 %v5459, 16
      %v5545 = vpop.permute.xlu0 %5544
      %5546 = vrot.lane.b32.xlu0 %v5460, 16
      %v5547 = vpop.permute.xlu0 %5546
      %5548 = vrot.lane.b32.xlu0 %v5461, 16
      %v5549 = vpop.permute.xlu0 %5548
      %5550 = vrot.lane.b32.xlu0 %v5462, 16
      %v5551 = vpop.permute.xlu0 %5550
      %5552 = vrot.lane.b32.xlu0 %v5463, 16
      %v5553 = vpop.permute.xlu0 %5552
      %5554 = vrot.lane.b32.xlu0 %v5464, 16
      %v5555 = vpop.permute.xlu0 %5554
      %5556 = vrot.lane.b32.xlu0 %v5465, 16
      %v5557 = vpop.permute.xlu0 %5556
      %5558 = vrot.lane.b32.xlu0 %v5466, 16
      %v5559 = vpop.permute.xlu0 %5558
      %5560 = vrot.lane.b32.xlu0 %v5467, 16
      %v5561 = vpop.permute.xlu0 %5560
      %5562 = vrot.lane.b32.xlu0 %v5468, 16
      %v5563 = vpop.permute.xlu0 %5562
      %5564 = vrot.lane.b32.xlu0 %v5469, 16
      %v5565 = vpop.permute.xlu0 %5564
      %5598 = vst.msk [vmem:[#allocation7] sm:$0xf] %vm4619, %v5503
      %5599 = vst.msk [vmem:[#allocation7 + $0x4] sm:$0xf] %vm4619, %v5505
      %5600 = vst.msk [vmem:[#allocation7 + $0x8] sm:$0xf] %vm4619, %v5507
      %5601 = vst.msk [vmem:[#allocation7 + $0xc] sm:$0xf] %vm4619, %v5509
      %5602 = vst.msk [vmem:[#allocation7 + $0x10] sm:$0xf] %vm4619, %v5511
      %5603 = vst.msk [vmem:[#allocation7 + $0x14] sm:$0xf] %vm4619, %v5513
      %5604 = vst.msk [vmem:[#allocation7 + $0x18] sm:$0xf] %vm4619, %v5515
      %5605 = vst.msk [vmem:[#allocation7 + $0x1c] sm:$0xf] %vm4619, %v5517
      %5606 = vst.msk [vmem:[#allocation7 + $0x20] sm:$0xf] %vm4619, %v5519
      %5607 = vst.msk [vmem:[#allocation7 + $0x24] sm:$0xf] %vm4619, %v5521
      %5608 = vst.msk [vmem:[#allocation7 + $0x28] sm:$0xf] %vm4619, %v5523
      %5609 = vst.msk [vmem:[#allocation7 + $0x2c] sm:$0xf] %vm4619, %v5525
      %5610 = vst.msk [vmem:[#allocation7 + $0x30] sm:$0xf] %vm4619, %v5527
      %5611 = vst.msk [vmem:[#allocation7 + $0x34] sm:$0xf] %vm4619, %v5529
      %5612 = vst.msk [vmem:[#allocation7 + $0x38] sm:$0xf] %vm4619, %v5531
      %5613 = vst.msk [vmem:[#allocation7 + $0x3c] sm:$0xf] %vm4619, %v5533
      %5614 = vst.msk [vmem:[#allocation7 + $0x40] sm:$0xf] %vm4619, %v5535
      %5615 = vst.msk [vmem:[#allocation7 + $0x44] sm:$0xf] %vm4619, %v5537
      %5616 = vst.msk [vmem:[#allocation7 + $0x48] sm:$0xf] %vm4619, %v5539
      %5617 = vst.msk [vmem:[#allocation7 + $0x4c] sm:$0xf] %vm4619, %v5541
      %5618 = vst.msk [vmem:[#allocation7 + $0x50] sm:$0xf] %vm4619, %v5543
      %5619 = vst.msk [vmem:[#allocation7 + $0x54] sm:$0xf] %vm4619, %v5545
      %5620 = vst.msk [vmem:[#allocation7 + $0x58] sm:$0xf] %vm4619, %v5547
      %5621 = vst.msk [vmem:[#allocation7 + $0x5c] sm:$0xf] %vm4619, %v5549
      %5622 = vst.msk [vmem:[#allocation7 + $0x60] sm:$0xf] %vm4619, %v5551
      %5623 = vst.msk [vmem:[#allocation7 + $0x64] sm:$0xf] %vm4619, %v5553
      %5624 = vst.msk [vmem:[#allocation7 + $0x68] sm:$0xf] %vm4619, %v5555
      %5625 = vst.msk [vmem:[#allocation7 + $0x6c] sm:$0xf] %vm4619, %v5557
      %5626 = vst.msk [vmem:[#allocation7 + $0x70] sm:$0xf] %vm4619, %v5559
      %5627 = vst.msk [vmem:[#allocation7 + $0x74] sm:$0xf] %vm4619, %v5561
      %5628 = vst.msk [vmem:[#allocation7 + $0x78] sm:$0xf] %vm4619, %v5563
      %5629 = vst.msk [vmem:[#allocation7 + $0x7c] sm:$0xf] %vm4619, %v5565
      %v5630 = vld [vmem:[#allocation8] sm:$0xff]
      %v5631 = vld [vmem:[#allocation8 + $0x8] sm:$0xff]
      %v5632 = vld [vmem:[#allocation8 + $0x10] sm:$0xff]
      %v5633 = vld [vmem:[#allocation8 + $0x18] sm:$0xff]
      %v5634 = vld [vmem:[#allocation8 + $0x20] sm:$0xff]
      %v5635 = vld [vmem:[#allocation8 + $0x28] sm:$0xff]
      %v5636 = vld [vmem:[#allocation8 + $0x30] sm:$0xff]
      %v5637 = vld [vmem:[#allocation8 + $0x38] sm:$0xff]
      %v5638 = vld [vmem:[#allocation8 + $0x40] sm:$0xff]
      %v5639 = vld [vmem:[#allocation8 + $0x48] sm:$0xff]
      %v5640 = vld [vmem:[#allocation8 + $0x50] sm:$0xff]
      %v5641 = vld [vmem:[#allocation8 + $0x58] sm:$0xff]
      %v5642 = vld [vmem:[#allocation8 + $0x60] sm:$0xff]
      %v5643 = vld [vmem:[#allocation8 + $0x68] sm:$0xff]
      %v5644 = vld [vmem:[#allocation8 + $0x70] sm:$0xff]
      %v5645 = vld [vmem:[#allocation8 + $0x78] sm:$0xff]
      %v5646 = vld [vmem:[#allocation8 + $0x80] sm:$0xff]
      %v5647 = vld [vmem:[#allocation8 + $0x88] sm:$0xff]
      %v5648 = vld [vmem:[#allocation8 + $0x90] sm:$0xff]
      %v5649 = vld [vmem:[#allocation8 + $0x98] sm:$0xff]
      %v5650 = vld [vmem:[#allocation8 + $0xa0] sm:$0xff]
      %v5651 = vld [vmem:[#allocation8 + $0xa8] sm:$0xff]
      %v5652 = vld [vmem:[#allocation8 + $0xb0] sm:$0xff]
      %v5653 = vld [vmem:[#allocation8 + $0xb8] sm:$0xff]
      %v5654 = vld [vmem:[#allocation8 + $0xc0] sm:$0xff]
      %v5655 = vld [vmem:[#allocation8 + $0xc8] sm:$0xff]
      %v5656 = vld [vmem:[#allocation8 + $0xd0] sm:$0xff]
      %v5657 = vld [vmem:[#allocation8 + $0xd8] sm:$0xff]
      %v5658 = vld [vmem:[#allocation8 + $0xe0] sm:$0xff]
      %v5659 = vld [vmem:[#allocation8 + $0xe8] sm:$0xff]
      %v5660 = vld [vmem:[#allocation8 + $0xf0] sm:$0xff]
      %v5661 = vld [vmem:[#allocation8 + $0xf8] sm:$0xff]
      %v5662 = vld [vmem:[#allocation7] sm:$0xf]
      %v5663 = vld [vmem:[#allocation7 + $0x4] sm:$0xf]
      %v5664 = vld [vmem:[#allocation7 + $0x8] sm:$0xf]
      %v5665 = vld [vmem:[#allocation7 + $0xc] sm:$0xf]
      %v5666 = vld [vmem:[#allocation7 + $0x10] sm:$0xf]
      %v5667 = vld [vmem:[#allocation7 + $0x14] sm:$0xf]
      %v5668 = vld [vmem:[#allocation7 + $0x18] sm:$0xf]
      %v5669 = vld [vmem:[#allocation7 + $0x1c] sm:$0xf]
      %v5670 = vld [vmem:[#allocation7 + $0x20] sm:$0xf]
      %v5671 = vld [vmem:[#allocation7 + $0x24] sm:$0xf]
      %v5672 = vld [vmem:[#allocation7 + $0x28] sm:$0xf]
      %v5673 = vld [vmem:[#allocation7 + $0x2c] sm:$0xf]
      %v5674 = vld [vmem:[#allocation7 + $0x30] sm:$0xf]
      %v5675 = vld [vmem:[#allocation7 + $0x34] sm:$0xf]
      %v5676 = vld [vmem:[#allocation7 + $0x38] sm:$0xf]
      %v5677 = vld [vmem:[#allocation7 + $0x3c] sm:$0xf]
      %v5678 = vld [vmem:[#allocation7 + $0x40] sm:$0xf]
      %v5679 = vld [vmem:[#allocation7 + $0x44] sm:$0xf]
      %v5680 = vld [vmem:[#allocation7 + $0x48] sm:$0xf]
      %v5681 = vld [vmem:[#allocation7 + $0x4c] sm:$0xf]
      %v5682 = vld [vmem:[#allocation7 + $0x50] sm:$0xf]
      %v5683 = vld [vmem:[#allocation7 + $0x54] sm:$0xf]
      %v5684 = vld [vmem:[#allocation7 + $0x58] sm:$0xf]
      %v5685 = vld [vmem:[#allocation7 + $0x5c] sm:$0xf]
      %v5686 = vld [vmem:[#allocation7 + $0x60] sm:$0xf]
      %v5687 = vld [vmem:[#allocation7 + $0x64] sm:$0xf]
      %v5688 = vld [vmem:[#allocation7 + $0x68] sm:$0xf]
      %v5689 = vld [vmem:[#allocation7 + $0x6c] sm:$0xf]
      %v5690 = vld [vmem:[#allocation7 + $0x70] sm:$0xf]
      %v5691 = vld [vmem:[#allocation7 + $0x74] sm:$0xf]
      %v5692 = vld [vmem:[#allocation7 + $0x78] sm:$0xf]
      %v5693 = vld [vmem:[#allocation7 + $0x7c] sm:$0xf]
      %s5694 = scalar_lea.vmem %s3, 12
      %v5695 = vld [vmem:[%s5694] sm:$0xf]
      %v5696 = vld [vmem:[%s5694 + $0x4] sm:$0xf]
      %v5697 = vld [vmem:[%s5694 + $0x8] sm:$0xf]
      %v5730 = vunpack.c.l.b16 %v5662
      %v5731 = vunpack.c.l.b16 %v5663
      %v5732 = vunpack.c.l.b16 %v5664
      %v5733 = vunpack.c.l.b16 %v5665
      %v5734 = vunpack.c.l.b16 %v5666
      %v5735 = vunpack.c.l.b16 %v5667
      %v5736 = vunpack.c.l.b16 %v5668
      %v5737 = vunpack.c.l.b16 %v5669
      %v5738 = vunpack.c.l.b16 %v5670
      %v5739 = vunpack.c.l.b16 %v5671
      %v5740 = vunpack.c.l.b16 %v5672
      %v5741 = vunpack.c.l.b16 %v5673
      %v5742 = vunpack.c.l.b16 %v5674
      %v5743 = vunpack.c.l.b16 %v5675
      %v5744 = vunpack.c.l.b16 %v5676
      %v5745 = vunpack.c.l.b16 %v5677
      %v5746 = vunpack.c.l.b16 %v5678
      %v5747 = vunpack.c.l.b16 %v5679
      %v5748 = vunpack.c.l.b16 %v5680
      %v5749 = vunpack.c.l.b16 %v5681
      %v5750 = vunpack.c.l.b16 %v5682
      %v5751 = vunpack.c.l.b16 %v5683
      %v5752 = vunpack.c.l.b16 %v5684
      %v5753 = vunpack.c.l.b16 %v5685
      %v5754 = vunpack.c.l.b16 %v5686
      %v5755 = vunpack.c.l.b16 %v5687
      %v5756 = vunpack.c.l.b16 %v5688
      %v5757 = vunpack.c.l.b16 %v5689
      %v5758 = vunpack.c.l.b16 %v5690
      %v5759 = vunpack.c.l.b16 %v5691
      %v5760 = vunpack.c.l.b16 %v5692
      %v5761 = vunpack.c.l.b16 %v5693
      %v5762 = vpack.c.b16 %v5731, %v5730
      %v5763 = vpack.c.b16 %v5733, %v5732
      %v5764 = vpack.c.b16 %v5735, %v5734
      %v5765 = vpack.c.b16 %v5737, %v5736
      %v5766 = vpack.c.b16 %v5739, %v5738
      %v5767 = vpack.c.b16 %v5741, %v5740
      %v5768 = vpack.c.b16 %v5743, %v5742
      %v5769 = vpack.c.b16 %v5745, %v5744
      %v5770 = vpack.c.b16 %v5747, %v5746
      %v5771 = vpack.c.b16 %v5749, %v5748
      %v5772 = vpack.c.b16 %v5751, %v5750
      %v5773 = vpack.c.b16 %v5753, %v5752
      %v5774 = vpack.c.b16 %v5755, %v5754
      %v5775 = vpack.c.b16 %v5757, %v5756
      %v5776 = vpack.c.b16 %v5759, %v5758
      %v5777 = vpack.c.b16 %v5761, %v5760
      %v5781 = vunpack.c.l.b16 %v5695
      %v5782 = vunpack.c.l.b16 %v5696
      %v5783 = vunpack.c.l.b16 %v5697
      %v5784 = vpack.c.b16 %v5782, %v5781
      %v5785 = vpack.c.b16 %v5783, %v5783
      %v5788 = vsel %vm4808, %v5762, 0
      %v5791 = vsel %vm4808, %v5763, 0
      %v5794 = vsel %vm4808, %v5764, 0
      %v5797 = vsel %vm4808, %v5765, 0
      %v5800 = vsel %vm4808, %v5766, 0
      %v5803 = vsel %vm4808, %v5767, 0
      %v5806 = vsel %vm4808, %v5768, 0
      %v5809 = vsel %vm4808, %v5769, 0
      %v5812 = vsel %vm4808, %v5770, 0
      %v5815 = vsel %vm4808, %v5771, 0
      %v5818 = vsel %vm4808, %v5772, 0
      %v5821 = vsel %vm4808, %v5773, 0
      %v5824 = vsel %vm4808, %v5774, 0
      %v5827 = vsel %vm4808, %v5775, 0
      %v5830 = vsel %vm4808, %v5776, 0
      %v5833 = vsel %vm4808, %v5777, 0
      %v5836 = vsel %vm4857, %v5785, 0
      %5838 = vmatpush.bf16.msra.mxu0 0
      %5839 = vmatpush.bf16.msra.mxu0 0
      %5840 = vmatpush.bf16.msra.mxu0 0
      %5841 = vmatpush.bf16.msra.mxu0 0
      %5842 = vmatpush.bf16.msra.mxu0 0
      %5843 = vmatpush.bf16.msra.mxu0 0
      %5844 = vmatpush.bf16.msra.mxu0 %v5836
      %5845 = vmatpush.bf16.msra.mxu0 %v5784
      %5846 = vmatmul.bf16.gmra.mxu0 %v5788
      %v5847 = vpop.f32.mrf.mxu0
      %v5848 = vadd.f32 0.0, %v5847
      %v5849 = vpop.f32.mrf.mxu0
      %v5850 = vadd.f32 0.0, %v5849
      %5851 = vmatmul.bf16.gmra.mxu0 %v5791
      %v5852 = vpop.f32.mrf.mxu0
      %v5853 = vadd.f32 0.0, %v5852
      %v5854 = vpop.f32.mrf.mxu0
      %v5855 = vadd.f32 0.0, %v5854
      %5856 = vmatmul.bf16.gmra.mxu0 %v5794
      %v5857 = vpop.f32.mrf.mxu0
      %v5858 = vadd.f32 0.0, %v5857
      %v5859 = vpop.f32.mrf.mxu0
      %v5860 = vadd.f32 0.0, %v5859
      %5861 = vmatmul.bf16.gmra.mxu0 %v5797
      %v5862 = vpop.f32.mrf.mxu0
      %v5863 = vadd.f32 0.0, %v5862
      %v5864 = vpop.f32.mrf.mxu0
      %v5865 = vadd.f32 0.0, %v5864
      %5866 = vmatmul.bf16.gmra.mxu0 %v5800
      %v5867 = vpop.f32.mrf.mxu0
      %v5868 = vadd.f32 0.0, %v5867
      %v5869 = vpop.f32.mrf.mxu0
      %v5870 = vadd.f32 0.0, %v5869
      %5871 = vmatmul.bf16.gmra.mxu0 %v5803
      %v5872 = vpop.f32.mrf.mxu0
      %v5873 = vadd.f32 0.0, %v5872
      %v5874 = vpop.f32.mrf.mxu0
      %v5875 = vadd.f32 0.0, %v5874
      %5876 = vmatmul.bf16.gmra.mxu0 %v5806
      %v5877 = vpop.f32.mrf.mxu0
      %v5878 = vadd.f32 0.0, %v5877
      %v5879 = vpop.f32.mrf.mxu0
      %v5880 = vadd.f32 0.0, %v5879
      %5881 = vmatmul.bf16.gmra.mxu0 %v5809
      %v5882 = vpop.f32.mrf.mxu0
      %v5883 = vadd.f32 0.0, %v5882
      %v5884 = vpop.f32.mrf.mxu0
      %v5885 = vadd.f32 0.0, %v5884
      %5886 = vmatmul.bf16.gmra.mxu0 %v5812
      %v5887 = vpop.f32.mrf.mxu0
      %v5888 = vadd.f32 0.0, %v5887
      %v5889 = vpop.f32.mrf.mxu0
      %v5890 = vadd.f32 0.0, %v5889
      %5891 = vmatmul.bf16.gmra.mxu0 %v5815
      %v5892 = vpop.f32.mrf.mxu0
      %v5893 = vadd.f32 0.0, %v5892
      %v5894 = vpop.f32.mrf.mxu0
      %v5895 = vadd.f32 0.0, %v5894
      %5896 = vmatmul.bf16.gmra.mxu0 %v5818
      %v5897 = vpop.f32.mrf.mxu0
      %v5898 = vadd.f32 0.0, %v5897
      %v5899 = vpop.f32.mrf.mxu0
      %v5900 = vadd.f32 0.0, %v5899
      %5901 = vmatmul.bf16.gmra.mxu0 %v5821
      %v5902 = vpop.f32.mrf.mxu0
      %v5903 = vadd.f32 0.0, %v5902
      %v5904 = vpop.f32.mrf.mxu0
      %v5905 = vadd.f32 0.0, %v5904
      %5906 = vmatmul.bf16.gmra.mxu0 %v5824
      %v5907 = vpop.f32.mrf.mxu0
      %v5908 = vadd.f32 0.0, %v5907
      %v5909 = vpop.f32.mrf.mxu0
      %v5910 = vadd.f32 0.0, %v5909
      %5911 = vmatmul.bf16.gmra.mxu0 %v5827
      %v5912 = vpop.f32.mrf.mxu0
      %v5913 = vadd.f32 0.0, %v5912
      %v5914 = vpop.f32.mrf.mxu0
      %v5915 = vadd.f32 0.0, %v5914
      %5916 = vmatmul.bf16.gmra.mxu0 %v5830
      %v5917 = vpop.f32.mrf.mxu0
      %v5918 = vadd.f32 0.0, %v5917
      %v5919 = vpop.f32.mrf.mxu0
      %v5920 = vadd.f32 0.0, %v5919
      %5921 = vmatmul.bf16.gmra.mxu0 %v5833
      %v5922 = vpop.f32.mrf.mxu0
      %v5923 = vadd.f32 0.0, %v5922
      %v5924 = vpop.f32.mrf.mxu0
      %v5925 = vadd.f32 0.0, %v5924
      %5926 = vdwg.mxu0
      %v5927 = vadd.f32 %v5630, %v5848
      %v5928 = vadd.f32 %v5631, %v5850
      %v5929 = vadd.f32 %v5632, %v5853
      %v5930 = vadd.f32 %v5633, %v5855
      %v5931 = vadd.f32 %v5634, %v5858
      %v5932 = vadd.f32 %v5635, %v5860
      %v5933 = vadd.f32 %v5636, %v5863
      %v5934 = vadd.f32 %v5637, %v5865
      %v5935 = vadd.f32 %v5638, %v5868
      %v5936 = vadd.f32 %v5639, %v5870
      %v5937 = vadd.f32 %v5640, %v5873
      %v5938 = vadd.f32 %v5641, %v5875
      %v5939 = vadd.f32 %v5642, %v5878
      %v5940 = vadd.f32 %v5643, %v5880
      %v5941 = vadd.f32 %v5644, %v5883
      %v5942 = vadd.f32 %v5645, %v5885
      %v5943 = vadd.f32 %v5646, %v5888
      %v5944 = vadd.f32 %v5647, %v5890
      %v5945 = vadd.f32 %v5648, %v5893
      %v5946 = vadd.f32 %v5649, %v5895
      %v5947 = vadd.f32 %v5650, %v5898
      %v5948 = vadd.f32 %v5651, %v5900
      %v5949 = vadd.f32 %v5652, %v5903
      %v5950 = vadd.f32 %v5653, %v5905
      %v5951 = vadd.f32 %v5654, %v5908
      %v5952 = vadd.f32 %v5655, %v5910
      %v5953 = vadd.f32 %v5656, %v5913
      %v5954 = vadd.f32 %v5657, %v5915
      %v5955 = vadd.f32 %v5658, %v5918
      %v5956 = vadd.f32 %v5659, %v5920
      %v5957 = vadd.f32 %v5660, %v5923
      %v5958 = vadd.f32 %v5661, %v5925
      %5959 = vst.msk [vmem:[#allocation8] sm:$0xff] %vm340, %v5927
      %5960 = vst.msk [vmem:[#allocation8 + $0x8] sm:$0xff] %vm340, %v5928
      %5961 = vst.msk [vmem:[#allocation8 + $0x10] sm:$0xff] %vm340, %v5929
      %5962 = vst.msk [vmem:[#allocation8 + $0x18] sm:$0xff] %vm340, %v5930
      %5963 = vst.msk [vmem:[#allocation8 + $0x20] sm:$0xff] %vm340, %v5931
      %5964 = vst.msk [vmem:[#allocation8 + $0x28] sm:$0xff] %vm340, %v5932
      %5965 = vst.msk [vmem:[#allocation8 + $0x30] sm:$0xff] %vm340, %v5933
      %5966 = vst.msk [vmem:[#allocation8 + $0x38] sm:$0xff] %vm340, %v5934
      %5967 = vst.msk [vmem:[#allocation8 + $0x40] sm:$0xff] %vm340, %v5935
      %5968 = vst.msk [vmem:[#allocation8 + $0x48] sm:$0xff] %vm340, %v5936
      %5969 = vst.msk [vmem:[#allocation8 + $0x50] sm:$0xff] %vm340, %v5937
      %5970 = vst.msk [vmem:[#allocation8 + $0x58] sm:$0xff] %vm340, %v5938
      %5971 = vst.msk [vmem:[#allocation8 + $0x60] sm:$0xff] %vm340, %v5939
      %5972 = vst.msk [vmem:[#allocation8 + $0x68] sm:$0xff] %vm340, %v5940
      %5973 = vst.msk [vmem:[#allocation8 + $0x70] sm:$0xff] %vm340, %v5941
      %5974 = vst.msk [vmem:[#allocation8 + $0x78] sm:$0xff] %vm340, %v5942
      %5975 = vst.msk [vmem:[#allocation8 + $0x80] sm:$0xff] %vm340, %v5943
      %5976 = vst.msk [vmem:[#allocation8 + $0x88] sm:$0xff] %vm340, %v5944
      %5977 = vst.msk [vmem:[#allocation8 + $0x90] sm:$0xff] %vm340, %v5945
      %5978 = vst.msk [vmem:[#allocation8 + $0x98] sm:$0xff] %vm340, %v5946
      %5979 = vst.msk [vmem:[#allocation8 + $0xa0] sm:$0xff] %vm340, %v5947
      %5980 = vst.msk [vmem:[#allocation8 + $0xa8] sm:$0xff] %vm340, %v5948
      %5981 = vst.msk [vmem:[#allocation8 + $0xb0] sm:$0xff] %vm340, %v5949
      %5982 = vst.msk [vmem:[#allocation8 + $0xb8] sm:$0xff] %vm340, %v5950
      %5983 = vst.msk [vmem:[#allocation8 + $0xc0] sm:$0xff] %vm340, %v5951
      %5984 = vst.msk [vmem:[#allocation8 + $0xc8] sm:$0xff] %vm340, %v5952
      %5985 = vst.msk [vmem:[#allocation8 + $0xd0] sm:$0xff] %vm340, %v5953
      %5986 = vst.msk [vmem:[#allocation8 + $0xd8] sm:$0xff] %vm340, %v5954
      %5987 = vst.msk [vmem:[#allocation8 + $0xe0] sm:$0xff] %vm340, %v5955
      %5988 = vst.msk [vmem:[#allocation8 + $0xe8] sm:$0xff] %vm340, %v5956
      %5989 = vst.msk [vmem:[#allocation8 + $0xf0] sm:$0xff] %vm340, %v5957
      %5990 = vst.msk [vmem:[#allocation8 + $0xf8] sm:$0xff] %vm340, %v5958
      %v5991 = vld [vmem:[#allocation5 + $0x2] sm:$0xff]
      %v5992 = vld [vmem:[#allocation5 + $0xa] sm:$0xff]
      %v5993 = vld [vmem:[#allocation5 + $0x1a] sm:$0xff]
      %v5994 = vld [vmem:[#allocation5 + $0x22] sm:$0xff]
      %v5995 = vld [vmem:[#allocation5 + $0x32] sm:$0xff]
      %v5996 = vld [vmem:[#allocation5 + $0x3a] sm:$0xff]
      %v5997 = vld [vmem:[#allocation5 + $0x4a] sm:$0xff]
      %v5998 = vld [vmem:[#allocation5 + $0x52] sm:$0xff]
      %v5999 = vld [vmem:[#allocation5 + $0x62] sm:$0xff]
      %v6000 = vld [vmem:[#allocation5 + $0x6a] sm:$0xff]
      %v6001 = vld [vmem:[#allocation5 + $0x7a] sm:$0xff]
      %v6002 = vld [vmem:[#allocation5 + $0x82] sm:$0xff]
      %v6003 = vld [vmem:[#allocation5 + $0x92] sm:$0xff]
      %v6004 = vld [vmem:[#allocation5 + $0x9a] sm:$0xff]
      %v6005 = vld [vmem:[#allocation5 + $0xaa] sm:$0xff]
      %v6006 = vld [vmem:[#allocation5 + $0xb2] sm:$0xff]
      %v6007 = vld [vmem:[#allocation5 + $0xc2] sm:$0xff]
      %v6008 = vld [vmem:[#allocation5 + $0xca] sm:$0xff]
      %v6009 = vld [vmem:[#allocation5 + $0xda] sm:$0xff]
      %v6010 = vld [vmem:[#allocation5 + $0xe2] sm:$0xff]
      %v6011 = vld [vmem:[#allocation5 + $0xf2] sm:$0xff]
      %v6012 = vld [vmem:[#allocation5 + $0xfa] sm:$0xff]
      %v6013 = vld [vmem:[#allocation5 + $0x10a] sm:$0xff]
      %v6014 = vld [vmem:[#allocation5 + $0x112] sm:$0xff]
      %v6015 = vld [vmem:[#allocation5 + $0x122] sm:$0xff]
      %v6016 = vld [vmem:[#allocation5 + $0x12a] sm:$0xff]
      %v6017 = vld [vmem:[#allocation5 + $0x13a] sm:$0xff]
      %v6018 = vld [vmem:[#allocation5 + $0x142] sm:$0xff]
      %v6019 = vld [vmem:[#allocation5 + $0x152] sm:$0xff]
      %v6020 = vld [vmem:[#allocation5 + $0x15a] sm:$0xff]
      %v6021 = vld [vmem:[#allocation5 + $0x16a] sm:$0xff]
      %v6022 = vld [vmem:[#allocation5 + $0x172] sm:$0xff]
      %v6023 = vld [vmem:[#allocation5 + $0x182] sm:$0xff]
      %v6024 = vld [vmem:[#allocation5 + $0x18a] sm:$0xff]
      %v6025 = vld [vmem:[#allocation5 + $0x19a] sm:$0xff]
      %v6026 = vld [vmem:[#allocation5 + $0x1a2] sm:$0xff]
      %6027 = vst.msk [vmem:[#allocation6] sm:$0xff] %vm340, %v5991
      %6028 = vst.msk [vmem:[#allocation6 + $0x8] sm:$0xff] %vm340, %v5992
      %6029 = vst.msk [vmem:[#allocation6 + $0x10] sm:$0xff] %vm340, %v5993
      %6030 = vst.msk [vmem:[#allocation6 + $0x18] sm:$0xff] %vm340, %v5994
      %6031 = vst.msk [vmem:[#allocation6 + $0x20] sm:$0xff] %vm340, %v5995
      %6032 = vst.msk [vmem:[#allocation6 + $0x28] sm:$0xff] %vm340, %v5996
      %6033 = vst.msk [vmem:[#allocation6 + $0x30] sm:$0xff] %vm340, %v5997
      %6034 = vst.msk [vmem:[#allocation6 + $0x38] sm:$0xff] %vm340, %v5998
      %6035 = vst.msk [vmem:[#allocation6 + $0x40] sm:$0xff] %vm340, %v5999
      %6036 = vst.msk [vmem:[#allocation6 + $0x48] sm:$0xff] %vm340, %v6000
      %6037 = vst.msk [vmem:[#allocation6 + $0x50] sm:$0xff] %vm340, %v6001
      %6038 = vst.msk [vmem:[#allocation6 + $0x58] sm:$0xff] %vm340, %v6002
      %6039 = vst.msk [vmem:[#allocation6 + $0x60] sm:$0xff] %vm340, %v6003
      %6040 = vst.msk [vmem:[#allocation6 + $0x68] sm:$0xff] %vm340, %v6004
      %6041 = vst.msk [vmem:[#allocation6 + $0x70] sm:$0xff] %vm340, %v6005
      %6042 = vst.msk [vmem:[#allocation6 + $0x78] sm:$0xff] %vm340, %v6006
      %6043 = vst.msk [vmem:[#allocation6 + $0x80] sm:$0xff] %vm340, %v6007
      %6044 = vst.msk [vmem:[#allocation6 + $0x88] sm:$0xff] %vm340, %v6008
      %6045 = vst.msk [vmem:[#allocation6 + $0x90] sm:$0xff] %vm340, %v6009
      %6046 = vst.msk [vmem:[#allocation6 + $0x98] sm:$0xff] %vm340, %v6010
      %6047 = vst.msk [vmem:[#allocation6 + $0xa0] sm:$0xff] %vm340, %v6011
      %6048 = vst.msk [vmem:[#allocation6 + $0xa8] sm:$0xff] %vm340, %v6012
      %6049 = vst.msk [vmem:[#allocation6 + $0xb0] sm:$0xff] %vm340, %v6013
      %6050 = vst.msk [vmem:[#allocation6 + $0xb8] sm:$0xff] %vm340, %v6014
      %6051 = vst.msk [vmem:[#allocation6 + $0xc0] sm:$0xff] %vm340, %v6015
      %6052 = vst.msk [vmem:[#allocation6 + $0xc8] sm:$0xff] %vm340, %v6016
      %6053 = vst.msk [vmem:[#allocation6 + $0xd0] sm:$0xff] %vm340, %v6017
      %6054 = vst.msk [vmem:[#allocation6 + $0xd8] sm:$0xff] %vm340, %v6018
      %6055 = vst.msk [vmem:[#allocation6 + $0xe0] sm:$0xff] %vm340, %v6019
      %6056 = vst.msk [vmem:[#allocation6 + $0xe8] sm:$0xff] %vm340, %v6020
      %6057 = vst.msk [vmem:[#allocation6 + $0xf0] sm:$0xff] %vm340, %v6021
      %6058 = vst.msk [vmem:[#allocation6 + $0xf8] sm:$0xff] %vm340, %v6022
      %6059 = vst.msk [vmem:[#allocation6 + $0x100] sm:$0xff] %vm340, %v6023
      %6060 = vst.msk [vmem:[#allocation6 + $0x108] sm:$0xff] %vm340, %v6024
      %6061 = vst.msk [vmem:[#allocation6 + $0x110] sm:$0xff] %vm340, %v6025
      %6062 = vst.msk [vmem:[#allocation6 + $0x118] sm:$0xff] %vm340, %v6026
      %v6063 = vld [vmem:[#allocation6] sm:$0xff]
      %v6064 = vld [vmem:[#allocation6 + $0x8] sm:$0xff]
      %v6065 = vld [vmem:[#allocation6 + $0x10] sm:$0xff]
      %v6066 = vld [vmem:[#allocation6 + $0x18] sm:$0xff]
      %v6067 = vld [vmem:[#allocation6 + $0x20] sm:$0xff]
      %v6068 = vld [vmem:[#allocation6 + $0x28] sm:$0xff]
      %v6069 = vld [vmem:[#allocation6 + $0x30] sm:$0xff]
      %v6070 = vld [vmem:[#allocation6 + $0x38] sm:$0xff]
      %v6071 = vld [vmem:[#allocation6 + $0x40] sm:$0xff]
      %v6072 = vld [vmem:[#allocation6 + $0x48] sm:$0xff]
      %v6073 = vld [vmem:[#allocation6 + $0x50] sm:$0xff]
      %v6074 = vld [vmem:[#allocation6 + $0x58] sm:$0xff]
      %v6075 = vld [vmem:[#allocation6 + $0x60] sm:$0xff]
      %v6076 = vld [vmem:[#allocation6 + $0x68] sm:$0xff]
      %v6077 = vld [vmem:[#allocation6 + $0x70] sm:$0xff]
      %v6078 = vld [vmem:[#allocation6 + $0x78] sm:$0xff]
      %v6079 = vld [vmem:[#allocation6 + $0x80] sm:$0xff]
      %v6080 = vld [vmem:[#allocation6 + $0x88] sm:$0xff]
      %v6081 = vld [vmem:[#allocation6 + $0x90] sm:$0xff]
      %v6082 = vld [vmem:[#allocation6 + $0x98] sm:$0xff]
      %v6083 = vld [vmem:[#allocation6 + $0xa0] sm:$0xff]
      %v6084 = vld [vmem:[#allocation6 + $0xa8] sm:$0xff]
      %v6085 = vld [vmem:[#allocation6 + $0xb0] sm:$0xff]
      %v6086 = vld [vmem:[#allocation6 + $0xb8] sm:$0xff]
      %v6087 = vld [vmem:[#allocation6 + $0xc0] sm:$0xff]
      %v6088 = vld [vmem:[#allocation6 + $0xc8] sm:$0xff]
      %v6089 = vld [vmem:[#allocation6 + $0xd0] sm:$0xff]
      %v6090 = vld [vmem:[#allocation6 + $0xd8] sm:$0xff]
      %v6091 = vld [vmem:[#allocation6 + $0xe0] sm:$0xff]
      %v6092 = vld [vmem:[#allocation6 + $0xe8] sm:$0xff]
      %v6093 = vld [vmem:[#allocation6 + $0xf0] sm:$0xff]
      %v6094 = vld [vmem:[#allocation6 + $0xf8] sm:$0xff]
      %v6095 = vpack.c.bf16 %v6063, %v6063
      %v6096 = vpack.c.bf16 %v6064, %v6064
      %v6097 = vpack.c.bf16 %v6065, %v6065
      %v6098 = vpack.c.bf16 %v6066, %v6066
      %v6099 = vpack.c.bf16 %v6067, %v6067
      %v6100 = vpack.c.bf16 %v6068, %v6068
      %v6101 = vpack.c.bf16 %v6069, %v6069
      %v6102 = vpack.c.bf16 %v6070, %v6070
      %v6103 = vpack.c.bf16 %v6071, %v6071
      %v6104 = vpack.c.bf16 %v6072, %v6072
      %v6105 = vpack.c.bf16 %v6073, %v6073
      %v6106 = vpack.c.bf16 %v6074, %v6074
      %v6107 = vpack.c.bf16 %v6075, %v6075
      %v6108 = vpack.c.bf16 %v6076, %v6076
      %v6109 = vpack.c.bf16 %v6077, %v6077
      %v6110 = vpack.c.bf16 %v6078, %v6078
      %v6111 = vpack.c.bf16 %v6079, %v6079
      %v6112 = vpack.c.bf16 %v6080, %v6080
      %v6113 = vpack.c.bf16 %v6081, %v6081
      %v6114 = vpack.c.bf16 %v6082, %v6082
      %v6115 = vpack.c.bf16 %v6083, %v6083
      %v6116 = vpack.c.bf16 %v6084, %v6084
      %v6117 = vpack.c.bf16 %v6085, %v6085
      %v6118 = vpack.c.bf16 %v6086, %v6086
      %v6119 = vpack.c.bf16 %v6087, %v6087
      %v6120 = vpack.c.bf16 %v6088, %v6088
      %v6121 = vpack.c.bf16 %v6089, %v6089
      %v6122 = vpack.c.bf16 %v6090, %v6090
      %v6123 = vpack.c.bf16 %v6091, %v6091
      %v6124 = vpack.c.bf16 %v6092, %v6092
      %v6125 = vpack.c.bf16 %v6093, %v6093
      %v6126 = vpack.c.bf16 %v6094, %v6094
      %6127 = vst.msk [vmem:[#allocation7] sm:$0xf] %vm4167, %v6095
      %6128 = vst.msk [vmem:[#allocation7 + $0x4] sm:$0xf] %vm4167, %v6096
      %6129 = vst.msk [vmem:[#allocation7 + $0x8] sm:$0xf] %vm4167, %v6097
      %6130 = vst.msk [vmem:[#allocation7 + $0xc] sm:$0xf] %vm4167, %v6098
      %6131 = vst.msk [vmem:[#allocation7 + $0x10] sm:$0xf] %vm4167, %v6099
      %6132 = vst.msk [vmem:[#allocation7 + $0x14] sm:$0xf] %vm4167, %v6100
      %6133 = vst.msk [vmem:[#allocation7 + $0x18] sm:$0xf] %vm4167, %v6101
      %6134 = vst.msk [vmem:[#allocation7 + $0x1c] sm:$0xf] %vm4167, %v6102
      %6135 = vst.msk [vmem:[#allocation7 + $0x20] sm:$0xf] %vm4167, %v6103
      %6136 = vst.msk [vmem:[#allocation7 + $0x24] sm:$0xf] %vm4167, %v6104
      %6137 = vst.msk [vmem:[#allocation7 + $0x28] sm:$0xf] %vm4167, %v6105
      %6138 = vst.msk [vmem:[#allocation7 + $0x2c] sm:$0xf] %vm4167, %v6106
      %6139 = vst.msk [vmem:[#allocation7 + $0x30] sm:$0xf] %vm4167, %v6107
      %6140 = vst.msk [vmem:[#allocation7 + $0x34] sm:$0xf] %vm4167, %v6108
      %6141 = vst.msk [vmem:[#allocation7 + $0x38] sm:$0xf] %vm4167, %v6109
      %6142 = vst.msk [vmem:[#allocation7 + $0x3c] sm:$0xf] %vm4167, %v6110
      %6143 = vst.msk [vmem:[#allocation7 + $0x40] sm:$0xf] %vm4167, %v6111
      %6144 = vst.msk [vmem:[#allocation7 + $0x44] sm:$0xf] %vm4167, %v6112
      %6145 = vst.msk [vmem:[#allocation7 + $0x48] sm:$0xf] %vm4167, %v6113
      %6146 = vst.msk [vmem:[#allocation7 + $0x4c] sm:$0xf] %vm4167, %v6114
      %6147 = vst.msk [vmem:[#allocation7 + $0x50] sm:$0xf] %vm4167, %v6115
      %6148 = vst.msk [vmem:[#allocation7 + $0x54] sm:$0xf] %vm4167, %v6116
      %6149 = vst.msk [vmem:[#allocation7 + $0x58] sm:$0xf] %vm4167, %v6117
      %6150 = vst.msk [vmem:[#allocation7 + $0x5c] sm:$0xf] %vm4167, %v6118
      %6151 = vst.msk [vmem:[#allocation7 + $0x60] sm:$0xf] %vm4167, %v6119
      %6152 = vst.msk [vmem:[#allocation7 + $0x64] sm:$0xf] %vm4167, %v6120
      %6153 = vst.msk [vmem:[#allocation7 + $0x68] sm:$0xf] %vm4167, %v6121
      %6154 = vst.msk [vmem:[#allocation7 + $0x6c] sm:$0xf] %vm4167, %v6122
      %6155 = vst.msk [vmem:[#allocation7 + $0x70] sm:$0xf] %vm4167, %v6123
      %6156 = vst.msk [vmem:[#allocation7 + $0x74] sm:$0xf] %vm4167, %v6124
      %6157 = vst.msk [vmem:[#allocation7 + $0x78] sm:$0xf] %vm4167, %v6125
      %6158 = vst.msk [vmem:[#allocation7 + $0x7c] sm:$0xf] %vm4167, %v6126
      %v6159 = vld [vmem:[%s4200] sm:$0xff]
      %v6160 = vld [vmem:[%s4200 + $0x8] sm:$0xff]
      %v6161 = vld [vmem:[%s4200 + $0x10] sm:$0xff]
      %v6162 = vld [vmem:[%s4200 + $0x18] sm:$0xff]
      %v6163 = vld [vmem:[%s4200 + $0x20] sm:$0xff]
      %v6164 = vld [vmem:[%s4200 + $0x28] sm:$0xff]
      %v6165 = vld [vmem:[%s4200 + $0x30] sm:$0xff]
      %v6166 = vld [vmem:[%s4200 + $0x38] sm:$0xff]
      %v6167 = vld [vmem:[%s4200 + $0x40] sm:$0xff]
      %v6168 = vld [vmem:[%s4200 + $0x48] sm:$0xff]
      %v6169 = vld [vmem:[%s4200 + $0x50] sm:$0xff]
      %v6170 = vld [vmem:[%s4200 + $0x58] sm:$0xff]
      %v6171 = vld [vmem:[%s4200 + $0x60] sm:$0xff]
      %v6172 = vld [vmem:[%s4200 + $0x68] sm:$0xff]
      %v6173 = vld [vmem:[%s4200 + $0x70] sm:$0xff]
      %v6174 = vld [vmem:[%s4200 + $0x78] sm:$0xff]
      %v6175 = vld [vmem:[%s4200 + $0x80] sm:$0xff]
      %v6176 = vld [vmem:[%s4200 + $0x88] sm:$0xff]
      %v6177 = vld [vmem:[%s4200 + $0x90] sm:$0xff]
      %v6178 = vld [vmem:[%s4200 + $0x98] sm:$0xff]
      %v6179 = vld [vmem:[%s4200 + $0xa0] sm:$0xff]
      %v6180 = vld [vmem:[%s4200 + $0xa8] sm:$0xff]
      %v6181 = vld [vmem:[%s4200 + $0xb0] sm:$0xff]
      %v6182 = vld [vmem:[%s4200 + $0xb8] sm:$0xff]
      %v6183 = vld [vmem:[%s4200 + $0xc0] sm:$0xff]
      %v6184 = vld [vmem:[%s4200 + $0xc8] sm:$0xff]
      %v6185 = vld [vmem:[%s4200 + $0xd0] sm:$0xff]
      %v6186 = vld [vmem:[%s4200 + $0xd8] sm:$0xff]
      %v6187 = vld [vmem:[%s4200 + $0xe0] sm:$0xff]
      %v6188 = vld [vmem:[%s4200 + $0xe8] sm:$0xff]
      %v6189 = vld [vmem:[%s4200 + $0xf0] sm:$0xff]
      %v6190 = vld [vmem:[%s4200 + $0xf8] sm:$0xff]
      %v6191 = vpack.c.bf16 %v6159, %v6159
      %v6192 = vpack.c.bf16 %v6160, %v6160
      %v6193 = vpack.c.bf16 %v6161, %v6161
      %v6194 = vpack.c.bf16 %v6162, %v6162
      %v6195 = vpack.c.bf16 %v6163, %v6163
      %v6196 = vpack.c.bf16 %v6164, %v6164
      %v6197 = vpack.c.bf16 %v6165, %v6165
      %v6198 = vpack.c.bf16 %v6166, %v6166
      %v6199 = vpack.c.bf16 %v6167, %v6167
      %v6200 = vpack.c.bf16 %v6168, %v6168
      %v6201 = vpack.c.bf16 %v6169, %v6169
      %v6202 = vpack.c.bf16 %v6170, %v6170
      %v6203 = vpack.c.bf16 %v6171, %v6171
      %v6204 = vpack.c.bf16 %v6172, %v6172
      %v6205 = vpack.c.bf16 %v6173, %v6173
      %v6206 = vpack.c.bf16 %v6174, %v6174
      %v6207 = vpack.c.bf16 %v6175, %v6175
      %v6208 = vpack.c.bf16 %v6176, %v6176
      %v6209 = vpack.c.bf16 %v6177, %v6177
      %v6210 = vpack.c.bf16 %v6178, %v6178
      %v6211 = vpack.c.bf16 %v6179, %v6179
      %v6212 = vpack.c.bf16 %v6180, %v6180
      %v6213 = vpack.c.bf16 %v6181, %v6181
      %v6214 = vpack.c.bf16 %v6182, %v6182
      %v6215 = vpack.c.bf16 %v6183, %v6183
      %v6216 = vpack.c.bf16 %v6184, %v6184
      %v6217 = vpack.c.bf16 %v6185, %v6185
      %v6218 = vpack.c.bf16 %v6186, %v6186
      %v6219 = vpack.c.bf16 %v6187, %v6187
      %v6220 = vpack.c.bf16 %v6188, %v6188
      %v6221 = vpack.c.bf16 %v6189, %v6189
      %v6222 = vpack.c.bf16 %v6190, %v6190
      %6255 = vrot.lane.b32.xlu0 %v6191, 8
      %v6256 = vpop.permute.xlu0 %6255
      %6257 = vrot.lane.b32.xlu0 %v6192, 8
      %v6258 = vpop.permute.xlu0 %6257
      %6259 = vrot.lane.b32.xlu0 %v6193, 8
      %v6260 = vpop.permute.xlu0 %6259
      %6261 = vrot.lane.b32.xlu0 %v6194, 8
      %v6262 = vpop.permute.xlu0 %6261
      %6263 = vrot.lane.b32.xlu0 %v6195, 8
      %v6264 = vpop.permute.xlu0 %6263
      %6265 = vrot.lane.b32.xlu0 %v6196, 8
      %v6266 = vpop.permute.xlu0 %6265
      %6267 = vrot.lane.b32.xlu0 %v6197, 8
      %v6268 = vpop.permute.xlu0 %6267
      %6269 = vrot.lane.b32.xlu0 %v6198, 8
      %v6270 = vpop.permute.xlu0 %6269
      %6271 = vrot.lane.b32.xlu0 %v6199, 8
      %v6272 = vpop.permute.xlu0 %6271
      %6273 = vrot.lane.b32.xlu0 %v6200, 8
      %v6274 = vpop.permute.xlu0 %6273
      %6275 = vrot.lane.b32.xlu0 %v6201, 8
      %v6276 = vpop.permute.xlu0 %6275
      %6277 = vrot.lane.b32.xlu0 %v6202, 8
      %v6278 = vpop.permute.xlu0 %6277
      %6279 = vrot.lane.b32.xlu0 %v6203, 8
      %v6280 = vpop.permute.xlu0 %6279
      %6281 = vrot.lane.b32.xlu0 %v6204, 8
      %v6282 = vpop.permute.xlu0 %6281
      %6283 = vrot.lane.b32.xlu0 %v6205, 8
      %v6284 = vpop.permute.xlu0 %6283
      %6285 = vrot.lane.b32.xlu0 %v6206, 8
      %v6286 = vpop.permute.xlu0 %6285
      %6287 = vrot.lane.b32.xlu0 %v6207, 8
      %v6288 = vpop.permute.xlu0 %6287
      %6289 = vrot.lane.b32.xlu0 %v6208, 8
      %v6290 = vpop.permute.xlu0 %6289
      %6291 = vrot.lane.b32.xlu0 %v6209, 8
      %v6292 = vpop.permute.xlu0 %6291
      %6293 = vrot.lane.b32.xlu0 %v6210, 8
      %v6294 = vpop.permute.xlu0 %6293
      %6295 = vrot.lane.b32.xlu0 %v6211, 8
      %v6296 = vpop.permute.xlu0 %6295
      %6297 = vrot.lane.b32.xlu0 %v6212, 8
      %v6298 = vpop.permute.xlu0 %6297
      %6299 = vrot.lane.b32.xlu0 %v6213, 8
      %v6300 = vpop.permute.xlu0 %6299
      %6301 = vrot.lane.b32.xlu0 %v6214, 8
      %v6302 = vpop.permute.xlu0 %6301
      %6303 = vrot.lane.b32.xlu0 %v6215, 8
      %v6304 = vpop.permute.xlu0 %6303
      %6305 = vrot.lane.b32.xlu0 %v6216, 8
      %v6306 = vpop.permute.xlu0 %6305
      %6307 = vrot.lane.b32.xlu0 %v6217, 8
      %v6308 = vpop.permute.xlu0 %6307
      %6309 = vrot.lane.b32.xlu0 %v6218, 8
      %v6310 = vpop.permute.xlu0 %6309
      %6311 = vrot.lane.b32.xlu0 %v6219, 8
      %v6312 = vpop.permute.xlu0 %6311
      %6313 = vrot.lane.b32.xlu0 %v6220, 8
      %v6314 = vpop.permute.xlu0 %6313
      %6315 = vrot.lane.b32.xlu0 %v6221, 8
      %v6316 = vpop.permute.xlu0 %6315
      %6317 = vrot.lane.b32.xlu0 %v6222, 8
      %v6318 = vpop.permute.xlu0 %6317
      %6351 = vst.msk [vmem:[#allocation7] sm:$0xf] %vm4393, %v6256
      %6352 = vst.msk [vmem:[#allocation7 + $0x4] sm:$0xf] %vm4393, %v6258
      %6353 = vst.msk [vmem:[#allocation7 + $0x8] sm:$0xf] %vm4393, %v6260
      %6354 = vst.msk [vmem:[#allocation7 + $0xc] sm:$0xf] %vm4393, %v6262
      %6355 = vst.msk [vmem:[#allocation7 + $0x10] sm:$0xf] %vm4393, %v6264
      %6356 = vst.msk [vmem:[#allocation7 + $0x14] sm:$0xf] %vm4393, %v6266
      %6357 = vst.msk [vmem:[#allocation7 + $0x18] sm:$0xf] %vm4393, %v6268
      %6358 = vst.msk [vmem:[#allocation7 + $0x1c] sm:$0xf] %vm4393, %v6270
      %6359 = vst.msk [vmem:[#allocation7 + $0x20] sm:$0xf] %vm4393, %v6272
      %6360 = vst.msk [vmem:[#allocation7 + $0x24] sm:$0xf] %vm4393, %v6274
      %6361 = vst.msk [vmem:[#allocation7 + $0x28] sm:$0xf] %vm4393, %v6276
      %6362 = vst.msk [vmem:[#allocation7 + $0x2c] sm:$0xf] %vm4393, %v6278
      %6363 = vst.msk [vmem:[#allocation7 + $0x30] sm:$0xf] %vm4393, %v6280
      %6364 = vst.msk [vmem:[#allocation7 + $0x34] sm:$0xf] %vm4393, %v6282
      %6365 = vst.msk [vmem:[#allocation7 + $0x38] sm:$0xf] %vm4393, %v6284
      %6366 = vst.msk [vmem:[#allocation7 + $0x3c] sm:$0xf] %vm4393, %v6286
      %6367 = vst.msk [vmem:[#allocation7 + $0x40] sm:$0xf] %vm4393, %v6288
      %6368 = vst.msk [vmem:[#allocation7 + $0x44] sm:$0xf] %vm4393, %v6290
      %6369 = vst.msk [vmem:[#allocation7 + $0x48] sm:$0xf] %vm4393, %v6292
      %6370 = vst.msk [vmem:[#allocation7 + $0x4c] sm:$0xf] %vm4393, %v6294
      %6371 = vst.msk [vmem:[#allocation7 + $0x50] sm:$0xf] %vm4393, %v6296
      %6372 = vst.msk [vmem:[#allocation7 + $0x54] sm:$0xf] %vm4393, %v6298
      %6373 = vst.msk [vmem:[#allocation7 + $0x58] sm:$0xf] %vm4393, %v6300
      %6374 = vst.msk [vmem:[#allocation7 + $0x5c] sm:$0xf] %vm4393, %v6302
      %6375 = vst.msk [vmem:[#allocation7 + $0x60] sm:$0xf] %vm4393, %v6304
      %6376 = vst.msk [vmem:[#allocation7 + $0x64] sm:$0xf] %vm4393, %v6306
      %6377 = vst.msk [vmem:[#allocation7 + $0x68] sm:$0xf] %vm4393, %v6308
      %6378 = vst.msk [vmem:[#allocation7 + $0x6c] sm:$0xf] %vm4393, %v6310
      %6379 = vst.msk [vmem:[#allocation7 + $0x70] sm:$0xf] %vm4393, %v6312
      %6380 = vst.msk [vmem:[#allocation7 + $0x74] sm:$0xf] %vm4393, %v6314
      %6381 = vst.msk [vmem:[#allocation7 + $0x78] sm:$0xf] %vm4393, %v6316
      %6382 = vst.msk [vmem:[#allocation7 + $0x7c] sm:$0xf] %vm4393, %v6318
      %v6383 = vld [vmem:[%s4426] sm:$0xff]
      %v6384 = vld [vmem:[%s4426 + $0x8] sm:$0xff]
      %v6385 = vld [vmem:[%s4426 + $0x10] sm:$0xff]
      %v6386 = vld [vmem:[%s4426 + $0x18] sm:$0xff]
      %v6387 = vld [vmem:[%s4426 + $0x20] sm:$0xff]
      %v6388 = vld [vmem:[%s4426 + $0x28] sm:$0xff]
      %v6389 = vld [vmem:[%s4426 + $0x30] sm:$0xff]
      %v6390 = vld [vmem:[%s4426 + $0x38] sm:$0xff]
      %v6391 = vld [vmem:[%s4426 + $0x40] sm:$0xff]
      %v6392 = vld [vmem:[%s4426 + $0x48] sm:$0xff]
      %v6393 = vld [vmem:[%s4426 + $0x50] sm:$0xff]
      %v6394 = vld [vmem:[%s4426 + $0x58] sm:$0xff]
      %v6395 = vld [vmem:[%s4426 + $0x60] sm:$0xff]
      %v6396 = vld [vmem:[%s4426 + $0x68] sm:$0xff]
      %v6397 = vld [vmem:[%s4426 + $0x70] sm:$0xff]
      %v6398 = vld [vmem:[%s4426 + $0x78] sm:$0xff]
      %v6399 = vld [vmem:[%s4426 + $0x80] sm:$0xff]
      %v6400 = vld [vmem:[%s4426 + $0x88] sm:$0xff]
      %v6401 = vld [vmem:[%s4426 + $0x90] sm:$0xff]
      %v6402 = vld [vmem:[%s4426 + $0x98] sm:$0xff]
      %v6403 = vld [vmem:[%s4426 + $0xa0] sm:$0xff]
      %v6404 = vld [vmem:[%s4426 + $0xa8] sm:$0xff]
      %v6405 = vld [vmem:[%s4426 + $0xb0] sm:$0xff]
      %v6406 = vld [vmem:[%s4426 + $0xb8] sm:$0xff]
      %v6407 = vld [vmem:[%s4426 + $0xc0] sm:$0xff]
      %v6408 = vld [vmem:[%s4426 + $0xc8] sm:$0xff]
      %v6409 = vld [vmem:[%s4426 + $0xd0] sm:$0xff]
      %v6410 = vld [vmem:[%s4426 + $0xd8] sm:$0xff]
      %v6411 = vld [vmem:[%s4426 + $0xe0] sm:$0xff]
      %v6412 = vld [vmem:[%s4426 + $0xe8] sm:$0xff]
      %v6413 = vld [vmem:[%s4426 + $0xf0] sm:$0xff]
      %v6414 = vld [vmem:[%s4426 + $0xf8] sm:$0xff]
      %v6415 = vpack.c.bf16 %v6383, %v6383
      %v6416 = vpack.c.bf16 %v6384, %v6384
      %v6417 = vpack.c.bf16 %v6385, %v6385
      %v6418 = vpack.c.bf16 %v6386, %v6386
      %v6419 = vpack.c.bf16 %v6387, %v6387
      %v6420 = vpack.c.bf16 %v6388, %v6388
      %v6421 = vpack.c.bf16 %v6389, %v6389
      %v6422 = vpack.c.bf16 %v6390, %v6390
      %v6423 = vpack.c.bf16 %v6391, %v6391
      %v6424 = vpack.c.bf16 %v6392, %v6392
      %v6425 = vpack.c.bf16 %v6393, %v6393
      %v6426 = vpack.c.bf16 %v6394, %v6394
      %v6427 = vpack.c.bf16 %v6395, %v6395
      %v6428 = vpack.c.bf16 %v6396, %v6396
      %v6429 = vpack.c.bf16 %v6397, %v6397
      %v6430 = vpack.c.bf16 %v6398, %v6398
      %v6431 = vpack.c.bf16 %v6399, %v6399
      %v6432 = vpack.c.bf16 %v6400, %v6400
      %v6433 = vpack.c.bf16 %v6401, %v6401
      %v6434 = vpack.c.bf16 %v6402, %v6402
      %v6435 = vpack.c.bf16 %v6403, %v6403
      %v6436 = vpack.c.bf16 %v6404, %v6404
      %v6437 = vpack.c.bf16 %v6405, %v6405
      %v6438 = vpack.c.bf16 %v6406, %v6406
      %v6439 = vpack.c.bf16 %v6407, %v6407
      %v6440 = vpack.c.bf16 %v6408, %v6408
      %v6441 = vpack.c.bf16 %v6409, %v6409
      %v6442 = vpack.c.bf16 %v6410, %v6410
      %v6443 = vpack.c.bf16 %v6411, %v6411
      %v6444 = vpack.c.bf16 %v6412, %v6412
      %v6445 = vpack.c.bf16 %v6413, %v6413
      %v6446 = vpack.c.bf16 %v6414, %v6414
      %6479 = vrot.lane.b32.xlu0 %v6415, 16
      %v6480 = vpop.permute.xlu0 %6479
      %6481 = vrot.lane.b32.xlu0 %v6416, 16
      %v6482 = vpop.permute.xlu0 %6481
      %6483 = vrot.lane.b32.xlu0 %v6417, 16
      %v6484 = vpop.permute.xlu0 %6483
      %6485 = vrot.lane.b32.xlu0 %v6418, 16
      %v6486 = vpop.permute.xlu0 %6485
      %6487 = vrot.lane.b32.xlu0 %v6419, 16
      %v6488 = vpop.permute.xlu0 %6487
      %6489 = vrot.lane.b32.xlu0 %v6420, 16
      %v6490 = vpop.permute.xlu0 %6489
      %6491 = vrot.lane.b32.xlu0 %v6421, 16
      %v6492 = vpop.permute.xlu0 %6491
      %6493 = vrot.lane.b32.xlu0 %v6422, 16
      %v6494 = vpop.permute.xlu0 %6493
      %6495 = vrot.lane.b32.xlu0 %v6423, 16
      %v6496 = vpop.permute.xlu0 %6495
      %6497 = vrot.lane.b32.xlu0 %v6424, 16
      %v6498 = vpop.permute.xlu0 %6497
      %6499 = vrot.lane.b32.xlu0 %v6425, 16
      %v6500 = vpop.permute.xlu0 %6499
      %6501 = vrot.lane.b32.xlu0 %v6426, 16
      %v6502 = vpop.permute.xlu0 %6501
      %6503 = vrot.lane.b32.xlu0 %v6427, 16
      %v6504 = vpop.permute.xlu0 %6503
      %6505 = vrot.lane.b32.xlu0 %v6428, 16
      %v6506 = vpop.permute.xlu0 %6505
      %6507 = vrot.lane.b32.xlu0 %v6429, 16
      %v6508 = vpop.permute.xlu0 %6507
      %6509 = vrot.lane.b32.xlu0 %v6430, 16
      %v6510 = vpop.permute.xlu0 %6509
      %6511 = vrot.lane.b32.xlu0 %v6431, 16
      %v6512 = vpop.permute.xlu0 %6511
      %6513 = vrot.lane.b32.xlu0 %v6432, 16
      %v6514 = vpop.permute.xlu0 %6513
      %6515 = vrot.lane.b32.xlu0 %v6433, 16
      %v6516 = vpop.permute.xlu0 %6515
      %6517 = vrot.lane.b32.xlu0 %v6434, 16
      %v6518 = vpop.permute.xlu0 %6517
      %6519 = vrot.lane.b32.xlu0 %v6435, 16
      %v6520 = vpop.permute.xlu0 %6519
      %6521 = vrot.lane.b32.xlu0 %v6436, 16
      %v6522 = vpop.permute.xlu0 %6521
      %6523 = vrot.lane.b32.xlu0 %v6437, 16
      %v6524 = vpop.permute.xlu0 %6523
      %6525 = vrot.lane.b32.xlu0 %v6438, 16
      %v6526 = vpop.permute.xlu0 %6525
      %6527 = vrot.lane.b32.xlu0 %v6439, 16
      %v6528 = vpop.permute.xlu0 %6527
      %6529 = vrot.lane.b32.xlu0 %v6440, 16
      %v6530 = vpop.permute.xlu0 %6529
      %6531 = vrot.lane.b32.xlu0 %v6441, 16
      %v6532 = vpop.permute.xlu0 %6531
      %6533 = vrot.lane.b32.xlu0 %v6442, 16
      %v6534 = vpop.permute.xlu0 %6533
      %6535 = vrot.lane.b32.xlu0 %v6443, 16
      %v6536 = vpop.permute.xlu0 %6535
      %6537 = vrot.lane.b32.xlu0 %v6444, 16
      %v6538 = vpop.permute.xlu0 %6537
      %6539 = vrot.lane.b32.xlu0 %v6445, 16
      %v6540 = vpop.permute.xlu0 %6539
      %6541 = vrot.lane.b32.xlu0 %v6446, 16
      %v6542 = vpop.permute.xlu0 %6541
      %6575 = vst.msk [vmem:[#allocation7] sm:$0xf] %vm4619, %v6480
      %6576 = vst.msk [vmem:[#allocation7 + $0x4] sm:$0xf] %vm4619, %v6482
      %6577 = vst.msk [vmem:[#allocation7 + $0x8] sm:$0xf] %vm4619, %v6484
      %6578 = vst.msk [vmem:[#allocation7 + $0xc] sm:$0xf] %vm4619, %v6486
      %6579 = vst.msk [vmem:[#allocation7 + $0x10] sm:$0xf] %vm4619, %v6488
      %6580 = vst.msk [vmem:[#allocation7 + $0x14] sm:$0xf] %vm4619, %v6490
      %6581 = vst.msk [vmem:[#allocation7 + $0x18] sm:$0xf] %vm4619, %v6492
      %6582 = vst.msk [vmem:[#allocation7 + $0x1c] sm:$0xf] %vm4619, %v6494
      %6583 = vst.msk [vmem:[#allocation7 + $0x20] sm:$0xf] %vm4619, %v6496
      %6584 = vst.msk [vmem:[#allocation7 + $0x24] sm:$0xf] %vm4619, %v6498
      %6585 = vst.msk [vmem:[#allocation7 + $0x28] sm:$0xf] %vm4619, %v6500
      %6586 = vst.msk [vmem:[#allocation7 + $0x2c] sm:$0xf] %vm4619, %v6502
      %6587 = vst.msk [vmem:[#allocation7 + $0x30] sm:$0xf] %vm4619, %v6504
      %6588 = vst.msk [vmem:[#allocation7 + $0x34] sm:$0xf] %vm4619, %v6506
      %6589 = vst.msk [vmem:[#allocation7 + $0x38] sm:$0xf] %vm4619, %v6508
      %6590 = vst.msk [vmem:[#allocation7 + $0x3c] sm:$0xf] %vm4619, %v6510
      %6591 = vst.msk [vmem:[#allocation7 + $0x40] sm:$0xf] %vm4619, %v6512
      %6592 = vst.msk [vmem:[#allocation7 + $0x44] sm:$0xf] %vm4619, %v6514
      %6593 = vst.msk [vmem:[#allocation7 + $0x48] sm:$0xf] %vm4619, %v6516
      %6594 = vst.msk [vmem:[#allocation7 + $0x4c] sm:$0xf] %vm4619, %v6518
      %6595 = vst.msk [vmem:[#allocation7 + $0x50] sm:$0xf] %vm4619, %v6520
      %6596 = vst.msk [vmem:[#allocation7 + $0x54] sm:$0xf] %vm4619, %v6522
      %6597 = vst.msk [vmem:[#allocation7 + $0x58] sm:$0xf] %vm4619, %v6524
      %6598 = vst.msk [vmem:[#allocation7 + $0x5c] sm:$0xf] %vm4619, %v6526
      %6599 = vst.msk [vmem:[#allocation7 + $0x60] sm:$0xf] %vm4619, %v6528
      %6600 = vst.msk [vmem:[#allocation7 + $0x64] sm:$0xf] %vm4619, %v6530
      %6601 = vst.msk [vmem:[#allocation7 + $0x68] sm:$0xf] %vm4619, %v6532
      %6602 = vst.msk [vmem:[#allocation7 + $0x6c] sm:$0xf] %vm4619, %v6534
      %6603 = vst.msk [vmem:[#allocation7 + $0x70] sm:$0xf] %vm4619, %v6536
      %6604 = vst.msk [vmem:[#allocation7 + $0x74] sm:$0xf] %vm4619, %v6538
      %6605 = vst.msk [vmem:[#allocation7 + $0x78] sm:$0xf] %vm4619, %v6540
      %6606 = vst.msk [vmem:[#allocation7 + $0x7c] sm:$0xf] %vm4619, %v6542
      %v6607 = vld [vmem:[#allocation8] sm:$0xff]
      %v6608 = vld [vmem:[#allocation8 + $0x8] sm:$0xff]
      %v6609 = vld [vmem:[#allocation8 + $0x10] sm:$0xff]
      %v6610 = vld [vmem:[#allocation8 + $0x18] sm:$0xff]
      %v6611 = vld [vmem:[#allocation8 + $0x20] sm:$0xff]
      %v6612 = vld [vmem:[#allocation8 + $0x28] sm:$0xff]
      %v6613 = vld [vmem:[#allocation8 + $0x30] sm:$0xff]
      %v6614 = vld [vmem:[#allocation8 + $0x38] sm:$0xff]
      %v6615 = vld [vmem:[#allocation8 + $0x40] sm:$0xff]
      %v6616 = vld [vmem:[#allocation8 + $0x48] sm:$0xff]
      %v6617 = vld [vmem:[#allocation8 + $0x50] sm:$0xff]
      %v6618 = vld [vmem:[#allocation8 + $0x58] sm:$0xff]
      %v6619 = vld [vmem:[#allocation8 + $0x60] sm:$0xff]
      %v6620 = vld [vmem:[#allocation8 + $0x68] sm:$0xff]
      %v6621 = vld [vmem:[#allocation8 + $0x70] sm:$0xff]
      %v6622 = vld [vmem:[#allocation8 + $0x78] sm:$0xff]
      %v6623 = vld [vmem:[#allocation8 + $0x80] sm:$0xff]
      %v6624 = vld [vmem:[#allocation8 + $0x88] sm:$0xff]
      %v6625 = vld [vmem:[#allocation8 + $0x90] sm:$0xff]
      %v6626 = vld [vmem:[#allocation8 + $0x98] sm:$0xff]
      %v6627 = vld [vmem:[#allocation8 + $0xa0] sm:$0xff]
      %v6628 = vld [vmem:[#allocation8 + $0xa8] sm:$0xff]
      %v6629 = vld [vmem:[#allocation8 + $0xb0] sm:$0xff]
      %v6630 = vld [vmem:[#allocation8 + $0xb8] sm:$0xff]
      %v6631 = vld [vmem:[#allocation8 + $0xc0] sm:$0xff]
      %v6632 = vld [vmem:[#allocation8 + $0xc8] sm:$0xff]
      %v6633 = vld [vmem:[#allocation8 + $0xd0] sm:$0xff]
      %v6634 = vld [vmem:[#allocation8 + $0xd8] sm:$0xff]
      %v6635 = vld [vmem:[#allocation8 + $0xe0] sm:$0xff]
      %v6636 = vld [vmem:[#allocation8 + $0xe8] sm:$0xff]
      %v6637 = vld [vmem:[#allocation8 + $0xf0] sm:$0xff]
      %v6638 = vld [vmem:[#allocation8 + $0xf8] sm:$0xff]
      %v6639 = vld [vmem:[#allocation7] sm:$0xf]
      %v6640 = vld [vmem:[#allocation7 + $0x4] sm:$0xf]
      %v6641 = vld [vmem:[#allocation7 + $0x8] sm:$0xf]
      %v6642 = vld [vmem:[#allocation7 + $0xc] sm:$0xf]
      %v6643 = vld [vmem:[#allocation7 + $0x10] sm:$0xf]
      %v6644 = vld [vmem:[#allocation7 + $0x14] sm:$0xf]
      %v6645 = vld [vmem:[#allocation7 + $0x18] sm:$0xf]
      %v6646 = vld [vmem:[#allocation7 + $0x1c] sm:$0xf]
      %v6647 = vld [vmem:[#allocation7 + $0x20] sm:$0xf]
      %v6648 = vld [vmem:[#allocation7 + $0x24] sm:$0xf]
      %v6649 = vld [vmem:[#allocation7 + $0x28] sm:$0xf]
      %v6650 = vld [vmem:[#allocation7 + $0x2c] sm:$0xf]
      %v6651 = vld [vmem:[#allocation7 + $0x30] sm:$0xf]
      %v6652 = vld [vmem:[#allocation7 + $0x34] sm:$0xf]
      %v6653 = vld [vmem:[#allocation7 + $0x38] sm:$0xf]
      %v6654 = vld [vmem:[#allocation7 + $0x3c] sm:$0xf]
      %v6655 = vld [vmem:[#allocation7 + $0x40] sm:$0xf]
      %v6656 = vld [vmem:[#allocation7 + $0x44] sm:$0xf]
      %v6657 = vld [vmem:[#allocation7 + $0x48] sm:$0xf]
      %v6658 = vld [vmem:[#allocation7 + $0x4c] sm:$0xf]
      %v6659 = vld [vmem:[#allocation7 + $0x50] sm:$0xf]
      %v6660 = vld [vmem:[#allocation7 + $0x54] sm:$0xf]
      %v6661 = vld [vmem:[#allocation7 + $0x58] sm:$0xf]
      %v6662 = vld [vmem:[#allocation7 + $0x5c] sm:$0xf]
      %v6663 = vld [vmem:[#allocation7 + $0x60] sm:$0xf]
      %v6664 = vld [vmem:[#allocation7 + $0x64] sm:$0xf]
      %v6665 = vld [vmem:[#allocation7 + $0x68] sm:$0xf]
      %v6666 = vld [vmem:[#allocation7 + $0x6c] sm:$0xf]
      %v6667 = vld [vmem:[#allocation7 + $0x70] sm:$0xf]
      %v6668 = vld [vmem:[#allocation7 + $0x74] sm:$0xf]
      %v6669 = vld [vmem:[#allocation7 + $0x78] sm:$0xf]
      %v6670 = vld [vmem:[#allocation7 + $0x7c] sm:$0xf]
      %s6671 = scalar_lea.vmem %s3, 24
      %v6672 = vld [vmem:[%s6671] sm:$0xf]
      %v6673 = vld [vmem:[%s6671 + $0x4] sm:$0xf]
      %v6674 = vld [vmem:[%s6671 + $0x8] sm:$0xf]
      %v6707 = vunpack.c.l.b16 %v6639
      %v6708 = vunpack.c.l.b16 %v6640
      %v6709 = vunpack.c.l.b16 %v6641
      %v6710 = vunpack.c.l.b16 %v6642
      %v6711 = vunpack.c.l.b16 %v6643
      %v6712 = vunpack.c.l.b16 %v6644
      %v6713 = vunpack.c.l.b16 %v6645
      %v6714 = vunpack.c.l.b16 %v6646
      %v6715 = vunpack.c.l.b16 %v6647
      %v6716 = vunpack.c.l.b16 %v6648
      %v6717 = vunpack.c.l.b16 %v6649
      %v6718 = vunpack.c.l.b16 %v6650
      %v6719 = vunpack.c.l.b16 %v6651
      %v6720 = vunpack.c.l.b16 %v6652
      %v6721 = vunpack.c.l.b16 %v6653
      %v6722 = vunpack.c.l.b16 %v6654
      %v6723 = vunpack.c.l.b16 %v6655
      %v6724 = vunpack.c.l.b16 %v6656
      %v6725 = vunpack.c.l.b16 %v6657
      %v6726 = vunpack.c.l.b16 %v6658
      %v6727 = vunpack.c.l.b16 %v6659
      %v6728 = vunpack.c.l.b16 %v6660
      %v6729 = vunpack.c.l.b16 %v6661
      %v6730 = vunpack.c.l.b16 %v6662
      %v6731 = vunpack.c.l.b16 %v6663
      %v6732 = vunpack.c.l.b16 %v6664
      %v6733 = vunpack.c.l.b16 %v6665
      %v6734 = vunpack.c.l.b16 %v6666
      %v6735 = vunpack.c.l.b16 %v6667
      %v6736 = vunpack.c.l.b16 %v6668
      %v6737 = vunpack.c.l.b16 %v6669
      %v6738 = vunpack.c.l.b16 %v6670
      %v6739 = vpack.c.b16 %v6708, %v6707
      %v6740 = vpack.c.b16 %v6710, %v6709
      %v6741 = vpack.c.b16 %v6712, %v6711
      %v6742 = vpack.c.b16 %v6714, %v6713
      %v6743 = vpack.c.b16 %v6716, %v6715
      %v6744 = vpack.c.b16 %v6718, %v6717
      %v6745 = vpack.c.b16 %v6720, %v6719
      %v6746 = vpack.c.b16 %v6722, %v6721
      %v6747 = vpack.c.b16 %v6724, %v6723
      %v6748 = vpack.c.b16 %v6726, %v6725
      %v6749 = vpack.c.b16 %v6728, %v6727
      %v6750 = vpack.c.b16 %v6730, %v6729
      %v6751 = vpack.c.b16 %v6732, %v6731
      %v6752 = vpack.c.b16 %v6734, %v6733
      %v6753 = vpack.c.b16 %v6736, %v6735
      %v6754 = vpack.c.b16 %v6738, %v6737
      %v6758 = vunpack.c.l.b16 %v6672
      %v6759 = vunpack.c.l.b16 %v6673
      %v6760 = vunpack.c.l.b16 %v6674
      %v6761 = vpack.c.b16 %v6759, %v6758
      %v6762 = vpack.c.b16 %v6760, %v6760
      %v6765 = vsel %vm4808, %v6739, 0
      %v6768 = vsel %vm4808, %v6740, 0
      %v6771 = vsel %vm4808, %v6741, 0
      %v6774 = vsel %vm4808, %v6742, 0
      %v6777 = vsel %vm4808, %v6743, 0
      %v6780 = vsel %vm4808, %v6744, 0
      %v6783 = vsel %vm4808, %v6745, 0
      %v6786 = vsel %vm4808, %v6746, 0
      %v6789 = vsel %vm4808, %v6747, 0
      %v6792 = vsel %vm4808, %v6748, 0
      %v6795 = vsel %vm4808, %v6749, 0
      %v6798 = vsel %vm4808, %v6750, 0
      %v6801 = vsel %vm4808, %v6751, 0
      %v6804 = vsel %vm4808, %v6752, 0
      %v6807 = vsel %vm4808, %v6753, 0
      %v6810 = vsel %vm4808, %v6754, 0
      %v6813 = vsel %vm4857, %v6762, 0
      %6815 = vmatpush.bf16.msra.mxu0 0
      %6816 = vmatpush.bf16.msra.mxu0 0
      %6817 = vmatpush.bf16.msra.mxu0 0
      %6818 = vmatpush.bf16.msra.mxu0 0
      %6819 = vmatpush.bf16.msra.mxu0 0
      %6820 = vmatpush.bf16.msra.mxu0 0
      %6821 = vmatpush.bf16.msra.mxu0 %v6813
      %6822 = vmatpush.bf16.msra.mxu0 %v6761
      %6823 = vmatmul.bf16.gmra.mxu0 %v6765
      %v6824 = vpop.f32.mrf.mxu0
      %v6825 = vadd.f32 0.0, %v6824
      %v6826 = vpop.f32.mrf.mxu0
      %v6827 = vadd.f32 0.0, %v6826
      %6828 = vmatmul.bf16.gmra.mxu0 %v6768
      %v6829 = vpop.f32.mrf.mxu0
      %v6830 = vadd.f32 0.0, %v6829
      %v6831 = vpop.f32.mrf.mxu0
      %v6832 = vadd.f32 0.0, %v6831
      %6833 = vmatmul.bf16.gmra.mxu0 %v6771
      %v6834 = vpop.f32.mrf.mxu0
      %v6835 = vadd.f32 0.0, %v6834
      %v6836 = vpop.f32.mrf.mxu0
      %v6837 = vadd.f32 0.0, %v6836
      %6838 = vmatmul.bf16.gmra.mxu0 %v6774
      %v6839 = vpop.f32.mrf.mxu0
      %v6840 = vadd.f32 0.0, %v6839
      %v6841 = vpop.f32.mrf.mxu0
      %v6842 = vadd.f32 0.0, %v6841
      %6843 = vmatmul.bf16.gmra.mxu0 %v6777
      %v6844 = vpop.f32.mrf.mxu0
      %v6845 = vadd.f32 0.0, %v6844
      %v6846 = vpop.f32.mrf.mxu0
      %v6847 = vadd.f32 0.0, %v6846
      %6848 = vmatmul.bf16.gmra.mxu0 %v6780
      %v6849 = vpop.f32.mrf.mxu0
      %v6850 = vadd.f32 0.0, %v6849
      %v6851 = vpop.f32.mrf.mxu0
      %v6852 = vadd.f32 0.0, %v6851
      %6853 = vmatmul.bf16.gmra.mxu0 %v6783
      %v6854 = vpop.f32.mrf.mxu0
      %v6855 = vadd.f32 0.0, %v6854
      %v6856 = vpop.f32.mrf.mxu0
      %v6857 = vadd.f32 0.0, %v6856
      %6858 = vmatmul.bf16.gmra.mxu0 %v6786
      %v6859 = vpop.f32.mrf.mxu0
      %v6860 = vadd.f32 0.0, %v6859
      %v6861 = vpop.f32.mrf.mxu0
      %v6862 = vadd.f32 0.0, %v6861
      %6863 = vmatmul.bf16.gmra.mxu0 %v6789
      %v6864 = vpop.f32.mrf.mxu0
      %v6865 = vadd.f32 0.0, %v6864
      %v6866 = vpop.f32.mrf.mxu0
      %v6867 = vadd.f32 0.0, %v6866
      %6868 = vmatmul.bf16.gmra.mxu0 %v6792
      %v6869 = vpop.f32.mrf.mxu0
      %v6870 = vadd.f32 0.0, %v6869
      %v6871 = vpop.f32.mrf.mxu0
      %v6872 = vadd.f32 0.0, %v6871
      %6873 = vmatmul.bf16.gmra.mxu0 %v6795
      %v6874 = vpop.f32.mrf.mxu0
      %v6875 = vadd.f32 0.0, %v6874
      %v6876 = vpop.f32.mrf.mxu0
      %v6877 = vadd.f32 0.0, %v6876
      %6878 = vmatmul.bf16.gmra.mxu0 %v6798
      %v6879 = vpop.f32.mrf.mxu0
      %v6880 = vadd.f32 0.0, %v6879
      %v6881 = vpop.f32.mrf.mxu0
      %v6882 = vadd.f32 0.0, %v6881
      %6883 = vmatmul.bf16.gmra.mxu0 %v6801
      %v6884 = vpop.f32.mrf.mxu0
      %v6885 = vadd.f32 0.0, %v6884
      %v6886 = vpop.f32.mrf.mxu0
      %v6887 = vadd.f32 0.0, %v6886
      %6888 = vmatmul.bf16.gmra.mxu0 %v6804
      %v6889 = vpop.f32.mrf.mxu0
      %v6890 = vadd.f32 0.0, %v6889
      %v6891 = vpop.f32.mrf.mxu0
      %v6892 = vadd.f32 0.0, %v6891
      %6893 = vmatmul.bf16.gmra.mxu0 %v6807
      %v6894 = vpop.f32.mrf.mxu0
      %v6895 = vadd.f32 0.0, %v6894
      %v6896 = vpop.f32.mrf.mxu0
      %v6897 = vadd.f32 0.0, %v6896
      %6898 = vmatmul.bf16.gmra.mxu0 %v6810
      %v6899 = vpop.f32.mrf.mxu0
      %v6900 = vadd.f32 0.0, %v6899
      %v6901 = vpop.f32.mrf.mxu0
      %v6902 = vadd.f32 0.0, %v6901
      %6903 = vdwg.mxu0
      %v6904 = vadd.f32 %v6607, %v6825
      %v6905 = vadd.f32 %v6608, %v6827
      %v6906 = vadd.f32 %v6609, %v6830
      %v6907 = vadd.f32 %v6610, %v6832
      %v6908 = vadd.f32 %v6611, %v6835
      %v6909 = vadd.f32 %v6612, %v6837
      %v6910 = vadd.f32 %v6613, %v6840
      %v6911 = vadd.f32 %v6614, %v6842
      %v6912 = vadd.f32 %v6615, %v6845
      %v6913 = vadd.f32 %v6616, %v6847
      %v6914 = vadd.f32 %v6617, %v6850
      %v6915 = vadd.f32 %v6618, %v6852
      %v6916 = vadd.f32 %v6619, %v6855
      %v6917 = vadd.f32 %v6620, %v6857
      %v6918 = vadd.f32 %v6621, %v6860
      %v6919 = vadd.f32 %v6622, %v6862
      %v6920 = vadd.f32 %v6623, %v6865
      %v6921 = vadd.f32 %v6624, %v6867
      %v6922 = vadd.f32 %v6625, %v6870
      %v6923 = vadd.f32 %v6626, %v6872
      %v6924 = vadd.f32 %v6627, %v6875
      %v6925 = vadd.f32 %v6628, %v6877
      %v6926 = vadd.f32 %v6629, %v6880
      %v6927 = vadd.f32 %v6630, %v6882
      %v6928 = vadd.f32 %v6631, %v6885
      %v6929 = vadd.f32 %v6632, %v6887
      %v6930 = vadd.f32 %v6633, %v6890
      %v6931 = vadd.f32 %v6634, %v6892
      %v6932 = vadd.f32 %v6635, %v6895
      %v6933 = vadd.f32 %v6636, %v6897
      %v6934 = vadd.f32 %v6637, %v6900
      %v6935 = vadd.f32 %v6638, %v6902
      %6936 = vst.msk [vmem:[#allocation8] sm:$0xff] %vm340, %v6904
      %6937 = vst.msk [vmem:[#allocation8 + $0x8] sm:$0xff] %vm340, %v6905
      %6938 = vst.msk [vmem:[#allocation8 + $0x10] sm:$0xff] %vm340, %v6906
      %6939 = vst.msk [vmem:[#allocation8 + $0x18] sm:$0xff] %vm340, %v6907
      %6940 = vst.msk [vmem:[#allocation8 + $0x20] sm:$0xff] %vm340, %v6908
      %6941 = vst.msk [vmem:[#allocation8 + $0x28] sm:$0xff] %vm340, %v6909
      %6942 = vst.msk [vmem:[#allocation8 + $0x30] sm:$0xff] %vm340, %v6910
      %6943 = vst.msk [vmem:[#allocation8 + $0x38] sm:$0xff] %vm340, %v6911
      %6944 = vst.msk [vmem:[#allocation8 + $0x40] sm:$0xff] %vm340, %v6912
      %6945 = vst.msk [vmem:[#allocation8 + $0x48] sm:$0xff] %vm340, %v6913
      %6946 = vst.msk [vmem:[#allocation8 + $0x50] sm:$0xff] %vm340, %v6914
      %6947 = vst.msk [vmem:[#allocation8 + $0x58] sm:$0xff] %vm340, %v6915
      %6948 = vst.msk [vmem:[#allocation8 + $0x60] sm:$0xff] %vm340, %v6916
      %6949 = vst.msk [vmem:[#allocation8 + $0x68] sm:$0xff] %vm340, %v6917
      %6950 = vst.msk [vmem:[#allocation8 + $0x70] sm:$0xff] %vm340, %v6918
      %6951 = vst.msk [vmem:[#allocation8 + $0x78] sm:$0xff] %vm340, %v6919
      %6952 = vst.msk [vmem:[#allocation8 + $0x80] sm:$0xff] %vm340, %v6920
      %6953 = vst.msk [vmem:[#allocation8 + $0x88] sm:$0xff] %vm340, %v6921
      %6954 = vst.msk [vmem:[#allocation8 + $0x90] sm:$0xff] %vm340, %v6922
      %6955 = vst.msk [vmem:[#allocation8 + $0x98] sm:$0xff] %vm340, %v6923
      %6956 = vst.msk [vmem:[#allocation8 + $0xa0] sm:$0xff] %vm340, %v6924
      %6957 = vst.msk [vmem:[#allocation8 + $0xa8] sm:$0xff] %vm340, %v6925
      %6958 = vst.msk [vmem:[#allocation8 + $0xb0] sm:$0xff] %vm340, %v6926
      %6959 = vst.msk [vmem:[#allocation8 + $0xb8] sm:$0xff] %vm340, %v6927
      %6960 = vst.msk [vmem:[#allocation8 + $0xc0] sm:$0xff] %vm340, %v6928
      %6961 = vst.msk [vmem:[#allocation8 + $0xc8] sm:$0xff] %vm340, %v6929
      %6962 = vst.msk [vmem:[#allocation8 + $0xd0] sm:$0xff] %vm340, %v6930
      %6963 = vst.msk [vmem:[#allocation8 + $0xd8] sm:$0xff] %vm340, %v6931
      %6964 = vst.msk [vmem:[#allocation8 + $0xe0] sm:$0xff] %vm340, %v6932
      %6965 = vst.msk [vmem:[#allocation8 + $0xe8] sm:$0xff] %vm340, %v6933
      %6966 = vst.msk [vmem:[#allocation8 + $0xf0] sm:$0xff] %vm340, %v6934
      %6967 = vst.msk [vmem:[#allocation8 + $0xf8] sm:$0xff] %vm340, %v6935
      %v6968 = vld [vmem:[#allocation8] sm:$0xff]
      %v6969 = vld [vmem:[#allocation8 + $0x8] sm:$0xff]
      %v6970 = vld [vmem:[#allocation8 + $0x10] sm:$0xff]
      %v6971 = vld [vmem:[#allocation8 + $0x18] sm:$0xff]
      %v6972 = vld [vmem:[#allocation8 + $0x20] sm:$0xff]
      %v6973 = vld [vmem:[#allocation8 + $0x28] sm:$0xff]
      %v6974 = vld [vmem:[#allocation8 + $0x30] sm:$0xff]
      %v6975 = vld [vmem:[#allocation8 + $0x38] sm:$0xff]
      %v6976 = vld [vmem:[#allocation8 + $0x40] sm:$0xff]
      %v6977 = vld [vmem:[#allocation8 + $0x48] sm:$0xff]
      %v6978 = vld [vmem:[#allocation8 + $0x50] sm:$0xff]
      %v6979 = vld [vmem:[#allocation8 + $0x58] sm:$0xff]
      %v6980 = vld [vmem:[#allocation8 + $0x60] sm:$0xff]
      %v6981 = vld [vmem:[#allocation8 + $0x68] sm:$0xff]
      %v6982 = vld [vmem:[#allocation8 + $0x70] sm:$0xff]
      %v6983 = vld [vmem:[#allocation8 + $0x78] sm:$0xff]
      %v6984 = vld [vmem:[#allocation8 + $0x80] sm:$0xff]
      %v6985 = vld [vmem:[#allocation8 + $0x88] sm:$0xff]
      %v6986 = vld [vmem:[#allocation8 + $0x90] sm:$0xff]
      %v6987 = vld [vmem:[#allocation8 + $0x98] sm:$0xff]
      %v6988 = vld [vmem:[#allocation8 + $0xa0] sm:$0xff]
      %v6989 = vld [vmem:[#allocation8 + $0xa8] sm:$0xff]
      %v6990 = vld [vmem:[#allocation8 + $0xb0] sm:$0xff]
      %v6991 = vld [vmem:[#allocation8 + $0xb8] sm:$0xff]
      %v6992 = vld [vmem:[#allocation8 + $0xc0] sm:$0xff]
      %v6993 = vld [vmem:[#allocation8 + $0xc8] sm:$0xff]
      %v6994 = vld [vmem:[#allocation8 + $0xd0] sm:$0xff]
      %v6995 = vld [vmem:[#allocation8 + $0xd8] sm:$0xff]
      %v6996 = vld [vmem:[#allocation8 + $0xe0] sm:$0xff]
      %v6997 = vld [vmem:[#allocation8 + $0xe8] sm:$0xff]
      %v6998 = vld [vmem:[#allocation8 + $0xf0] sm:$0xff]
      %v6999 = vld [vmem:[#allocation8 + $0xf8] sm:$0xff]
      %v7000 = vsel %vm340, %v6968, 0.0
      %v7001 = vsel %vm340, %v6969, 0.0
      %v7002 = vadd.f32 %v7000, %v7001
      %v7003 = vsel %vm340, %v6970, 0.0
      %v7004 = vadd.f32 %v7002, %v7003
      %v7005 = vsel %vm340, %v6971, 0.0
      %v7006 = vadd.f32 %v7004, %v7005
      %v7007 = vsel %vm340, %v6972, 0.0
      %v7008 = vadd.f32 %v7006, %v7007
      %v7009 = vsel %vm340, %v6973, 0.0
      %v7010 = vadd.f32 %v7008, %v7009
      %v7011 = vsel %vm340, %v6974, 0.0
      %v7012 = vadd.f32 %v7010, %v7011
      %v7013 = vsel %vm340, %v6975, 0.0
      %v7014 = vadd.f32 %v7012, %v7013
      %v7015 = vsel %vm340, %v6976, 0.0
      %v7016 = vadd.f32 %v7014, %v7015
      %v7017 = vsel %vm340, %v6977, 0.0
      %v7018 = vadd.f32 %v7016, %v7017
      %v7019 = vsel %vm340, %v6978, 0.0
      %v7020 = vadd.f32 %v7018, %v7019
      %v7021 = vsel %vm340, %v6979, 0.0
      %v7022 = vadd.f32 %v7020, %v7021
      %v7023 = vsel %vm340, %v6980, 0.0
      %v7024 = vadd.f32 %v7022, %v7023
      %v7025 = vsel %vm340, %v6981, 0.0
      %v7026 = vadd.f32 %v7024, %v7025
      %v7027 = vsel %vm340, %v6982, 0.0
      %v7028 = vadd.f32 %v7026, %v7027
      %v7029 = vsel %vm340, %v6983, 0.0
      %v7030 = vadd.f32 %v7028, %v7029
      %v7031 = vsel %vm340, %v6984, 0.0
      %v7032 = vadd.f32 %v7030, %v7031
      %v7033 = vsel %vm340, %v6985, 0.0
      %v7034 = vadd.f32 %v7032, %v7033
      %v7035 = vsel %vm340, %v6986, 0.0
      %v7036 = vadd.f32 %v7034, %v7035
      %v7037 = vsel %vm340, %v6987, 0.0
      %v7038 = vadd.f32 %v7036, %v7037
      %v7039 = vsel %vm340, %v6988, 0.0
      %v7040 = vadd.f32 %v7038, %v7039
      %v7041 = vsel %vm340, %v6989, 0.0
      %v7042 = vadd.f32 %v7040, %v7041
      %v7043 = vsel %vm340, %v6990, 0.0
      %v7044 = vadd.f32 %v7042, %v7043
      %v7045 = vsel %vm340, %v6991, 0.0
      %v7046 = vadd.f32 %v7044, %v7045
      %v7047 = vsel %vm340, %v6992, 0.0
      %v7048 = vadd.f32 %v7046, %v7047
      %v7049 = vsel %vm340, %v6993, 0.0
      %v7050 = vadd.f32 %v7048, %v7049
      %v7051 = vsel %vm340, %v6994, 0.0
      %v7052 = vadd.f32 %v7050, %v7051
      %v7053 = vsel %vm340, %v6995, 0.0
      %v7054 = vadd.f32 %v7052, %v7053
      %v7055 = vsel %vm340, %v6996, 0.0
      %v7056 = vadd.f32 %v7054, %v7055
      %v7057 = vsel %vm340, %v6997, 0.0
      %v7058 = vadd.f32 %v7056, %v7057
      %v7059 = vsel %vm340, %v6998, 0.0
      %v7060 = vadd.f32 %v7058, %v7059
      %v7061 = vsel %vm340, %v6999, 0.0
      %v7062 = vadd.f32 %v7060, %v7061
      %v7063 = vrot.slane %v7062, 4
      %v7064 = vadd.f32 %v7062, %v7063
      %v7065 = vrot.slane %v7064, 2
      %v7066 = vadd.f32 %v7064, %v7065
      %v7067 = vrot.slane %v7066, 1
      %v7068 = vadd.f32 %v7066, %v7067
      %v7069 = vmul.f32 %v7068, %v3700
      %v7070 = vsub.f32 %v6968, %v7069
      %v7071 = vsub.f32 %v6969, %v7069
      %v7072 = vsub.f32 %v6970, %v7069
      %v7073 = vsub.f32 %v6971, %v7069
      %v7074 = vsub.f32 %v6972, %v7069
      %v7075 = vsub.f32 %v6973, %v7069
      %v7076 = vsub.f32 %v6974, %v7069
      %v7077 = vsub.f32 %v6975, %v7069
      %v7078 = vsub.f32 %v6976, %v7069
      %v7079 = vsub.f32 %v6977, %v7069
      %v7080 = vsub.f32 %v6978, %v7069
      %v7081 = vsub.f32 %v6979, %v7069
      %v7082 = vsub.f32 %v6980, %v7069
      %v7083 = vsub.f32 %v6981, %v7069
      %v7084 = vsub.f32 %v6982, %v7069
      %v7085 = vsub.f32 %v6983, %v7069
      %v7086 = vsub.f32 %v6984, %v7069
      %v7087 = vsub.f32 %v6985, %v7069
      %v7088 = vsub.f32 %v6986, %v7069
      %v7089 = vsub.f32 %v6987, %v7069
      %v7090 = vsub.f32 %v6988, %v7069
      %v7091 = vsub.f32 %v6989, %v7069
      %v7092 = vsub.f32 %v6990, %v7069
      %v7093 = vsub.f32 %v6991, %v7069
      %v7094 = vsub.f32 %v6992, %v7069
      %v7095 = vsub.f32 %v6993, %v7069
      %v7096 = vsub.f32 %v6994, %v7069
      %v7097 = vsub.f32 %v6995, %v7069
      %v7098 = vsub.f32 %v6996, %v7069
      %v7099 = vsub.f32 %v6997, %v7069
      %v7100 = vsub.f32 %v6998, %v7069
      %v7101 = vsub.f32 %v6999, %v7069
      %v7102 = vmul.f32 %v7070, %v7070
      %v7103 = vmul.f32 %v7071, %v7071
      %v7104 = vmul.f32 %v7072, %v7072
      %v7105 = vmul.f32 %v7073, %v7073
      %v7106 = vmul.f32 %v7074, %v7074
      %v7107 = vmul.f32 %v7075, %v7075
      %v7108 = vmul.f32 %v7076, %v7076
      %v7109 = vmul.f32 %v7077, %v7077
      %v7110 = vmul.f32 %v7078, %v7078
      %v7111 = vmul.f32 %v7079, %v7079
      %v7112 = vmul.f32 %v7080, %v7080
      %v7113 = vmul.f32 %v7081, %v7081
      %v7114 = vmul.f32 %v7082, %v7082
      %v7115 = vmul.f32 %v7083, %v7083
      %v7116 = vmul.f32 %v7084, %v7084
      %v7117 = vmul.f32 %v7085, %v7085
      %v7118 = vmul.f32 %v7086, %v7086
      %v7119 = vmul.f32 %v7087, %v7087
      %v7120 = vmul.f32 %v7088, %v7088
      %v7121 = vmul.f32 %v7089, %v7089
      %v7122 = vmul.f32 %v7090, %v7090
      %v7123 = vmul.f32 %v7091, %v7091
      %v7124 = vmul.f32 %v7092, %v7092
      %v7125 = vmul.f32 %v7093, %v7093
      %v7126 = vmul.f32 %v7094, %v7094
      %v7127 = vmul.f32 %v7095, %v7095
      %v7128 = vmul.f32 %v7096, %v7096
      %v7129 = vmul.f32 %v7097, %v7097
      %v7130 = vmul.f32 %v7098, %v7098
      %v7131 = vmul.f32 %v7099, %v7099
      %v7132 = vmul.f32 %v7100, %v7100
      %v7133 = vmul.f32 %v7101, %v7101
      %v7134 = vsel %vm340, %v7102, 0.0
      %v7135 = vsel %vm340, %v7103, 0.0
      %v7136 = vadd.f32 %v7134, %v7135
      %v7137 = vsel %vm340, %v7104, 0.0
      %v7138 = vadd.f32 %v7136, %v7137
      %v7139 = vsel %vm340, %v7105, 0.0
      %v7140 = vadd.f32 %v7138, %v7139
      %v7141 = vsel %vm340, %v7106, 0.0
      %v7142 = vadd.f32 %v7140, %v7141
      %v7143 = vsel %vm340, %v7107, 0.0
      %v7144 = vadd.f32 %v7142, %v7143
      %v7145 = vsel %vm340, %v7108, 0.0
      %v7146 = vadd.f32 %v7144, %v7145
      %v7147 = vsel %vm340, %v7109, 0.0
      %v7148 = vadd.f32 %v7146, %v7147
      %v7149 = vsel %vm340, %v7110, 0.0
      %v7150 = vadd.f32 %v7148, %v7149
      %v7151 = vsel %vm340, %v7111, 0.0
      %v7152 = vadd.f32 %v7150, %v7151
      %v7153 = vsel %vm340, %v7112, 0.0
      %v7154 = vadd.f32 %v7152, %v7153
      %v7155 = vsel %vm340, %v7113, 0.0
      %v7156 = vadd.f32 %v7154, %v7155
      %v7157 = vsel %vm340, %v7114, 0.0
      %v7158 = vadd.f32 %v7156, %v7157
      %v7159 = vsel %vm340, %v7115, 0.0
      %v7160 = vadd.f32 %v7158, %v7159
      %v7161 = vsel %vm340, %v7116, 0.0
      %v7162 = vadd.f32 %v7160, %v7161
      %v7163 = vsel %vm340, %v7117, 0.0
      %v7164 = vadd.f32 %v7162, %v7163
      %v7165 = vsel %vm340, %v7118, 0.0
      %v7166 = vadd.f32 %v7164, %v7165
      %v7167 = vsel %vm340, %v7119, 0.0
      %v7168 = vadd.f32 %v7166, %v7167
      %v7169 = vsel %vm340, %v7120, 0.0
      %v7170 = vadd.f32 %v7168, %v7169
      %v7171 = vsel %vm340, %v7121, 0.0
      %v7172 = vadd.f32 %v7170, %v7171
      %v7173 = vsel %vm340, %v7122, 0.0
      %v7174 = vadd.f32 %v7172, %v7173
      %v7175 = vsel %vm340, %v7123, 0.0
      %v7176 = vadd.f32 %v7174, %v7175
      %v7177 = vsel %vm340, %v7124, 0.0
      %v7178 = vadd.f32 %v7176, %v7177
      %v7179 = vsel %vm340, %v7125, 0.0
      %v7180 = vadd.f32 %v7178, %v7179
      %v7181 = vsel %vm340, %v7126, 0.0
      %v7182 = vadd.f32 %v7180, %v7181
      %v7183 = vsel %vm340, %v7127, 0.0
      %v7184 = vadd.f32 %v7182, %v7183
      %v7185 = vsel %vm340, %v7128, 0.0
      %v7186 = vadd.f32 %v7184, %v7185
      %v7187 = vsel %vm340, %v7129, 0.0
      %v7188 = vadd.f32 %v7186, %v7187
      %v7189 = vsel %vm340, %v7130, 0.0
      %v7190 = vadd.f32 %v7188, %v7189
      %v7191 = vsel %vm340, %v7131, 0.0
      %v7192 = vadd.f32 %v7190, %v7191
      %v7193 = vsel %vm340, %v7132, 0.0
      %v7194 = vadd.f32 %v7192, %v7193
      %v7195 = vsel %vm340, %v7133, 0.0
      %v7196 = vadd.f32 %v7194, %v7195
      %v7197 = vrot.slane %v7196, 4
      %v7198 = vadd.f32 %v7196, %v7197
      %v7199 = vrot.slane %v7198, 2
      %v7200 = vadd.f32 %v7198, %v7199
      %v7201 = vrot.slane %v7200, 1
      %v7202 = vadd.f32 %v7200, %v7201
      %v7203 = vmul.f32 %v7202, %v3700
      %v7204 = vadd.f32 %v7203, 1e-05
      %v7205 = vrsqrt.pop %v7204
      %v7206 = vmul.f32 %v7205, %v7204
      %v7207 = vmul.f32 %v7206, %v7205
      %v7208 = vmul.f32 0.5, %v7207
      %v7209 = vsub.f32 1.5, %v7208
      %v7210 = vmul.f32 %v7205, %v7209
      %vm7211 = vweird.f32 %v7204
      %vm7212 = vweird.f32 %v7205
      %vm7213 = vmor %vm7211, %vm7212
      %v7214 = vsel %vm7213, %v7205, %v7210
      %v7215 = vmul.f32 %v7070, %v7214
      %v7216 = vmul.f32 %v7071, %v7214
      %v7217 = vmul.f32 %v7072, %v7214
      %v7218 = vmul.f32 %v7073, %v7214
      %v7219 = vmul.f32 %v7074, %v7214
      %v7220 = vmul.f32 %v7075, %v7214
      %v7221 = vmul.f32 %v7076, %v7214
      %v7222 = vmul.f32 %v7077, %v7214
      %v7223 = vmul.f32 %v7078, %v7214
      %v7224 = vmul.f32 %v7079, %v7214
      %v7225 = vmul.f32 %v7080, %v7214
      %v7226 = vmul.f32 %v7081, %v7214
      %v7227 = vmul.f32 %v7082, %v7214
      %v7228 = vmul.f32 %v7083, %v7214
      %v7229 = vmul.f32 %v7084, %v7214
      %v7230 = vmul.f32 %v7085, %v7214
      %v7231 = vmul.f32 %v7086, %v7214
      %v7232 = vmul.f32 %v7087, %v7214
      %v7233 = vmul.f32 %v7088, %v7214
      %v7234 = vmul.f32 %v7089, %v7214
      %v7235 = vmul.f32 %v7090, %v7214
      %v7236 = vmul.f32 %v7091, %v7214
      %v7237 = vmul.f32 %v7092, %v7214
      %v7238 = vmul.f32 %v7093, %v7214
      %v7239 = vmul.f32 %v7094, %v7214
      %v7240 = vmul.f32 %v7095, %v7214
      %v7241 = vmul.f32 %v7096, %v7214
      %v7242 = vmul.f32 %v7097, %v7214
      %v7243 = vmul.f32 %v7098, %v7214
      %v7244 = vmul.f32 %v7099, %v7214
      %v7245 = vmul.f32 %v7100, %v7214
      %v7246 = vmul.f32 %v7101, %v7214
      %v7247 = vmax.f32 %v7215, 0.0
      %v7248 = vmax.f32 %v7216, 0.0
      %v7249 = vmax.f32 %v7217, 0.0
      %v7250 = vmax.f32 %v7218, 0.0
      %v7251 = vmax.f32 %v7219, 0.0
      %v7252 = vmax.f32 %v7220, 0.0
      %v7253 = vmax.f32 %v7221, 0.0
      %v7254 = vmax.f32 %v7222, 0.0
      %v7255 = vmax.f32 %v7223, 0.0
      %v7256 = vmax.f32 %v7224, 0.0
      %v7257 = vmax.f32 %v7225, 0.0
      %v7258 = vmax.f32 %v7226, 0.0
      %v7259 = vmax.f32 %v7227, 0.0
      %v7260 = vmax.f32 %v7228, 0.0
      %v7261 = vmax.f32 %v7229, 0.0
      %v7262 = vmax.f32 %v7230, 0.0
      %v7263 = vmax.f32 %v7231, 0.0
      %v7264 = vmax.f32 %v7232, 0.0
      %v7265 = vmax.f32 %v7233, 0.0
      %v7266 = vmax.f32 %v7234, 0.0
      %v7267 = vmax.f32 %v7235, 0.0
      %v7268 = vmax.f32 %v7236, 0.0
      %v7269 = vmax.f32 %v7237, 0.0
      %v7270 = vmax.f32 %v7238, 0.0
      %v7271 = vmax.f32 %v7239, 0.0
      %v7272 = vmax.f32 %v7240, 0.0
      %v7273 = vmax.f32 %v7241, 0.0
      %v7274 = vmax.f32 %v7242, 0.0
      %v7275 = vmax.f32 %v7243, 0.0
      %v7276 = vmax.f32 %v7244, 0.0
      %v7277 = vmax.f32 %v7245, 0.0
      %v7278 = vmax.f32 %v7246, 0.0
      %7279 = vst.msk [vmem:[%s217] sm:$0xff] %vm340, %v7247
      %7280 = vst.msk [vmem:[%s217 + $0x8] sm:$0xff] %vm340, %v7248
      %7281 = vst.msk [vmem:[%s217 + $0x10] sm:$0xff] %vm340, %v7249
      %7282 = vst.msk [vmem:[%s217 + $0x18] sm:$0xff] %vm340, %v7250
      %7283 = vst.msk [vmem:[%s217 + $0x20] sm:$0xff] %vm340, %v7251
      %7284 = vst.msk [vmem:[%s217 + $0x28] sm:$0xff] %vm340, %v7252
      %7285 = vst.msk [vmem:[%s217 + $0x30] sm:$0xff] %vm340, %v7253
      %7286 = vst.msk [vmem:[%s217 + $0x38] sm:$0xff] %vm340, %v7254
      %7287 = vst.msk [vmem:[%s217 + $0x40] sm:$0xff] %vm340, %v7255
      %7288 = vst.msk [vmem:[%s217 + $0x48] sm:$0xff] %vm340, %v7256
      %7289 = vst.msk [vmem:[%s217 + $0x50] sm:$0xff] %vm340, %v7257
      %7290 = vst.msk [vmem:[%s217 + $0x58] sm:$0xff] %vm340, %v7258
      %7291 = vst.msk [vmem:[%s217 + $0x60] sm:$0xff] %vm340, %v7259
      %7292 = vst.msk [vmem:[%s217 + $0x68] sm:$0xff] %vm340, %v7260
      %7293 = vst.msk [vmem:[%s217 + $0x70] sm:$0xff] %vm340, %v7261
      %7294 = vst.msk [vmem:[%s217 + $0x78] sm:$0xff] %vm340, %v7262
      %7295 = vst.msk [vmem:[%s217 + $0x80] sm:$0xff] %vm340, %v7263
      %7296 = vst.msk [vmem:[%s217 + $0x88] sm:$0xff] %vm340, %v7264
      %7297 = vst.msk [vmem:[%s217 + $0x90] sm:$0xff] %vm340, %v7265
      %7298 = vst.msk [vmem:[%s217 + $0x98] sm:$0xff] %vm340, %v7266
      %7299 = vst.msk [vmem:[%s217 + $0xa0] sm:$0xff] %vm340, %v7267
      %7300 = vst.msk [vmem:[%s217 + $0xa8] sm:$0xff] %vm340, %v7268
      %7301 = vst.msk [vmem:[%s217 + $0xb0] sm:$0xff] %vm340, %v7269
      %7302 = vst.msk [vmem:[%s217 + $0xb8] sm:$0xff] %vm340, %v7270
      %7303 = vst.msk [vmem:[%s217 + $0xc0] sm:$0xff] %vm340, %v7271
      %7304 = vst.msk [vmem:[%s217 + $0xc8] sm:$0xff] %vm340, %v7272
      %7305 = vst.msk [vmem:[%s217 + $0xd0] sm:$0xff] %vm340, %v7273
      %7306 = vst.msk [vmem:[%s217 + $0xd8] sm:$0xff] %vm340, %v7274
      %7307 = vst.msk [vmem:[%s217 + $0xe0] sm:$0xff] %vm340, %v7275
      %7308 = vst.msk [vmem:[%s217 + $0xe8] sm:$0xff] %vm340, %v7276
      %7309 = vst.msk [vmem:[%s217 + $0xf0] sm:$0xff] %vm340, %v7277
      %7310 = vst.msk [vmem:[%s217 + $0xf8] sm:$0xff] %vm340, %v7278
      %p7311 = scmp.lt.s32.totalorder %s15, 1
      %s7312 = scalar_select %p7311, %s15, 1
      %s7313 = smul.addr %s7312, 32
      %s7314 = smul.addr %s7313, 8
      %s7315 = scalar_lea.vmem %s4, %s7314
      // Predicated region
      $region37: #{up_forward.1} parent=35 // pred_check
        %p7316 = pneg %p127
      $region38: #{up_forward.1} parent=35 // pred_check_branch
        %7318 = sbr.rel (%p7316) target = $region40
      $region39: #{up_forward.1} parent=35 // pred_region
        _
      $region40: #{up_forward.1} parent=35 // pred_fallthru
        _
    $region36: #{up_forward.1} parent=5 // pred_fallthru
      _
    %p7319 = scmp.le.s32.totalorder 2, %s10
    // Predicated region
    $region41: #{up_forward.1} parent=5 // pred_check
      %p7320 = pneg %p7319
    $region42: #{up_forward.1} parent=5 // pred_check_branch
      %7322 = sbr.rel (%p7320) target = $region44
    $region43: #{up_forward.1} parent=5 // pred_region
      %s7323 = ssub.s32 %s10, 2
      // Predicated region
      $region45: #{up_forward.1} parent=43 // pred_check
        %p7324 = pneg %p133
      $region46: #{up_forward.1} parent=43 // pred_check_branch
        %7326 = sbr.rel (%p7324) target = $region48
      $region47: #{up_forward.1} parent=43 // pred_region
        %p7327 = scmp.lt.s32.totalorder %s16, 1
        %s7328 = scalar_select %p7327, %s16, 1
        %s7329 = smul.addr %s7328, 32
        %s7330 = smul.addr %s7329, 8
        %s7331 = scalar_lea.vmem %s4, %s7330
      $region48: #{up_forward.1} parent=43 // pred_fallthru
        _
    $region44: #{up_forward.1} parent=5 // pred_fallthru
      _
  $region6: #{up_forward.1} parent=0 // loop_footer
    %s14 = sadd.s32 1, %s10
  $region7: #{up_forward.1} parent=0 // loop_footer_branch
    %9 = sbr.rel target = $region3
  $region8: #{up_forward.1} parent=0 // loop_exit
    _

</llo_original>
